<compile_context>
chip_gen: v7x
topology: tpu7x:2x2x1
jax: 0.10.0
libtpu: 0.0.40
codegen_flags: <defaults>
</compile_context>

<pallas_src>
import functools

import jax
import jax.numpy as jnp
from jax.experimental import pallas as pl
from jax.experimental.pallas import tpu as pltpu

HIDDEN = 64


# ----------------------------------------------------------------------------
# Fused kernel: recompute trunk (tiny) + one lane-dense tile of the output
# layer per grid step:  out[:, j*tile_n:(j+1)*tile_n] = h @ W_out_tile + b_tile
# ----------------------------------------------------------------------------
def _matrixnet_kernel(x_ref, w_in_ref, b_in_ref, w_h_ref, b_h_ref,
                      w_out_ref, b_out_ref, o_ref, *, num_h_layers):
    # --- trunk, recomputed per step (hides under the W_out DMA) -------------
    h = jnp.dot(x_ref[...], w_in_ref[...],
                preferred_element_type=jnp.float32) + b_in_ref[...]
    for l in range(num_h_layers):          # static unroll
        h = jnp.maximum(h, 0.0)            # nn.ReLU()
        h = jnp.dot(h, w_h_ref[l],
                    preferred_element_type=jnp.float32) + b_h_ref[l]
    # --- output layer tile: bf16 weights/activations, f32 accumulation ------
    o_ref[...] = (jnp.dot(h.astype(jnp.bfloat16), w_out_ref[...],
                          preferred_element_type=jnp.float32)
                  + b_out_ref[...])


def matrixnet_forward(real, imag, params, *, num_h_layers, tile_n=16384):
    """Pallas implementation of MatrixNet.forward(real, imag)."""
    w_in, b_in, w_h, b_h, w_out, b_out = params
    x = jnp.concatenate([real, imag], axis=1)          # torch.cat(dim=1) (glue)
    B, F = x.shape
    out_features = w_out.shape[1]
    assert out_features % tile_n == 0
    n_tiles = out_features // tile_n

    kernel = functools.partial(_matrixnet_kernel, num_h_layers=num_h_layers)

    # Cost hint: dominated by streaming bf16 W_out; trunk recompute is noise.
    flops = (2 * B * HIDDEN * out_features
             + n_tiles * 2 * B * (F + num_h_layers * HIDDEN) * HIDDEN)
    bytes_accessed = (w_out.size * w_out.dtype.itemsize
                      + b_out.size * b_out.dtype.itemsize
                      + B * out_features * 4
                      + (x.size + w_in.size + b_in.size
                         + w_h.size + b_h.size) * 4)

    out = pl.pallas_call(
        kernel,
        out_shape=jax.ShapeDtypeStruct((B, out_features), jnp.float32),
        grid=(n_tiles,),
        in_specs=[
            pl.BlockSpec((B, F), lambda j: (0, 0)),             # x (resident)
            pl.BlockSpec((F, HIDDEN), lambda j: (0, 0)),        # w_in
            pl.BlockSpec((1, HIDDEN), lambda j: (0, 0)),        # b_in
            pl.BlockSpec(w_h.shape, lambda j: (0, 0, 0)),       # hidden weights
            pl.BlockSpec(b_h.shape, lambda j: (0, 0, 0)),       # hidden biases
            pl.BlockSpec((HIDDEN, tile_n), lambda j: (0, j)),   # W_out tile (bf16)
            pl.BlockSpec((1, tile_n), lambda j: (0, j)),        # b_out tile
        ],
        out_specs=pl.BlockSpec((B, tile_n), lambda j: (0, j)),
        compiler_params=pltpu.CompilerParams(
            dimension_semantics=("parallel",)),                 # v7x megacore split
        cost_estimate=pl.CostEstimate(
            flops=flops, transcendentals=0, bytes_accessed=bytes_accessed),
    )(x, w_in, b_in, w_h, b_h, w_out, b_out)

    # reshape(-1, 128, 128, 2) -> complex, as in the PyTorch module (glue;
    # the reshape is a no-copy view and the complex() fuses).
    out = out.reshape(-1, 128, 128, 2)
    return jax.lax.complex(out[..., 0], out[..., 1])


def init_params(key, in_features, out_features, num_h_layers):
    """Deterministic init mimicking nn.Linear (uniform +/- 1/sqrt(fan_in)).

    Weights are stored transposed relative to PyTorch: (in, out).
    W_out is stored in bfloat16 (weight-only quantization of the dominant
    streamed matrix); everything else stays float32.
    """
    keys = jax.random.split(key, 2 * (num_h_layers + 2))

    def linear(kw, kb, fan_in, fan_out):
        bound = 1.0 / jnp.sqrt(fan_in)
        w = jax.random.uniform(kw, (fan_in, fan_out), jnp.float32, -bound, bound)
        b = jax.random.uniform(kb, (1, fan_out), jnp.float32, -bound, bound)
        return w, b

    w_in, b_in = linear(keys[0], keys[1], in_features, HIDDEN)
    if num_h_layers > 0:
        w_hs, b_hs = [], []
        for i in range(num_h_layers):
            w, b = linear(keys[2 + 2 * i], keys[3 + 2 * i], HIDDEN, HIDDEN)
            w_hs.append(w)
            b_hs.append(b)
        w_h = jnp.stack(w_hs, axis=0)                  # (L, 64, 64)
        b_h = jnp.stack(b_hs, axis=0)                  # (L, 1, 64)
    else:                                              # unused dummies
        w_h = jnp.zeros((1, HIDDEN, HIDDEN), jnp.float32)
        b_h = jnp.zeros((1, 1, HIDDEN), jnp.float32)
    w_out, b_out = linear(keys[-2], keys[-1], HIDDEN, out_features)
    return (w_in, b_in, w_h, b_h, w_out.astype(jnp.bfloat16), b_out)


def _reference_forward(real, imag, params, num_h_layers):
    """Pure-JAX f32 reference matching the PyTorch semantics (W_out upcast)."""
    w_in, b_in, w_h, b_h, w_out, b_out = params
    x = jnp.concatenate([real, imag], axis=1)
    x = x @ w_in + b_in
    for l in range(num_h_layers):
        x = jnp.maximum(x, 0.0)
        x = x @ w_h[l] + b_h[l]
    out = x @ w_out.astype(jnp.float32) + b_out
    out = out.reshape(-1, 128, 128, 2)
    return jax.lax.complex(out[..., 0], out[..., 1])


if __name__ == "__main__":
    # Small shapes consistent with the module: the forward's reshape forces
    # out_features = 128 * 128 * 2 = 32768 per sample.
    batch = 2
    in_features = 32                 # real, imag each contribute 16 features
    num_h_layers = 2
    out_features = 128 * 128 * 2

    key = jax.random.PRNGKey(0)
    k_real, k_imag, k_params = jax.random.split(key, 3)
    real = jax.random.normal(k_real, (batch, in_features // 2), jnp.float32)
    imag = jax.random.normal(k_imag, (batch, in_features // 2), jnp.float32)
    params = init_params(k_params, in_features, out_features, num_h_layers)

    out = matrixnet_forward(real, imag, params, num_h_layers=num_h_layers)
    out = jax.block_until_ready(out)

    ref = _reference_forward(real, imag, params, num_h_layers)
    assert out.shape == (batch, 128, 128) and out.dtype == jnp.complex64
    # Tolerance relaxed for the bf16 activation cast in the output matmul
    # (weights themselves are identically quantized in kernel and reference).
    assert jnp.allclose(out, ref, atol=2e-2, rtol=2e-2)

    print("KERNEL_OK")
</pallas_src>

<mosaic_0001>
module attributes {stable_mosaic.version = 11 : i64} {
  func.func @_matrixnet_kernel(%arg0: i32, %arg1: memref<2x32xf32, #tpu.memory_space<vmem>>, %arg2: memref<32x64xf32, #tpu.memory_space<vmem>>, %arg3: memref<1x64xf32, #tpu.memory_space<vmem>>, %arg4: memref<2x64x64xf32, #tpu.memory_space<vmem>>, %arg5: memref<2x1x64xf32, #tpu.memory_space<vmem>>, %arg6: memref<64x16384xbf16, #tpu.memory_space<vmem>>, %arg7: memref<1x16384xf32, #tpu.memory_space<vmem>>, %arg8: memref<2x16384xf32, #tpu.memory_space<vmem>>) attributes {dimension_semantics = [#tpu.dimension_semantics<parallel>], iteration_bounds = array<i64: 2>, scalar_prefetch = 0 : i64, scratch_operands = 0 : i64, tpu.core_type = #tpu.core_type<tc>, window_params = [{pipeline_mode = #tpu.pipeline_mode<synchronous>, transform_indices = @transform_0, window_bounds = array<i64: 2, 32>}, {pipeline_mode = #tpu.pipeline_mode<synchronous>, transform_indices = @transform_1, window_bounds = array<i64: 32, 64>}, {pipeline_mode = #tpu.pipeline_mode<synchronous>, transform_indices = @transform_2, window_bounds = array<i64: 1, 64>}, {pipeline_mode = #tpu.pipeline_mode<synchronous>, transform_indices = @transform_3, window_bounds = array<i64: 2, 64, 64>}, {pipeline_mode = #tpu.pipeline_mode<synchronous>, transform_indices = @transform_4, window_bounds = array<i64: 2, 1, 64>}, {transform_indices = @transform_5, window_bounds = array<i64: 64, 16384>}, {transform_indices = @transform_6, window_bounds = array<i64: 1, 16384>}, {transform_indices = @transform_7, window_bounds = array<i64: 2, 16384>}]} {
    %c0 = arith.constant 0 : index
    %c0_0 = arith.constant 0 : index
    %0 = vector.load %arg1[%c0, %c0_0] : memref<2x32xf32, #tpu.memory_space<vmem>>, vector<2x32xf32>
    %c0_1 = arith.constant 0 : index
    %c0_2 = arith.constant 0 : index
    %1 = vector.load %arg2[%c0_1, %c0_2] : memref<32x64xf32, #tpu.memory_space<vmem>>, vector<32x64xf32>
    %cst = arith.constant dense<0.000000e+00> : vector<2x64xf32>
    %2 = tpu.matmul %0, %1, %cst {dimension_numbers = #tpu.dot_dimension_numbers<[1], [0], [0], [1], [0, 0, 1, 1], [], []>} : vector<2x32xf32>, vector<32x64xf32>, vector<2x64xf32> -> vector<2x64xf32>
    %c0_3 = arith.constant 0 : index
    %c0_4 = arith.constant 0 : index
    %3 = vector.load %arg3[%c0_3, %c0_4] : memref<1x64xf32, #tpu.memory_space<vmem>>, vector<1x64xf32>
    %4 = vector.broadcast %3 : vector<1x64xf32> to vector<2x64xf32>
    %5 = arith.addf %2, %4 : vector<2x64xf32>
    %cst_5 = arith.constant 0.000000e+00 : f32
    %6 = vector.broadcast %cst_5 : f32 to vector<2x64xf32>
    %7 = arith.maximumf %5, %6 : vector<2x64xf32>
    %c0_6 = arith.constant 0 : index
    %c0_7 = arith.constant 0 : index
    %c0_8 = arith.constant 0 : index
    %8 = vector.load %arg4[%c0_6, %c0_7, %c0_8] : memref<2x64x64xf32, #tpu.memory_space<vmem>>, vector<1x64x64xf32>
    %9 = vector.shape_cast %8 : vector<1x64x64xf32> to vector<64x64xf32>
    %cst_9 = arith.constant dense<0.000000e+00> : vector<2x64xf32>
    %10 = tpu.matmul %7, %9, %cst_9 {dimension_numbers = #tpu.dot_dimension_numbers<[1], [0], [0], [1], [0, 0, 1, 1], [], []>} : vector<2x64xf32>, vector<64x64xf32>, vector<2x64xf32> -> vector<2x64xf32>
    %c0_10 = arith.constant 0 : index
    %c0_11 = arith.constant 0 : index
    %c0_12 = arith.constant 0 : index
    %11 = vector.load %arg5[%c0_10, %c0_11, %c0_12] : memref<2x1x64xf32, #tpu.memory_space<vmem>>, vector<1x1x64xf32>
    %12 = vector.shape_cast %11 : vector<1x1x64xf32> to vector<1x64xf32>
    %13 = vector.broadcast %12 : vector<1x64xf32> to vector<2x64xf32>
    %14 = arith.addf %10, %13 : vector<2x64xf32>
    %cst_13 = arith.constant 0.000000e+00 : f32
    %15 = vector.broadcast %cst_13 : f32 to vector<2x64xf32>
    %16 = arith.maximumf %14, %15 : vector<2x64xf32>
    %c1 = arith.constant 1 : index
    %c0_14 = arith.constant 0 : index
    %c0_15 = arith.constant 0 : index
    %17 = vector.load %arg4[%c1, %c0_14, %c0_15] : memref<2x64x64xf32, #tpu.memory_space<vmem>>, vector<1x64x64xf32>
    %18 = vector.shape_cast %17 : vector<1x64x64xf32> to vector<64x64xf32>
    %cst_16 = arith.constant dense<0.000000e+00> : vector<2x64xf32>
    %19 = tpu.matmul %16, %18, %cst_16 {dimension_numbers = #tpu.dot_dimension_numbers<[1], [0], [0], [1], [0, 0, 1, 1], [], []>} : vector<2x64xf32>, vector<64x64xf32>, vector<2x64xf32> -> vector<2x64xf32>
    %c1_17 = arith.constant 1 : index
    %c0_18 = arith.constant 0 : index
    %c0_19 = arith.constant 0 : index
    %20 = vector.load %arg5[%c1_17, %c0_18, %c0_19] : memref<2x1x64xf32, #tpu.memory_space<vmem>>, vector<1x1x64xf32>
    %21 = vector.shape_cast %20 : vector<1x1x64xf32> to vector<1x64xf32>
    %22 = vector.broadcast %21 : vector<1x64xf32> to vector<2x64xf32>
    %23 = arith.addf %19, %22 : vector<2x64xf32>
    %24 = arith.truncf %23 : vector<2x64xf32> to vector<2x64xbf16>
    %c0_20 = arith.constant 0 : index
    %c0_21 = arith.constant 0 : index
    %25 = vector.load %arg6[%c0_20, %c0_21] : memref<64x16384xbf16, #tpu.memory_space<vmem>>, vector<64x16384xbf16>
    %cst_22 = arith.constant dense<0.000000e+00> : vector<2x16384xf32>
    %26 = tpu.matmul %24, %25, %cst_22 {dimension_numbers = #tpu.dot_dimension_numbers<[1], [0], [0], [1], [0, 0, 1, 1], [], []>} : vector<2x64xbf16>, vector<64x16384xbf16>, vector<2x16384xf32> -> vector<2x16384xf32>
    %c0_23 = arith.constant 0 : index
    %c0_24 = arith.constant 0 : index
    %27 = vector.load %arg7[%c0_23, %c0_24] : memref<1x16384xf32, #tpu.memory_space<vmem>>, vector<1x16384xf32>
    %28 = vector.broadcast %27 : vector<1x16384xf32> to vector<2x16384xf32>
    %29 = arith.addf %26, %28 : vector<2x16384xf32>
    %c0_25 = arith.constant 0 : index
    %c0_26 = arith.constant 0 : index
    %30 = vector.load %arg8[%c0_25, %c0_26] : memref<2x16384xf32, #tpu.memory_space<vmem>>, vector<2x16384xf32>
    tpu.vector_store %arg8[%c0_25, %c0_26], %29 {strides = array<i32>} : memref<2x16384xf32, #tpu.memory_space<vmem>>, vector<2x16384xf32>,
    return
  }
  func.func @transform_0(%arg0: i32) -> (i32, i32) {
    %c0_i32 = arith.constant 0 : i32
    %c0_i32_0 = arith.constant 0 : i32
    %c0_i32_1 = arith.constant 0 : i32
    return %c0_i32, %c0_i32_0 : i32, i32
  }
  func.func @transform_1(%arg0: i32) -> (i32, i32) {
    %c0_i32 = arith.constant 0 : i32
    %c0_i32_0 = arith.constant 0 : i32
    %c0_i32_1 = arith.constant 0 : i32
    return %c0_i32, %c0_i32_0 : i32, i32
  }
  func.func @transform_2(%arg0: i32) -> (i32, i32) {
    %c0_i32 = arith.constant 0 : i32
    %c0_i32_0 = arith.constant 0 : i32
    %c0_i32_1 = arith.constant 0 : i32
    return %c0_i32, %c0_i32_0 : i32, i32
  }
  func.func @transform_3(%arg0: i32) -> (i32, i32, i32) {
    %c0_i32 = arith.constant 0 : i32
    %c0_i32_0 = arith.constant 0 : i32
    %c0_i32_1 = arith.constant 0 : i32
    %c0_i32_2 = arith.constant 0 : i32
    return %c0_i32, %c0_i32_0, %c0_i32_1 : i32, i32, i32
  }
  func.func @transform_4(%arg0: i32) -> (i32, i32, i32) {
    %c0_i32 = arith.constant 0 : i32
    %c0_i32_0 = arith.constant 0 : i32
    %c0_i32_1 = arith.constant 0 : i32
    %c0_i32_2 = arith.constant 0 : i32
    return %c0_i32, %c0_i32_0, %c0_i32_1 : i32, i32, i32
  }
  func.func @transform_5(%arg0: i32) -> (i32, i32) {
    %c0_i32 = arith.constant 0 : i32
    %c0_i32_0 = arith.constant 0 : i32
    return %c0_i32, %arg0 : i32, i32
  }
  func.func @transform_6(%arg0: i32) -> (i32, i32) {
    %c0_i32 = arith.constant 0 : i32
    %c0_i32_0 = arith.constant 0 : i32
    return %c0_i32, %arg0 : i32, i32
  }
  func.func @transform_7(%arg0: i32) -> (i32, i32) {
    %c0_i32 = arith.constant 0 : i32
    %c0_i32_0 = arith.constant 0 : i32
    return %c0_i32, %arg0 : i32, i32
  }
}

</mosaic_0001>

<llo_original>
// kernel: tpu_custom_call.1
$region0: #{tpu_custom_call.1}
  #allocation0 [shape = 'u32[]', space=smem, size = 0x4, offset = 0x4, fixed_abs, tag = 'smem constant byte address 0x4 - core index']
  #allocation1 [shape = 'u32[144,128]{1,0:T(1,128)}', space=vmem, size = 0x12000, scoped, tag = 'internal scratch']
  %s0 = inlined_call_operand.hbm [shape: f32[2,32], index: 0, kind: input, shape index: {}]
  %s1 = inlined_call_operand.hbm [shape: f32[32,64], index: 1, kind: input, shape index: {}]
  %s2 = inlined_call_operand.hbm [shape: f32[1,64], index: 2, kind: input, shape index: {}]
  %s3 = inlined_call_operand.hbm [shape: f32[2,64,64], index: 3, kind: input, shape index: {}]
  %s4 = inlined_call_operand.hbm [shape: f32[2,1,64], index: 4, kind: input, shape index: {}]
  %s5 = inlined_call_operand.hbm [shape: bf16[64,32768], index: 5, kind: input, shape index: {}]
  %s6 = inlined_call_operand.hbm [shape: f32[1,32768], index: 6, kind: input, shape index: {}]
  %s7 = inlined_call_operand.hbm [shape: f32[2,32768], index: 7, kind: output, shape index: {}]
  %s8 = sld [smem:[#allocation0]]
  $region89: #{tpu_custom_call.1} parent=0
    _
  %s10 = ssub.s32 1, %s8
  %s11 = scalar_select 0, %s10, %s8
  $region1: #{tpu_custom_call.1} parent=0
    #allocation2 [shape = 'u8[1024]{0}', space=vmem, size = 0x400, scoped, tag = 'input window, operand 0, single buffered']
    #allocation3 [shape = 's32[2]{0}', space=sflag, size = 0x8, scoped, tag = 'scoped memory for tpu_custom_call.1']
    #allocation4 [shape = 's32[2]{0}', space=sflag, size = 0x8, scoped, tag = 'scoped memory for tpu_custom_call.1']
    #allocation5 [shape = 'u8[16384]{0}', space=vmem, size = 0x4000, scoped, tag = 'input window, operand 1, single buffered']
    #allocation6 [shape = 's32[1]{0}', space=sflag, size = 0x4, scoped, tag = 'scoped memory for tpu_custom_call.1']
    #allocation7 [shape = 'u8[512]{0}', space=vmem, size = 0x400, scoped, tag = 'input window, operand 2, single buffered']
    #allocation8 [shape = 'u8[65536]{0}', space=vmem, size = 0x10000, scoped, tag = 'input window, operand 3, single buffered']
    #allocation9 [shape = 's32[1]{0}', space=sflag, size = 0x4, scoped, tag = 'scoped memory for tpu_custom_call.1']
    #allocation10 [shape = 'u8[1024]{0}', space=vmem, size = 0x400, scoped, tag = 'input window, operand 4, single buffered']
    #allocation11 [shape = 'u8[4194304]{0}', space=vmem, size = 0x400000, scoped, tag = 'input window, operand 5']
    #allocation12 [shape = 's32[2]{0}', space=sflag, size = 0x8, scoped, tag = 'scoped memory for tpu_custom_call.1']
    #allocation13 [shape = 'u8[131072]{0}', space=vmem, size = 0x20000, scoped, tag = 'input window, operand 6']
    #allocation14 [shape = 'u8[262144]{0}', space=vmem, size = 0x40000, scoped, tag = 'output window, operand 0']
    %12 = vsyncpa [#allocation3], 0
    %13 = vsyncpa [#allocation6], 0
    %14 = vsyncpa [#allocation9], 0
    %15 = vsyncpa [#allocation12], 0
    %s16 = scalar_lea.sflag [#allocation12], 1
    %17 = vsyncpa %s16, 0
    %18 = vsyncpa [#allocation4], 0
    %s19 = scalar_lea.sflag [#allocation4], 1
    %20 = vsyncpa %s19, 0
    loop: start=0, step=1, limit=4
    $region2: #{tpu_custom_call.1} parent=1 // loop_pre_header
      _
    $region3: #{tpu_custom_call.1} parent=1 // loop_header
      %s22 = sphi 0, %s26
      %p23 = scmp.ge.s32.totalorder %s22, 4
      %s30 = sphi 0, %s30
      %s32 = sphi 0, %s30
      %s33 = sphi 0, %s32
      %s47 = sphi 0, %s33
      %s51 = sphi 0, %s51
      %s53 = sphi 0, %s51
      %s54 = sphi 0, %s53
      %s68 = sphi 0, %s54
      %s72 = sphi 0, %s72
      %s74 = sphi 0, %s72
      %s75 = sphi 0, %s74
      %s89 = sphi 0, %s75
      %s93 = sphi 0, %s93
      %s95 = sphi 0, %s93
      %s96 = sphi 0, %s95
      %s110 = sphi 0, %s96
      %s114 = sphi 0, %s114
      %s116 = sphi 0, %s114
      %s117 = sphi 0, %s116
      %s131 = sphi 0, %s117
      %s137 = sphi 0, %s139
      %s140 = sphi 0, %s137
      %s141 = sphi 0, %s140
      %s157 = sphi 0, %s141
      %s163 = sphi 0, %s165
      %s166 = sphi 0, %s163
      %s167 = sphi 0, %s166
      %s183 = sphi 0, %s167
      %s189 = sphi 0, %s191
      %s192 = sphi 0, %s189
      %s193 = sphi 0, %s192
      %s209 = sphi 0, %s193
    $region4: #{tpu_custom_call.1} parent=1 // loop_header_branch
      %25 = sbr.rel (%p23) target = $region8
    $region5: #{tpu_custom_call.1} parent=1 // loop_body
      %s27 = ssub.s32 %s22, 1
      %s28 = ssub.s32 %s22, 2
      %s29 = sadd.s32 %s22, 1
      %s31 = sadd.s32 %s30, 1
      %p34 = scmp.eq.s32.totalorder %s22, 1
      %p35 = scmp.ne.s32.totalorder %s30, %s32
      %p36 = scmp.eq.s32.totalorder %s22, 0
      %p37 = por %p35, %p36
      %p38 = scmp.ne.s32.totalorder %s30, %s32
      %p39 = scmp.eq.s32.totalorder %s27, 1
      %p40 = por %p38, %p39
      %p41 = scmp.ne.s32.totalorder %s32, %s33
      %p42 = scmp.eq.s32.totalorder %s27, 0
      %p43 = por %p41, %p42
      %p44 = scmp.ne.s32.totalorder %s32, %s33
      %p45 = scmp.eq.s32.totalorder %s28, 1
      %p46 = por %p44, %p45
      %p48 = scmp.ne.s32.totalorder %s33, %s47
      %p49 = scmp.eq.s32.totalorder %s28, 0
      %p50 = por %p48, %p49
      %s52 = sadd.s32 %s51, 1
      %p55 = scmp.eq.s32.totalorder %s22, 1
      %p56 = scmp.ne.s32.totalorder %s51, %s53
      %p57 = scmp.eq.s32.totalorder %s22, 0
      %p58 = por %p56, %p57
      %p59 = scmp.ne.s32.totalorder %s51, %s53
      %p60 = scmp.eq.s32.totalorder %s27, 1
      %p61 = por %p59, %p60
      %p62 = scmp.ne.s32.totalorder %s53, %s54
      %p63 = scmp.eq.s32.totalorder %s27, 0
      %p64 = por %p62, %p63
      %p65 = scmp.ne.s32.totalorder %s53, %s54
      %p66 = scmp.eq.s32.totalorder %s28, 1
      %p67 = por %p65, %p66
      %p69 = scmp.ne.s32.totalorder %s54, %s68
      %p70 = scmp.eq.s32.totalorder %s28, 0
      %p71 = por %p69, %p70
      %s73 = sadd.s32 %s72, 1
      %p76 = scmp.eq.s32.totalorder %s22, 1
      %p77 = scmp.ne.s32.totalorder %s72, %s74
      %p78 = scmp.eq.s32.totalorder %s22, 0
      %p79 = por %p77, %p78
      %p80 = scmp.ne.s32.totalorder %s72, %s74
      %p81 = scmp.eq.s32.totalorder %s27, 1
      %p82 = por %p80, %p81
      %p83 = scmp.ne.s32.totalorder %s74, %s75
      %p84 = scmp.eq.s32.totalorder %s27, 0
      %p85 = por %p83, %p84
      %p86 = scmp.ne.s32.totalorder %s74, %s75
      %p87 = scmp.eq.s32.totalorder %s28, 1
      %p88 = por %p86, %p87
      %p90 = scmp.ne.s32.totalorder %s75, %s89
      %p91 = scmp.eq.s32.totalorder %s28, 0
      %p92 = por %p90, %p91
      %s94 = sadd.s32 %s93, 1
      %p97 = scmp.eq.s32.totalorder %s22, 1
      %p98 = scmp.ne.s32.totalorder %s93, %s95
      %p99 = scmp.eq.s32.totalorder %s22, 0
      %p100 = por %p98, %p99
      %p101 = scmp.ne.s32.totalorder %s93, %s95
      %p102 = scmp.eq.s32.totalorder %s27, 1
      %p103 = por %p101, %p102
      %p104 = scmp.ne.s32.totalorder %s95, %s96
      %p105 = scmp.eq.s32.totalorder %s27, 0
      %p106 = por %p104, %p105
      %p107 = scmp.ne.s32.totalorder %s95, %s96
      %p108 = scmp.eq.s32.totalorder %s28, 1
      %p109 = por %p107, %p108
      %p111 = scmp.ne.s32.totalorder %s96, %s110
      %p112 = scmp.eq.s32.totalorder %s28, 0
      %p113 = por %p111, %p112
      %s115 = sadd.s32 %s114, 1
      %p118 = scmp.eq.s32.totalorder %s22, 1
      %p119 = scmp.ne.s32.totalorder %s114, %s116
      %p120 = scmp.eq.s32.totalorder %s22, 0
      %p121 = por %p119, %p120
      %p122 = scmp.ne.s32.totalorder %s114, %s116
      %p123 = scmp.eq.s32.totalorder %s27, 1
      %p124 = por %p122, %p123
      %p125 = scmp.ne.s32.totalorder %s116, %s117
      %p126 = scmp.eq.s32.totalorder %s27, 0
      %p127 = por %p125, %p126
      %p128 = scmp.ne.s32.totalorder %s116, %s117
      %p129 = scmp.eq.s32.totalorder %s28, 1
      %p130 = por %p128, %p129
      %p132 = scmp.ne.s32.totalorder %s117, %s131
      %p133 = scmp.eq.s32.totalorder %s28, 0
      %p134 = por %p132, %p133
      %s135 = ssub.s32 %s22, %s29
      %p136 = scmp.eq.s32.totalorder %s135, 0
      %s138 = sadd.s32 %s137, 1
      %s139 = scalar_select %p136, %s137, %s138
      %p142 = pneg %p136
      %p143 = scmp.eq.s32.totalorder %s22, 1
      %p144 = por %p142, %p143
      %p145 = scmp.ne.s32.totalorder %s137, %s140
      %p146 = scmp.eq.s32.totalorder %s22, 0
      %p147 = por %p145, %p146
      %p148 = scmp.ne.s32.totalorder %s137, %s140
      %p149 = scmp.eq.s32.totalorder %s27, 1
      %p150 = por %p148, %p149
      %p151 = scmp.ne.s32.totalorder %s140, %s141
      %p152 = scmp.eq.s32.totalorder %s27, 0
      %p153 = por %p151, %p152
      %p154 = scmp.ne.s32.totalorder %s140, %s141
      %p155 = scmp.eq.s32.totalorder %s28, 1
      %p156 = por %p154, %p155
      %p158 = scmp.ne.s32.totalorder %s141, %s157
      %p159 = scmp.eq.s32.totalorder %s28, 0
      %p160 = por %p158, %p159
      %s161 = ssub.s32 %s22, %s29
      %p162 = scmp.eq.s32.totalorder %s161, 0
      %s164 = sadd.s32 %s163, 1
      %s165 = scalar_select %p162, %s163, %s164
      %p168 = pneg %p162
      %p169 = scmp.eq.s32.totalorder %s22, 1
      %p170 = por %p168, %p169
      %p171 = scmp.ne.s32.totalorder %s163, %s166
      %p172 = scmp.eq.s32.totalorder %s22, 0
      %p173 = por %p171, %p172
      %p174 = scmp.ne.s32.totalorder %s163, %s166
      %p175 = scmp.eq.s32.totalorder %s27, 1
      %p176 = por %p174, %p175
      %p177 = scmp.ne.s32.totalorder %s166, %s167
      %p178 = scmp.eq.s32.totalorder %s27, 0
      %p179 = por %p177, %p178
      %p180 = scmp.ne.s32.totalorder %s166, %s167
      %p181 = scmp.eq.s32.totalorder %s28, 1
      %p182 = por %p180, %p181
      %p184 = scmp.ne.s32.totalorder %s167, %s183
      %p185 = scmp.eq.s32.totalorder %s28, 0
      %p186 = por %p184, %p185
      %s187 = ssub.s32 %s22, %s29
      %p188 = scmp.eq.s32.totalorder %s187, 0
      %s190 = sadd.s32 %s189, 1
      %s191 = scalar_select %p188, %s189, %s190
      %p194 = pneg %p188
      %p195 = scmp.eq.s32.totalorder %s22, 1
      %p196 = por %p194, %p195
      %p197 = scmp.ne.s32.totalorder %s189, %s192
      %p198 = scmp.eq.s32.totalorder %s22, 0
      %p199 = por %p197, %p198
      %p200 = scmp.ne.s32.totalorder %s189, %s192
      %p201 = scmp.eq.s32.totalorder %s27, 1
      %p202 = por %p200, %p201
      %p203 = scmp.ne.s32.totalorder %s192, %s193
      %p204 = scmp.eq.s32.totalorder %s27, 0
      %p205 = por %p203, %p204
      %p206 = scmp.ne.s32.totalorder %s192, %s193
      %p207 = scmp.eq.s32.totalorder %s28, 1
      %p208 = por %p206, %p207
      %p210 = scmp.ne.s32.totalorder %s193, %s209
      %p211 = scmp.eq.s32.totalorder %s28, 0
      %p212 = por %p210, %p211
      %p213 = scmp.le.s32.totalorder 1, %s22
      %p214 = scmp.lt.s32.totalorder %s22, 3
      %p215 = pnand %p213, %p214
      %p216 = pneg %p215
      // Predicated region
      $region9: #{tpu_custom_call.1} parent=5 // pred_check
        _
      $region10: #{tpu_custom_call.1} parent=5 // pred_check_branch
        %218 = sbr.rel (%p215) target = $region12
      $region11: #{tpu_custom_call.1} parent=5 // pred_region
        %s219 = ssub.s32 %s22, 1
        // Predicated region
        $region13: #{tpu_custom_call.1} parent=11 // pred_check
          %p220 = pneg %p43
        $region14: #{tpu_custom_call.1} parent=11 // pred_check_branch
          %222 = sbr.rel (%p220) target = $region16
        $region15: #{tpu_custom_call.1} parent=11 // pred_region
          %s224 = ssub.s32 32, 32
          %225 = vsyncadd [#allocation3], %s224
          %s227 = sshll.u32 [#allocation2], 4
          %s228 = int_to_ptr.vmem [resolvable:$true] %s227
          %230 = dma.hbm_to_vmem [thread:$0]  %s0, 32, %s228, [#allocation3]
        $region16: #{tpu_custom_call.1} parent=11 // pred_fallthru
          _
        // Predicated region
        $region17: #{tpu_custom_call.1} parent=11 // pred_check
          %p231 = pneg %p64
        $region18: #{tpu_custom_call.1} parent=11 // pred_check_branch
          %233 = sbr.rel (%p231) target = $region20
        $region19: #{tpu_custom_call.1} parent=11 // pred_region
          %s235 = ssub.s32 512, 512
          %236 = vsyncadd [#allocation6], %s235
          %s237 = sshll.u32 [#allocation5], 4
          %s238 = int_to_ptr.vmem [resolvable:$true] %s237
          %243 = dma.hbm_to_vmem [thread:$0]  %s1, 512, %s238, [#allocation6], 128, 128, 8
        $region20: #{tpu_custom_call.1} parent=11 // pred_fallthru
          _
        // Predicated region
        $region21: #{tpu_custom_call.1} parent=11 // pred_check
          %p244 = pneg %p85
        $region22: #{tpu_custom_call.1} parent=11 // pred_check_branch
          %246 = sbr.rel (%p244) target = $region24
        $region23: #{tpu_custom_call.1} parent=11 // pred_region
          %s248 = ssub.s32 16, 16
          %249 = vsyncadd [#allocation6], %s248
          %s251 = sshll.u32 [#allocation7], 4
          %s252 = int_to_ptr.vmem [resolvable:$true] %s251
          %254 = dma.hbm_to_vmem [thread:$0]  %s2, 16, %s252, [#allocation6]
        $region24: #{tpu_custom_call.1} parent=11 // pred_fallthru
          _
        // Predicated region
        $region25: #{tpu_custom_call.1} parent=11 // pred_check
          %p255 = pneg %p106
        $region26: #{tpu_custom_call.1} parent=11 // pred_check_branch
          %257 = sbr.rel (%p255) target = $region28
        $region27: #{tpu_custom_call.1} parent=11 // pred_region
          %s259 = ssub.s32 2048, 2048
          %260 = vsyncadd [#allocation9], %s259
          %s261 = sshll.u32 [#allocation8], 4
          %s262 = int_to_ptr.vmem [resolvable:$true] %s261
          %267 = dma.hbm_to_vmem [thread:$0]  %s3, 2048, %s262, [#allocation9], 128, 128, 8
        $region28: #{tpu_custom_call.1} parent=11 // pred_fallthru
          _
        // Predicated region
        $region29: #{tpu_custom_call.1} parent=11 // pred_check
          %p268 = pneg %p127
        $region30: #{tpu_custom_call.1} parent=11 // pred_check_branch
          %270 = sbr.rel (%p268) target = $region32
        $region31: #{tpu_custom_call.1} parent=11 // pred_region
          %s272 = ssub.s32 32, 32
          %273 = vsyncadd [#allocation9], %s272
          %s274 = sshll.u32 [#allocation10], 4
          %s275 = int_to_ptr.vmem [resolvable:$true] %s274
          %280 = dma.hbm_to_vmem [thread:$0]  %s4, 32, %s275, [#allocation9], 16, 16, 1
        $region32: #{tpu_custom_call.1} parent=11 // pred_fallthru
          _
      $region12: #{tpu_custom_call.1} parent=5 // pred_fallthru
        _
      %p281 = scmp.lt.s32.totalorder %s22, 2
      // Predicated region
      $region33: #{tpu_custom_call.1} parent=5 // pred_check
        %p282 = pneg %p281
      $region34: #{tpu_custom_call.1} parent=5 // pred_check_branch
        %284 = sbr.rel (%p282) target = $region36
      $region35: #{tpu_custom_call.1} parent=5 // pred_region
        // Predicated region
        $region37: #{tpu_custom_call.1} parent=35 // pred_check
          %p285 = pneg %p147
        $region38: #{tpu_custom_call.1} parent=35 // pred_check_branch
          %287 = sbr.rel (%p285) target = $region40
        $region39: #{tpu_custom_call.1} parent=35 // pred_region
          %s288 = sand.u32 %s22, 1
          %s289 = scalar_lea.sflag [#allocation12], %s288
          %s290 = sand.u32 %s137, 1
          %s291 = smul.addr %s290, 4096
          %s292 = scalar_lea.vmem [#allocation11], %s291
          %s293 = smul.u32 128, %s22
          %s295 = ssub.s32 65536, 65536
          %296 = vsyncadd %s289, %s295
          %s297 = smul.addr %s293, 64
          %s298 = scalar_lea.hbm %s5, %s297
          %s299 = sshll.u32 %s292, 4
          %s300 = int_to_ptr.vmem [resolvable:$true] %s299
          %305 = dma.hbm_to_vmem [thread:$0]  %s298, 65536, %s300, %s289, 16384, 8192, 512
        $region40: #{tpu_custom_call.1} parent=35 // pred_fallthru
          _
        // Predicated region
        $region41: #{tpu_custom_call.1} parent=35 // pred_check
          %p306 = pneg %p173
        $region42: #{tpu_custom_call.1} parent=35 // pred_check_branch
          %308 = sbr.rel (%p306) target = $region44
        $region43: #{tpu_custom_call.1} parent=35 // pred_region
          %s309 = sand.u32 %s22, 1
          %s310 = scalar_lea.sflag [#allocation12], %s309
          %s311 = sand.u32 %s163, 1
          %s312 = smul.addr %s311, 128
          %s313 = scalar_lea.vmem [#allocation13], %s312
          %s314 = smul.u32 128, %s22
          %s316 = ssub.s32 2048, 2048
          %317 = vsyncadd %s310, %s316
          %s318 = smul.addr %s314, 16
          %s319 = scalar_lea.hbm %s6, %s318
          %s321 = sshll.u32 %s313, 4
          %s322 = int_to_ptr.vmem [resolvable:$true] %s321
          %324 = dma.hbm_to_vmem [thread:$0]  %s319, 2048, %s322, %s310
        $region44: #{tpu_custom_call.1} parent=35 // pred_fallthru
          _
      $region36: #{tpu_custom_call.1} parent=5 // pred_fallthru
        _
      %p325 = scmp.le.s32.totalorder 1, %s22
      %p326 = scmp.lt.s32.totalorder %s22, 3
      %p327 = pnand %p325, %p326
      %p328 = pneg %p327
      // Predicated region
      $region45: #{tpu_custom_call.1} parent=5 // pred_check
        _
      $region46: #{tpu_custom_call.1} parent=5 // pred_check_branch
        %330 = sbr.rel (%p327) target = $region48
      $region47: #{tpu_custom_call.1} parent=5 // pred_region
        %s331 = ssub.s32 %s22, 1
        // Predicated region
        $region49: #{tpu_custom_call.1} parent=47 // pred_check
          %p332 = pneg %p43
        $region50: #{tpu_custom_call.1} parent=47 // pred_check_branch
          %334 = sbr.rel (%p332) target = $region52
        $region51: #{tpu_custom_call.1} parent=47 // pred_region
          %335 = dma.done [#allocation3], 32
        $region52: #{tpu_custom_call.1} parent=47 // pred_fallthru
          _
        // Predicated region
        $region53: #{tpu_custom_call.1} parent=47 // pred_check
          %p336 = pneg %p64
        $region54: #{tpu_custom_call.1} parent=47 // pred_check_branch
          %338 = sbr.rel (%p336) target = $region56
        $region55: #{tpu_custom_call.1} parent=47 // pred_region
          %339 = dma.done [#allocation6], 512
        $region56: #{tpu_custom_call.1} parent=47 // pred_fallthru
          _
        // Predicated region
        $region57: #{tpu_custom_call.1} parent=47 // pred_check
          %p340 = pneg %p85
        $region58: #{tpu_custom_call.1} parent=47 // pred_check_branch
          %342 = sbr.rel (%p340) target = $region60
        $region59: #{tpu_custom_call.1} parent=47 // pred_region
          %343 = dma.done [#allocation6], 16
        $region60: #{tpu_custom_call.1} parent=47 // pred_fallthru
          _
        // Predicated region
        $region61: #{tpu_custom_call.1} parent=47 // pred_check
          %p344 = pneg %p106
        $region62: #{tpu_custom_call.1} parent=47 // pred_check_branch
          %346 = sbr.rel (%p344) target = $region64
        $region63: #{tpu_custom_call.1} parent=47 // pred_region
          %347 = dma.done [#allocation9], 2048
        $region64: #{tpu_custom_call.1} parent=47 // pred_fallthru
          _
        // Predicated region
        $region65: #{tpu_custom_call.1} parent=47 // pred_check
          %p348 = pneg %p127
        $region66: #{tpu_custom_call.1} parent=47 // pred_check_branch
          %350 = sbr.rel (%p348) target = $region68
        $region67: #{tpu_custom_call.1} parent=47 // pred_region
          %351 = dma.done [#allocation9], 32
        $region68: #{tpu_custom_call.1} parent=47 // pred_fallthru
          _
        %s352 = sand.u32 %s27, 1
        %s353 = scalar_lea.sflag [#allocation12], %s352
        %s354 = sand.u32 %s140, 1
        %s355 = smul.addr %s354, 4096
        %s356 = scalar_lea.vmem [#allocation11], %s355
        // Predicated region
        $region69: #{tpu_custom_call.1} parent=47 // pred_check
          %p357 = pneg %p153
        $region70: #{tpu_custom_call.1} parent=47 // pred_check_branch
          %359 = sbr.rel (%p357) target = $region72
        $region71: #{tpu_custom_call.1} parent=47 // pred_region
          %360 = dma.done %s353, 65536
        $region72: #{tpu_custom_call.1} parent=47 // pred_fallthru
          _
        %s361 = sand.u32 %s27, 1
        %s362 = scalar_lea.sflag [#allocation12], %s361
        %s363 = sand.u32 %s166, 1
        %s364 = smul.addr %s363, 128
        %s365 = scalar_lea.vmem [#allocation13], %s364
        // Predicated region
        $region73: #{tpu_custom_call.1} parent=47 // pred_check
          %p366 = pneg %p179
        $region74: #{tpu_custom_call.1} parent=47 // pred_check_branch
          %368 = sbr.rel (%p366) target = $region76
        $region75: #{tpu_custom_call.1} parent=47 // pred_region
          %369 = dma.done %s362, 2048
        $region76: #{tpu_custom_call.1} parent=47 // pred_fallthru
          _
        %p370 = pneg %p43
        %p371 = pneg %p40
        %p372 = pneg %p64
        %p373 = pneg %p61
        %p374 = pneg %p85
        %p375 = pneg %p82
        %p376 = pneg %p106
        %p377 = pneg %p103
        %p378 = pneg %p127
        %p379 = pneg %p124
        %s380 = sand.u32 %s27, 1
        %s381 = scalar_lea.sflag [#allocation12], %s380
        %s382 = sand.u32 %s140, 1
        %s383 = smul.addr %s382, 4096
        %s384 = scalar_lea.vmem [#allocation11], %s383
        %p385 = pneg %p153
        %p386 = pneg %p150
        %s387 = sand.u32 %s27, 1
        %s388 = scalar_lea.sflag [#allocation12], %s387
        %s389 = sand.u32 %s166, 1
        %s390 = smul.addr %s389, 128
        %s391 = scalar_lea.vmem [#allocation13], %s390
        %p392 = pneg %p179
        %p393 = pneg %p176
        %p394 = pneg %p205
        %p395 = pneg %p202
        %s396 = sand.u32 %s192, 1
        %s397 = scalar_lea.sflag [#allocation4], %s396
        %s398 = sand.u32 %s192, 1
        %s399 = smul.addr %s398, 256
        %s400 = scalar_lea.vmem [#allocation14], %s399
        %s401 = smul.u32 128, %s27
        %s402 = smul.u32 128, %s27
        %s403 = smul.u32 128, %s27
        %v405 = vld [vmem:[#allocation2] sm:$0x3]
        %v406 = vld [vmem:[#allocation5] sm:$0xff]
        %v407 = vld [vmem:[#allocation5 + $0x8] sm:$0xff]
        %v408 = vld [vmem:[#allocation5 + $0x10] sm:$0xff]
        %v409 = vld [vmem:[#allocation5 + $0x18] sm:$0xff]
        %v410 = vld [vmem:[#allocation7] sm:$0x1]
        %v412 = vlaneseq
        %v413 = vshrl.u32 %v412, 7
        %v414 = vsub.s32 0, %v413
        %v415 = vrot.slane %v410, %v414
        %vm417 = vcmask 261120
        %v419 = vsel %vm417, %v405, 0
        %421 = vmatprep.subr.mxu0 0.0
        %422 = vmatpush1.msra.mxu0 %v406
        %423 = vmatprep.subr.mxu0 0.0
        %424 = vmatpush1.msra.mxu0 %v407
        %425 = vmatprep.subr.mxu0 0.0
        %426 = vmatpush1.msra.mxu0 %v408
        %427 = vmatprep.subr.mxu0 0.0
        %428 = vmatpush1.msra.mxu0 %v409
        %429 = vmatprep.subr.mxu0 0.0
        %430 = vmatpush1.msra.mxu0 0.0
        %431 = vmatprep.subr.mxu0 0.0
        %432 = vmatpush1.msra.mxu0 0.0
        %433 = vmatprep.subr.mxu0 0.0
        %434 = vmatpush1.msra.mxu0 0.0
        %435 = vmatprep.subr.mxu0 0.0
        %436 = vmatpush1.msra.mxu0 0.0
        %437 = vmatprep.subr.mxu0 0.0
        %438 = vmatpush1.msra.mxu0 0.0
        %439 = vmatprep.subr.mxu0 0.0
        %440 = vmatpush1.msra.mxu0 0.0
        %441 = vmatprep.subr.mxu0 0.0
        %442 = vmatpush1.msra.mxu0 0.0
        %443 = vmatprep.subr.mxu0 0.0
        %444 = vmatpush1.msra.mxu0 0.0
        %445 = vmatprep.subr.mxu0 0.0
        %446 = vmatpush1.msra.mxu0 0.0
        %447 = vmatprep.subr.mxu0 0.0
        %448 = vmatpush1.msra.mxu0 0.0
        %449 = vmatprep.subr.mxu0 0.0
        %450 = vmatpush1.msra.mxu0 0.0
        %451 = vmatprep.subr.mxu0 0.0
        %452 = vmatpush1.msra.mxu0 0.0
        %453 = vmatprep.subr.mxu0 0.0
        %454 = vmatpush1.msra.mxu0 0.0
        %455 = vmatprep.subr.mxu0 0.0
        %456 = vmatpush1.msra.mxu0 0.0
        %457 = vmatprep.subr.mxu0 0.0
        %458 = vmatpush1.msra.mxu0 0.0
        %459 = vmatprep.subr.mxu0 0.0
        %460 = vmatpush1.msra.mxu0 0.0
        %461 = vmatprep.subr.mxu0 0.0
        %462 = vmatpush1.msra.mxu0 0.0
        %463 = vmatprep.subr.mxu0 0.0
        %464 = vmatpush1.msra.mxu0 0.0
        %465 = vmatprep.subr.mxu0 0.0
        %466 = vmatpush1.msra.mxu0 0.0
        %467 = vmatprep.subr.mxu0 0.0
        %468 = vmatpush1.msra.mxu0 0.0
        %469 = vmatprep.subr.mxu0 0.0
        %470 = vmatpush1.msra.mxu0 0.0
        %471 = vmatprep.subr.mxu0 0.0
        %472 = vmatpush1.msra.mxu0 0.0
        %473 = vmatprep.subr.mxu0 0.0
        %474 = vmatpush1.msra.mxu0 0.0
        %475 = vmatprep.subr.mxu0 0.0
        %476 = vmatpush1.msra.mxu0 0.0
        %477 = vmatprep.subr.mxu0 0.0
        %478 = vmatpush1.msra.mxu0 0.0
        %479 = vmatprep.subr.mxu0 0.0
        %480 = vmatpush1.msra.mxu0 0.0
        %481 = vmatprep.subr.mxu0 0.0
        %482 = vmatpush1.msra.mxu0 0.0
        %483 = vmatprep.subr.mxu0 0.0
        %484 = vmatpush1.msra.mxu0 0.0
        %485 = vmatprep.mubr.f32.mxu0 0.0
        %486 = vmatmul.mubr.f32.gmra.mrb[0].mxu0 %v419
        %v487 = vpop.f32.mrb[0].mxu0
        %v488 = vadd.f32 %v415, %v487
        %v489 = vpop.f32.mrb[0].mxu0
        %490 = vdwg.mxu0
        %v491 = vmax.f32 %v488, 0.0
        %v492 = vld [vmem:[#allocation8] sm:$0xff]
        %v493 = vld [vmem:[#allocation8 + $0x8] sm:$0xff]
        %v494 = vld [vmem:[#allocation8 + $0x10] sm:$0xff]
        %v495 = vld [vmem:[#allocation8 + $0x18] sm:$0xff]
        %v496 = vld [vmem:[#allocation8 + $0x20] sm:$0xff]
        %v497 = vld [vmem:[#allocation8 + $0x28] sm:$0xff]
        %v498 = vld [vmem:[#allocation8 + $0x30] sm:$0xff]
        %v499 = vld [vmem:[#allocation8 + $0x38] sm:$0xff]
        %v500 = vld [vmem:[#allocation10] sm:$0x1]
        %v502 = vlaneseq
        %v503 = vshrl.u32 %v502, 7
        %v504 = vsub.s32 0, %v503
        %v505 = vrot.slane %v500, %v504
        %vm507 = vcmask 523264
        %v509 = vsel %vm507, %v491, 0
        %511 = vmatprep.subr.mxu0 0.0
        %512 = vmatpush1.msra.mxu0 %v492
        %513 = vmatprep.subr.mxu0 0.0
        %514 = vmatpush1.msra.mxu0 %v493
        %515 = vmatprep.subr.mxu0 0.0
        %516 = vmatpush1.msra.mxu0 %v494
        %517 = vmatprep.subr.mxu0 0.0
        %518 = vmatpush1.msra.mxu0 %v495
        %519 = vmatprep.subr.mxu0 0.0
        %520 = vmatpush1.msra.mxu0 %v496
        %521 = vmatprep.subr.mxu0 0.0
        %522 = vmatpush1.msra.mxu0 %v497
        %523 = vmatprep.subr.mxu0 0.0
        %524 = vmatpush1.msra.mxu0 %v498
        %525 = vmatprep.subr.mxu0 0.0
        %526 = vmatpush1.msra.mxu0 %v499
        %527 = vmatprep.subr.mxu0 0.0
        %528 = vmatpush1.msra.mxu0 0.0
        %529 = vmatprep.subr.mxu0 0.0
        %530 = vmatpush1.msra.mxu0 0.0
        %531 = vmatprep.subr.mxu0 0.0
        %532 = vmatpush1.msra.mxu0 0.0
        %533 = vmatprep.subr.mxu0 0.0
        %534 = vmatpush1.msra.mxu0 0.0
        %535 = vmatprep.subr.mxu0 0.0
        %536 = vmatpush1.msra.mxu0 0.0
        %537 = vmatprep.subr.mxu0 0.0
        %538 = vmatpush1.msra.mxu0 0.0
        %539 = vmatprep.subr.mxu0 0.0
        %540 = vmatpush1.msra.mxu0 0.0
        %541 = vmatprep.subr.mxu0 0.0
        %542 = vmatpush1.msra.mxu0 0.0
        %543 = vmatprep.subr.mxu0 0.0
        %544 = vmatpush1.msra.mxu0 0.0
        %545 = vmatprep.subr.mxu0 0.0
        %546 = vmatpush1.msra.mxu0 0.0
        %547 = vmatprep.subr.mxu0 0.0
        %548 = vmatpush1.msra.mxu0 0.0
        %549 = vmatprep.subr.mxu0 0.0
        %550 = vmatpush1.msra.mxu0 0.0
        %551 = vmatprep.subr.mxu0 0.0
        %552 = vmatpush1.msra.mxu0 0.0
        %553 = vmatprep.subr.mxu0 0.0
        %554 = vmatpush1.msra.mxu0 0.0
        %555 = vmatprep.subr.mxu0 0.0
        %556 = vmatpush1.msra.mxu0 0.0
        %557 = vmatprep.subr.mxu0 0.0
        %558 = vmatpush1.msra.mxu0 0.0
        %559 = vmatprep.subr.mxu0 0.0
        %560 = vmatpush1.msra.mxu0 0.0
        %561 = vmatprep.subr.mxu0 0.0
        %562 = vmatpush1.msra.mxu0 0.0
        %563 = vmatprep.subr.mxu0 0.0
        %564 = vmatpush1.msra.mxu0 0.0
        %565 = vmatprep.subr.mxu0 0.0
        %566 = vmatpush1.msra.mxu0 0.0
        %567 = vmatprep.subr.mxu0 0.0
        %568 = vmatpush1.msra.mxu0 0.0
        %569 = vmatprep.subr.mxu0 0.0
        %570 = vmatpush1.msra.mxu0 0.0
        %571 = vmatprep.subr.mxu0 0.0
        %572 = vmatpush1.msra.mxu0 0.0
        %573 = vmatprep.subr.mxu0 0.0
        %574 = vmatpush1.msra.mxu0 0.0
        %575 = vmatprep.mubr.f32.mxu0 0.0
        %576 = vmatmul.mubr.f32.gmra.mrb[0].mxu0 %v509
        %v577 = vpop.f32.mrb[0].mxu0
        %v578 = vadd.f32 %v505, %v577
        %v579 = vpop.f32.mrb[0].mxu0
        %580 = vdwg.mxu0
        %v581 = vmax.f32 %v578, 0.0
        %s582 = scalar_lea.vmem [#allocation8], 64
        %v583 = vld [vmem:[%s582] sm:$0xff]
        %v584 = vld [vmem:[%s582 + $0x8] sm:$0xff]
        %v585 = vld [vmem:[%s582 + $0x10] sm:$0xff]
        %v586 = vld [vmem:[%s582 + $0x18] sm:$0xff]
        %v587 = vld [vmem:[%s582 + $0x20] sm:$0xff]
        %v588 = vld [vmem:[%s582 + $0x28] sm:$0xff]
        %v589 = vld [vmem:[%s582 + $0x30] sm:$0xff]
        %v590 = vld [vmem:[%s582 + $0x38] sm:$0xff]
        %s591 = scalar_lea.vmem [#allocation10], 1
        %v592 = vld [vmem:[%s591] sm:$0x1]
        %v594 = vlaneseq
        %v595 = vshrl.u32 %v594, 7
        %v596 = vsub.s32 0, %v595
        %v597 = vrot.slane %v592, %v596
        %v600 = vsel %vm507, %v581, 0
        %602 = vmatprep.subr.mxu0 0.0
        %603 = vmatpush1.msra.mxu0 %v583
        %604 = vmatprep.subr.mxu0 0.0
        %605 = vmatpush1.msra.mxu0 %v584
        %606 = vmatprep.subr.mxu0 0.0
        %607 = vmatpush1.msra.mxu0 %v585
        %608 = vmatprep.subr.mxu0 0.0
        %609 = vmatpush1.msra.mxu0 %v586
        %610 = vmatprep.subr.mxu0 0.0
        %611 = vmatpush1.msra.mxu0 %v587
        %612 = vmatprep.subr.mxu0 0.0
        %613 = vmatpush1.msra.mxu0 %v588
        %614 = vmatprep.subr.mxu0 0.0
        %615 = vmatpush1.msra.mxu0 %v589
        %616 = vmatprep.subr.mxu0 0.0
        %617 = vmatpush1.msra.mxu0 %v590
        %618 = vmatprep.subr.mxu0 0.0
        %619 = vmatpush1.msra.mxu0 0.0
        %620 = vmatprep.subr.mxu0 0.0
        %621 = vmatpush1.msra.mxu0 0.0
        %622 = vmatprep.subr.mxu0 0.0
        %623 = vmatpush1.msra.mxu0 0.0
        %624 = vmatprep.subr.mxu0 0.0
        %625 = vmatpush1.msra.mxu0 0.0
        %626 = vmatprep.subr.mxu0 0.0
        %627 = vmatpush1.msra.mxu0 0.0
        %628 = vmatprep.subr.mxu0 0.0
        %629 = vmatpush1.msra.mxu0 0.0
        %630 = vmatprep.subr.mxu0 0.0
        %631 = vmatpush1.msra.mxu0 0.0
        %632 = vmatprep.subr.mxu0 0.0
        %633 = vmatpush1.msra.mxu0 0.0
        %634 = vmatprep.subr.mxu0 0.0
        %635 = vmatpush1.msra.mxu0 0.0
        %636 = vmatprep.subr.mxu0 0.0
        %637 = vmatpush1.msra.mxu0 0.0
        %638 = vmatprep.subr.mxu0 0.0
        %639 = vmatpush1.msra.mxu0 0.0
        %640 = vmatprep.subr.mxu0 0.0
        %641 = vmatpush1.msra.mxu0 0.0
        %642 = vmatprep.subr.mxu0 0.0
        %643 = vmatpush1.msra.mxu0 0.0
        %644 = vmatprep.subr.mxu0 0.0
        %645 = vmatpush1.msra.mxu0 0.0
        %646 = vmatprep.subr.mxu0 0.0
        %647 = vmatpush1.msra.mxu0 0.0
        %648 = vmatprep.subr.mxu0 0.0
        %649 = vmatpush1.msra.mxu0 0.0
        %650 = vmatprep.subr.mxu0 0.0
        %651 = vmatpush1.msra.mxu0 0.0
        %652 = vmatprep.subr.mxu0 0.0
        %653 = vmatpush1.msra.mxu0 0.0
        %654 = vmatprep.subr.mxu0 0.0
        %655 = vmatpush1.msra.mxu0 0.0
        %656 = vmatprep.subr.mxu0 0.0
        %657 = vmatpush1.msra.mxu0 0.0
        %658 = vmatprep.subr.mxu0 0.0
        %659 = vmatpush1.msra.mxu0 0.0
        %660 = vmatprep.subr.mxu0 0.0
        %661 = vmatpush1.msra.mxu0 0.0
        %662 = vmatprep.subr.mxu0 0.0
        %663 = vmatpush1.msra.mxu0 0.0
        %664 = vmatprep.subr.mxu0 0.0
        %665 = vmatpush1.msra.mxu0 0.0
        %666 = vmatprep.mubr.f32.mxu0 0.0
        %667 = vmatmul.mubr.f32.gmra.mrb[0].mxu0 %v600
        %v668 = vpop.f32.mrb[0].mxu0
        %v669 = vadd.f32 %v597, %v668
        %v670 = vpop.f32.mrb[0].mxu0
        %671 = vdwg.mxu0
        %v672 = vpack.c.bf16 %v669, %v669
        %v673 = vld [vmem:[%s356] sm:$0xff]
        %v674 = vld [vmem:[%s356 + $0x8] sm:$0xff]
        %v675 = vld [vmem:[%s356 + $0x10] sm:$0xff]
        %v676 = vld [vmem:[%s356 + $0x18] sm:$0xff]
        %v677 = vld [vmem:[%s356 + $0x20] sm:$0xff]
        %v678 = vld [vmem:[%s356 + $0x28] sm:$0xff]
        %v679 = vld [vmem:[%s356 + $0x30] sm:$0xff]
        %v680 = vld [vmem:[%s356 + $0x38] sm:$0xff]
        %v681 = vld [vmem:[%s356 + $0x40] sm:$0xff]
        %v682 = vld [vmem:[%s356 + $0x48] sm:$0xff]
        %v683 = vld [vmem:[%s356 + $0x50] sm:$0xff]
        %v684 = vld [vmem:[%s356 + $0x58] sm:$0xff]
        %v685 = vld [vmem:[%s356 + $0x60] sm:$0xff]
        %v686 = vld [vmem:[%s356 + $0x68] sm:$0xff]
        %v687 = vld [vmem:[%s356 + $0x70] sm:$0xff]
        %v688 = vld [vmem:[%s356 + $0x78] sm:$0xff]
        %v689 = vld [vmem:[%s356 + $0x80] sm:$0xff]
        %v690 = vld [vmem:[%s356 + $0x88] sm:$0xff]
        %v691 = vld [vmem:[%s356 + $0x90] sm:$0xff]
        %v692 = vld [vmem:[%s356 + $0x98] sm:$0xff]
        %v693 = vld [vmem:[%s356 + $0xa0] sm:$0xff]
        %v694 = vld [vmem:[%s356 + $0xa8] sm:$0xff]
        %v695 = vld [vmem:[%s356 + $0xb0] sm:$0xff]
        %v696 = vld [vmem:[%s356 + $0xb8] sm:$0xff]
        %v697 = vld [vmem:[%s356 + $0xc0] sm:$0xff]
        %v698 = vld [vmem:[%s356 + $0xc8] sm:$0xff]
        %v699 = vld [vmem:[%s356 + $0xd0] sm:$0xff]
        %v700 = vld [vmem:[%s356 + $0xd8] sm:$0xff]
        %v701 = vld [vmem:[%s356 + $0xe0] sm:$0xff]
        %v702 = vld [vmem:[%s356 + $0xe8] sm:$0xff]
        %v703 = vld [vmem:[%s356 + $0xf0] sm:$0xff]
        %v704 = vld [vmem:[%s356 + $0xf8] sm:$0xff]
        %v705 = vld [vmem:[%s356 + $0x100] sm:$0xff]
        %v706 = vld [vmem:[%s356 + $0x108] sm:$0xff]
        %v707 = vld [vmem:[%s356 + $0x110] sm:$0xff]
        %v708 = vld [vmem:[%s356 + $0x118] sm:$0xff]
        %v709 = vld [vmem:[%s356 + $0x120] sm:$0xff]
        %v710 = vld [vmem:[%s356 + $0x128] sm:$0xff]
        %v711 = vld [vmem:[%s356 + $0x130] sm:$0xff]
        %v712 = vld [vmem:[%s356 + $0x138] sm:$0xff]
        %v713 = vld [vmem:[%s356 + $0x140] sm:$0xff]
        %v714 = vld [vmem:[%s356 + $0x148] sm:$0xff]
        %v715 = vld [vmem:[%s356 + $0x150] sm:$0xff]
        %v716 = vld [vmem:[%s356 + $0x158] sm:$0xff]
        %v717 = vld [vmem:[%s356 + $0x160] sm:$0xff]
        %v718 = vld [vmem:[%s356 + $0x168] sm:$0xff]
        %v719 = vld [vmem:[%s356 + $0x170] sm:$0xff]
        %v720 = vld [vmem:[%s356 + $0x178] sm:$0xff]
        %v721 = vld [vmem:[%s356 + $0x180] sm:$0xff]
        %v722 = vld [vmem:[%s356 + $0x188] sm:$0xff]
        %v723 = vld [vmem:[%s356 + $0x190] sm:$0xff]
        %v724 = vld [vmem:[%s356 + $0x198] sm:$0xff]
        %v725 = vld [vmem:[%s356 + $0x1a0] sm:$0xff]
        %v726 = vld [vmem:[%s356 + $0x1a8] sm:$0xff]
        %v727 = vld [vmem:[%s356 + $0x1b0] sm:$0xff]
        %v728 = vld [vmem:[%s356 + $0x1b8] sm:$0xff]
        %v729 = vld [vmem:[%s356 + $0x1c0] sm:$0xff]
        %v730 = vld [vmem:[%s356 + $0x1c8] sm:$0xff]
        %v731 = vld [vmem:[%s356 + $0x1d0] sm:$0xff]
        %v732 = vld [vmem:[%s356 + $0x1d8] sm:$0xff]
        %v733 = vld [vmem:[%s356 + $0x1e0] sm:$0xff]
        %v734 = vld [vmem:[%s356 + $0x1e8] sm:$0xff]
        %v735 = vld [vmem:[%s356 + $0x1f0] sm:$0xff]
        %v736 = vld [vmem:[%s356 + $0x1f8] sm:$0xff]
        %v737 = vld [vmem:[%s356 + $0x200] sm:$0xff]
        %v738 = vld [vmem:[%s356 + $0x208] sm:$0xff]
        %v739 = vld [vmem:[%s356 + $0x210] sm:$0xff]
        %v740 = vld [vmem:[%s356 + $0x218] sm:$0xff]
        %v741 = vld [vmem:[%s356 + $0x220] sm:$0xff]
        %v742 = vld [vmem:[%s356 + $0x228] sm:$0xff]
        %v743 = vld [vmem:[%s356 + $0x230] sm:$0xff]
        %v744 = vld [vmem:[%s356 + $0x238] sm:$0xff]
        %v745 = vld [vmem:[%s356 + $0x240] sm:$0xff]
        %v746 = vld [vmem:[%s356 + $0x248] sm:$0xff]
        %v747 = vld [vmem:[%s356 + $0x250] sm:$0xff]
        %v748 = vld [vmem:[%s356 + $0x258] sm:$0xff]
        %v749 = vld [vmem:[%s356 + $0x260] sm:$0xff]
        %v750 = vld [vmem:[%s356 + $0x268] sm:$0xff]
        %v751 = vld [vmem:[%s356 + $0x270] sm:$0xff]
        %v752 = vld [vmem:[%s356 + $0x278] sm:$0xff]
        %v753 = vld [vmem:[%s356 + $0x280] sm:$0xff]
        %v754 = vld [vmem:[%s356 + $0x288] sm:$0xff]
        %v755 = vld [vmem:[%s356 + $0x290] sm:$0xff]
        %v756 = vld [vmem:[%s356 + $0x298] sm:$0xff]
        %v757 = vld [vmem:[%s356 + $0x2a0] sm:$0xff]
        %v758 = vld [vmem:[%s356 + $0x2a8] sm:$0xff]
        %v759 = vld [vmem:[%s356 + $0x2b0] sm:$0xff]
        %v760 = vld [vmem:[%s356 + $0x2b8] sm:$0xff]
        %v761 = vld [vmem:[%s356 + $0x2c0] sm:$0xff]
        %v762 = vld [vmem:[%s356 + $0x2c8] sm:$0xff]
        %v763 = vld [vmem:[%s356 + $0x2d0] sm:$0xff]
        %v764 = vld [vmem:[%s356 + $0x2d8] sm:$0xff]
        %v765 = vld [vmem:[%s356 + $0x2e0] sm:$0xff]
        %v766 = vld [vmem:[%s356 + $0x2e8] sm:$0xff]
        %v767 = vld [vmem:[%s356 + $0x2f0] sm:$0xff]
        %v768 = vld [vmem:[%s356 + $0x2f8] sm:$0xff]
        %v769 = vld [vmem:[%s356 + $0x300] sm:$0xff]
        %v770 = vld [vmem:[%s356 + $0x308] sm:$0xff]
        %v771 = vld [vmem:[%s356 + $0x310] sm:$0xff]
        %v772 = vld [vmem:[%s356 + $0x318] sm:$0xff]
        %v773 = vld [vmem:[%s356 + $0x320] sm:$0xff]
        %v774 = vld [vmem:[%s356 + $0x328] sm:$0xff]
        %v775 = vld [vmem:[%s356 + $0x330] sm:$0xff]
        %v776 = vld [vmem:[%s356 + $0x338] sm:$0xff]
        %v777 = vld [vmem:[%s356 + $0x340] sm:$0xff]
        %v778 = vld [vmem:[%s356 + $0x348] sm:$0xff]
        %v779 = vld [vmem:[%s356 + $0x350] sm:$0xff]
        %v780 = vld [vmem:[%s356 + $0x358] sm:$0xff]
        %v781 = vld [vmem:[%s356 + $0x360] sm:$0xff]
        %v782 = vld [vmem:[%s356 + $0x368] sm:$0xff]
        %v783 = vld [vmem:[%s356 + $0x370] sm:$0xff]
        %v784 = vld [vmem:[%s356 + $0x378] sm:$0xff]
        %v785 = vld [vmem:[%s356 + $0x380] sm:$0xff]
        %v786 = vld [vmem:[%s356 + $0x388] sm:$0xff]
        %v787 = vld [vmem:[%s356 + $0x390] sm:$0xff]
        %v788 = vld [vmem:[%s356 + $0x398] sm:$0xff]
        %v789 = vld [vmem:[%s356 + $0x3a0] sm:$0xff]
        %v790 = vld [vmem:[%s356 + $0x3a8] sm:$0xff]
        %v791 = vld [vmem:[%s356 + $0x3b0] sm:$0xff]
        %v792 = vld [vmem:[%s356 + $0x3b8] sm:$0xff]
        %v793 = vld [vmem:[%s356 + $0x3c0] sm:$0xff]
        %v794 = vld [vmem:[%s356 + $0x3c8] sm:$0xff]
        %v795 = vld [vmem:[%s356 + $0x3d0] sm:$0xff]
        %v796 = vld [vmem:[%s356 + $0x3d8] sm:$0xff]
        %v797 = vld [vmem:[%s356 + $0x3e0] sm:$0xff]
        %v798 = vld [vmem:[%s356 + $0x3e8] sm:$0xff]
        %v799 = vld [vmem:[%s356 + $0x3f0] sm:$0xff]
        %v800 = vld [vmem:[%s356 + $0x3f8] sm:$0xff]
        %v801 = vld [vmem:[%s356 + $0x400] sm:$0xff]
        %v802 = vld [vmem:[%s356 + $0x408] sm:$0xff]
        %v803 = vld [vmem:[%s356 + $0x410] sm:$0xff]
        %v804 = vld [vmem:[%s356 + $0x418] sm:$0xff]
        %v805 = vld [vmem:[%s356 + $0x420] sm:$0xff]
        %v806 = vld [vmem:[%s356 + $0x428] sm:$0xff]
        %v807 = vld [vmem:[%s356 + $0x430] sm:$0xff]
        %v808 = vld [vmem:[%s356 + $0x438] sm:$0xff]
        %v809 = vld [vmem:[%s356 + $0x440] sm:$0xff]
        %v810 = vld [vmem:[%s356 + $0x448] sm:$0xff]
        %v811 = vld [vmem:[%s356 + $0x450] sm:$0xff]
        %v812 = vld [vmem:[%s356 + $0x458] sm:$0xff]
        %v813 = vld [vmem:[%s356 + $0x460] sm:$0xff]
        %v814 = vld [vmem:[%s356 + $0x468] sm:$0xff]
        %v815 = vld [vmem:[%s356 + $0x470] sm:$0xff]
        %v816 = vld [vmem:[%s356 + $0x478] sm:$0xff]
        %v817 = vld [vmem:[%s356 + $0x480] sm:$0xff]
        %v818 = vld [vmem:[%s356 + $0x488] sm:$0xff]
        %v819 = vld [vmem:[%s356 + $0x490] sm:$0xff]
        %v820 = vld [vmem:[%s356 + $0x498] sm:$0xff]
        %v821 = vld [vmem:[%s356 + $0x4a0] sm:$0xff]
        %v822 = vld [vmem:[%s356 + $0x4a8] sm:$0xff]
        %v823 = vld [vmem:[%s356 + $0x4b0] sm:$0xff]
        %v824 = vld [vmem:[%s356 + $0x4b8] sm:$0xff]
        %v825 = vld [vmem:[%s356 + $0x4c0] sm:$0xff]
        %v826 = vld [vmem:[%s356 + $0x4c8] sm:$0xff]
        %v827 = vld [vmem:[%s356 + $0x4d0] sm:$0xff]
        %v828 = vld [vmem:[%s356 + $0x4d8] sm:$0xff]
        %v829 = vld [vmem:[%s356 + $0x4e0] sm:$0xff]
        %v830 = vld [vmem:[%s356 + $0x4e8] sm:$0xff]
        %v831 = vld [vmem:[%s356 + $0x4f0] sm:$0xff]
        %v832 = vld [vmem:[%s356 + $0x4f8] sm:$0xff]
        %v833 = vld [vmem:[%s356 + $0x500] sm:$0xff]
        %v834 = vld [vmem:[%s356 + $0x508] sm:$0xff]
        %v835 = vld [vmem:[%s356 + $0x510] sm:$0xff]
        %v836 = vld [vmem:[%s356 + $0x518] sm:$0xff]
        %v837 = vld [vmem:[%s356 + $0x520] sm:$0xff]
        %v838 = vld [vmem:[%s356 + $0x528] sm:$0xff]
        %v839 = vld [vmem:[%s356 + $0x530] sm:$0xff]
        %v840 = vld [vmem:[%s356 + $0x538] sm:$0xff]
        %v841 = vld [vmem:[%s356 + $0x540] sm:$0xff]
        %v842 = vld [vmem:[%s356 + $0x548] sm:$0xff]
        %v843 = vld [vmem:[%s356 + $0x550] sm:$0xff]
        %v844 = vld [vmem:[%s356 + $0x558] sm:$0xff]
        %v845 = vld [vmem:[%s356 + $0x560] sm:$0xff]
        %v846 = vld [vmem:[%s356 + $0x568] sm:$0xff]
        %v847 = vld [vmem:[%s356 + $0x570] sm:$0xff]
        %v848 = vld [vmem:[%s356 + $0x578] sm:$0xff]
        %v849 = vld [vmem:[%s356 + $0x580] sm:$0xff]
        %v850 = vld [vmem:[%s356 + $0x588] sm:$0xff]
        %v851 = vld [vmem:[%s356 + $0x590] sm:$0xff]
        %v852 = vld [vmem:[%s356 + $0x598] sm:$0xff]
        %v853 = vld [vmem:[%s356 + $0x5a0] sm:$0xff]
        %v854 = vld [vmem:[%s356 + $0x5a8] sm:$0xff]
        %v855 = vld [vmem:[%s356 + $0x5b0] sm:$0xff]
        %v856 = vld [vmem:[%s356 + $0x5b8] sm:$0xff]
        %v857 = vld [vmem:[%s356 + $0x5c0] sm:$0xff]
        %v858 = vld [vmem:[%s356 + $0x5c8] sm:$0xff]
        %v859 = vld [vmem:[%s356 + $0x5d0] sm:$0xff]
        %v860 = vld [vmem:[%s356 + $0x5d8] sm:$0xff]
        %v861 = vld [vmem:[%s356 + $0x5e0] sm:$0xff]
        %v862 = vld [vmem:[%s356 + $0x5e8] sm:$0xff]
        %v863 = vld [vmem:[%s356 + $0x5f0] sm:$0xff]
        %v864 = vld [vmem:[%s356 + $0x5f8] sm:$0xff]
        %v865 = vld [vmem:[%s356 + $0x600] sm:$0xff]
        %v866 = vld [vmem:[%s356 + $0x608] sm:$0xff]
        %v867 = vld [vmem:[%s356 + $0x610] sm:$0xff]
        %v868 = vld [vmem:[%s356 + $0x618] sm:$0xff]
        %v869 = vld [vmem:[%s356 + $0x620] sm:$0xff]
        %v870 = vld [vmem:[%s356 + $0x628] sm:$0xff]
        %v871 = vld [vmem:[%s356 + $0x630] sm:$0xff]
        %v872 = vld [vmem:[%s356 + $0x638] sm:$0xff]
        %v873 = vld [vmem:[%s356 + $0x640] sm:$0xff]
        %v874 = vld [vmem:[%s356 + $0x648] sm:$0xff]
        %v875 = vld [vmem:[%s356 + $0x650] sm:$0xff]
        %v876 = vld [vmem:[%s356 + $0x658] sm:$0xff]
        %v877 = vld [vmem:[%s356 + $0x660] sm:$0xff]
        %v878 = vld [vmem:[%s356 + $0x668] sm:$0xff]
        %v879 = vld [vmem:[%s356 + $0x670] sm:$0xff]
        %v880 = vld [vmem:[%s356 + $0x678] sm:$0xff]
        %v881 = vld [vmem:[%s356 + $0x680] sm:$0xff]
        %v882 = vld [vmem:[%s356 + $0x688] sm:$0xff]
        %v883 = vld [vmem:[%s356 + $0x690] sm:$0xff]
        %v884 = vld [vmem:[%s356 + $0x698] sm:$0xff]
        %v885 = vld [vmem:[%s356 + $0x6a0] sm:$0xff]
        %v886 = vld [vmem:[%s356 + $0x6a8] sm:$0xff]
        %v887 = vld [vmem:[%s356 + $0x6b0] sm:$0xff]
        %v888 = vld [vmem:[%s356 + $0x6b8] sm:$0xff]
        %v889 = vld [vmem:[%s356 + $0x6c0] sm:$0xff]
        %v890 = vld [vmem:[%s356 + $0x6c8] sm:$0xff]
        %v891 = vld [vmem:[%s356 + $0x6d0] sm:$0xff]
        %v892 = vld [vmem:[%s356 + $0x6d8] sm:$0xff]
        %v893 = vld [vmem:[%s356 + $0x6e0] sm:$0xff]
        %v894 = vld [vmem:[%s356 + $0x6e8] sm:$0xff]
        %v895 = vld [vmem:[%s356 + $0x6f0] sm:$0xff]
        %v896 = vld [vmem:[%s356 + $0x6f8] sm:$0xff]
        %v897 = vld [vmem:[%s356 + $0x700] sm:$0xff]
        %v898 = vld [vmem:[%s356 + $0x708] sm:$0xff]
        %v899 = vld [vmem:[%s356 + $0x710] sm:$0xff]
        %v900 = vld [vmem:[%s356 + $0x718] sm:$0xff]
        %v901 = vld [vmem:[%s356 + $0x720] sm:$0xff]
        %v902 = vld [vmem:[%s356 + $0x728] sm:$0xff]
        %v903 = vld [vmem:[%s356 + $0x730] sm:$0xff]
        %v904 = vld [vmem:[%s356 + $0x738] sm:$0xff]
        %v905 = vld [vmem:[%s356 + $0x740] sm:$0xff]
        %v906 = vld [vmem:[%s356 + $0x748] sm:$0xff]
        %v907 = vld [vmem:[%s356 + $0x750] sm:$0xff]
        %v908 = vld [vmem:[%s356 + $0x758] sm:$0xff]
        %v909 = vld [vmem:[%s356 + $0x760] sm:$0xff]
        %v910 = vld [vmem:[%s356 + $0x768] sm:$0xff]
        %v911 = vld [vmem:[%s356 + $0x770] sm:$0xff]
        %v912 = vld [vmem:[%s356 + $0x778] sm:$0xff]
        %v913 = vld [vmem:[%s356 + $0x780] sm:$0xff]
        %v914 = vld [vmem:[%s356 + $0x788] sm:$0xff]
        %v915 = vld [vmem:[%s356 + $0x790] sm:$0xff]
        %v916 = vld [vmem:[%s356 + $0x798] sm:$0xff]
        %v917 = vld [vmem:[%s356 + $0x7a0] sm:$0xff]
        %v918 = vld [vmem:[%s356 + $0x7a8] sm:$0xff]
        %v919 = vld [vmem:[%s356 + $0x7b0] sm:$0xff]
        %v920 = vld [vmem:[%s356 + $0x7b8] sm:$0xff]
        %v921 = vld [vmem:[%s356 + $0x7c0] sm:$0xff]
        %v922 = vld [vmem:[%s356 + $0x7c8] sm:$0xff]
        %v923 = vld [vmem:[%s356 + $0x7d0] sm:$0xff]
        %v924 = vld [vmem:[%s356 + $0x7d8] sm:$0xff]
        %v925 = vld [vmem:[%s356 + $0x7e0] sm:$0xff]
        %v926 = vld [vmem:[%s356 + $0x7e8] sm:$0xff]
        %v927 = vld [vmem:[%s356 + $0x7f0] sm:$0xff]
        %v928 = vld [vmem:[%s356 + $0x7f8] sm:$0xff]
        %v929 = vld [vmem:[%s356 + $0x800] sm:$0xff]
        %v930 = vld [vmem:[%s356 + $0x808] sm:$0xff]
        %v931 = vld [vmem:[%s356 + $0x810] sm:$0xff]
        %v932 = vld [vmem:[%s356 + $0x818] sm:$0xff]
        %v933 = vld [vmem:[%s356 + $0x820] sm:$0xff]
        %v934 = vld [vmem:[%s356 + $0x828] sm:$0xff]
        %v935 = vld [vmem:[%s356 + $0x830] sm:$0xff]
        %v936 = vld [vmem:[%s356 + $0x838] sm:$0xff]
        %v937 = vld [vmem:[%s356 + $0x840] sm:$0xff]
        %v938 = vld [vmem:[%s356 + $0x848] sm:$0xff]
        %v939 = vld [vmem:[%s356 + $0x850] sm:$0xff]
        %v940 = vld [vmem:[%s356 + $0x858] sm:$0xff]
        %v941 = vld [vmem:[%s356 + $0x860] sm:$0xff]
        %v942 = vld [vmem:[%s356 + $0x868] sm:$0xff]
        %v943 = vld [vmem:[%s356 + $0x870] sm:$0xff]
        %v944 = vld [vmem:[%s356 + $0x878] sm:$0xff]
        %v945 = vld [vmem:[%s356 + $0x880] sm:$0xff]
        %v946 = vld [vmem:[%s356 + $0x888] sm:$0xff]
        %v947 = vld [vmem:[%s356 + $0x890] sm:$0xff]
        %v948 = vld [vmem:[%s356 + $0x898] sm:$0xff]
        %v949 = vld [vmem:[%s356 + $0x8a0] sm:$0xff]
        %v950 = vld [vmem:[%s356 + $0x8a8] sm:$0xff]
        %v951 = vld [vmem:[%s356 + $0x8b0] sm:$0xff]
        %v952 = vld [vmem:[%s356 + $0x8b8] sm:$0xff]
        %v953 = vld [vmem:[%s356 + $0x8c0] sm:$0xff]
        %v954 = vld [vmem:[%s356 + $0x8c8] sm:$0xff]
        %v955 = vld [vmem:[%s356 + $0x8d0] sm:$0xff]
        %v956 = vld [vmem:[%s356 + $0x8d8] sm:$0xff]
        %v957 = vld [vmem:[%s356 + $0x8e0] sm:$0xff]
        %v958 = vld [vmem:[%s356 + $0x8e8] sm:$0xff]
        %v959 = vld [vmem:[%s356 + $0x8f0] sm:$0xff]
        %v960 = vld [vmem:[%s356 + $0x8f8] sm:$0xff]
        %v961 = vld [vmem:[%s356 + $0x900] sm:$0xff]
        %v962 = vld [vmem:[%s356 + $0x908] sm:$0xff]
        %v963 = vld [vmem:[%s356 + $0x910] sm:$0xff]
        %v964 = vld [vmem:[%s356 + $0x918] sm:$0xff]
        %v965 = vld [vmem:[%s356 + $0x920] sm:$0xff]
        %v966 = vld [vmem:[%s356 + $0x928] sm:$0xff]
        %v967 = vld [vmem:[%s356 + $0x930] sm:$0xff]
        %v968 = vld [vmem:[%s356 + $0x938] sm:$0xff]
        %v969 = vld [vmem:[%s356 + $0x940] sm:$0xff]
        %v970 = vld [vmem:[%s356 + $0x948] sm:$0xff]
        %v971 = vld [vmem:[%s356 + $0x950] sm:$0xff]
        %v972 = vld [vmem:[%s356 + $0x958] sm:$0xff]
        %v973 = vld [vmem:[%s356 + $0x960] sm:$0xff]
        %v974 = vld [vmem:[%s356 + $0x968] sm:$0xff]
        %v975 = vld [vmem:[%s356 + $0x970] sm:$0xff]
        %v976 = vld [vmem:[%s356 + $0x978] sm:$0xff]
        %v977 = vld [vmem:[%s356 + $0x980] sm:$0xff]
        %v978 = vld [vmem:[%s356 + $0x988] sm:$0xff]
        %v979 = vld [vmem:[%s356 + $0x990] sm:$0xff]
        %v980 = vld [vmem:[%s356 + $0x998] sm:$0xff]
        %v981 = vld [vmem:[%s356 + $0x9a0] sm:$0xff]
        %v982 = vld [vmem:[%s356 + $0x9a8] sm:$0xff]
        %v983 = vld [vmem:[%s356 + $0x9b0] sm:$0xff]
        %v984 = vld [vmem:[%s356 + $0x9b8] sm:$0xff]
        %v985 = vld [vmem:[%s356 + $0x9c0] sm:$0xff]
        %v986 = vld [vmem:[%s356 + $0x9c8] sm:$0xff]
        %v987 = vld [vmem:[%s356 + $0x9d0] sm:$0xff]
        %v988 = vld [vmem:[%s356 + $0x9d8] sm:$0xff]
        %v989 = vld [vmem:[%s356 + $0x9e0] sm:$0xff]
        %v990 = vld [vmem:[%s356 + $0x9e8] sm:$0xff]
        %v991 = vld [vmem:[%s356 + $0x9f0] sm:$0xff]
        %v992 = vld [vmem:[%s356 + $0x9f8] sm:$0xff]
        %v993 = vld [vmem:[%s356 + $0xa00] sm:$0xff]
        %v994 = vld [vmem:[%s356 + $0xa08] sm:$0xff]
        %v995 = vld [vmem:[%s356 + $0xa10] sm:$0xff]
        %v996 = vld [vmem:[%s356 + $0xa18] sm:$0xff]
        %v997 = vld [vmem:[%s356 + $0xa20] sm:$0xff]
        %v998 = vld [vmem:[%s356 + $0xa28] sm:$0xff]
        %v999 = vld [vmem:[%s356 + $0xa30] sm:$0xff]
        %v1000 = vld [vmem:[%s356 + $0xa38] sm:$0xff]
        %v1001 = vld [vmem:[%s356 + $0xa40] sm:$0xff]
        %v1002 = vld [vmem:[%s356 + $0xa48] sm:$0xff]
        %v1003 = vld [vmem:[%s356 + $0xa50] sm:$0xff]
        %v1004 = vld [vmem:[%s356 + $0xa58] sm:$0xff]
        %v1005 = vld [vmem:[%s356 + $0xa60] sm:$0xff]
        %v1006 = vld [vmem:[%s356 + $0xa68] sm:$0xff]
        %v1007 = vld [vmem:[%s356 + $0xa70] sm:$0xff]
        %v1008 = vld [vmem:[%s356 + $0xa78] sm:$0xff]
        %v1009 = vld [vmem:[%s356 + $0xa80] sm:$0xff]
        %v1010 = vld [vmem:[%s356 + $0xa88] sm:$0xff]
        %v1011 = vld [vmem:[%s356 + $0xa90] sm:$0xff]
        %v1012 = vld [vmem:[%s356 + $0xa98] sm:$0xff]
        %v1013 = vld [vmem:[%s356 + $0xaa0] sm:$0xff]
        %v1014 = vld [vmem:[%s356 + $0xaa8] sm:$0xff]
        %v1015 = vld [vmem:[%s356 + $0xab0] sm:$0xff]
        %v1016 = vld [vmem:[%s356 + $0xab8] sm:$0xff]
        %v1017 = vld [vmem:[%s356 + $0xac0] sm:$0xff]
        %v1018 = vld [vmem:[%s356 + $0xac8] sm:$0xff]
        %v1019 = vld [vmem:[%s356 + $0xad0] sm:$0xff]
        %v1020 = vld [vmem:[%s356 + $0xad8] sm:$0xff]
        %v1021 = vld [vmem:[%s356 + $0xae0] sm:$0xff]
        %v1022 = vld [vmem:[%s356 + $0xae8] sm:$0xff]
        %v1023 = vld [vmem:[%s356 + $0xaf0] sm:$0xff]
        %v1024 = vld [vmem:[%s356 + $0xaf8] sm:$0xff]
        %v1025 = vld [vmem:[%s356 + $0xb00] sm:$0xff]
        %v1026 = vld [vmem:[%s356 + $0xb08] sm:$0xff]
        %v1027 = vld [vmem:[%s356 + $0xb10] sm:$0xff]
        %v1028 = vld [vmem:[%s356 + $0xb18] sm:$0xff]
        %v1029 = vld [vmem:[%s356 + $0xb20] sm:$0xff]
        %v1030 = vld [vmem:[%s356 + $0xb28] sm:$0xff]
        %v1031 = vld [vmem:[%s356 + $0xb30] sm:$0xff]
        %v1032 = vld [vmem:[%s356 + $0xb38] sm:$0xff]
        %v1033 = vld [vmem:[%s356 + $0xb40] sm:$0xff]
        %v1034 = vld [vmem:[%s356 + $0xb48] sm:$0xff]
        %v1035 = vld [vmem:[%s356 + $0xb50] sm:$0xff]
        %v1036 = vld [vmem:[%s356 + $0xb58] sm:$0xff]
        %v1037 = vld [vmem:[%s356 + $0xb60] sm:$0xff]
        %v1038 = vld [vmem:[%s356 + $0xb68] sm:$0xff]
        %v1039 = vld [vmem:[%s356 + $0xb70] sm:$0xff]
        %v1040 = vld [vmem:[%s356 + $0xb78] sm:$0xff]
        %v1041 = vld [vmem:[%s356 + $0xb80] sm:$0xff]
        %v1042 = vld [vmem:[%s356 + $0xb88] sm:$0xff]
        %v1043 = vld [vmem:[%s356 + $0xb90] sm:$0xff]
        %v1044 = vld [vmem:[%s356 + $0xb98] sm:$0xff]
        %v1045 = vld [vmem:[%s356 + $0xba0] sm:$0xff]
        %v1046 = vld [vmem:[%s356 + $0xba8] sm:$0xff]
        %v1047 = vld [vmem:[%s356 + $0xbb0] sm:$0xff]
        %v1048 = vld [vmem:[%s356 + $0xbb8] sm:$0xff]
        %v1049 = vld [vmem:[%s356 + $0xbc0] sm:$0xff]
        %v1050 = vld [vmem:[%s356 + $0xbc8] sm:$0xff]
        %v1051 = vld [vmem:[%s356 + $0xbd0] sm:$0xff]
        %v1052 = vld [vmem:[%s356 + $0xbd8] sm:$0xff]
        %v1053 = vld [vmem:[%s356 + $0xbe0] sm:$0xff]
        %v1054 = vld [vmem:[%s356 + $0xbe8] sm:$0xff]
        %v1055 = vld [vmem:[%s356 + $0xbf0] sm:$0xff]
        %v1056 = vld [vmem:[%s356 + $0xbf8] sm:$0xff]
        %v1057 = vld [vmem:[%s356 + $0xc00] sm:$0xff]
        %v1058 = vld [vmem:[%s356 + $0xc08] sm:$0xff]
        %v1059 = vld [vmem:[%s356 + $0xc10] sm:$0xff]
        %v1060 = vld [vmem:[%s356 + $0xc18] sm:$0xff]
        %v1061 = vld [vmem:[%s356 + $0xc20] sm:$0xff]
        %v1062 = vld [vmem:[%s356 + $0xc28] sm:$0xff]
        %v1063 = vld [vmem:[%s356 + $0xc30] sm:$0xff]
        %v1064 = vld [vmem:[%s356 + $0xc38] sm:$0xff]
        %v1065 = vld [vmem:[%s356 + $0xc40] sm:$0xff]
        %v1066 = vld [vmem:[%s356 + $0xc48] sm:$0xff]
        %v1067 = vld [vmem:[%s356 + $0xc50] sm:$0xff]
        %v1068 = vld [vmem:[%s356 + $0xc58] sm:$0xff]
        %v1069 = vld [vmem:[%s356 + $0xc60] sm:$0xff]
        %v1070 = vld [vmem:[%s356 + $0xc68] sm:$0xff]
        %v1071 = vld [vmem:[%s356 + $0xc70] sm:$0xff]
        %v1072 = vld [vmem:[%s356 + $0xc78] sm:$0xff]
        %v1073 = vld [vmem:[%s356 + $0xc80] sm:$0xff]
        %v1074 = vld [vmem:[%s356 + $0xc88] sm:$0xff]
        %v1075 = vld [vmem:[%s356 + $0xc90] sm:$0xff]
        %v1076 = vld [vmem:[%s356 + $0xc98] sm:$0xff]
        %v1077 = vld [vmem:[%s356 + $0xca0] sm:$0xff]
        %v1078 = vld [vmem:[%s356 + $0xca8] sm:$0xff]
        %v1079 = vld [vmem:[%s356 + $0xcb0] sm:$0xff]
        %v1080 = vld [vmem:[%s356 + $0xcb8] sm:$0xff]
        %v1081 = vld [vmem:[%s356 + $0xcc0] sm:$0xff]
        %v1082 = vld [vmem:[%s356 + $0xcc8] sm:$0xff]
        %v1083 = vld [vmem:[%s356 + $0xcd0] sm:$0xff]
        %v1084 = vld [vmem:[%s356 + $0xcd8] sm:$0xff]
        %v1085 = vld [vmem:[%s356 + $0xce0] sm:$0xff]
        %v1086 = vld [vmem:[%s356 + $0xce8] sm:$0xff]
        %v1087 = vld [vmem:[%s356 + $0xcf0] sm:$0xff]
        %v1088 = vld [vmem:[%s356 + $0xcf8] sm:$0xff]
        %v1089 = vld [vmem:[%s356 + $0xd00] sm:$0xff]
        %v1090 = vld [vmem:[%s356 + $0xd08] sm:$0xff]
        %v1091 = vld [vmem:[%s356 + $0xd10] sm:$0xff]
        %v1092 = vld [vmem:[%s356 + $0xd18] sm:$0xff]
        %v1093 = vld [vmem:[%s356 + $0xd20] sm:$0xff]
        %v1094 = vld [vmem:[%s356 + $0xd28] sm:$0xff]
        %v1095 = vld [vmem:[%s356 + $0xd30] sm:$0xff]
        %v1096 = vld [vmem:[%s356 + $0xd38] sm:$0xff]
        %v1097 = vld [vmem:[%s356 + $0xd40] sm:$0xff]
        %v1098 = vld [vmem:[%s356 + $0xd48] sm:$0xff]
        %v1099 = vld [vmem:[%s356 + $0xd50] sm:$0xff]
        %v1100 = vld [vmem:[%s356 + $0xd58] sm:$0xff]
        %v1101 = vld [vmem:[%s356 + $0xd60] sm:$0xff]
        %v1102 = vld [vmem:[%s356 + $0xd68] sm:$0xff]
        %v1103 = vld [vmem:[%s356 + $0xd70] sm:$0xff]
        %v1104 = vld [vmem:[%s356 + $0xd78] sm:$0xff]
        %v1105 = vld [vmem:[%s356 + $0xd80] sm:$0xff]
        %v1106 = vld [vmem:[%s356 + $0xd88] sm:$0xff]
        %v1107 = vld [vmem:[%s356 + $0xd90] sm:$0xff]
        %v1108 = vld [vmem:[%s356 + $0xd98] sm:$0xff]
        %v1109 = vld [vmem:[%s356 + $0xda0] sm:$0xff]
        %v1110 = vld [vmem:[%s356 + $0xda8] sm:$0xff]
        %v1111 = vld [vmem:[%s356 + $0xdb0] sm:$0xff]
        %v1112 = vld [vmem:[%s356 + $0xdb8] sm:$0xff]
        %v1113 = vld [vmem:[%s356 + $0xdc0] sm:$0xff]
        %v1114 = vld [vmem:[%s356 + $0xdc8] sm:$0xff]
        %v1115 = vld [vmem:[%s356 + $0xdd0] sm:$0xff]
        %v1116 = vld [vmem:[%s356 + $0xdd8] sm:$0xff]
        %v1117 = vld [vmem:[%s356 + $0xde0] sm:$0xff]
        %v1118 = vld [vmem:[%s356 + $0xde8] sm:$0xff]
        %v1119 = vld [vmem:[%s356 + $0xdf0] sm:$0xff]
        %v1120 = vld [vmem:[%s356 + $0xdf8] sm:$0xff]
        %v1121 = vld [vmem:[%s356 + $0xe00] sm:$0xff]
        %v1122 = vld [vmem:[%s356 + $0xe08] sm:$0xff]
        %v1123 = vld [vmem:[%s356 + $0xe10] sm:$0xff]
        %v1124 = vld [vmem:[%s356 + $0xe18] sm:$0xff]
        %v1125 = vld [vmem:[%s356 + $0xe20] sm:$0xff]
        %v1126 = vld [vmem:[%s356 + $0xe28] sm:$0xff]
        %v1127 = vld [vmem:[%s356 + $0xe30] sm:$0xff]
        %v1128 = vld [vmem:[%s356 + $0xe38] sm:$0xff]
        %v1129 = vld [vmem:[%s356 + $0xe40] sm:$0xff]
        %v1130 = vld [vmem:[%s356 + $0xe48] sm:$0xff]
        %v1131 = vld [vmem:[%s356 + $0xe50] sm:$0xff]
        %v1132 = vld [vmem:[%s356 + $0xe58] sm:$0xff]
        %v1133 = vld [vmem:[%s356 + $0xe60] sm:$0xff]
        %v1134 = vld [vmem:[%s356 + $0xe68] sm:$0xff]
        %v1135 = vld [vmem:[%s356 + $0xe70] sm:$0xff]
        %v1136 = vld [vmem:[%s356 + $0xe78] sm:$0xff]
        %v1137 = vld [vmem:[%s356 + $0xe80] sm:$0xff]
        %v1138 = vld [vmem:[%s356 + $0xe88] sm:$0xff]
        %v1139 = vld [vmem:[%s356 + $0xe90] sm:$0xff]
        %v1140 = vld [vmem:[%s356 + $0xe98] sm:$0xff]
        %v1141 = vld [vmem:[%s356 + $0xea0] sm:$0xff]
        %v1142 = vld [vmem:[%s356 + $0xea8] sm:$0xff]
        %v1143 = vld [vmem:[%s356 + $0xeb0] sm:$0xff]
        %v1144 = vld [vmem:[%s356 + $0xeb8] sm:$0xff]
        %v1145 = vld [vmem:[%s356 + $0xec0] sm:$0xff]
        %v1146 = vld [vmem:[%s356 + $0xec8] sm:$0xff]
        %v1147 = vld [vmem:[%s356 + $0xed0] sm:$0xff]
        %v1148 = vld [vmem:[%s356 + $0xed8] sm:$0xff]
        %v1149 = vld [vmem:[%s356 + $0xee0] sm:$0xff]
        %v1150 = vld [vmem:[%s356 + $0xee8] sm:$0xff]
        %v1151 = vld [vmem:[%s356 + $0xef0] sm:$0xff]
        %v1152 = vld [vmem:[%s356 + $0xef8] sm:$0xff]
        %v1153 = vld [vmem:[%s356 + $0xf00] sm:$0xff]
        %v1154 = vld [vmem:[%s356 + $0xf08] sm:$0xff]
        %v1155 = vld [vmem:[%s356 + $0xf10] sm:$0xff]
        %v1156 = vld [vmem:[%s356 + $0xf18] sm:$0xff]
        %v1157 = vld [vmem:[%s356 + $0xf20] sm:$0xff]
        %v1158 = vld [vmem:[%s356 + $0xf28] sm:$0xff]
        %v1159 = vld [vmem:[%s356 + $0xf30] sm:$0xff]
        %v1160 = vld [vmem:[%s356 + $0xf38] sm:$0xff]
        %v1161 = vld [vmem:[%s356 + $0xf40] sm:$0xff]
        %v1162 = vld [vmem:[%s356 + $0xf48] sm:$0xff]
        %v1163 = vld [vmem:[%s356 + $0xf50] sm:$0xff]
        %v1164 = vld [vmem:[%s356 + $0xf58] sm:$0xff]
        %v1165 = vld [vmem:[%s356 + $0xf60] sm:$0xff]
        %v1166 = vld [vmem:[%s356 + $0xf68] sm:$0xff]
        %v1167 = vld [vmem:[%s356 + $0xf70] sm:$0xff]
        %v1168 = vld [vmem:[%s356 + $0xf78] sm:$0xff]
        %v1169 = vld [vmem:[%s356 + $0xf80] sm:$0xff]
        %v1170 = vld [vmem:[%s356 + $0xf88] sm:$0xff]
        %v1171 = vld [vmem:[%s356 + $0xf90] sm:$0xff]
        %v1172 = vld [vmem:[%s356 + $0xf98] sm:$0xff]
        %v1173 = vld [vmem:[%s356 + $0xfa0] sm:$0xff]
        %v1174 = vld [vmem:[%s356 + $0xfa8] sm:$0xff]
        %v1175 = vld [vmem:[%s356 + $0xfb0] sm:$0xff]
        %v1176 = vld [vmem:[%s356 + $0xfb8] sm:$0xff]
        %v1177 = vld [vmem:[%s356 + $0xfc0] sm:$0xff]
        %v1178 = vld [vmem:[%s356 + $0xfc8] sm:$0xff]
        %v1179 = vld [vmem:[%s356 + $0xfd0] sm:$0xff]
        %v1180 = vld [vmem:[%s356 + $0xfd8] sm:$0xff]
        %v1181 = vld [vmem:[%s356 + $0xfe0] sm:$0xff]
        %v1182 = vld [vmem:[%s356 + $0xfe8] sm:$0xff]
        %v1183 = vld [vmem:[%s356 + $0xff0] sm:$0xff]
        %v1184 = vld [vmem:[%s356 + $0xff8] sm:$0xff]
        %v1185 = vld [vmem:[%s365] sm:$0xff]
        %v1186 = vld [vmem:[%s365 + $0x8] sm:$0xff]
        %v1187 = vld [vmem:[%s365 + $0x10] sm:$0xff]
        %v1188 = vld [vmem:[%s365 + $0x18] sm:$0xff]
        %v1189 = vld [vmem:[%s365 + $0x20] sm:$0xff]
        %v1190 = vld [vmem:[%s365 + $0x28] sm:$0xff]
        %v1191 = vld [vmem:[%s365 + $0x30] sm:$0xff]
        %v1192 = vld [vmem:[%s365 + $0x38] sm:$0xff]
        %v1193 = vld [vmem:[%s365 + $0x40] sm:$0xff]
        %v1194 = vld [vmem:[%s365 + $0x48] sm:$0xff]
        %v1195 = vld [vmem:[%s365 + $0x50] sm:$0xff]
        %v1196 = vld [vmem:[%s365 + $0x58] sm:$0xff]
        %v1197 = vld [vmem:[%s365 + $0x60] sm:$0xff]
        %v1198 = vld [vmem:[%s365 + $0x68] sm:$0xff]
        %v1199 = vld [vmem:[%s365 + $0x70] sm:$0xff]
        %v1200 = vld [vmem:[%s365 + $0x78] sm:$0xff]
        %v1217 = vlaneseq
        %v1218 = vshrl.u32 %v1217, 7
        %v1219 = vsub.s32 0, %v1218
        %v1220 = vrot.slane %v1185, %v1219
        %v1221 = vlaneseq
        %v1222 = vshrl.u32 %v1221, 7
        %v1223 = vsub.s32 1, %v1222
        %v1224 = vrot.slane %v1185, %v1223
        %v1225 = vlaneseq
        %v1226 = vshrl.u32 %v1225, 7
        %v1227 = vsub.s32 2, %v1226
        %v1228 = vrot.slane %v1185, %v1227
        %v1229 = vlaneseq
        %v1230 = vshrl.u32 %v1229, 7
        %v1231 = vsub.s32 3, %v1230
        %v1232 = vrot.slane %v1185, %v1231
        %v1233 = vlaneseq
        %v1234 = vshrl.u32 %v1233, 7
        %v1235 = vsub.s32 4, %v1234
        %v1236 = vrot.slane %v1185, %v1235
        %v1237 = vlaneseq
        %v1238 = vshrl.u32 %v1237, 7
        %v1239 = vsub.s32 5, %v1238
        %v1240 = vrot.slane %v1185, %v1239
        %v1241 = vlaneseq
        %v1242 = vshrl.u32 %v1241, 7
        %v1243 = vsub.s32 6, %v1242
        %v1244 = vrot.slane %v1185, %v1243
        %v1245 = vlaneseq
        %v1246 = vshrl.u32 %v1245, 7
        %v1247 = vsub.s32 7, %v1246
        %v1248 = vrot.slane %v1185, %v1247
        %v1249 = vlaneseq
        %v1250 = vshrl.u32 %v1249, 7
        %v1251 = vsub.s32 0, %v1250
        %v1252 = vrot.slane %v1186, %v1251
        %v1253 = vlaneseq
        %v1254 = vshrl.u32 %v1253, 7
        %v1255 = vsub.s32 1, %v1254
        %v1256 = vrot.slane %v1186, %v1255
        %v1257 = vlaneseq
        %v1258 = vshrl.u32 %v1257, 7
        %v1259 = vsub.s32 2, %v1258
        %v1260 = vrot.slane %v1186, %v1259
        %v1261 = vlaneseq
        %v1262 = vshrl.u32 %v1261, 7
        %v1263 = vsub.s32 3, %v1262
        %v1264 = vrot.slane %v1186, %v1263
        %v1265 = vlaneseq
        %v1266 = vshrl.u32 %v1265, 7
        %v1267 = vsub.s32 4, %v1266
        %v1268 = vrot.slane %v1186, %v1267
        %v1269 = vlaneseq
        %v1270 = vshrl.u32 %v1269, 7
        %v1271 = vsub.s32 5, %v1270
        %v1272 = vrot.slane %v1186, %v1271
        %v1273 = vlaneseq
        %v1274 = vshrl.u32 %v1273, 7
        %v1275 = vsub.s32 6, %v1274
        %v1276 = vrot.slane %v1186, %v1275
        %v1277 = vlaneseq
        %v1278 = vshrl.u32 %v1277, 7
        %v1279 = vsub.s32 7, %v1278
        %v1280 = vrot.slane %v1186, %v1279
        %v1281 = vlaneseq
        %v1282 = vshrl.u32 %v1281, 7
        %v1283 = vsub.s32 0, %v1282
        %v1284 = vrot.slane %v1187, %v1283
        %v1285 = vlaneseq
        %v1286 = vshrl.u32 %v1285, 7
        %v1287 = vsub.s32 1, %v1286
        %v1288 = vrot.slane %v1187, %v1287
        %v1289 = vlaneseq
        %v1290 = vshrl.u32 %v1289, 7
        %v1291 = vsub.s32 2, %v1290
        %v1292 = vrot.slane %v1187, %v1291
        %v1293 = vlaneseq
        %v1294 = vshrl.u32 %v1293, 7
        %v1295 = vsub.s32 3, %v1294
        %v1296 = vrot.slane %v1187, %v1295
        %v1297 = vlaneseq
        %v1298 = vshrl.u32 %v1297, 7
        %v1299 = vsub.s32 4, %v1298
        %v1300 = vrot.slane %v1187, %v1299
        %v1301 = vlaneseq
        %v1302 = vshrl.u32 %v1301, 7
        %v1303 = vsub.s32 5, %v1302
        %v1304 = vrot.slane %v1187, %v1303
        %v1305 = vlaneseq
        %v1306 = vshrl.u32 %v1305, 7
        %v1307 = vsub.s32 6, %v1306
        %v1308 = vrot.slane %v1187, %v1307
        %v1309 = vlaneseq
        %v1310 = vshrl.u32 %v1309, 7
        %v1311 = vsub.s32 7, %v1310
        %v1312 = vrot.slane %v1187, %v1311
        %v1313 = vlaneseq
        %v1314 = vshrl.u32 %v1313, 7
        %v1315 = vsub.s32 0, %v1314
        %v1316 = vrot.slane %v1188, %v1315
        %v1317 = vlaneseq
        %v1318 = vshrl.u32 %v1317, 7
        %v1319 = vsub.s32 1, %v1318
        %v1320 = vrot.slane %v1188, %v1319
        %v1321 = vlaneseq
        %v1322 = vshrl.u32 %v1321, 7
        %v1323 = vsub.s32 2, %v1322
        %v1324 = vrot.slane %v1188, %v1323
        %v1325 = vlaneseq
        %v1326 = vshrl.u32 %v1325, 7
        %v1327 = vsub.s32 3, %v1326
        %v1328 = vrot.slane %v1188, %v1327
        %v1329 = vlaneseq
        %v1330 = vshrl.u32 %v1329, 7
        %v1331 = vsub.s32 4, %v1330
        %v1332 = vrot.slane %v1188, %v1331
        %v1333 = vlaneseq
        %v1334 = vshrl.u32 %v1333, 7
        %v1335 = vsub.s32 5, %v1334
        %v1336 = vrot.slane %v1188, %v1335
        %v1337 = vlaneseq
        %v1338 = vshrl.u32 %v1337, 7
        %v1339 = vsub.s32 6, %v1338
        %v1340 = vrot.slane %v1188, %v1339
        %v1341 = vlaneseq
        %v1342 = vshrl.u32 %v1341, 7
        %v1343 = vsub.s32 7, %v1342
        %v1344 = vrot.slane %v1188, %v1343
        %v1345 = vlaneseq
        %v1346 = vshrl.u32 %v1345, 7
        %v1347 = vsub.s32 0, %v1346
        %v1348 = vrot.slane %v1189, %v1347
        %v1349 = vlaneseq
        %v1350 = vshrl.u32 %v1349, 7
        %v1351 = vsub.s32 1, %v1350
        %v1352 = vrot.slane %v1189, %v1351
        %v1353 = vlaneseq
        %v1354 = vshrl.u32 %v1353, 7
        %v1355 = vsub.s32 2, %v1354
        %v1356 = vrot.slane %v1189, %v1355
        %v1357 = vlaneseq
        %v1358 = vshrl.u32 %v1357, 7
        %v1359 = vsub.s32 3, %v1358
        %v1360 = vrot.slane %v1189, %v1359
        %v1361 = vlaneseq
        %v1362 = vshrl.u32 %v1361, 7
        %v1363 = vsub.s32 4, %v1362
        %v1364 = vrot.slane %v1189, %v1363
        %v1365 = vlaneseq
        %v1366 = vshrl.u32 %v1365, 7
        %v1367 = vsub.s32 5, %v1366
        %v1368 = vrot.slane %v1189, %v1367
        %v1369 = vlaneseq
        %v1370 = vshrl.u32 %v1369, 7
        %v1371 = vsub.s32 6, %v1370
        %v1372 = vrot.slane %v1189, %v1371
        %v1373 = vlaneseq
        %v1374 = vshrl.u32 %v1373, 7
        %v1375 = vsub.s32 7, %v1374
        %v1376 = vrot.slane %v1189, %v1375
        %v1377 = vlaneseq
        %v1378 = vshrl.u32 %v1377, 7
        %v1379 = vsub.s32 0, %v1378
        %v1380 = vrot.slane %v1190, %v1379
        %v1381 = vlaneseq
        %v1382 = vshrl.u32 %v1381, 7
        %v1383 = vsub.s32 1, %v1382
        %v1384 = vrot.slane %v1190, %v1383
        %v1385 = vlaneseq
        %v1386 = vshrl.u32 %v1385, 7
        %v1387 = vsub.s32 2, %v1386
        %v1388 = vrot.slane %v1190, %v1387
        %v1389 = vlaneseq
        %v1390 = vshrl.u32 %v1389, 7
        %v1391 = vsub.s32 3, %v1390
        %v1392 = vrot.slane %v1190, %v1391
        %v1393 = vlaneseq
        %v1394 = vshrl.u32 %v1393, 7
        %v1395 = vsub.s32 4, %v1394
        %v1396 = vrot.slane %v1190, %v1395
        %v1397 = vlaneseq
        %v1398 = vshrl.u32 %v1397, 7
        %v1399 = vsub.s32 5, %v1398
        %v1400 = vrot.slane %v1190, %v1399
        %v1401 = vlaneseq
        %v1402 = vshrl.u32 %v1401, 7
        %v1403 = vsub.s32 6, %v1402
        %v1404 = vrot.slane %v1190, %v1403
        %v1405 = vlaneseq
        %v1406 = vshrl.u32 %v1405, 7
        %v1407 = vsub.s32 7, %v1406
        %v1408 = vrot.slane %v1190, %v1407
        %v1409 = vlaneseq
        %v1410 = vshrl.u32 %v1409, 7
        %v1411 = vsub.s32 0, %v1410
        %v1412 = vrot.slane %v1191, %v1411
        %v1413 = vlaneseq
        %v1414 = vshrl.u32 %v1413, 7
        %v1415 = vsub.s32 1, %v1414
        %v1416 = vrot.slane %v1191, %v1415
        %v1417 = vlaneseq
        %v1418 = vshrl.u32 %v1417, 7
        %v1419 = vsub.s32 2, %v1418
        %v1420 = vrot.slane %v1191, %v1419
        %v1421 = vlaneseq
        %v1422 = vshrl.u32 %v1421, 7
        %v1423 = vsub.s32 3, %v1422
        %v1424 = vrot.slane %v1191, %v1423
        %v1425 = vlaneseq
        %v1426 = vshrl.u32 %v1425, 7
        %v1427 = vsub.s32 4, %v1426
        %v1428 = vrot.slane %v1191, %v1427
        %v1429 = vlaneseq
        %v1430 = vshrl.u32 %v1429, 7
        %v1431 = vsub.s32 5, %v1430
        %v1432 = vrot.slane %v1191, %v1431
        %v1433 = vlaneseq
        %v1434 = vshrl.u32 %v1433, 7
        %v1435 = vsub.s32 6, %v1434
        %v1436 = vrot.slane %v1191, %v1435
        %v1437 = vlaneseq
        %v1438 = vshrl.u32 %v1437, 7
        %v1439 = vsub.s32 7, %v1438
        %v1440 = vrot.slane %v1191, %v1439
        %v1441 = vlaneseq
        %v1442 = vshrl.u32 %v1441, 7
        %v1443 = vsub.s32 0, %v1442
        %v1444 = vrot.slane %v1192, %v1443
        %v1445 = vlaneseq
        %v1446 = vshrl.u32 %v1445, 7
        %v1447 = vsub.s32 1, %v1446
        %v1448 = vrot.slane %v1192, %v1447
        %v1449 = vlaneseq
        %v1450 = vshrl.u32 %v1449, 7
        %v1451 = vsub.s32 2, %v1450
        %v1452 = vrot.slane %v1192, %v1451
        %v1453 = vlaneseq
        %v1454 = vshrl.u32 %v1453, 7
        %v1455 = vsub.s32 3, %v1454
        %v1456 = vrot.slane %v1192, %v1455
        %v1457 = vlaneseq
        %v1458 = vshrl.u32 %v1457, 7
        %v1459 = vsub.s32 4, %v1458
        %v1460 = vrot.slane %v1192, %v1459
        %v1461 = vlaneseq
        %v1462 = vshrl.u32 %v1461, 7
        %v1463 = vsub.s32 5, %v1462
        %v1464 = vrot.slane %v1192, %v1463
        %v1465 = vlaneseq
        %v1466 = vshrl.u32 %v1465, 7
        %v1467 = vsub.s32 6, %v1466
        %v1468 = vrot.slane %v1192, %v1467
        %v1469 = vlaneseq
        %v1470 = vshrl.u32 %v1469, 7
        %v1471 = vsub.s32 7, %v1470
        %v1472 = vrot.slane %v1192, %v1471
        %v1473 = vlaneseq
        %v1474 = vshrl.u32 %v1473, 7
        %v1475 = vsub.s32 0, %v1474
        %v1476 = vrot.slane %v1193, %v1475
        %v1477 = vlaneseq
        %v1478 = vshrl.u32 %v1477, 7
        %v1479 = vsub.s32 1, %v1478
        %v1480 = vrot.slane %v1193, %v1479
        %v1481 = vlaneseq
        %v1482 = vshrl.u32 %v1481, 7
        %v1483 = vsub.s32 2, %v1482
        %v1484 = vrot.slane %v1193, %v1483
        %v1485 = vlaneseq
        %v1486 = vshrl.u32 %v1485, 7
        %v1487 = vsub.s32 3, %v1486
        %v1488 = vrot.slane %v1193, %v1487
        %v1489 = vlaneseq
        %v1490 = vshrl.u32 %v1489, 7
        %v1491 = vsub.s32 4, %v1490
        %v1492 = vrot.slane %v1193, %v1491
        %v1493 = vlaneseq
        %v1494 = vshrl.u32 %v1493, 7
        %v1495 = vsub.s32 5, %v1494
        %v1496 = vrot.slane %v1193, %v1495
        %v1497 = vlaneseq
        %v1498 = vshrl.u32 %v1497, 7
        %v1499 = vsub.s32 6, %v1498
        %v1500 = vrot.slane %v1193, %v1499
        %v1501 = vlaneseq
        %v1502 = vshrl.u32 %v1501, 7
        %v1503 = vsub.s32 7, %v1502
        %v1504 = vrot.slane %v1193, %v1503
        %v1505 = vlaneseq
        %v1506 = vshrl.u32 %v1505, 7
        %v1507 = vsub.s32 0, %v1506
        %v1508 = vrot.slane %v1194, %v1507
        %v1509 = vlaneseq
        %v1510 = vshrl.u32 %v1509, 7
        %v1511 = vsub.s32 1, %v1510
        %v1512 = vrot.slane %v1194, %v1511
        %v1513 = vlaneseq
        %v1514 = vshrl.u32 %v1513, 7
        %v1515 = vsub.s32 2, %v1514
        %v1516 = vrot.slane %v1194, %v1515
        %v1517 = vlaneseq
        %v1518 = vshrl.u32 %v1517, 7
        %v1519 = vsub.s32 3, %v1518
        %v1520 = vrot.slane %v1194, %v1519
        %v1521 = vlaneseq
        %v1522 = vshrl.u32 %v1521, 7
        %v1523 = vsub.s32 4, %v1522
        %v1524 = vrot.slane %v1194, %v1523
        %v1525 = vlaneseq
        %v1526 = vshrl.u32 %v1525, 7
        %v1527 = vsub.s32 5, %v1526
        %v1528 = vrot.slane %v1194, %v1527
        %v1529 = vlaneseq
        %v1530 = vshrl.u32 %v1529, 7
        %v1531 = vsub.s32 6, %v1530
        %v1532 = vrot.slane %v1194, %v1531
        %v1533 = vlaneseq
        %v1534 = vshrl.u32 %v1533, 7
        %v1535 = vsub.s32 7, %v1534
        %v1536 = vrot.slane %v1194, %v1535
        %v1537 = vlaneseq
        %v1538 = vshrl.u32 %v1537, 7
        %v1539 = vsub.s32 0, %v1538
        %v1540 = vrot.slane %v1195, %v1539
        %v1541 = vlaneseq
        %v1542 = vshrl.u32 %v1541, 7
        %v1543 = vsub.s32 1, %v1542
        %v1544 = vrot.slane %v1195, %v1543
        %v1545 = vlaneseq
        %v1546 = vshrl.u32 %v1545, 7
        %v1547 = vsub.s32 2, %v1546
        %v1548 = vrot.slane %v1195, %v1547
        %v1549 = vlaneseq
        %v1550 = vshrl.u32 %v1549, 7
        %v1551 = vsub.s32 3, %v1550
        %v1552 = vrot.slane %v1195, %v1551
        %v1553 = vlaneseq
        %v1554 = vshrl.u32 %v1553, 7
        %v1555 = vsub.s32 4, %v1554
        %v1556 = vrot.slane %v1195, %v1555
        %v1557 = vlaneseq
        %v1558 = vshrl.u32 %v1557, 7
        %v1559 = vsub.s32 5, %v1558
        %v1560 = vrot.slane %v1195, %v1559
        %v1561 = vlaneseq
        %v1562 = vshrl.u32 %v1561, 7
        %v1563 = vsub.s32 6, %v1562
        %v1564 = vrot.slane %v1195, %v1563
        %v1565 = vlaneseq
        %v1566 = vshrl.u32 %v1565, 7
        %v1567 = vsub.s32 7, %v1566
        %v1568 = vrot.slane %v1195, %v1567
        %v1569 = vlaneseq
        %v1570 = vshrl.u32 %v1569, 7
        %v1571 = vsub.s32 0, %v1570
        %v1572 = vrot.slane %v1196, %v1571
        %v1573 = vlaneseq
        %v1574 = vshrl.u32 %v1573, 7
        %v1575 = vsub.s32 1, %v1574
        %v1576 = vrot.slane %v1196, %v1575
        %v1577 = vlaneseq
        %v1578 = vshrl.u32 %v1577, 7
        %v1579 = vsub.s32 2, %v1578
        %v1580 = vrot.slane %v1196, %v1579
        %v1581 = vlaneseq
        %v1582 = vshrl.u32 %v1581, 7
        %v1583 = vsub.s32 3, %v1582
        %v1584 = vrot.slane %v1196, %v1583
        %v1585 = vlaneseq
        %v1586 = vshrl.u32 %v1585, 7
        %v1587 = vsub.s32 4, %v1586
        %v1588 = vrot.slane %v1196, %v1587
        %v1589 = vlaneseq
        %v1590 = vshrl.u32 %v1589, 7
        %v1591 = vsub.s32 5, %v1590
        %v1592 = vrot.slane %v1196, %v1591
        %v1593 = vlaneseq
        %v1594 = vshrl.u32 %v1593, 7
        %v1595 = vsub.s32 6, %v1594
        %v1596 = vrot.slane %v1196, %v1595
        %v1597 = vlaneseq
        %v1598 = vshrl.u32 %v1597, 7
        %v1599 = vsub.s32 7, %v1598
        %v1600 = vrot.slane %v1196, %v1599
        %v1601 = vlaneseq
        %v1602 = vshrl.u32 %v1601, 7
        %v1603 = vsub.s32 0, %v1602
        %v1604 = vrot.slane %v1197, %v1603
        %v1605 = vlaneseq
        %v1606 = vshrl.u32 %v1605, 7
        %v1607 = vsub.s32 1, %v1606
        %v1608 = vrot.slane %v1197, %v1607
        %v1609 = vlaneseq
        %v1610 = vshrl.u32 %v1609, 7
        %v1611 = vsub.s32 2, %v1610
        %v1612 = vrot.slane %v1197, %v1611
        %v1613 = vlaneseq
        %v1614 = vshrl.u32 %v1613, 7
        %v1615 = vsub.s32 3, %v1614
        %v1616 = vrot.slane %v1197, %v1615
        %v1617 = vlaneseq
        %v1618 = vshrl.u32 %v1617, 7
        %v1619 = vsub.s32 4, %v1618
        %v1620 = vrot.slane %v1197, %v1619
        %v1621 = vlaneseq
        %v1622 = vshrl.u32 %v1621, 7
        %v1623 = vsub.s32 5, %v1622
        %v1624 = vrot.slane %v1197, %v1623
        %v1625 = vlaneseq
        %v1626 = vshrl.u32 %v1625, 7
        %v1627 = vsub.s32 6, %v1626
        %v1628 = vrot.slane %v1197, %v1627
        %v1629 = vlaneseq
        %v1630 = vshrl.u32 %v1629, 7
        %v1631 = vsub.s32 7, %v1630
        %v1632 = vrot.slane %v1197, %v1631
        %v1633 = vlaneseq
        %v1634 = vshrl.u32 %v1633, 7
        %v1635 = vsub.s32 0, %v1634
        %v1636 = vrot.slane %v1198, %v1635
        %v1637 = vlaneseq
        %v1638 = vshrl.u32 %v1637, 7
        %v1639 = vsub.s32 1, %v1638
        %v1640 = vrot.slane %v1198, %v1639
        %v1641 = vlaneseq
        %v1642 = vshrl.u32 %v1641, 7
        %v1643 = vsub.s32 2, %v1642
        %v1644 = vrot.slane %v1198, %v1643
        %v1645 = vlaneseq
        %v1646 = vshrl.u32 %v1645, 7
        %v1647 = vsub.s32 3, %v1646
        %v1648 = vrot.slane %v1198, %v1647
        %v1649 = vlaneseq
        %v1650 = vshrl.u32 %v1649, 7
        %v1651 = vsub.s32 4, %v1650
        %v1652 = vrot.slane %v1198, %v1651
        %v1653 = vlaneseq
        %v1654 = vshrl.u32 %v1653, 7
        %v1655 = vsub.s32 5, %v1654
        %v1656 = vrot.slane %v1198, %v1655
        %v1657 = vlaneseq
        %v1658 = vshrl.u32 %v1657, 7
        %v1659 = vsub.s32 6, %v1658
        %v1660 = vrot.slane %v1198, %v1659
        %v1661 = vlaneseq
        %v1662 = vshrl.u32 %v1661, 7
        %v1663 = vsub.s32 7, %v1662
        %v1664 = vrot.slane %v1198, %v1663
        %v1665 = vlaneseq
        %v1666 = vshrl.u32 %v1665, 7
        %v1667 = vsub.s32 0, %v1666
        %v1668 = vrot.slane %v1199, %v1667
        %v1669 = vlaneseq
        %v1670 = vshrl.u32 %v1669, 7
        %v1671 = vsub.s32 1, %v1670
        %v1672 = vrot.slane %v1199, %v1671
        %v1673 = vlaneseq
        %v1674 = vshrl.u32 %v1673, 7
        %v1675 = vsub.s32 2, %v1674
        %v1676 = vrot.slane %v1199, %v1675
        %v1677 = vlaneseq
        %v1678 = vshrl.u32 %v1677, 7
        %v1679 = vsub.s32 3, %v1678
        %v1680 = vrot.slane %v1199, %v1679
        %v1681 = vlaneseq
        %v1682 = vshrl.u32 %v1681, 7
        %v1683 = vsub.s32 4, %v1682
        %v1684 = vrot.slane %v1199, %v1683
        %v1685 = vlaneseq
        %v1686 = vshrl.u32 %v1685, 7
        %v1687 = vsub.s32 5, %v1686
        %v1688 = vrot.slane %v1199, %v1687
        %v1689 = vlaneseq
        %v1690 = vshrl.u32 %v1689, 7
        %v1691 = vsub.s32 6, %v1690
        %v1692 = vrot.slane %v1199, %v1691
        %v1693 = vlaneseq
        %v1694 = vshrl.u32 %v1693, 7
        %v1695 = vsub.s32 7, %v1694
        %v1696 = vrot.slane %v1199, %v1695
        %v1697 = vlaneseq
        %v1698 = vshrl.u32 %v1697, 7
        %v1699 = vsub.s32 0, %v1698
        %v1700 = vrot.slane %v1200, %v1699
        %v1701 = vlaneseq
        %v1702 = vshrl.u32 %v1701, 7
        %v1703 = vsub.s32 1, %v1702
        %v1704 = vrot.slane %v1200, %v1703
        %v1705 = vlaneseq
        %v1706 = vshrl.u32 %v1705, 7
        %v1707 = vsub.s32 2, %v1706
        %v1708 = vrot.slane %v1200, %v1707
        %v1709 = vlaneseq
        %v1710 = vshrl.u32 %v1709, 7
        %v1711 = vsub.s32 3, %v1710
        %v1712 = vrot.slane %v1200, %v1711
        %v1713 = vlaneseq
        %v1714 = vshrl.u32 %v1713, 7
        %v1715 = vsub.s32 4, %v1714
        %v1716 = vrot.slane %v1200, %v1715
        %v1717 = vlaneseq
        %v1718 = vshrl.u32 %v1717, 7
        %v1719 = vsub.s32 5, %v1718
        %v1720 = vrot.slane %v1200, %v1719
        %v1721 = vlaneseq
        %v1722 = vshrl.u32 %v1721, 7
        %v1723 = vsub.s32 6, %v1722
        %v1724 = vrot.slane %v1200, %v1723
        %v1725 = vlaneseq
        %v1726 = vshrl.u32 %v1725, 7
        %v1727 = vsub.s32 7, %v1726
        %v1728 = vrot.slane %v1200, %v1727
        %v2369 = vunpack.c.l.b16 %v673
        %v2370 = vunpack.c.h.b16 %v673
        %v2371 = vunpack.c.l.b16 %v674
        %v2372 = vunpack.c.h.b16 %v674
        %v2373 = vunpack.c.l.b16 %v675
        %v2374 = vunpack.c.h.b16 %v675
        %v2375 = vunpack.c.l.b16 %v676
        %v2376 = vunpack.c.h.b16 %v676
        %v2377 = vunpack.c.l.b16 %v677
        %v2378 = vunpack.c.h.b16 %v677
        %v2379 = vunpack.c.l.b16 %v678
        %v2380 = vunpack.c.h.b16 %v678
        %v2381 = vunpack.c.l.b16 %v679
        %v2382 = vunpack.c.h.b16 %v679
        %v2383 = vunpack.c.l.b16 %v680
        %v2384 = vunpack.c.h.b16 %v680
        %v2385 = vunpack.c.l.b16 %v681
        %v2386 = vunpack.c.h.b16 %v681
        %v2387 = vunpack.c.l.b16 %v682
        %v2388 = vunpack.c.h.b16 %v682
        %v2389 = vunpack.c.l.b16 %v683
        %v2390 = vunpack.c.h.b16 %v683
        %v2391 = vunpack.c.l.b16 %v684
        %v2392 = vunpack.c.h.b16 %v684
        %v2393 = vunpack.c.l.b16 %v685
        %v2394 = vunpack.c.h.b16 %v685
        %v2395 = vunpack.c.l.b16 %v686
        %v2396 = vunpack.c.h.b16 %v686
        %v2397 = vunpack.c.l.b16 %v687
        %v2398 = vunpack.c.h.b16 %v687
        %v2399 = vunpack.c.l.b16 %v688
        %v2400 = vunpack.c.h.b16 %v688
        %v2401 = vunpack.c.l.b16 %v689
        %v2402 = vunpack.c.h.b16 %v689
        %v2403 = vunpack.c.l.b16 %v690
        %v2404 = vunpack.c.h.b16 %v690
        %v2405 = vunpack.c.l.b16 %v691
        %v2406 = vunpack.c.h.b16 %v691
        %v2407 = vunpack.c.l.b16 %v692
        %v2408 = vunpack.c.h.b16 %v692
        %v2409 = vunpack.c.l.b16 %v693
        %v2410 = vunpack.c.h.b16 %v693
        %v2411 = vunpack.c.l.b16 %v694
        %v2412 = vunpack.c.h.b16 %v694
        %v2413 = vunpack.c.l.b16 %v695
        %v2414 = vunpack.c.h.b16 %v695
        %v2415 = vunpack.c.l.b16 %v696
        %v2416 = vunpack.c.h.b16 %v696
        %v2417 = vunpack.c.l.b16 %v697
        %v2418 = vunpack.c.h.b16 %v697
        %v2419 = vunpack.c.l.b16 %v698
        %v2420 = vunpack.c.h.b16 %v698
        %v2421 = vunpack.c.l.b16 %v699
        %v2422 = vunpack.c.h.b16 %v699
        %v2423 = vunpack.c.l.b16 %v700
        %v2424 = vunpack.c.h.b16 %v700
        %v2425 = vunpack.c.l.b16 %v701
        %v2426 = vunpack.c.h.b16 %v701
        %v2427 = vunpack.c.l.b16 %v702
        %v2428 = vunpack.c.h.b16 %v702
        %v2429 = vunpack.c.l.b16 %v703
        %v2430 = vunpack.c.h.b16 %v703
        %v2431 = vunpack.c.l.b16 %v704
        %v2432 = vunpack.c.h.b16 %v704
        %v2433 = vunpack.c.l.b16 %v705
        %v2434 = vunpack.c.h.b16 %v705
        %v2435 = vunpack.c.l.b16 %v706
        %v2436 = vunpack.c.h.b16 %v706
        %v2437 = vunpack.c.l.b16 %v707
        %v2438 = vunpack.c.h.b16 %v707
        %v2439 = vunpack.c.l.b16 %v708
        %v2440 = vunpack.c.h.b16 %v708
        %v2441 = vunpack.c.l.b16 %v709
        %v2442 = vunpack.c.h.b16 %v709
        %v2443 = vunpack.c.l.b16 %v710
        %v2444 = vunpack.c.h.b16 %v710
        %v2445 = vunpack.c.l.b16 %v711
        %v2446 = vunpack.c.h.b16 %v711
        %v2447 = vunpack.c.l.b16 %v712
        %v2448 = vunpack.c.h.b16 %v712
        %v2449 = vunpack.c.l.b16 %v713
        %v2450 = vunpack.c.h.b16 %v713
        %v2451 = vunpack.c.l.b16 %v714
        %v2452 = vunpack.c.h.b16 %v714
        %v2453 = vunpack.c.l.b16 %v715
        %v2454 = vunpack.c.h.b16 %v715
        %v2455 = vunpack.c.l.b16 %v716
        %v2456 = vunpack.c.h.b16 %v716
        %v2457 = vunpack.c.l.b16 %v717
        %v2458 = vunpack.c.h.b16 %v717
        %v2459 = vunpack.c.l.b16 %v718
        %v2460 = vunpack.c.h.b16 %v718
        %v2461 = vunpack.c.l.b16 %v719
        %v2462 = vunpack.c.h.b16 %v719
        %v2463 = vunpack.c.l.b16 %v720
        %v2464 = vunpack.c.h.b16 %v720
        %v2465 = vunpack.c.l.b16 %v721
        %v2466 = vunpack.c.h.b16 %v721
        %v2467 = vunpack.c.l.b16 %v722
        %v2468 = vunpack.c.h.b16 %v722
        %v2469 = vunpack.c.l.b16 %v723
        %v2470 = vunpack.c.h.b16 %v723
        %v2471 = vunpack.c.l.b16 %v724
        %v2472 = vunpack.c.h.b16 %v724
        %v2473 = vunpack.c.l.b16 %v725
        %v2474 = vunpack.c.h.b16 %v725
        %v2475 = vunpack.c.l.b16 %v726
        %v2476 = vunpack.c.h.b16 %v726
        %v2477 = vunpack.c.l.b16 %v727
        %v2478 = vunpack.c.h.b16 %v727
        %v2479 = vunpack.c.l.b16 %v728
        %v2480 = vunpack.c.h.b16 %v728
        %v2481 = vunpack.c.l.b16 %v729
        %v2482 = vunpack.c.h.b16 %v729
        %v2483 = vunpack.c.l.b16 %v730
        %v2484 = vunpack.c.h.b16 %v730
        %v2485 = vunpack.c.l.b16 %v731
        %v2486 = vunpack.c.h.b16 %v731
        %v2487 = vunpack.c.l.b16 %v732
        %v2488 = vunpack.c.h.b16 %v732
        %v2489 = vunpack.c.l.b16 %v733
        %v2490 = vunpack.c.h.b16 %v733
        %v2491 = vunpack.c.l.b16 %v734
        %v2492 = vunpack.c.h.b16 %v734
        %v2493 = vunpack.c.l.b16 %v735
        %v2494 = vunpack.c.h.b16 %v735
        %v2495 = vunpack.c.l.b16 %v736
        %v2496 = vunpack.c.h.b16 %v736
        %v2497 = vunpack.c.l.b16 %v737
        %v2498 = vunpack.c.h.b16 %v737
        %v2499 = vunpack.c.l.b16 %v738
        %v2500 = vunpack.c.h.b16 %v738
        %v2501 = vunpack.c.l.b16 %v739
        %v2502 = vunpack.c.h.b16 %v739
        %v2503 = vunpack.c.l.b16 %v740
        %v2504 = vunpack.c.h.b16 %v740
        %v2505 = vunpack.c.l.b16 %v741
        %v2506 = vunpack.c.h.b16 %v741
        %v2507 = vunpack.c.l.b16 %v742
        %v2508 = vunpack.c.h.b16 %v742
        %v2509 = vunpack.c.l.b16 %v743
        %v2510 = vunpack.c.h.b16 %v743
        %v2511 = vunpack.c.l.b16 %v744
        %v2512 = vunpack.c.h.b16 %v744
        %v2513 = vunpack.c.l.b16 %v745
        %v2514 = vunpack.c.h.b16 %v745
        %v2515 = vunpack.c.l.b16 %v746
        %v2516 = vunpack.c.h.b16 %v746
        %v2517 = vunpack.c.l.b16 %v747
        %v2518 = vunpack.c.h.b16 %v747
        %v2519 = vunpack.c.l.b16 %v748
        %v2520 = vunpack.c.h.b16 %v748
        %v2521 = vunpack.c.l.b16 %v749
        %v2522 = vunpack.c.h.b16 %v749
        %v2523 = vunpack.c.l.b16 %v750
        %v2524 = vunpack.c.h.b16 %v750
        %v2525 = vunpack.c.l.b16 %v751
        %v2526 = vunpack.c.h.b16 %v751
        %v2527 = vunpack.c.l.b16 %v752
        %v2528 = vunpack.c.h.b16 %v752
        %v2529 = vunpack.c.l.b16 %v753
        %v2530 = vunpack.c.h.b16 %v753
        %v2531 = vunpack.c.l.b16 %v754
        %v2532 = vunpack.c.h.b16 %v754
        %v2533 = vunpack.c.l.b16 %v755
        %v2534 = vunpack.c.h.b16 %v755
        %v2535 = vunpack.c.l.b16 %v756
        %v2536 = vunpack.c.h.b16 %v756
        %v2537 = vunpack.c.l.b16 %v757
        %v2538 = vunpack.c.h.b16 %v757
        %v2539 = vunpack.c.l.b16 %v758
        %v2540 = vunpack.c.h.b16 %v758
        %v2541 = vunpack.c.l.b16 %v759
        %v2542 = vunpack.c.h.b16 %v759
        %v2543 = vunpack.c.l.b16 %v760
        %v2544 = vunpack.c.h.b16 %v760
        %v2545 = vunpack.c.l.b16 %v761
        %v2546 = vunpack.c.h.b16 %v761
        %v2547 = vunpack.c.l.b16 %v762
        %v2548 = vunpack.c.h.b16 %v762
        %v2549 = vunpack.c.l.b16 %v763
        %v2550 = vunpack.c.h.b16 %v763
        %v2551 = vunpack.c.l.b16 %v764
        %v2552 = vunpack.c.h.b16 %v764
        %v2553 = vunpack.c.l.b16 %v765
        %v2554 = vunpack.c.h.b16 %v765
        %v2555 = vunpack.c.l.b16 %v766
        %v2556 = vunpack.c.h.b16 %v766
        %v2557 = vunpack.c.l.b16 %v767
        %v2558 = vunpack.c.h.b16 %v767
        %v2559 = vunpack.c.l.b16 %v768
        %v2560 = vunpack.c.h.b16 %v768
        %v2561 = vunpack.c.l.b16 %v769
        %v2562 = vunpack.c.h.b16 %v769
        %v2563 = vunpack.c.l.b16 %v770
        %v2564 = vunpack.c.h.b16 %v770
        %v2565 = vunpack.c.l.b16 %v771
        %v2566 = vunpack.c.h.b16 %v771
        %v2567 = vunpack.c.l.b16 %v772
        %v2568 = vunpack.c.h.b16 %v772
        %v2569 = vunpack.c.l.b16 %v773
        %v2570 = vunpack.c.h.b16 %v773
        %v2571 = vunpack.c.l.b16 %v774
        %v2572 = vunpack.c.h.b16 %v774
        %v2573 = vunpack.c.l.b16 %v775
        %v2574 = vunpack.c.h.b16 %v775
        %v2575 = vunpack.c.l.b16 %v776
        %v2576 = vunpack.c.h.b16 %v776
        %v2577 = vunpack.c.l.b16 %v777
        %v2578 = vunpack.c.h.b16 %v777
        %v2579 = vunpack.c.l.b16 %v778
        %v2580 = vunpack.c.h.b16 %v778
        %v2581 = vunpack.c.l.b16 %v779
        %v2582 = vunpack.c.h.b16 %v779
        %v2583 = vunpack.c.l.b16 %v780
        %v2584 = vunpack.c.h.b16 %v780
        %v2585 = vunpack.c.l.b16 %v781
        %v2586 = vunpack.c.h.b16 %v781
        %v2587 = vunpack.c.l.b16 %v782
        %v2588 = vunpack.c.h.b16 %v782
        %v2589 = vunpack.c.l.b16 %v783
        %v2590 = vunpack.c.h.b16 %v783
        %v2591 = vunpack.c.l.b16 %v784
        %v2592 = vunpack.c.h.b16 %v784
        %v2593 = vunpack.c.l.b16 %v785
        %v2594 = vunpack.c.h.b16 %v785
        %v2595 = vunpack.c.l.b16 %v786
        %v2596 = vunpack.c.h.b16 %v786
        %v2597 = vunpack.c.l.b16 %v787
        %v2598 = vunpack.c.h.b16 %v787
        %v2599 = vunpack.c.l.b16 %v788
        %v2600 = vunpack.c.h.b16 %v788
        %v2601 = vunpack.c.l.b16 %v789
        %v2602 = vunpack.c.h.b16 %v789
        %v2603 = vunpack.c.l.b16 %v790
        %v2604 = vunpack.c.h.b16 %v790
        %v2605 = vunpack.c.l.b16 %v791
        %v2606 = vunpack.c.h.b16 %v791
        %v2607 = vunpack.c.l.b16 %v792
        %v2608 = vunpack.c.h.b16 %v792
        %v2609 = vunpack.c.l.b16 %v793
        %v2610 = vunpack.c.h.b16 %v793
        %v2611 = vunpack.c.l.b16 %v794
        %v2612 = vunpack.c.h.b16 %v794
        %v2613 = vunpack.c.l.b16 %v795
        %v2614 = vunpack.c.h.b16 %v795
        %v2615 = vunpack.c.l.b16 %v796
        %v2616 = vunpack.c.h.b16 %v796
        %v2617 = vunpack.c.l.b16 %v797
        %v2618 = vunpack.c.h.b16 %v797
        %v2619 = vunpack.c.l.b16 %v798
        %v2620 = vunpack.c.h.b16 %v798
        %v2621 = vunpack.c.l.b16 %v799
        %v2622 = vunpack.c.h.b16 %v799
        %v2623 = vunpack.c.l.b16 %v800
        %v2624 = vunpack.c.h.b16 %v800
        %v2625 = vunpack.c.l.b16 %v801
        %v2626 = vunpack.c.h.b16 %v801
        %v2627 = vunpack.c.l.b16 %v802
        %v2628 = vunpack.c.h.b16 %v802
        %v2629 = vunpack.c.l.b16 %v803
        %v2630 = vunpack.c.h.b16 %v803
        %v2631 = vunpack.c.l.b16 %v804
        %v2632 = vunpack.c.h.b16 %v804
        %v2633 = vunpack.c.l.b16 %v805
        %v2634 = vunpack.c.h.b16 %v805
        %v2635 = vunpack.c.l.b16 %v806
        %v2636 = vunpack.c.h.b16 %v806
        %v2637 = vunpack.c.l.b16 %v807
        %v2638 = vunpack.c.h.b16 %v807
        %v2639 = vunpack.c.l.b16 %v808
        %v2640 = vunpack.c.h.b16 %v808
        %v2641 = vunpack.c.l.b16 %v809
        %v2642 = vunpack.c.h.b16 %v809
        %v2643 = vunpack.c.l.b16 %v810
        %v2644 = vunpack.c.h.b16 %v810
        %v2645 = vunpack.c.l.b16 %v811
        %v2646 = vunpack.c.h.b16 %v811
        %v2647 = vunpack.c.l.b16 %v812
        %v2648 = vunpack.c.h.b16 %v812
        %v2649 = vunpack.c.l.b16 %v813
        %v2650 = vunpack.c.h.b16 %v813
        %v2651 = vunpack.c.l.b16 %v814
        %v2652 = vunpack.c.h.b16 %v814
        %v2653 = vunpack.c.l.b16 %v815
        %v2654 = vunpack.c.h.b16 %v815
        %v2655 = vunpack.c.l.b16 %v816
        %v2656 = vunpack.c.h.b16 %v816
        %v2657 = vunpack.c.l.b16 %v817
        %v2658 = vunpack.c.h.b16 %v817
        %v2659 = vunpack.c.l.b16 %v818
        %v2660 = vunpack.c.h.b16 %v818
        %v2661 = vunpack.c.l.b16 %v819
        %v2662 = vunpack.c.h.b16 %v819
        %v2663 = vunpack.c.l.b16 %v820
        %v2664 = vunpack.c.h.b16 %v820
        %v2665 = vunpack.c.l.b16 %v821
        %v2666 = vunpack.c.h.b16 %v821
        %v2667 = vunpack.c.l.b16 %v822
        %v2668 = vunpack.c.h.b16 %v822
        %v2669 = vunpack.c.l.b16 %v823
        %v2670 = vunpack.c.h.b16 %v823
        %v2671 = vunpack.c.l.b16 %v824
        %v2672 = vunpack.c.h.b16 %v824
        %v2673 = vunpack.c.l.b16 %v825
        %v2674 = vunpack.c.h.b16 %v825
        %v2675 = vunpack.c.l.b16 %v826
        %v2676 = vunpack.c.h.b16 %v826
        %v2677 = vunpack.c.l.b16 %v827
        %v2678 = vunpack.c.h.b16 %v827
        %v2679 = vunpack.c.l.b16 %v828
        %v2680 = vunpack.c.h.b16 %v828
        %v2681 = vunpack.c.l.b16 %v829
        %v2682 = vunpack.c.h.b16 %v829
        %v2683 = vunpack.c.l.b16 %v830
        %v2684 = vunpack.c.h.b16 %v830
        %v2685 = vunpack.c.l.b16 %v831
        %v2686 = vunpack.c.h.b16 %v831
        %v2687 = vunpack.c.l.b16 %v832
        %v2688 = vunpack.c.h.b16 %v832
        %v2689 = vunpack.c.l.b16 %v833
        %v2690 = vunpack.c.h.b16 %v833
        %v2691 = vunpack.c.l.b16 %v834
        %v2692 = vunpack.c.h.b16 %v834
        %v2693 = vunpack.c.l.b16 %v835
        %v2694 = vunpack.c.h.b16 %v835
        %v2695 = vunpack.c.l.b16 %v836
        %v2696 = vunpack.c.h.b16 %v836
        %v2697 = vunpack.c.l.b16 %v837
        %v2698 = vunpack.c.h.b16 %v837
        %v2699 = vunpack.c.l.b16 %v838
        %v2700 = vunpack.c.h.b16 %v838
        %v2701 = vunpack.c.l.b16 %v839
        %v2702 = vunpack.c.h.b16 %v839
        %v2703 = vunpack.c.l.b16 %v840
        %v2704 = vunpack.c.h.b16 %v840
        %v2705 = vunpack.c.l.b16 %v841
        %v2706 = vunpack.c.h.b16 %v841
        %v2707 = vunpack.c.l.b16 %v842
        %v2708 = vunpack.c.h.b16 %v842
        %v2709 = vunpack.c.l.b16 %v843
        %v2710 = vunpack.c.h.b16 %v843
        %v2711 = vunpack.c.l.b16 %v844
        %v2712 = vunpack.c.h.b16 %v844
        %v2713 = vunpack.c.l.b16 %v845
        %v2714 = vunpack.c.h.b16 %v845
        %v2715 = vunpack.c.l.b16 %v846
        %v2716 = vunpack.c.h.b16 %v846
        %v2717 = vunpack.c.l.b16 %v847
        %v2718 = vunpack.c.h.b16 %v847
        %v2719 = vunpack.c.l.b16 %v848
        %v2720 = vunpack.c.h.b16 %v848
        %v2721 = vunpack.c.l.b16 %v849
        %v2722 = vunpack.c.h.b16 %v849
        %v2723 = vunpack.c.l.b16 %v850
        %v2724 = vunpack.c.h.b16 %v850
        %v2725 = vunpack.c.l.b16 %v851
        %v2726 = vunpack.c.h.b16 %v851
        %v2727 = vunpack.c.l.b16 %v852
        %v2728 = vunpack.c.h.b16 %v852
        %v2729 = vunpack.c.l.b16 %v853
        %v2730 = vunpack.c.h.b16 %v853
        %v2731 = vunpack.c.l.b16 %v854
        %v2732 = vunpack.c.h.b16 %v854
        %v2733 = vunpack.c.l.b16 %v855
        %v2734 = vunpack.c.h.b16 %v855
        %v2735 = vunpack.c.l.b16 %v856
        %v2736 = vunpack.c.h.b16 %v856
        %v2737 = vunpack.c.l.b16 %v857
        %v2738 = vunpack.c.h.b16 %v857
        %v2739 = vunpack.c.l.b16 %v858
        %v2740 = vunpack.c.h.b16 %v858
        %v2741 = vunpack.c.l.b16 %v859
        %v2742 = vunpack.c.h.b16 %v859
        %v2743 = vunpack.c.l.b16 %v860
        %v2744 = vunpack.c.h.b16 %v860
        %v2745 = vunpack.c.l.b16 %v861
        %v2746 = vunpack.c.h.b16 %v861
        %v2747 = vunpack.c.l.b16 %v862
        %v2748 = vunpack.c.h.b16 %v862
        %v2749 = vunpack.c.l.b16 %v863
        %v2750 = vunpack.c.h.b16 %v863
        %v2751 = vunpack.c.l.b16 %v864
        %v2752 = vunpack.c.h.b16 %v864
        %v2753 = vunpack.c.l.b16 %v865
        %v2754 = vunpack.c.h.b16 %v865
        %v2755 = vunpack.c.l.b16 %v866
        %v2756 = vunpack.c.h.b16 %v866
        %v2757 = vunpack.c.l.b16 %v867
        %v2758 = vunpack.c.h.b16 %v867
        %v2759 = vunpack.c.l.b16 %v868
        %v2760 = vunpack.c.h.b16 %v868
        %v2761 = vunpack.c.l.b16 %v869
        %v2762 = vunpack.c.h.b16 %v869
        %v2763 = vunpack.c.l.b16 %v870
        %v2764 = vunpack.c.h.b16 %v870
        %v2765 = vunpack.c.l.b16 %v871
        %v2766 = vunpack.c.h.b16 %v871
        %v2767 = vunpack.c.l.b16 %v872
        %v2768 = vunpack.c.h.b16 %v872
        %v2769 = vunpack.c.l.b16 %v873
        %v2770 = vunpack.c.h.b16 %v873
        %v2771 = vunpack.c.l.b16 %v874
        %v2772 = vunpack.c.h.b16 %v874
        %v2773 = vunpack.c.l.b16 %v875
        %v2774 = vunpack.c.h.b16 %v875
        %v2775 = vunpack.c.l.b16 %v876
        %v2776 = vunpack.c.h.b16 %v876
        %v2777 = vunpack.c.l.b16 %v877
        %v2778 = vunpack.c.h.b16 %v877
        %v2779 = vunpack.c.l.b16 %v878
        %v2780 = vunpack.c.h.b16 %v878
        %v2781 = vunpack.c.l.b16 %v879
        %v2782 = vunpack.c.h.b16 %v879
        %v2783 = vunpack.c.l.b16 %v880
        %v2784 = vunpack.c.h.b16 %v880
        %v2785 = vunpack.c.l.b16 %v881
        %v2786 = vunpack.c.h.b16 %v881
        %v2787 = vunpack.c.l.b16 %v882
        %v2788 = vunpack.c.h.b16 %v882
        %v2789 = vunpack.c.l.b16 %v883
        %v2790 = vunpack.c.h.b16 %v883
        %v2791 = vunpack.c.l.b16 %v884
        %v2792 = vunpack.c.h.b16 %v884
        %v2793 = vunpack.c.l.b16 %v885
        %v2794 = vunpack.c.h.b16 %v885
        %v2795 = vunpack.c.l.b16 %v886
        %v2796 = vunpack.c.h.b16 %v886
        %v2797 = vunpack.c.l.b16 %v887
        %v2798 = vunpack.c.h.b16 %v887
        %v2799 = vunpack.c.l.b16 %v888
        %v2800 = vunpack.c.h.b16 %v888
        %v2801 = vunpack.c.l.b16 %v889
        %v2802 = vunpack.c.h.b16 %v889
        %v2803 = vunpack.c.l.b16 %v890
        %v2804 = vunpack.c.h.b16 %v890
        %v2805 = vunpack.c.l.b16 %v891
        %v2806 = vunpack.c.h.b16 %v891
        %v2807 = vunpack.c.l.b16 %v892
        %v2808 = vunpack.c.h.b16 %v892
        %v2809 = vunpack.c.l.b16 %v893
        %v2810 = vunpack.c.h.b16 %v893
        %v2811 = vunpack.c.l.b16 %v894
        %v2812 = vunpack.c.h.b16 %v894
        %v2813 = vunpack.c.l.b16 %v895
        %v2814 = vunpack.c.h.b16 %v895
        %v2815 = vunpack.c.l.b16 %v896
        %v2816 = vunpack.c.h.b16 %v896
        %v2817 = vunpack.c.l.b16 %v897
        %v2818 = vunpack.c.h.b16 %v897
        %v2819 = vunpack.c.l.b16 %v898
        %v2820 = vunpack.c.h.b16 %v898
        %v2821 = vunpack.c.l.b16 %v899
        %v2822 = vunpack.c.h.b16 %v899
        %v2823 = vunpack.c.l.b16 %v900
        %v2824 = vunpack.c.h.b16 %v900
        %v2825 = vunpack.c.l.b16 %v901
        %v2826 = vunpack.c.h.b16 %v901
        %v2827 = vunpack.c.l.b16 %v902
        %v2828 = vunpack.c.h.b16 %v902
        %v2829 = vunpack.c.l.b16 %v903
        %v2830 = vunpack.c.h.b16 %v903
        %v2831 = vunpack.c.l.b16 %v904
        %v2832 = vunpack.c.h.b16 %v904
        %v2833 = vunpack.c.l.b16 %v905
        %v2834 = vunpack.c.h.b16 %v905
        %v2835 = vunpack.c.l.b16 %v906
        %v2836 = vunpack.c.h.b16 %v906
        %v2837 = vunpack.c.l.b16 %v907
        %v2838 = vunpack.c.h.b16 %v907
        %v2839 = vunpack.c.l.b16 %v908
        %v2840 = vunpack.c.h.b16 %v908
        %v2841 = vunpack.c.l.b16 %v909
        %v2842 = vunpack.c.h.b16 %v909
        %v2843 = vunpack.c.l.b16 %v910
        %v2844 = vunpack.c.h.b16 %v910
        %v2845 = vunpack.c.l.b16 %v911
        %v2846 = vunpack.c.h.b16 %v911
        %v2847 = vunpack.c.l.b16 %v912
        %v2848 = vunpack.c.h.b16 %v912
        %v2849 = vunpack.c.l.b16 %v913
        %v2850 = vunpack.c.h.b16 %v913
        %v2851 = vunpack.c.l.b16 %v914
        %v2852 = vunpack.c.h.b16 %v914
        %v2853 = vunpack.c.l.b16 %v915
        %v2854 = vunpack.c.h.b16 %v915
        %v2855 = vunpack.c.l.b16 %v916
        %v2856 = vunpack.c.h.b16 %v916
        %v2857 = vunpack.c.l.b16 %v917
        %v2858 = vunpack.c.h.b16 %v917
        %v2859 = vunpack.c.l.b16 %v918
        %v2860 = vunpack.c.h.b16 %v918
        %v2861 = vunpack.c.l.b16 %v919
        %v2862 = vunpack.c.h.b16 %v919
        %v2863 = vunpack.c.l.b16 %v920
        %v2864 = vunpack.c.h.b16 %v920
        %v2865 = vunpack.c.l.b16 %v921
        %v2866 = vunpack.c.h.b16 %v921
        %v2867 = vunpack.c.l.b16 %v922
        %v2868 = vunpack.c.h.b16 %v922
        %v2869 = vunpack.c.l.b16 %v923
        %v2870 = vunpack.c.h.b16 %v923
        %v2871 = vunpack.c.l.b16 %v924
        %v2872 = vunpack.c.h.b16 %v924
        %v2873 = vunpack.c.l.b16 %v925
        %v2874 = vunpack.c.h.b16 %v925
        %v2875 = vunpack.c.l.b16 %v926
        %v2876 = vunpack.c.h.b16 %v926
        %v2877 = vunpack.c.l.b16 %v927
        %v2878 = vunpack.c.h.b16 %v927
        %v2879 = vunpack.c.l.b16 %v928
        %v2880 = vunpack.c.h.b16 %v928
        %v2881 = vunpack.c.l.b16 %v929
        %v2882 = vunpack.c.h.b16 %v929
        %v2883 = vunpack.c.l.b16 %v930
        %v2884 = vunpack.c.h.b16 %v930
        %v2885 = vunpack.c.l.b16 %v931
        %v2886 = vunpack.c.h.b16 %v931
        %v2887 = vunpack.c.l.b16 %v932
        %v2888 = vunpack.c.h.b16 %v932
        %v2889 = vunpack.c.l.b16 %v933
        %v2890 = vunpack.c.h.b16 %v933
        %v2891 = vunpack.c.l.b16 %v934
        %v2892 = vunpack.c.h.b16 %v934
        %v2893 = vunpack.c.l.b16 %v935
        %v2894 = vunpack.c.h.b16 %v935
        %v2895 = vunpack.c.l.b16 %v936
        %v2896 = vunpack.c.h.b16 %v936
        %v2897 = vunpack.c.l.b16 %v937
        %v2898 = vunpack.c.h.b16 %v937
        %v2899 = vunpack.c.l.b16 %v938
        %v2900 = vunpack.c.h.b16 %v938
        %v2901 = vunpack.c.l.b16 %v939
        %v2902 = vunpack.c.h.b16 %v939
        %v2903 = vunpack.c.l.b16 %v940
        %v2904 = vunpack.c.h.b16 %v940
        %v2905 = vunpack.c.l.b16 %v941
        %v2906 = vunpack.c.h.b16 %v941
        %v2907 = vunpack.c.l.b16 %v942
        %v2908 = vunpack.c.h.b16 %v942
        %v2909 = vunpack.c.l.b16 %v943
        %v2910 = vunpack.c.h.b16 %v943
        %v2911 = vunpack.c.l.b16 %v944
        %v2912 = vunpack.c.h.b16 %v944
        %v2913 = vunpack.c.l.b16 %v945
        %v2914 = vunpack.c.h.b16 %v945
        %v2915 = vunpack.c.l.b16 %v946
        %v2916 = vunpack.c.h.b16 %v946
        %v2917 = vunpack.c.l.b16 %v947
        %v2918 = vunpack.c.h.b16 %v947
        %v2919 = vunpack.c.l.b16 %v948
        %v2920 = vunpack.c.h.b16 %v948
        %v2921 = vunpack.c.l.b16 %v949
        %v2922 = vunpack.c.h.b16 %v949
        %v2923 = vunpack.c.l.b16 %v950
        %v2924 = vunpack.c.h.b16 %v950
        %v2925 = vunpack.c.l.b16 %v951
        %v2926 = vunpack.c.h.b16 %v951
        %v2927 = vunpack.c.l.b16 %v952
        %v2928 = vunpack.c.h.b16 %v952
        %v2929 = vunpack.c.l.b16 %v953
        %v2930 = vunpack.c.h.b16 %v953
        %v2931 = vunpack.c.l.b16 %v954
        %v2932 = vunpack.c.h.b16 %v954
        %v2933 = vunpack.c.l.b16 %v955
        %v2934 = vunpack.c.h.b16 %v955
        %v2935 = vunpack.c.l.b16 %v956
        %v2936 = vunpack.c.h.b16 %v956
        %v2937 = vunpack.c.l.b16 %v957
        %v2938 = vunpack.c.h.b16 %v957
        %v2939 = vunpack.c.l.b16 %v958
        %v2940 = vunpack.c.h.b16 %v958
        %v2941 = vunpack.c.l.b16 %v959
        %v2942 = vunpack.c.h.b16 %v959
        %v2943 = vunpack.c.l.b16 %v960
        %v2944 = vunpack.c.h.b16 %v960
        %v2945 = vunpack.c.l.b16 %v961
        %v2946 = vunpack.c.h.b16 %v961
        %v2947 = vunpack.c.l.b16 %v962
        %v2948 = vunpack.c.h.b16 %v962
        %v2949 = vunpack.c.l.b16 %v963
        %v2950 = vunpack.c.h.b16 %v963
        %v2951 = vunpack.c.l.b16 %v964
        %v2952 = vunpack.c.h.b16 %v964
        %v2953 = vunpack.c.l.b16 %v965
        %v2954 = vunpack.c.h.b16 %v965
        %v2955 = vunpack.c.l.b16 %v966
        %v2956 = vunpack.c.h.b16 %v966
        %v2957 = vunpack.c.l.b16 %v967
        %v2958 = vunpack.c.h.b16 %v967
        %v2959 = vunpack.c.l.b16 %v968
        %v2960 = vunpack.c.h.b16 %v968
        %v2961 = vunpack.c.l.b16 %v969
        %v2962 = vunpack.c.h.b16 %v969
        %v2963 = vunpack.c.l.b16 %v970
        %v2964 = vunpack.c.h.b16 %v970
        %v2965 = vunpack.c.l.b16 %v971
        %v2966 = vunpack.c.h.b16 %v971
        %v2967 = vunpack.c.l.b16 %v972
        %v2968 = vunpack.c.h.b16 %v972
        %v2969 = vunpack.c.l.b16 %v973
        %v2970 = vunpack.c.h.b16 %v973
        %v2971 = vunpack.c.l.b16 %v974
        %v2972 = vunpack.c.h.b16 %v974
        %v2973 = vunpack.c.l.b16 %v975
        %v2974 = vunpack.c.h.b16 %v975
        %v2975 = vunpack.c.l.b16 %v976
        %v2976 = vunpack.c.h.b16 %v976
        %v2977 = vunpack.c.l.b16 %v977
        %v2978 = vunpack.c.h.b16 %v977
        %v2979 = vunpack.c.l.b16 %v978
        %v2980 = vunpack.c.h.b16 %v978
        %v2981 = vunpack.c.l.b16 %v979
        %v2982 = vunpack.c.h.b16 %v979
        %v2983 = vunpack.c.l.b16 %v980
        %v2984 = vunpack.c.h.b16 %v980
        %v2985 = vunpack.c.l.b16 %v981
        %v2986 = vunpack.c.h.b16 %v981
        %v2987 = vunpack.c.l.b16 %v982
        %v2988 = vunpack.c.h.b16 %v982
        %v2989 = vunpack.c.l.b16 %v983
        %v2990 = vunpack.c.h.b16 %v983
        %v2991 = vunpack.c.l.b16 %v984
        %v2992 = vunpack.c.h.b16 %v984
        %v2993 = vunpack.c.l.b16 %v985
        %v2994 = vunpack.c.h.b16 %v985
        %v2995 = vunpack.c.l.b16 %v986
        %v2996 = vunpack.c.h.b16 %v986
        %v2997 = vunpack.c.l.b16 %v987
        %v2998 = vunpack.c.h.b16 %v987
        %v2999 = vunpack.c.l.b16 %v988
        %v3000 = vunpack.c.h.b16 %v988
        %v3001 = vunpack.c.l.b16 %v989
        %v3002 = vunpack.c.h.b16 %v989
        %v3003 = vunpack.c.l.b16 %v990
        %v3004 = vunpack.c.h.b16 %v990
        %v3005 = vunpack.c.l.b16 %v991
        %v3006 = vunpack.c.h.b16 %v991
        %v3007 = vunpack.c.l.b16 %v992
        %v3008 = vunpack.c.h.b16 %v992
        %v3009 = vunpack.c.l.b16 %v993
        %v3010 = vunpack.c.h.b16 %v993
        %v3011 = vunpack.c.l.b16 %v994
        %v3012 = vunpack.c.h.b16 %v994
        %v3013 = vunpack.c.l.b16 %v995
        %v3014 = vunpack.c.h.b16 %v995
        %v3015 = vunpack.c.l.b16 %v996
        %v3016 = vunpack.c.h.b16 %v996
        %v3017 = vunpack.c.l.b16 %v997
        %v3018 = vunpack.c.h.b16 %v997
        %v3019 = vunpack.c.l.b16 %v998
        %v3020 = vunpack.c.h.b16 %v998
        %v3021 = vunpack.c.l.b16 %v999
        %v3022 = vunpack.c.h.b16 %v999
        %v3023 = vunpack.c.l.b16 %v1000
        %v3024 = vunpack.c.h.b16 %v1000
        %v3025 = vunpack.c.l.b16 %v1001
        %v3026 = vunpack.c.h.b16 %v1001
        %v3027 = vunpack.c.l.b16 %v1002
        %v3028 = vunpack.c.h.b16 %v1002
        %v3029 = vunpack.c.l.b16 %v1003
        %v3030 = vunpack.c.h.b16 %v1003
        %v3031 = vunpack.c.l.b16 %v1004
        %v3032 = vunpack.c.h.b16 %v1004
        %v3033 = vunpack.c.l.b16 %v1005
        %v3034 = vunpack.c.h.b16 %v1005
        %v3035 = vunpack.c.l.b16 %v1006
        %v3036 = vunpack.c.h.b16 %v1006
        %v3037 = vunpack.c.l.b16 %v1007
        %v3038 = vunpack.c.h.b16 %v1007
        %v3039 = vunpack.c.l.b16 %v1008
        %v3040 = vunpack.c.h.b16 %v1008
        %v3041 = vunpack.c.l.b16 %v1009
        %v3042 = vunpack.c.h.b16 %v1009
        %v3043 = vunpack.c.l.b16 %v1010
        %v3044 = vunpack.c.h.b16 %v1010
        %v3045 = vunpack.c.l.b16 %v1011
        %v3046 = vunpack.c.h.b16 %v1011
        %v3047 = vunpack.c.l.b16 %v1012
        %v3048 = vunpack.c.h.b16 %v1012
        %v3049 = vunpack.c.l.b16 %v1013
        %v3050 = vunpack.c.h.b16 %v1013
        %v3051 = vunpack.c.l.b16 %v1014
        %v3052 = vunpack.c.h.b16 %v1014
        %v3053 = vunpack.c.l.b16 %v1015
        %v3054 = vunpack.c.h.b16 %v1015
        %v3055 = vunpack.c.l.b16 %v1016
        %v3056 = vunpack.c.h.b16 %v1016
        %v3057 = vunpack.c.l.b16 %v1017
        %v3058 = vunpack.c.h.b16 %v1017
        %v3059 = vunpack.c.l.b16 %v1018
        %v3060 = vunpack.c.h.b16 %v1018
        %v3061 = vunpack.c.l.b16 %v1019
        %v3062 = vunpack.c.h.b16 %v1019
        %v3063 = vunpack.c.l.b16 %v1020
        %v3064 = vunpack.c.h.b16 %v1020
        %v3065 = vunpack.c.l.b16 %v1021
        %v3066 = vunpack.c.h.b16 %v1021
        %v3067 = vunpack.c.l.b16 %v1022
        %v3068 = vunpack.c.h.b16 %v1022
        %v3069 = vunpack.c.l.b16 %v1023
        %v3070 = vunpack.c.h.b16 %v1023
        %v3071 = vunpack.c.l.b16 %v1024
        %v3072 = vunpack.c.h.b16 %v1024
        %v3073 = vunpack.c.l.b16 %v1025
        %v3074 = vunpack.c.h.b16 %v1025
        %v3075 = vunpack.c.l.b16 %v1026
        %v3076 = vunpack.c.h.b16 %v1026
        %v3077 = vunpack.c.l.b16 %v1027
        %v3078 = vunpack.c.h.b16 %v1027
        %v3079 = vunpack.c.l.b16 %v1028
        %v3080 = vunpack.c.h.b16 %v1028
        %v3081 = vunpack.c.l.b16 %v1029
        %v3082 = vunpack.c.h.b16 %v1029
        %v3083 = vunpack.c.l.b16 %v1030
        %v3084 = vunpack.c.h.b16 %v1030
        %v3085 = vunpack.c.l.b16 %v1031
        %v3086 = vunpack.c.h.b16 %v1031
        %v3087 = vunpack.c.l.b16 %v1032
        %v3088 = vunpack.c.h.b16 %v1032
        %v3089 = vunpack.c.l.b16 %v1033
        %v3090 = vunpack.c.h.b16 %v1033
        %v3091 = vunpack.c.l.b16 %v1034
        %v3092 = vunpack.c.h.b16 %v1034
        %v3093 = vunpack.c.l.b16 %v1035
        %v3094 = vunpack.c.h.b16 %v1035
        %v3095 = vunpack.c.l.b16 %v1036
        %v3096 = vunpack.c.h.b16 %v1036
        %v3097 = vunpack.c.l.b16 %v1037
        %v3098 = vunpack.c.h.b16 %v1037
        %v3099 = vunpack.c.l.b16 %v1038
        %v3100 = vunpack.c.h.b16 %v1038
        %v3101 = vunpack.c.l.b16 %v1039
        %v3102 = vunpack.c.h.b16 %v1039
        %v3103 = vunpack.c.l.b16 %v1040
        %v3104 = vunpack.c.h.b16 %v1040
        %v3105 = vunpack.c.l.b16 %v1041
        %v3106 = vunpack.c.h.b16 %v1041
        %v3107 = vunpack.c.l.b16 %v1042
        %v3108 = vunpack.c.h.b16 %v1042
        %v3109 = vunpack.c.l.b16 %v1043
        %v3110 = vunpack.c.h.b16 %v1043
        %v3111 = vunpack.c.l.b16 %v1044
        %v3112 = vunpack.c.h.b16 %v1044
        %v3113 = vunpack.c.l.b16 %v1045
        %v3114 = vunpack.c.h.b16 %v1045
        %v3115 = vunpack.c.l.b16 %v1046
        %v3116 = vunpack.c.h.b16 %v1046
        %v3117 = vunpack.c.l.b16 %v1047
        %v3118 = vunpack.c.h.b16 %v1047
        %v3119 = vunpack.c.l.b16 %v1048
        %v3120 = vunpack.c.h.b16 %v1048
        %v3121 = vunpack.c.l.b16 %v1049
        %v3122 = vunpack.c.h.b16 %v1049
        %v3123 = vunpack.c.l.b16 %v1050
        %v3124 = vunpack.c.h.b16 %v1050
        %v3125 = vunpack.c.l.b16 %v1051
        %v3126 = vunpack.c.h.b16 %v1051
        %v3127 = vunpack.c.l.b16 %v1052
        %v3128 = vunpack.c.h.b16 %v1052
        %v3129 = vunpack.c.l.b16 %v1053
        %v3130 = vunpack.c.h.b16 %v1053
        %v3131 = vunpack.c.l.b16 %v1054
        %v3132 = vunpack.c.h.b16 %v1054
        %v3133 = vunpack.c.l.b16 %v1055
        %v3134 = vunpack.c.h.b16 %v1055
        %v3135 = vunpack.c.l.b16 %v1056
        %v3136 = vunpack.c.h.b16 %v1056
        %v3137 = vunpack.c.l.b16 %v1057
        %v3138 = vunpack.c.h.b16 %v1057
        %v3139 = vunpack.c.l.b16 %v1058
        %v3140 = vunpack.c.h.b16 %v1058
        %v3141 = vunpack.c.l.b16 %v1059
        %v3142 = vunpack.c.h.b16 %v1059
        %v3143 = vunpack.c.l.b16 %v1060
        %v3144 = vunpack.c.h.b16 %v1060
        %v3145 = vunpack.c.l.b16 %v1061
        %v3146 = vunpack.c.h.b16 %v1061
        %v3147 = vunpack.c.l.b16 %v1062
        %v3148 = vunpack.c.h.b16 %v1062
        %v3149 = vunpack.c.l.b16 %v1063
        %v3150 = vunpack.c.h.b16 %v1063
        %v3151 = vunpack.c.l.b16 %v1064
        %v3152 = vunpack.c.h.b16 %v1064
        %v3153 = vunpack.c.l.b16 %v1065
        %v3154 = vunpack.c.h.b16 %v1065
        %v3155 = vunpack.c.l.b16 %v1066
        %v3156 = vunpack.c.h.b16 %v1066
        %v3157 = vunpack.c.l.b16 %v1067
        %v3158 = vunpack.c.h.b16 %v1067
        %v3159 = vunpack.c.l.b16 %v1068
        %v3160 = vunpack.c.h.b16 %v1068
        %v3161 = vunpack.c.l.b16 %v1069
        %v3162 = vunpack.c.h.b16 %v1069
        %v3163 = vunpack.c.l.b16 %v1070
        %v3164 = vunpack.c.h.b16 %v1070
        %v3165 = vunpack.c.l.b16 %v1071
        %v3166 = vunpack.c.h.b16 %v1071
        %v3167 = vunpack.c.l.b16 %v1072
        %v3168 = vunpack.c.h.b16 %v1072
        %v3169 = vunpack.c.l.b16 %v1073
        %v3170 = vunpack.c.h.b16 %v1073
        %v3171 = vunpack.c.l.b16 %v1074
        %v3172 = vunpack.c.h.b16 %v1074
        %v3173 = vunpack.c.l.b16 %v1075
        %v3174 = vunpack.c.h.b16 %v1075
        %v3175 = vunpack.c.l.b16 %v1076
        %v3176 = vunpack.c.h.b16 %v1076
        %v3177 = vunpack.c.l.b16 %v1077
        %v3178 = vunpack.c.h.b16 %v1077
        %v3179 = vunpack.c.l.b16 %v1078
        %v3180 = vunpack.c.h.b16 %v1078
        %v3181 = vunpack.c.l.b16 %v1079
        %v3182 = vunpack.c.h.b16 %v1079
        %v3183 = vunpack.c.l.b16 %v1080
        %v3184 = vunpack.c.h.b16 %v1080
        %v3185 = vunpack.c.l.b16 %v1081
        %v3186 = vunpack.c.h.b16 %v1081
        %v3187 = vunpack.c.l.b16 %v1082
        %v3188 = vunpack.c.h.b16 %v1082
        %v3189 = vunpack.c.l.b16 %v1083
        %v3190 = vunpack.c.h.b16 %v1083
        %v3191 = vunpack.c.l.b16 %v1084
        %v3192 = vunpack.c.h.b16 %v1084
        %v3193 = vunpack.c.l.b16 %v1085
        %v3194 = vunpack.c.h.b16 %v1085
        %v3195 = vunpack.c.l.b16 %v1086
        %v3196 = vunpack.c.h.b16 %v1086
        %v3197 = vunpack.c.l.b16 %v1087
        %v3198 = vunpack.c.h.b16 %v1087
        %v3199 = vunpack.c.l.b16 %v1088
        %v3200 = vunpack.c.h.b16 %v1088
        %v3201 = vunpack.c.l.b16 %v1089
        %v3202 = vunpack.c.h.b16 %v1089
        %v3203 = vunpack.c.l.b16 %v1090
        %v3204 = vunpack.c.h.b16 %v1090
        %v3205 = vunpack.c.l.b16 %v1091
        %v3206 = vunpack.c.h.b16 %v1091
        %v3207 = vunpack.c.l.b16 %v1092
        %v3208 = vunpack.c.h.b16 %v1092
        %v3209 = vunpack.c.l.b16 %v1093
        %v3210 = vunpack.c.h.b16 %v1093
        %v3211 = vunpack.c.l.b16 %v1094
        %v3212 = vunpack.c.h.b16 %v1094
        %v3213 = vunpack.c.l.b16 %v1095
        %v3214 = vunpack.c.h.b16 %v1095
        %v3215 = vunpack.c.l.b16 %v1096
        %v3216 = vunpack.c.h.b16 %v1096
        %v3217 = vunpack.c.l.b16 %v1097
        %v3218 = vunpack.c.h.b16 %v1097
        %v3219 = vunpack.c.l.b16 %v1098
        %v3220 = vunpack.c.h.b16 %v1098
        %v3221 = vunpack.c.l.b16 %v1099
        %v3222 = vunpack.c.h.b16 %v1099
        %v3223 = vunpack.c.l.b16 %v1100
        %v3224 = vunpack.c.h.b16 %v1100
        %v3225 = vunpack.c.l.b16 %v1101
        %v3226 = vunpack.c.h.b16 %v1101
        %v3227 = vunpack.c.l.b16 %v1102
        %v3228 = vunpack.c.h.b16 %v1102
        %v3229 = vunpack.c.l.b16 %v1103
        %v3230 = vunpack.c.h.b16 %v1103
        %v3231 = vunpack.c.l.b16 %v1104
        %v3232 = vunpack.c.h.b16 %v1104
        %v3233 = vunpack.c.l.b16 %v1105
        %v3234 = vunpack.c.h.b16 %v1105
        %v3235 = vunpack.c.l.b16 %v1106
        %v3236 = vunpack.c.h.b16 %v1106
        %v3237 = vunpack.c.l.b16 %v1107
        %v3238 = vunpack.c.h.b16 %v1107
        %v3239 = vunpack.c.l.b16 %v1108
        %v3240 = vunpack.c.h.b16 %v1108
        %v3241 = vunpack.c.l.b16 %v1109
        %v3242 = vunpack.c.h.b16 %v1109
        %v3243 = vunpack.c.l.b16 %v1110
        %v3244 = vunpack.c.h.b16 %v1110
        %v3245 = vunpack.c.l.b16 %v1111
        %v3246 = vunpack.c.h.b16 %v1111
        %v3247 = vunpack.c.l.b16 %v1112
        %v3248 = vunpack.c.h.b16 %v1112
        %v3249 = vunpack.c.l.b16 %v1113
        %v3250 = vunpack.c.h.b16 %v1113
        %v3251 = vunpack.c.l.b16 %v1114
        %v3252 = vunpack.c.h.b16 %v1114
        %v3253 = vunpack.c.l.b16 %v1115
        %v3254 = vunpack.c.h.b16 %v1115
        %v3255 = vunpack.c.l.b16 %v1116
        %v3256 = vunpack.c.h.b16 %v1116
        %v3257 = vunpack.c.l.b16 %v1117
        %v3258 = vunpack.c.h.b16 %v1117
        %v3259 = vunpack.c.l.b16 %v1118
        %v3260 = vunpack.c.h.b16 %v1118
        %v3261 = vunpack.c.l.b16 %v1119
        %v3262 = vunpack.c.h.b16 %v1119
        %v3263 = vunpack.c.l.b16 %v1120
        %v3264 = vunpack.c.h.b16 %v1120
        %v3265 = vunpack.c.l.b16 %v1121
        %v3266 = vunpack.c.h.b16 %v1121
        %v3267 = vunpack.c.l.b16 %v1122
        %v3268 = vunpack.c.h.b16 %v1122
        %v3269 = vunpack.c.l.b16 %v1123
        %v3270 = vunpack.c.h.b16 %v1123
        %v3271 = vunpack.c.l.b16 %v1124
        %v3272 = vunpack.c.h.b16 %v1124
        %v3273 = vunpack.c.l.b16 %v1125
        %v3274 = vunpack.c.h.b16 %v1125
        %v3275 = vunpack.c.l.b16 %v1126
        %v3276 = vunpack.c.h.b16 %v1126
        %v3277 = vunpack.c.l.b16 %v1127
        %v3278 = vunpack.c.h.b16 %v1127
        %v3279 = vunpack.c.l.b16 %v1128
        %v3280 = vunpack.c.h.b16 %v1128
        %v3281 = vunpack.c.l.b16 %v1129
        %v3282 = vunpack.c.h.b16 %v1129
        %v3283 = vunpack.c.l.b16 %v1130
        %v3284 = vunpack.c.h.b16 %v1130
        %v3285 = vunpack.c.l.b16 %v1131
        %v3286 = vunpack.c.h.b16 %v1131
        %v3287 = vunpack.c.l.b16 %v1132
        %v3288 = vunpack.c.h.b16 %v1132
        %v3289 = vunpack.c.l.b16 %v1133
        %v3290 = vunpack.c.h.b16 %v1133
        %v3291 = vunpack.c.l.b16 %v1134
        %v3292 = vunpack.c.h.b16 %v1134
        %v3293 = vunpack.c.l.b16 %v1135
        %v3294 = vunpack.c.h.b16 %v1135
        %v3295 = vunpack.c.l.b16 %v1136
        %v3296 = vunpack.c.h.b16 %v1136
        %v3297 = vunpack.c.l.b16 %v1137
        %v3298 = vunpack.c.h.b16 %v1137
        %v3299 = vunpack.c.l.b16 %v1138
        %v3300 = vunpack.c.h.b16 %v1138
        %v3301 = vunpack.c.l.b16 %v1139
        %v3302 = vunpack.c.h.b16 %v1139
        %v3303 = vunpack.c.l.b16 %v1140
        %v3304 = vunpack.c.h.b16 %v1140
        %v3305 = vunpack.c.l.b16 %v1141
        %v3306 = vunpack.c.h.b16 %v1141
        %v3307 = vunpack.c.l.b16 %v1142
        %v3308 = vunpack.c.h.b16 %v1142
        %v3309 = vunpack.c.l.b16 %v1143
        %v3310 = vunpack.c.h.b16 %v1143
        %v3311 = vunpack.c.l.b16 %v1144
        %v3312 = vunpack.c.h.b16 %v1144
        %v3313 = vunpack.c.l.b16 %v1145
        %v3314 = vunpack.c.h.b16 %v1145
        %v3315 = vunpack.c.l.b16 %v1146
        %v3316 = vunpack.c.h.b16 %v1146
        %v3317 = vunpack.c.l.b16 %v1147
        %v3318 = vunpack.c.h.b16 %v1147
        %v3319 = vunpack.c.l.b16 %v1148
        %v3320 = vunpack.c.h.b16 %v1148
        %v3321 = vunpack.c.l.b16 %v1149
        %v3322 = vunpack.c.h.b16 %v1149
        %v3323 = vunpack.c.l.b16 %v1150
        %v3324 = vunpack.c.h.b16 %v1150
        %v3325 = vunpack.c.l.b16 %v1151
        %v3326 = vunpack.c.h.b16 %v1151
        %v3327 = vunpack.c.l.b16 %v1152
        %v3328 = vunpack.c.h.b16 %v1152
        %v3329 = vunpack.c.l.b16 %v1153
        %v3330 = vunpack.c.h.b16 %v1153
        %v3331 = vunpack.c.l.b16 %v1154
        %v3332 = vunpack.c.h.b16 %v1154
        %v3333 = vunpack.c.l.b16 %v1155
        %v3334 = vunpack.c.h.b16 %v1155
        %v3335 = vunpack.c.l.b16 %v1156
        %v3336 = vunpack.c.h.b16 %v1156
        %v3337 = vunpack.c.l.b16 %v1157
        %v3338 = vunpack.c.h.b16 %v1157
        %v3339 = vunpack.c.l.b16 %v1158
        %v3340 = vunpack.c.h.b16 %v1158
        %v3341 = vunpack.c.l.b16 %v1159
        %v3342 = vunpack.c.h.b16 %v1159
        %v3343 = vunpack.c.l.b16 %v1160
        %v3344 = vunpack.c.h.b16 %v1160
        %v3345 = vunpack.c.l.b16 %v1161
        %v3346 = vunpack.c.h.b16 %v1161
        %v3347 = vunpack.c.l.b16 %v1162
        %v3348 = vunpack.c.h.b16 %v1162
        %v3349 = vunpack.c.l.b16 %v1163
        %v3350 = vunpack.c.h.b16 %v1163
        %v3351 = vunpack.c.l.b16 %v1164
        %v3352 = vunpack.c.h.b16 %v1164
        %v3353 = vunpack.c.l.b16 %v1165
        %v3354 = vunpack.c.h.b16 %v1165
        %v3355 = vunpack.c.l.b16 %v1166
        %v3356 = vunpack.c.h.b16 %v1166
        %v3357 = vunpack.c.l.b16 %v1167
        %v3358 = vunpack.c.h.b16 %v1167
        %v3359 = vunpack.c.l.b16 %v1168
        %v3360 = vunpack.c.h.b16 %v1168
        %v3361 = vunpack.c.l.b16 %v1169
        %v3362 = vunpack.c.h.b16 %v1169
        %v3363 = vunpack.c.l.b16 %v1170
        %v3364 = vunpack.c.h.b16 %v1170
        %v3365 = vunpack.c.l.b16 %v1171
        %v3366 = vunpack.c.h.b16 %v1171
        %v3367 = vunpack.c.l.b16 %v1172
        %v3368 = vunpack.c.h.b16 %v1172
        %v3369 = vunpack.c.l.b16 %v1173
        %v3370 = vunpack.c.h.b16 %v1173
        %v3371 = vunpack.c.l.b16 %v1174
        %v3372 = vunpack.c.h.b16 %v1174
        %v3373 = vunpack.c.l.b16 %v1175
        %v3374 = vunpack.c.h.b16 %v1175
        %v3375 = vunpack.c.l.b16 %v1176
        %v3376 = vunpack.c.h.b16 %v1176
        %v3377 = vunpack.c.l.b16 %v1177
        %v3378 = vunpack.c.h.b16 %v1177
        %v3379 = vunpack.c.l.b16 %v1178
        %v3380 = vunpack.c.h.b16 %v1178
        %v3381 = vunpack.c.l.b16 %v1179
        %v3382 = vunpack.c.h.b16 %v1179
        %v3383 = vunpack.c.l.b16 %v1180
        %v3384 = vunpack.c.h.b16 %v1180
        %v3385 = vunpack.c.l.b16 %v1181
        %v3386 = vunpack.c.h.b16 %v1181
        %v3387 = vunpack.c.l.b16 %v1182
        %v3388 = vunpack.c.h.b16 %v1182
        %v3389 = vunpack.c.l.b16 %v1183
        %v3390 = vunpack.c.h.b16 %v1183
        %v3391 = vunpack.c.l.b16 %v1184
        %v3392 = vunpack.c.h.b16 %v1184
        %v3393 = vpack.c.b16 %v2497, %v2369
        %v3394 = vpack.c.b16 %v2498, %v2370
        %v3395 = vpack.c.b16 %v2499, %v2371
        %v3396 = vpack.c.b16 %v2500, %v2372
        %v3397 = vpack.c.b16 %v2501, %v2373
        %v3398 = vpack.c.b16 %v2502, %v2374
        %v3399 = vpack.c.b16 %v2503, %v2375
        %v3400 = vpack.c.b16 %v2504, %v2376
        %v3401 = vpack.c.b16 %v2505, %v2377
        %v3402 = vpack.c.b16 %v2506, %v2378
        %v3403 = vpack.c.b16 %v2507, %v2379
        %v3404 = vpack.c.b16 %v2508, %v2380
        %v3405 = vpack.c.b16 %v2509, %v2381
        %v3406 = vpack.c.b16 %v2510, %v2382
        %v3407 = vpack.c.b16 %v2511, %v2383
        %v3408 = vpack.c.b16 %v2512, %v2384
        %v3409 = vpack.c.b16 %v2513, %v2385
        %v3410 = vpack.c.b16 %v2514, %v2386
        %v3411 = vpack.c.b16 %v2515, %v2387
        %v3412 = vpack.c.b16 %v2516, %v2388
        %v3413 = vpack.c.b16 %v2517, %v2389
        %v3414 = vpack.c.b16 %v2518, %v2390
        %v3415 = vpack.c.b16 %v2519, %v2391
        %v3416 = vpack.c.b16 %v2520, %v2392
        %v3417 = vpack.c.b16 %v2521, %v2393
        %v3418 = vpack.c.b16 %v2522, %v2394
        %v3419 = vpack.c.b16 %v2523, %v2395
        %v3420 = vpack.c.b16 %v2524, %v2396
        %v3421 = vpack.c.b16 %v2525, %v2397
        %v3422 = vpack.c.b16 %v2526, %v2398
        %v3423 = vpack.c.b16 %v2527, %v2399
        %v3424 = vpack.c.b16 %v2528, %v2400
        %v3425 = vpack.c.b16 %v2529, %v2401
        %v3426 = vpack.c.b16 %v2530, %v2402
        %v3427 = vpack.c.b16 %v2531, %v2403
        %v3428 = vpack.c.b16 %v2532, %v2404
        %v3429 = vpack.c.b16 %v2533, %v2405
        %v3430 = vpack.c.b16 %v2534, %v2406
        %v3431 = vpack.c.b16 %v2535, %v2407
        %v3432 = vpack.c.b16 %v2536, %v2408
        %v3433 = vpack.c.b16 %v2537, %v2409
        %v3434 = vpack.c.b16 %v2538, %v2410
        %v3435 = vpack.c.b16 %v2539, %v2411
        %v3436 = vpack.c.b16 %v2540, %v2412
        %v3437 = vpack.c.b16 %v2541, %v2413
        %v3438 = vpack.c.b16 %v2542, %v2414
        %v3439 = vpack.c.b16 %v2543, %v2415
        %v3440 = vpack.c.b16 %v2544, %v2416
        %v3441 = vpack.c.b16 %v2545, %v2417
        %v3442 = vpack.c.b16 %v2546, %v2418
        %v3443 = vpack.c.b16 %v2547, %v2419
        %v3444 = vpack.c.b16 %v2548, %v2420
        %v3445 = vpack.c.b16 %v2549, %v2421
        %v3446 = vpack.c.b16 %v2550, %v2422
        %v3447 = vpack.c.b16 %v2551, %v2423
        %v3448 = vpack.c.b16 %v2552, %v2424
        %v3449 = vpack.c.b16 %v2553, %v2425
        %v3450 = vpack.c.b16 %v2554, %v2426
        %v3451 = vpack.c.b16 %v2555, %v2427
        %v3452 = vpack.c.b16 %v2556, %v2428
        %v3453 = vpack.c.b16 %v2557, %v2429
        %v3454 = vpack.c.b16 %v2558, %v2430
        %v3455 = vpack.c.b16 %v2559, %v2431
        %v3456 = vpack.c.b16 %v2560, %v2432
        %v3457 = vpack.c.b16 %v2561, %v2433
        %v3458 = vpack.c.b16 %v2562, %v2434
        %v3459 = vpack.c.b16 %v2563, %v2435
        %v3460 = vpack.c.b16 %v2564, %v2436
        %v3461 = vpack.c.b16 %v2565, %v2437
        %v3462 = vpack.c.b16 %v2566, %v2438
        %v3463 = vpack.c.b16 %v2567, %v2439
        %v3464 = vpack.c.b16 %v2568, %v2440
        %v3465 = vpack.c.b16 %v2569, %v2441
        %v3466 = vpack.c.b16 %v2570, %v2442
        %v3467 = vpack.c.b16 %v2571, %v2443
        %v3468 = vpack.c.b16 %v2572, %v2444
        %v3469 = vpack.c.b16 %v2573, %v2445
        %v3470 = vpack.c.b16 %v2574, %v2446
        %v3471 = vpack.c.b16 %v2575, %v2447
        %v3472 = vpack.c.b16 %v2576, %v2448
        %v3473 = vpack.c.b16 %v2577, %v2449
        %v3474 = vpack.c.b16 %v2578, %v2450
        %v3475 = vpack.c.b16 %v2579, %v2451
        %v3476 = vpack.c.b16 %v2580, %v2452
        %v3477 = vpack.c.b16 %v2581, %v2453
        %v3478 = vpack.c.b16 %v2582, %v2454
        %v3479 = vpack.c.b16 %v2583, %v2455
        %v3480 = vpack.c.b16 %v2584, %v2456
        %v3481 = vpack.c.b16 %v2585, %v2457
        %v3482 = vpack.c.b16 %v2586, %v2458
        %v3483 = vpack.c.b16 %v2587, %v2459
        %v3484 = vpack.c.b16 %v2588, %v2460
        %v3485 = vpack.c.b16 %v2589, %v2461
        %v3486 = vpack.c.b16 %v2590, %v2462
        %v3487 = vpack.c.b16 %v2591, %v2463
        %v3488 = vpack.c.b16 %v2592, %v2464
        %v3489 = vpack.c.b16 %v2593, %v2465
        %v3490 = vpack.c.b16 %v2594, %v2466
        %v3491 = vpack.c.b16 %v2595, %v2467
        %v3492 = vpack.c.b16 %v2596, %v2468
        %v3493 = vpack.c.b16 %v2597, %v2469
        %v3494 = vpack.c.b16 %v2598, %v2470
        %v3495 = vpack.c.b16 %v2599, %v2471
        %v3496 = vpack.c.b16 %v2600, %v2472
        %v3497 = vpack.c.b16 %v2601, %v2473
        %v3498 = vpack.c.b16 %v2602, %v2474
        %v3499 = vpack.c.b16 %v2603, %v2475
        %v3500 = vpack.c.b16 %v2604, %v2476
        %v3501 = vpack.c.b16 %v2605, %v2477
        %v3502 = vpack.c.b16 %v2606, %v2478
        %v3503 = vpack.c.b16 %v2607, %v2479
        %v3504 = vpack.c.b16 %v2608, %v2480
        %v3505 = vpack.c.b16 %v2609, %v2481
        %v3506 = vpack.c.b16 %v2610, %v2482
        %v3507 = vpack.c.b16 %v2611, %v2483
        %v3508 = vpack.c.b16 %v2612, %v2484
        %v3509 = vpack.c.b16 %v2613, %v2485
        %v3510 = vpack.c.b16 %v2614, %v2486
        %v3511 = vpack.c.b16 %v2615, %v2487
        %v3512 = vpack.c.b16 %v2616, %v2488
        %v3513 = vpack.c.b16 %v2617, %v2489
        %v3514 = vpack.c.b16 %v2618, %v2490
        %v3515 = vpack.c.b16 %v2619, %v2491
        %v3516 = vpack.c.b16 %v2620, %v2492
        %v3517 = vpack.c.b16 %v2621, %v2493
        %v3518 = vpack.c.b16 %v2622, %v2494
        %v3519 = vpack.c.b16 %v2623, %v2495
        %v3520 = vpack.c.b16 %v2624, %v2496
        %v3521 = vpack.c.b16 %v2753, %v2625
        %v3522 = vpack.c.b16 %v2754, %v2626
        %v3523 = vpack.c.b16 %v2755, %v2627
        %v3524 = vpack.c.b16 %v2756, %v2628
        %v3525 = vpack.c.b16 %v2757, %v2629
        %v3526 = vpack.c.b16 %v2758, %v2630
        %v3527 = vpack.c.b16 %v2759, %v2631
        %v3528 = vpack.c.b16 %v2760, %v2632
        %v3529 = vpack.c.b16 %v2761, %v2633
        %v3530 = vpack.c.b16 %v2762, %v2634
        %v3531 = vpack.c.b16 %v2763, %v2635
        %v3532 = vpack.c.b16 %v2764, %v2636
        %v3533 = vpack.c.b16 %v2765, %v2637
        %v3534 = vpack.c.b16 %v2766, %v2638
        %v3535 = vpack.c.b16 %v2767, %v2639
        %v3536 = vpack.c.b16 %v2768, %v2640
        %v3537 = vpack.c.b16 %v2769, %v2641
        %v3538 = vpack.c.b16 %v2770, %v2642
        %v3539 = vpack.c.b16 %v2771, %v2643
        %v3540 = vpack.c.b16 %v2772, %v2644
        %v3541 = vpack.c.b16 %v2773, %v2645
        %v3542 = vpack.c.b16 %v2774, %v2646
        %v3543 = vpack.c.b16 %v2775, %v2647
        %v3544 = vpack.c.b16 %v2776, %v2648
        %v3545 = vpack.c.b16 %v2777, %v2649
        %v3546 = vpack.c.b16 %v2778, %v2650
        %v3547 = vpack.c.b16 %v2779, %v2651
        %v3548 = vpack.c.b16 %v2780, %v2652
        %v3549 = vpack.c.b16 %v2781, %v2653
        %v3550 = vpack.c.b16 %v2782, %v2654
        %v3551 = vpack.c.b16 %v2783, %v2655
        %v3552 = vpack.c.b16 %v2784, %v2656
        %v3553 = vpack.c.b16 %v2785, %v2657
        %v3554 = vpack.c.b16 %v2786, %v2658
        %v3555 = vpack.c.b16 %v2787, %v2659
        %v3556 = vpack.c.b16 %v2788, %v2660
        %v3557 = vpack.c.b16 %v2789, %v2661
        %v3558 = vpack.c.b16 %v2790, %v2662
        %v3559 = vpack.c.b16 %v2791, %v2663
        %v3560 = vpack.c.b16 %v2792, %v2664
        %v3561 = vpack.c.b16 %v2793, %v2665
        %v3562 = vpack.c.b16 %v2794, %v2666
        %v3563 = vpack.c.b16 %v2795, %v2667
        %v3564 = vpack.c.b16 %v2796, %v2668
        %v3565 = vpack.c.b16 %v2797, %v2669
        %v3566 = vpack.c.b16 %v2798, %v2670
        %v3567 = vpack.c.b16 %v2799, %v2671
        %v3568 = vpack.c.b16 %v2800, %v2672
        %v3569 = vpack.c.b16 %v2801, %v2673
        %v3570 = vpack.c.b16 %v2802, %v2674
        %v3571 = vpack.c.b16 %v2803, %v2675
        %v3572 = vpack.c.b16 %v2804, %v2676
        %v3573 = vpack.c.b16 %v2805, %v2677
        %v3574 = vpack.c.b16 %v2806, %v2678
        %v3575 = vpack.c.b16 %v2807, %v2679
        %v3576 = vpack.c.b16 %v2808, %v2680
        %v3577 = vpack.c.b16 %v2809, %v2681
        %v3578 = vpack.c.b16 %v2810, %v2682
        %v3579 = vpack.c.b16 %v2811, %v2683
        %v3580 = vpack.c.b16 %v2812, %v2684
        %v3581 = vpack.c.b16 %v2813, %v2685
        %v3582 = vpack.c.b16 %v2814, %v2686
        %v3583 = vpack.c.b16 %v2815, %v2687
        %v3584 = vpack.c.b16 %v2816, %v2688
        %v3585 = vpack.c.b16 %v2817, %v2689
        %v3586 = vpack.c.b16 %v2818, %v2690
        %v3587 = vpack.c.b16 %v2819, %v2691
        %v3588 = vpack.c.b16 %v2820, %v2692
        %v3589 = vpack.c.b16 %v2821, %v2693
        %v3590 = vpack.c.b16 %v2822, %v2694
        %v3591 = vpack.c.b16 %v2823, %v2695
        %v3592 = vpack.c.b16 %v2824, %v2696
        %v3593 = vpack.c.b16 %v2825, %v2697
        %v3594 = vpack.c.b16 %v2826, %v2698
        %v3595 = vpack.c.b16 %v2827, %v2699
        %v3596 = vpack.c.b16 %v2828, %v2700
        %v3597 = vpack.c.b16 %v2829, %v2701
        %v3598 = vpack.c.b16 %v2830, %v2702
        %v3599 = vpack.c.b16 %v2831, %v2703
        %v3600 = vpack.c.b16 %v2832, %v2704
        %v3601 = vpack.c.b16 %v2833, %v2705
        %v3602 = vpack.c.b16 %v2834, %v2706
        %v3603 = vpack.c.b16 %v2835, %v2707
        %v3604 = vpack.c.b16 %v2836, %v2708
        %v3605 = vpack.c.b16 %v2837, %v2709
        %v3606 = vpack.c.b16 %v2838, %v2710
        %v3607 = vpack.c.b16 %v2839, %v2711
        %v3608 = vpack.c.b16 %v2840, %v2712
        %v3609 = vpack.c.b16 %v2841, %v2713
        %v3610 = vpack.c.b16 %v2842, %v2714
        %v3611 = vpack.c.b16 %v2843, %v2715
        %v3612 = vpack.c.b16 %v2844, %v2716
        %v3613 = vpack.c.b16 %v2845, %v2717
        %v3614 = vpack.c.b16 %v2846, %v2718
        %v3615 = vpack.c.b16 %v2847, %v2719
        %v3616 = vpack.c.b16 %v2848, %v2720
        %v3617 = vpack.c.b16 %v2849, %v2721
        %v3618 = vpack.c.b16 %v2850, %v2722
        %v3619 = vpack.c.b16 %v2851, %v2723
        %v3620 = vpack.c.b16 %v2852, %v2724
        %v3621 = vpack.c.b16 %v2853, %v2725
        %v3622 = vpack.c.b16 %v2854, %v2726
        %v3623 = vpack.c.b16 %v2855, %v2727
        %v3624 = vpack.c.b16 %v2856, %v2728
        %v3625 = vpack.c.b16 %v2857, %v2729
        %v3626 = vpack.c.b16 %v2858, %v2730
        %v3627 = vpack.c.b16 %v2859, %v2731
        %v3628 = vpack.c.b16 %v2860, %v2732
        %v3629 = vpack.c.b16 %v2861, %v2733
        %v3630 = vpack.c.b16 %v2862, %v2734
        %v3631 = vpack.c.b16 %v2863, %v2735
        %v3632 = vpack.c.b16 %v2864, %v2736
        %v3633 = vpack.c.b16 %v2865, %v2737
        %v3634 = vpack.c.b16 %v2866, %v2738
        %v3635 = vpack.c.b16 %v2867, %v2739
        %v3636 = vpack.c.b16 %v2868, %v2740
        %v3637 = vpack.c.b16 %v2869, %v2741
        %v3638 = vpack.c.b16 %v2870, %v2742
        %v3639 = vpack.c.b16 %v2871, %v2743
        %v3640 = vpack.c.b16 %v2872, %v2744
        %v3641 = vpack.c.b16 %v2873, %v2745
        %v3642 = vpack.c.b16 %v2874, %v2746
        %v3643 = vpack.c.b16 %v2875, %v2747
        %v3644 = vpack.c.b16 %v2876, %v2748
        %v3645 = vpack.c.b16 %v2877, %v2749
        %v3646 = vpack.c.b16 %v2878, %v2750
        %v3647 = vpack.c.b16 %v2879, %v2751
        %v3648 = vpack.c.b16 %v2880, %v2752
        %v3649 = vpack.c.b16 %v3009, %v2881
        %v3650 = vpack.c.b16 %v3010, %v2882
        %v3651 = vpack.c.b16 %v3011, %v2883
        %v3652 = vpack.c.b16 %v3012, %v2884
        %v3653 = vpack.c.b16 %v3013, %v2885
        %v3654 = vpack.c.b16 %v3014, %v2886
        %v3655 = vpack.c.b16 %v3015, %v2887
        %v3656 = vpack.c.b16 %v3016, %v2888
        %v3657 = vpack.c.b16 %v3017, %v2889
        %v3658 = vpack.c.b16 %v3018, %v2890
        %v3659 = vpack.c.b16 %v3019, %v2891
        %v3660 = vpack.c.b16 %v3020, %v2892
        %v3661 = vpack.c.b16 %v3021, %v2893
        %v3662 = vpack.c.b16 %v3022, %v2894
        %v3663 = vpack.c.b16 %v3023, %v2895
        %v3664 = vpack.c.b16 %v3024, %v2896
        %v3665 = vpack.c.b16 %v3025, %v2897
        %v3666 = vpack.c.b16 %v3026, %v2898
        %v3667 = vpack.c.b16 %v3027, %v2899
        %v3668 = vpack.c.b16 %v3028, %v2900
        %v3669 = vpack.c.b16 %v3029, %v2901
        %v3670 = vpack.c.b16 %v3030, %v2902
        %v3671 = vpack.c.b16 %v3031, %v2903
        %v3672 = vpack.c.b16 %v3032, %v2904
        %v3673 = vpack.c.b16 %v3033, %v2905
        %v3674 = vpack.c.b16 %v3034, %v2906
        %v3675 = vpack.c.b16 %v3035, %v2907
        %v3676 = vpack.c.b16 %v3036, %v2908
        %v3677 = vpack.c.b16 %v3037, %v2909
        %v3678 = vpack.c.b16 %v3038, %v2910
        %v3679 = vpack.c.b16 %v3039, %v2911
        %v3680 = vpack.c.b16 %v3040, %v2912
        %v3681 = vpack.c.b16 %v3041, %v2913
        %v3682 = vpack.c.b16 %v3042, %v2914
        %v3683 = vpack.c.b16 %v3043, %v2915
        %v3684 = vpack.c.b16 %v3044, %v2916
        %v3685 = vpack.c.b16 %v3045, %v2917
        %v3686 = vpack.c.b16 %v3046, %v2918
        %v3687 = vpack.c.b16 %v3047, %v2919
        %v3688 = vpack.c.b16 %v3048, %v2920
        %v3689 = vpack.c.b16 %v3049, %v2921
        %v3690 = vpack.c.b16 %v3050, %v2922
        %v3691 = vpack.c.b16 %v3051, %v2923
        %v3692 = vpack.c.b16 %v3052, %v2924
        %v3693 = vpack.c.b16 %v3053, %v2925
        %v3694 = vpack.c.b16 %v3054, %v2926
        %v3695 = vpack.c.b16 %v3055, %v2927
        %v3696 = vpack.c.b16 %v3056, %v2928
        %v3697 = vpack.c.b16 %v3057, %v2929
        %v3698 = vpack.c.b16 %v3058, %v2930
        %v3699 = vpack.c.b16 %v3059, %v2931
        %v3700 = vpack.c.b16 %v3060, %v2932
        %v3701 = vpack.c.b16 %v3061, %v2933
        %v3702 = vpack.c.b16 %v3062, %v2934
        %v3703 = vpack.c.b16 %v3063, %v2935
        %v3704 = vpack.c.b16 %v3064, %v2936
        %v3705 = vpack.c.b16 %v3065, %v2937
        %v3706 = vpack.c.b16 %v3066, %v2938
        %v3707 = vpack.c.b16 %v3067, %v2939
        %v3708 = vpack.c.b16 %v3068, %v2940
        %v3709 = vpack.c.b16 %v3069, %v2941
        %v3710 = vpack.c.b16 %v3070, %v2942
        %v3711 = vpack.c.b16 %v3071, %v2943
        %v3712 = vpack.c.b16 %v3072, %v2944
        %v3713 = vpack.c.b16 %v3073, %v2945
        %v3714 = vpack.c.b16 %v3074, %v2946
        %v3715 = vpack.c.b16 %v3075, %v2947
        %v3716 = vpack.c.b16 %v3076, %v2948
        %v3717 = vpack.c.b16 %v3077, %v2949
        %v3718 = vpack.c.b16 %v3078, %v2950
        %v3719 = vpack.c.b16 %v3079, %v2951
        %v3720 = vpack.c.b16 %v3080, %v2952
        %v3721 = vpack.c.b16 %v3081, %v2953
        %v3722 = vpack.c.b16 %v3082, %v2954
        %v3723 = vpack.c.b16 %v3083, %v2955
        %v3724 = vpack.c.b16 %v3084, %v2956
        %v3725 = vpack.c.b16 %v3085, %v2957
        %v3726 = vpack.c.b16 %v3086, %v2958
        %v3727 = vpack.c.b16 %v3087, %v2959
        %v3728 = vpack.c.b16 %v3088, %v2960
        %v3729 = vpack.c.b16 %v3089, %v2961
        %v3730 = vpack.c.b16 %v3090, %v2962
        %v3731 = vpack.c.b16 %v3091, %v2963
        %v3732 = vpack.c.b16 %v3092, %v2964
        %v3733 = vpack.c.b16 %v3093, %v2965
        %v3734 = vpack.c.b16 %v3094, %v2966
        %v3735 = vpack.c.b16 %v3095, %v2967
        %v3736 = vpack.c.b16 %v3096, %v2968
        %v3737 = vpack.c.b16 %v3097, %v2969
        %v3738 = vpack.c.b16 %v3098, %v2970
        %v3739 = vpack.c.b16 %v3099, %v2971
        %v3740 = vpack.c.b16 %v3100, %v2972
        %v3741 = vpack.c.b16 %v3101, %v2973
        %v3742 = vpack.c.b16 %v3102, %v2974
        %v3743 = vpack.c.b16 %v3103, %v2975
        %v3744 = vpack.c.b16 %v3104, %v2976
        %v3745 = vpack.c.b16 %v3105, %v2977
        %v3746 = vpack.c.b16 %v3106, %v2978
        %v3747 = vpack.c.b16 %v3107, %v2979
        %v3748 = vpack.c.b16 %v3108, %v2980
        %v3749 = vpack.c.b16 %v3109, %v2981
        %v3750 = vpack.c.b16 %v3110, %v2982
        %v3751 = vpack.c.b16 %v3111, %v2983
        %v3752 = vpack.c.b16 %v3112, %v2984
        %v3753 = vpack.c.b16 %v3113, %v2985
        %v3754 = vpack.c.b16 %v3114, %v2986
        %v3755 = vpack.c.b16 %v3115, %v2987
        %v3756 = vpack.c.b16 %v3116, %v2988
        %v3757 = vpack.c.b16 %v3117, %v2989
        %v3758 = vpack.c.b16 %v3118, %v2990
        %v3759 = vpack.c.b16 %v3119, %v2991
        %v3760 = vpack.c.b16 %v3120, %v2992
        %v3761 = vpack.c.b16 %v3121, %v2993
        %v3762 = vpack.c.b16 %v3122, %v2994
        %v3763 = vpack.c.b16 %v3123, %v2995
        %v3764 = vpack.c.b16 %v3124, %v2996
        %v3765 = vpack.c.b16 %v3125, %v2997
        %v3766 = vpack.c.b16 %v3126, %v2998
        %v3767 = vpack.c.b16 %v3127, %v2999
        %v3768 = vpack.c.b16 %v3128, %v3000
        %v3769 = vpack.c.b16 %v3129, %v3001
        %v3770 = vpack.c.b16 %v3130, %v3002
        %v3771 = vpack.c.b16 %v3131, %v3003
        %v3772 = vpack.c.b16 %v3132, %v3004
        %v3773 = vpack.c.b16 %v3133, %v3005
        %v3774 = vpack.c.b16 %v3134, %v3006
        %v3775 = vpack.c.b16 %v3135, %v3007
        %v3776 = vpack.c.b16 %v3136, %v3008
        %v3777 = vpack.c.b16 %v3265, %v3137
        %v3778 = vpack.c.b16 %v3266, %v3138
        %v3779 = vpack.c.b16 %v3267, %v3139
        %v3780 = vpack.c.b16 %v3268, %v3140
        %v3781 = vpack.c.b16 %v3269, %v3141
        %v3782 = vpack.c.b16 %v3270, %v3142
        %v3783 = vpack.c.b16 %v3271, %v3143
        %v3784 = vpack.c.b16 %v3272, %v3144
        %v3785 = vpack.c.b16 %v3273, %v3145
        %v3786 = vpack.c.b16 %v3274, %v3146
        %v3787 = vpack.c.b16 %v3275, %v3147
        %v3788 = vpack.c.b16 %v3276, %v3148
        %v3789 = vpack.c.b16 %v3277, %v3149
        %v3790 = vpack.c.b16 %v3278, %v3150
        %v3791 = vpack.c.b16 %v3279, %v3151
        %v3792 = vpack.c.b16 %v3280, %v3152
        %v3793 = vpack.c.b16 %v3281, %v3153
        %v3794 = vpack.c.b16 %v3282, %v3154
        %v3795 = vpack.c.b16 %v3283, %v3155
        %v3796 = vpack.c.b16 %v3284, %v3156
        %v3797 = vpack.c.b16 %v3285, %v3157
        %v3798 = vpack.c.b16 %v3286, %v3158
        %v3799 = vpack.c.b16 %v3287, %v3159
        %v3800 = vpack.c.b16 %v3288, %v3160
        %v3801 = vpack.c.b16 %v3289, %v3161
        %v3802 = vpack.c.b16 %v3290, %v3162
        %v3803 = vpack.c.b16 %v3291, %v3163
        %v3804 = vpack.c.b16 %v3292, %v3164
        %v3805 = vpack.c.b16 %v3293, %v3165
        %v3806 = vpack.c.b16 %v3294, %v3166
        %v3807 = vpack.c.b16 %v3295, %v3167
        %v3808 = vpack.c.b16 %v3296, %v3168
        %v3809 = vpack.c.b16 %v3297, %v3169
        %v3810 = vpack.c.b16 %v3298, %v3170
        %v3811 = vpack.c.b16 %v3299, %v3171
        %v3812 = vpack.c.b16 %v3300, %v3172
        %v3813 = vpack.c.b16 %v3301, %v3173
        %v3814 = vpack.c.b16 %v3302, %v3174
        %v3815 = vpack.c.b16 %v3303, %v3175
        %v3816 = vpack.c.b16 %v3304, %v3176
        %v3817 = vpack.c.b16 %v3305, %v3177
        %v3818 = vpack.c.b16 %v3306, %v3178
        %v3819 = vpack.c.b16 %v3307, %v3179
        %v3820 = vpack.c.b16 %v3308, %v3180
        %v3821 = vpack.c.b16 %v3309, %v3181
        %v3822 = vpack.c.b16 %v3310, %v3182
        %v3823 = vpack.c.b16 %v3311, %v3183
        %v3824 = vpack.c.b16 %v3312, %v3184
        %v3825 = vpack.c.b16 %v3313, %v3185
        %v3826 = vpack.c.b16 %v3314, %v3186
        %v3827 = vpack.c.b16 %v3315, %v3187
        %v3828 = vpack.c.b16 %v3316, %v3188
        %v3829 = vpack.c.b16 %v3317, %v3189
        %v3830 = vpack.c.b16 %v3318, %v3190
        %v3831 = vpack.c.b16 %v3319, %v3191
        %v3832 = vpack.c.b16 %v3320, %v3192
        %v3833 = vpack.c.b16 %v3321, %v3193
        %v3834 = vpack.c.b16 %v3322, %v3194
        %v3835 = vpack.c.b16 %v3323, %v3195
        %v3836 = vpack.c.b16 %v3324, %v3196
        %v3837 = vpack.c.b16 %v3325, %v3197
        %v3838 = vpack.c.b16 %v3326, %v3198
        %v3839 = vpack.c.b16 %v3327, %v3199
        %v3840 = vpack.c.b16 %v3328, %v3200
        %v3841 = vpack.c.b16 %v3329, %v3201
        %v3842 = vpack.c.b16 %v3330, %v3202
        %v3843 = vpack.c.b16 %v3331, %v3203
        %v3844 = vpack.c.b16 %v3332, %v3204
        %v3845 = vpack.c.b16 %v3333, %v3205
        %v3846 = vpack.c.b16 %v3334, %v3206
        %v3847 = vpack.c.b16 %v3335, %v3207
        %v3848 = vpack.c.b16 %v3336, %v3208
        %v3849 = vpack.c.b16 %v3337, %v3209
        %v3850 = vpack.c.b16 %v3338, %v3210
        %v3851 = vpack.c.b16 %v3339, %v3211
        %v3852 = vpack.c.b16 %v3340, %v3212
        %v3853 = vpack.c.b16 %v3341, %v3213
        %v3854 = vpack.c.b16 %v3342, %v3214
        %v3855 = vpack.c.b16 %v3343, %v3215
        %v3856 = vpack.c.b16 %v3344, %v3216
        %v3857 = vpack.c.b16 %v3345, %v3217
        %v3858 = vpack.c.b16 %v3346, %v3218
        %v3859 = vpack.c.b16 %v3347, %v3219
        %v3860 = vpack.c.b16 %v3348, %v3220
        %v3861 = vpack.c.b16 %v3349, %v3221
        %v3862 = vpack.c.b16 %v3350, %v3222
        %v3863 = vpack.c.b16 %v3351, %v3223
        %v3864 = vpack.c.b16 %v3352, %v3224
        %v3865 = vpack.c.b16 %v3353, %v3225
        %v3866 = vpack.c.b16 %v3354, %v3226
        %v3867 = vpack.c.b16 %v3355, %v3227
        %v3868 = vpack.c.b16 %v3356, %v3228
        %v3869 = vpack.c.b16 %v3357, %v3229
        %v3870 = vpack.c.b16 %v3358, %v3230
        %v3871 = vpack.c.b16 %v3359, %v3231
        %v3872 = vpack.c.b16 %v3360, %v3232
        %v3873 = vpack.c.b16 %v3361, %v3233
        %v3874 = vpack.c.b16 %v3362, %v3234
        %v3875 = vpack.c.b16 %v3363, %v3235
        %v3876 = vpack.c.b16 %v3364, %v3236
        %v3877 = vpack.c.b16 %v3365, %v3237
        %v3878 = vpack.c.b16 %v3366, %v3238
        %v3879 = vpack.c.b16 %v3367, %v3239
        %v3880 = vpack.c.b16 %v3368, %v3240
        %v3881 = vpack.c.b16 %v3369, %v3241
        %v3882 = vpack.c.b16 %v3370, %v3242
        %v3883 = vpack.c.b16 %v3371, %v3243
        %v3884 = vpack.c.b16 %v3372, %v3244
        %v3885 = vpack.c.b16 %v3373, %v3245
        %v3886 = vpack.c.b16 %v3374, %v3246
        %v3887 = vpack.c.b16 %v3375, %v3247
        %v3888 = vpack.c.b16 %v3376, %v3248
        %v3889 = vpack.c.b16 %v3377, %v3249
        %v3890 = vpack.c.b16 %v3378, %v3250
        %v3891 = vpack.c.b16 %v3379, %v3251
        %v3892 = vpack.c.b16 %v3380, %v3252
        %v3893 = vpack.c.b16 %v3381, %v3253
        %v3894 = vpack.c.b16 %v3382, %v3254
        %v3895 = vpack.c.b16 %v3383, %v3255
        %v3896 = vpack.c.b16 %v3384, %v3256
        %v3897 = vpack.c.b16 %v3385, %v3257
        %v3898 = vpack.c.b16 %v3386, %v3258
        %v3899 = vpack.c.b16 %v3387, %v3259
        %v3900 = vpack.c.b16 %v3388, %v3260
        %v3901 = vpack.c.b16 %v3389, %v3261
        %v3902 = vpack.c.b16 %v3390, %v3262
        %v3903 = vpack.c.b16 %v3391, %v3263
        %v3904 = vpack.c.b16 %v3392, %v3264
        %v4418 = vsel %vm507, %v672, 0
        %4420 = vmatprep.subr.bf16.mxu0 %v3394
        %4421 = vmatpush1.bf16.msra.mxu0 %v3393
        %4422 = vmatprep.subr.bf16.mxu0 %v3522
        %4423 = vmatpush1.bf16.msra.mxu0 %v3521
        %4424 = vmatprep.subr.bf16.mxu0 %v3650
        %4425 = vmatpush1.bf16.msra.mxu0 %v3649
        %4426 = vmatprep.subr.bf16.mxu0 %v3778
        %4427 = vmatpush1.bf16.msra.mxu0 %v3777
        %4428 = vmatprep.subr.bf16.mxu0 0
        %4429 = vmatpush1.bf16.msra.mxu0 0
        %4430 = vmatprep.subr.bf16.mxu0 0
        %4431 = vmatpush1.bf16.msra.mxu0 0
        %4432 = vmatprep.subr.bf16.mxu0 0
        %4433 = vmatpush1.bf16.msra.mxu0 0
        %4434 = vmatprep.subr.bf16.mxu0 0
        %4435 = vmatpush1.bf16.msra.mxu0 0
        %4436 = vmatprep.subr.bf16.mxu0 0
        %4437 = vmatpush1.bf16.msra.mxu0 0
        %4438 = vmatprep.subr.bf16.mxu0 0
        %4439 = vmatpush1.bf16.msra.mxu0 0
        %4440 = vmatprep.subr.bf16.mxu0 0
        %4441 = vmatpush1.bf16.msra.mxu0 0
        %4442 = vmatprep.subr.bf16.mxu0 0
        %4443 = vmatpush1.bf16.msra.mxu0 0
        %4444 = vmatprep.subr.bf16.mxu0 0
        %4445 = vmatpush1.bf16.msra.mxu0 0
        %4446 = vmatprep.subr.bf16.mxu0 0
        %4447 = vmatpush1.bf16.msra.mxu0 0
        %4448 = vmatprep.subr.bf16.mxu0 0
        %4449 = vmatpush1.bf16.msra.mxu0 0
        %4450 = vmatprep.subr.bf16.mxu0 0
        %4451 = vmatpush1.bf16.msra.mxu0 0
        %4452 = vmatprep.mubr.bf16.mxu0 0
        %4453 = vmatmul.mubr.bf16.gmra.mrb[0].mxu0 %v4418
        %v4454 = vpop.f32.mrb[0].mxu0
        %v4455 = vadd.f32 %v1220, %v4454
        %v4456 = vpop.f32.mrb[0].mxu0
        %v4457 = vadd.f32 %v1224, %v4456
        %v4458 = vpop.f32.mrb[0].mxu0
        %v4459 = vpop.f32.mrb[0].mxu0
        %4460 = vdwg.mxu0
        %4461 = vmatprep.subr.bf16.mxu0 %v3396
        %4462 = vmatpush1.bf16.msra.mxu0 %v3395
        %4463 = vmatprep.subr.bf16.mxu0 %v3524
        %4464 = vmatpush1.bf16.msra.mxu0 %v3523
        %4465 = vmatprep.subr.bf16.mxu0 %v3652
        %4466 = vmatpush1.bf16.msra.mxu0 %v3651
        %4467 = vmatprep.subr.bf16.mxu0 %v3780
        %4468 = vmatpush1.bf16.msra.mxu0 %v3779
        %4469 = vmatprep.subr.bf16.mxu0 0
        %4470 = vmatpush1.bf16.msra.mxu0 0
        %4471 = vmatprep.subr.bf16.mxu0 0
        %4472 = vmatpush1.bf16.msra.mxu0 0
        %4473 = vmatprep.subr.bf16.mxu0 0
        %4474 = vmatpush1.bf16.msra.mxu0 0
        %4475 = vmatprep.subr.bf16.mxu0 0
        %4476 = vmatpush1.bf16.msra.mxu0 0
        %4477 = vmatprep.subr.bf16.mxu0 0
        %4478 = vmatpush1.bf16.msra.mxu0 0
        %4479 = vmatprep.subr.bf16.mxu0 0
        %4480 = vmatpush1.bf16.msra.mxu0 0
        %4481 = vmatprep.subr.bf16.mxu0 0
        %4482 = vmatpush1.bf16.msra.mxu0 0
        %4483 = vmatprep.subr.bf16.mxu0 0
        %4484 = vmatpush1.bf16.msra.mxu0 0
        %4485 = vmatprep.subr.bf16.mxu0 0
        %4486 = vmatpush1.bf16.msra.mxu0 0
        %4487 = vmatprep.subr.bf16.mxu0 0
        %4488 = vmatpush1.bf16.msra.mxu0 0
        %4489 = vmatprep.subr.bf16.mxu0 0
        %4490 = vmatpush1.bf16.msra.mxu0 0
        %4491 = vmatprep.subr.bf16.mxu0 0
        %4492 = vmatpush1.bf16.msra.mxu0 0
        %4493 = vmatprep.mubr.bf16.mxu0 0
        %4494 = vmatmul.mubr.bf16.gmra.mrb[0].mxu0 %v4418
        %v4495 = vpop.f32.mrb[0].mxu0
        %v4496 = vadd.f32 %v1228, %v4495
        %v4497 = vpop.f32.mrb[0].mxu0
        %v4498 = vadd.f32 %v1232, %v4497
        %v4499 = vpop.f32.mrb[0].mxu0
        %v4500 = vpop.f32.mrb[0].mxu0
        %4501 = vdwg.mxu0
        %4502 = vmatprep.subr.bf16.mxu0 %v3398
        %4503 = vmatpush1.bf16.msra.mxu0 %v3397
        %4504 = vmatprep.subr.bf16.mxu0 %v3526
        %4505 = vmatpush1.bf16.msra.mxu0 %v3525
        %4506 = vmatprep.subr.bf16.mxu0 %v3654
        %4507 = vmatpush1.bf16.msra.mxu0 %v3653
        %4508 = vmatprep.subr.bf16.mxu0 %v3782
        %4509 = vmatpush1.bf16.msra.mxu0 %v3781
        %4510 = vmatprep.subr.bf16.mxu0 0
        %4511 = vmatpush1.bf16.msra.mxu0 0
        %4512 = vmatprep.subr.bf16.mxu0 0
        %4513 = vmatpush1.bf16.msra.mxu0 0
        %4514 = vmatprep.subr.bf16.mxu0 0
        %4515 = vmatpush1.bf16.msra.mxu0 0
        %4516 = vmatprep.subr.bf16.mxu0 0
        %4517 = vmatpush1.bf16.msra.mxu0 0
        %4518 = vmatprep.subr.bf16.mxu0 0
        %4519 = vmatpush1.bf16.msra.mxu0 0
        %4520 = vmatprep.subr.bf16.mxu0 0
        %4521 = vmatpush1.bf16.msra.mxu0 0
        %4522 = vmatprep.subr.bf16.mxu0 0
        %4523 = vmatpush1.bf16.msra.mxu0 0
        %4524 = vmatprep.subr.bf16.mxu0 0
        %4525 = vmatpush1.bf16.msra.mxu0 0
        %4526 = vmatprep.subr.bf16.mxu0 0
        %4527 = vmatpush1.bf16.msra.mxu0 0
        %4528 = vmatprep.subr.bf16.mxu0 0
        %4529 = vmatpush1.bf16.msra.mxu0 0
        %4530 = vmatprep.subr.bf16.mxu0 0
        %4531 = vmatpush1.bf16.msra.mxu0 0
        %4532 = vmatprep.subr.bf16.mxu0 0
        %4533 = vmatpush1.bf16.msra.mxu0 0
        %4534 = vmatprep.mubr.bf16.mxu0 0
        %4535 = vmatmul.mubr.bf16.gmra.mrb[0].mxu0 %v4418
        %v4536 = vpop.f32.mrb[0].mxu0
        %v4537 = vadd.f32 %v1236, %v4536
        %v4538 = vpop.f32.mrb[0].mxu0
        %v4539 = vadd.f32 %v1240, %v4538
        %v4540 = vpop.f32.mrb[0].mxu0
        %v4541 = vpop.f32.mrb[0].mxu0
        %4542 = vdwg.mxu0
        %4543 = vmatprep.subr.bf16.mxu0 %v3400
        %4544 = vmatpush1.bf16.msra.mxu0 %v3399
        %4545 = vmatprep.subr.bf16.mxu0 %v3528
        %4546 = vmatpush1.bf16.msra.mxu0 %v3527
        %4547 = vmatprep.subr.bf16.mxu0 %v3656
        %4548 = vmatpush1.bf16.msra.mxu0 %v3655
        %4549 = vmatprep.subr.bf16.mxu0 %v3784
        %4550 = vmatpush1.bf16.msra.mxu0 %v3783
        %4551 = vmatprep.subr.bf16.mxu0 0
        %4552 = vmatpush1.bf16.msra.mxu0 0
        %4553 = vmatprep.subr.bf16.mxu0 0
        %4554 = vmatpush1.bf16.msra.mxu0 0
        %4555 = vmatprep.subr.bf16.mxu0 0
        %4556 = vmatpush1.bf16.msra.mxu0 0
        %4557 = vmatprep.subr.bf16.mxu0 0
        %4558 = vmatpush1.bf16.msra.mxu0 0
        %4559 = vmatprep.subr.bf16.mxu0 0
        %4560 = vmatpush1.bf16.msra.mxu0 0
        %4561 = vmatprep.subr.bf16.mxu0 0
        %4562 = vmatpush1.bf16.msra.mxu0 0
        %4563 = vmatprep.subr.bf16.mxu0 0
        %4564 = vmatpush1.bf16.msra.mxu0 0
        %4565 = vmatprep.subr.bf16.mxu0 0
        %4566 = vmatpush1.bf16.msra.mxu0 0
        %4567 = vmatprep.subr.bf16.mxu0 0
        %4568 = vmatpush1.bf16.msra.mxu0 0
        %4569 = vmatprep.subr.bf16.mxu0 0
        %4570 = vmatpush1.bf16.msra.mxu0 0
        %4571 = vmatprep.subr.bf16.mxu0 0
        %4572 = vmatpush1.bf16.msra.mxu0 0
        %4573 = vmatprep.subr.bf16.mxu0 0
        %4574 = vmatpush1.bf16.msra.mxu0 0
        %4575 = vmatprep.mubr.bf16.mxu0 0
        %4576 = vmatmul.mubr.bf16.gmra.mrb[0].mxu0 %v4418
        %v4577 = vpop.f32.mrb[0].mxu0
        %v4578 = vadd.f32 %v1244, %v4577
        %v4579 = vpop.f32.mrb[0].mxu0
        %v4580 = vadd.f32 %v1248, %v4579
        %v4581 = vpop.f32.mrb[0].mxu0
        %v4582 = vpop.f32.mrb[0].mxu0
        %4583 = vdwg.mxu0
        %4584 = vmatprep.subr.bf16.mxu0 %v3402
        %4585 = vmatpush1.bf16.msra.mxu0 %v3401
        %4586 = vmatprep.subr.bf16.mxu0 %v3530
        %4587 = vmatpush1.bf16.msra.mxu0 %v3529
        %4588 = vmatprep.subr.bf16.mxu0 %v3658
        %4589 = vmatpush1.bf16.msra.mxu0 %v3657
        %4590 = vmatprep.subr.bf16.mxu0 %v3786
        %4591 = vmatpush1.bf16.msra.mxu0 %v3785
        %4592 = vmatprep.subr.bf16.mxu0 0
        %4593 = vmatpush1.bf16.msra.mxu0 0
        %4594 = vmatprep.subr.bf16.mxu0 0
        %4595 = vmatpush1.bf16.msra.mxu0 0
        %4596 = vmatprep.subr.bf16.mxu0 0
        %4597 = vmatpush1.bf16.msra.mxu0 0
        %4598 = vmatprep.subr.bf16.mxu0 0
        %4599 = vmatpush1.bf16.msra.mxu0 0
        %4600 = vmatprep.subr.bf16.mxu0 0
        %4601 = vmatpush1.bf16.msra.mxu0 0
        %4602 = vmatprep.subr.bf16.mxu0 0
        %4603 = vmatpush1.bf16.msra.mxu0 0
        %4604 = vmatprep.subr.bf16.mxu0 0
        %4605 = vmatpush1.bf16.msra.mxu0 0
        %4606 = vmatprep.subr.bf16.mxu0 0
        %4607 = vmatpush1.bf16.msra.mxu0 0
        %4608 = vmatprep.subr.bf16.mxu0 0
        %4609 = vmatpush1.bf16.msra.mxu0 0
        %4610 = vmatprep.subr.bf16.mxu0 0
        %4611 = vmatpush1.bf16.msra.mxu0 0
        %4612 = vmatprep.subr.bf16.mxu0 0
        %4613 = vmatpush1.bf16.msra.mxu0 0
        %4614 = vmatprep.subr.bf16.mxu0 0
        %4615 = vmatpush1.bf16.msra.mxu0 0
        %4616 = vmatprep.mubr.bf16.mxu0 0
        %4617 = vmatmul.mubr.bf16.gmra.mrb[0].mxu0 %v4418
        %v4618 = vpop.f32.mrb[0].mxu0
        %v4619 = vadd.f32 %v1252, %v4618
        %v4620 = vpop.f32.mrb[0].mxu0
        %v4621 = vadd.f32 %v1256, %v4620
        %v4622 = vpop.f32.mrb[0].mxu0
        %v4623 = vpop.f32.mrb[0].mxu0
        %4624 = vdwg.mxu0
        %4625 = vmatprep.subr.bf16.mxu0 %v3404
        %4626 = vmatpush1.bf16.msra.mxu0 %v3403
        %4627 = vmatprep.subr.bf16.mxu0 %v3532
        %4628 = vmatpush1.bf16.msra.mxu0 %v3531
        %4629 = vmatprep.subr.bf16.mxu0 %v3660
        %4630 = vmatpush1.bf16.msra.mxu0 %v3659
        %4631 = vmatprep.subr.bf16.mxu0 %v3788
        %4632 = vmatpush1.bf16.msra.mxu0 %v3787
        %4633 = vmatprep.subr.bf16.mxu0 0
        %4634 = vmatpush1.bf16.msra.mxu0 0
        %4635 = vmatprep.subr.bf16.mxu0 0
        %4636 = vmatpush1.bf16.msra.mxu0 0
        %4637 = vmatprep.subr.bf16.mxu0 0
        %4638 = vmatpush1.bf16.msra.mxu0 0
        %4639 = vmatprep.subr.bf16.mxu0 0
        %4640 = vmatpush1.bf16.msra.mxu0 0
        %4641 = vmatprep.subr.bf16.mxu0 0
        %4642 = vmatpush1.bf16.msra.mxu0 0
        %4643 = vmatprep.subr.bf16.mxu0 0
        %4644 = vmatpush1.bf16.msra.mxu0 0
        %4645 = vmatprep.subr.bf16.mxu0 0
        %4646 = vmatpush1.bf16.msra.mxu0 0
        %4647 = vmatprep.subr.bf16.mxu0 0
        %4648 = vmatpush1.bf16.msra.mxu0 0
        %4649 = vmatprep.subr.bf16.mxu0 0
        %4650 = vmatpush1.bf16.msra.mxu0 0
        %4651 = vmatprep.subr.bf16.mxu0 0
        %4652 = vmatpush1.bf16.msra.mxu0 0
        %4653 = vmatprep.subr.bf16.mxu0 0
        %4654 = vmatpush1.bf16.msra.mxu0 0
        %4655 = vmatprep.subr.bf16.mxu0 0
        %4656 = vmatpush1.bf16.msra.mxu0 0
        %4657 = vmatprep.mubr.bf16.mxu0 0
        %4658 = vmatmul.mubr.bf16.gmra.mrb[0].mxu0 %v4418
        %v4659 = vpop.f32.mrb[0].mxu0
        %v4660 = vadd.f32 %v1260, %v4659
        %v4661 = vpop.f32.mrb[0].mxu0
        %v4662 = vadd.f32 %v1264, %v4661
        %v4663 = vpop.f32.mrb[0].mxu0
        %v4664 = vpop.f32.mrb[0].mxu0
        %4665 = vdwg.mxu0
        %4666 = vmatprep.subr.bf16.mxu0 %v3406
        %4667 = vmatpush1.bf16.msra.mxu0 %v3405
        %4668 = vmatprep.subr.bf16.mxu0 %v3534
        %4669 = vmatpush1.bf16.msra.mxu0 %v3533
        %4670 = vmatprep.subr.bf16.mxu0 %v3662
        %4671 = vmatpush1.bf16.msra.mxu0 %v3661
        %4672 = vmatprep.subr.bf16.mxu0 %v3790
        %4673 = vmatpush1.bf16.msra.mxu0 %v3789
        %4674 = vmatprep.subr.bf16.mxu0 0
        %4675 = vmatpush1.bf16.msra.mxu0 0
        %4676 = vmatprep.subr.bf16.mxu0 0
        %4677 = vmatpush1.bf16.msra.mxu0 0
        %4678 = vmatprep.subr.bf16.mxu0 0
        %4679 = vmatpush1.bf16.msra.mxu0 0
        %4680 = vmatprep.subr.bf16.mxu0 0
        %4681 = vmatpush1.bf16.msra.mxu0 0
        %4682 = vmatprep.subr.bf16.mxu0 0
        %4683 = vmatpush1.bf16.msra.mxu0 0
        %4684 = vmatprep.subr.bf16.mxu0 0
        %4685 = vmatpush1.bf16.msra.mxu0 0
        %4686 = vmatprep.subr.bf16.mxu0 0
        %4687 = vmatpush1.bf16.msra.mxu0 0
        %4688 = vmatprep.subr.bf16.mxu0 0
        %4689 = vmatpush1.bf16.msra.mxu0 0
        %4690 = vmatprep.subr.bf16.mxu0 0
        %4691 = vmatpush1.bf16.msra.mxu0 0
        %4692 = vmatprep.subr.bf16.mxu0 0
        %4693 = vmatpush1.bf16.msra.mxu0 0
        %4694 = vmatprep.subr.bf16.mxu0 0
        %4695 = vmatpush1.bf16.msra.mxu0 0
        %4696 = vmatprep.subr.bf16.mxu0 0
        %4697 = vmatpush1.bf16.msra.mxu0 0
        %4698 = vmatprep.mubr.bf16.mxu0 0
        %4699 = vmatmul.mubr.bf16.gmra.mrb[0].mxu0 %v4418
        %v4700 = vpop.f32.mrb[0].mxu0
        %v4701 = vadd.f32 %v1268, %v4700
        %v4702 = vpop.f32.mrb[0].mxu0
        %v4703 = vadd.f32 %v1272, %v4702
        %v4704 = vpop.f32.mrb[0].mxu0
        %v4705 = vpop.f32.mrb[0].mxu0
        %4706 = vdwg.mxu0
        %4707 = vmatprep.subr.bf16.mxu0 %v3408
        %4708 = vmatpush1.bf16.msra.mxu0 %v3407
        %4709 = vmatprep.subr.bf16.mxu0 %v3536
        %4710 = vmatpush1.bf16.msra.mxu0 %v3535
        %4711 = vmatprep.subr.bf16.mxu0 %v3664
        %4712 = vmatpush1.bf16.msra.mxu0 %v3663
        %4713 = vmatprep.subr.bf16.mxu0 %v3792
        %4714 = vmatpush1.bf16.msra.mxu0 %v3791
        %4715 = vmatprep.subr.bf16.mxu0 0
        %4716 = vmatpush1.bf16.msra.mxu0 0
        %4717 = vmatprep.subr.bf16.mxu0 0
        %4718 = vmatpush1.bf16.msra.mxu0 0
        %4719 = vmatprep.subr.bf16.mxu0 0
        %4720 = vmatpush1.bf16.msra.mxu0 0
        %4721 = vmatprep.subr.bf16.mxu0 0
        %4722 = vmatpush1.bf16.msra.mxu0 0
        %4723 = vmatprep.subr.bf16.mxu0 0
        %4724 = vmatpush1.bf16.msra.mxu0 0
        %4725 = vmatprep.subr.bf16.mxu0 0
        %4726 = vmatpush1.bf16.msra.mxu0 0
        %4727 = vmatprep.subr.bf16.mxu0 0
        %4728 = vmatpush1.bf16.msra.mxu0 0
        %4729 = vmatprep.subr.bf16.mxu0 0
        %4730 = vmatpush1.bf16.msra.mxu0 0
        %4731 = vmatprep.subr.bf16.mxu0 0
        %4732 = vmatpush1.bf16.msra.mxu0 0
        %4733 = vmatprep.subr.bf16.mxu0 0
        %4734 = vmatpush1.bf16.msra.mxu0 0
        %4735 = vmatprep.subr.bf16.mxu0 0
        %4736 = vmatpush1.bf16.msra.mxu0 0
        %4737 = vmatprep.subr.bf16.mxu0 0
        %4738 = vmatpush1.bf16.msra.mxu0 0
        %4739 = vmatprep.mubr.bf16.mxu0 0
        %4740 = vmatmul.mubr.bf16.gmra.mrb[0].mxu0 %v4418
        %v4741 = vpop.f32.mrb[0].mxu0
        %v4742 = vadd.f32 %v1276, %v4741
        %v4743 = vpop.f32.mrb[0].mxu0
        %v4744 = vadd.f32 %v1280, %v4743
        %v4745 = vpop.f32.mrb[0].mxu0
        %v4746 = vpop.f32.mrb[0].mxu0
        %4747 = vdwg.mxu0
        %4748 = vmatprep.subr.bf16.mxu0 %v3410
        %4749 = vmatpush1.bf16.msra.mxu0 %v3409
        %4750 = vmatprep.subr.bf16.mxu0 %v3538
        %4751 = vmatpush1.bf16.msra.mxu0 %v3537
        %4752 = vmatprep.subr.bf16.mxu0 %v3666
        %4753 = vmatpush1.bf16.msra.mxu0 %v3665
        %4754 = vmatprep.subr.bf16.mxu0 %v3794
        %4755 = vmatpush1.bf16.msra.mxu0 %v3793
        %4756 = vmatprep.subr.bf16.mxu0 0
        %4757 = vmatpush1.bf16.msra.mxu0 0
        %4758 = vmatprep.subr.bf16.mxu0 0
        %4759 = vmatpush1.bf16.msra.mxu0 0
        %4760 = vmatprep.subr.bf16.mxu0 0
        %4761 = vmatpush1.bf16.msra.mxu0 0
        %4762 = vmatprep.subr.bf16.mxu0 0
        %4763 = vmatpush1.bf16.msra.mxu0 0
        %4764 = vmatprep.subr.bf16.mxu0 0
        %4765 = vmatpush1.bf16.msra.mxu0 0
        %4766 = vmatprep.subr.bf16.mxu0 0
        %4767 = vmatpush1.bf16.msra.mxu0 0
        %4768 = vmatprep.subr.bf16.mxu0 0
        %4769 = vmatpush1.bf16.msra.mxu0 0
        %4770 = vmatprep.subr.bf16.mxu0 0
        %4771 = vmatpush1.bf16.msra.mxu0 0
        %4772 = vmatprep.subr.bf16.mxu0 0
        %4773 = vmatpush1.bf16.msra.mxu0 0
        %4774 = vmatprep.subr.bf16.mxu0 0
        %4775 = vmatpush1.bf16.msra.mxu0 0
        %4776 = vmatprep.subr.bf16.mxu0 0
        %4777 = vmatpush1.bf16.msra.mxu0 0
        %4778 = vmatprep.subr.bf16.mxu0 0
        %4779 = vmatpush1.bf16.msra.mxu0 0
        %4780 = vmatprep.mubr.bf16.mxu0 0
        %4781 = vmatmul.mubr.bf16.gmra.mrb[0].mxu0 %v4418
        %v4782 = vpop.f32.mrb[0].mxu0
        %v4783 = vadd.f32 %v1284, %v4782
        %v4784 = vpop.f32.mrb[0].mxu0
        %v4785 = vadd.f32 %v1288, %v4784
        %v4786 = vpop.f32.mrb[0].mxu0
        %v4787 = vpop.f32.mrb[0].mxu0
        %4788 = vdwg.mxu0
        %4789 = vmatprep.subr.bf16.mxu0 %v3412
        %4790 = vmatpush1.bf16.msra.mxu0 %v3411
        %4791 = vmatprep.subr.bf16.mxu0 %v3540
        %4792 = vmatpush1.bf16.msra.mxu0 %v3539
        %4793 = vmatprep.subr.bf16.mxu0 %v3668
        %4794 = vmatpush1.bf16.msra.mxu0 %v3667
        %4795 = vmatprep.subr.bf16.mxu0 %v3796
        %4796 = vmatpush1.bf16.msra.mxu0 %v3795
        %4797 = vmatprep.subr.bf16.mxu0 0
        %4798 = vmatpush1.bf16.msra.mxu0 0
        %4799 = vmatprep.subr.bf16.mxu0 0
        %4800 = vmatpush1.bf16.msra.mxu0 0
        %4801 = vmatprep.subr.bf16.mxu0 0
        %4802 = vmatpush1.bf16.msra.mxu0 0
        %4803 = vmatprep.subr.bf16.mxu0 0
        %4804 = vmatpush1.bf16.msra.mxu0 0
        %4805 = vmatprep.subr.bf16.mxu0 0
        %4806 = vmatpush1.bf16.msra.mxu0 0
        %4807 = vmatprep.subr.bf16.mxu0 0
        %4808 = vmatpush1.bf16.msra.mxu0 0
        %4809 = vmatprep.subr.bf16.mxu0 0
        %4810 = vmatpush1.bf16.msra.mxu0 0
        %4811 = vmatprep.subr.bf16.mxu0 0
        %4812 = vmatpush1.bf16.msra.mxu0 0
        %4813 = vmatprep.subr.bf16.mxu0 0
        %4814 = vmatpush1.bf16.msra.mxu0 0
        %4815 = vmatprep.subr.bf16.mxu0 0
        %4816 = vmatpush1.bf16.msra.mxu0 0
        %4817 = vmatprep.subr.bf16.mxu0 0
        %4818 = vmatpush1.bf16.msra.mxu0 0
        %4819 = vmatprep.subr.bf16.mxu0 0
        %4820 = vmatpush1.bf16.msra.mxu0 0
        %4821 = vmatprep.mubr.bf16.mxu0 0
        %4822 = vmatmul.mubr.bf16.gmra.mrb[0].mxu0 %v4418
        %v4823 = vpop.f32.mrb[0].mxu0
        %v4824 = vadd.f32 %v1292, %v4823
        %v4825 = vpop.f32.mrb[0].mxu0
        %v4826 = vadd.f32 %v1296, %v4825
        %v4827 = vpop.f32.mrb[0].mxu0
        %v4828 = vpop.f32.mrb[0].mxu0
        %4829 = vdwg.mxu0
        %4830 = vmatprep.subr.bf16.mxu0 %v3414
        %4831 = vmatpush1.bf16.msra.mxu0 %v3413
        %4832 = vmatprep.subr.bf16.mxu0 %v3542
        %4833 = vmatpush1.bf16.msra.mxu0 %v3541
        %4834 = vmatprep.subr.bf16.mxu0 %v3670
        %4835 = vmatpush1.bf16.msra.mxu0 %v3669
        %4836 = vmatprep.subr.bf16.mxu0 %v3798
        %4837 = vmatpush1.bf16.msra.mxu0 %v3797
        %4838 = vmatprep.subr.bf16.mxu0 0
        %4839 = vmatpush1.bf16.msra.mxu0 0
        %4840 = vmatprep.subr.bf16.mxu0 0
        %4841 = vmatpush1.bf16.msra.mxu0 0
        %4842 = vmatprep.subr.bf16.mxu0 0
        %4843 = vmatpush1.bf16.msra.mxu0 0
        %4844 = vmatprep.subr.bf16.mxu0 0
        %4845 = vmatpush1.bf16.msra.mxu0 0
        %4846 = vmatprep.subr.bf16.mxu0 0
        %4847 = vmatpush1.bf16.msra.mxu0 0
        %4848 = vmatprep.subr.bf16.mxu0 0
        %4849 = vmatpush1.bf16.msra.mxu0 0
        %4850 = vmatprep.subr.bf16.mxu0 0
        %4851 = vmatpush1.bf16.msra.mxu0 0
        %4852 = vmatprep.subr.bf16.mxu0 0
        %4853 = vmatpush1.bf16.msra.mxu0 0
        %4854 = vmatprep.subr.bf16.mxu0 0
        %4855 = vmatpush1.bf16.msra.mxu0 0
        %4856 = vmatprep.subr.bf16.mxu0 0
        %4857 = vmatpush1.bf16.msra.mxu0 0
        %4858 = vmatprep.subr.bf16.mxu0 0
        %4859 = vmatpush1.bf16.msra.mxu0 0
        %4860 = vmatprep.subr.bf16.mxu0 0
        %4861 = vmatpush1.bf16.msra.mxu0 0
        %4862 = vmatprep.mubr.bf16.mxu0 0
        %4863 = vmatmul.mubr.bf16.gmra.mrb[0].mxu0 %v4418
        %v4864 = vpop.f32.mrb[0].mxu0
        %v4865 = vadd.f32 %v1300, %v4864
        %v4866 = vpop.f32.mrb[0].mxu0
        %v4867 = vadd.f32 %v1304, %v4866
        %v4868 = vpop.f32.mrb[0].mxu0
        %v4869 = vpop.f32.mrb[0].mxu0
        %4870 = vdwg.mxu0
        %4871 = vmatprep.subr.bf16.mxu0 %v3416
        %4872 = vmatpush1.bf16.msra.mxu0 %v3415
        %4873 = vmatprep.subr.bf16.mxu0 %v3544
        %4874 = vmatpush1.bf16.msra.mxu0 %v3543
        %4875 = vmatprep.subr.bf16.mxu0 %v3672
        %4876 = vmatpush1.bf16.msra.mxu0 %v3671
        %4877 = vmatprep.subr.bf16.mxu0 %v3800
        %4878 = vmatpush1.bf16.msra.mxu0 %v3799
        %4879 = vmatprep.subr.bf16.mxu0 0
        %4880 = vmatpush1.bf16.msra.mxu0 0
        %4881 = vmatprep.subr.bf16.mxu0 0
        %4882 = vmatpush1.bf16.msra.mxu0 0
        %4883 = vmatprep.subr.bf16.mxu0 0
        %4884 = vmatpush1.bf16.msra.mxu0 0
        %4885 = vmatprep.subr.bf16.mxu0 0
        %4886 = vmatpush1.bf16.msra.mxu0 0
        %4887 = vmatprep.subr.bf16.mxu0 0
        %4888 = vmatpush1.bf16.msra.mxu0 0
        %4889 = vmatprep.subr.bf16.mxu0 0
        %4890 = vmatpush1.bf16.msra.mxu0 0
        %4891 = vmatprep.subr.bf16.mxu0 0
        %4892 = vmatpush1.bf16.msra.mxu0 0
        %4893 = vmatprep.subr.bf16.mxu0 0
        %4894 = vmatpush1.bf16.msra.mxu0 0
        %4895 = vmatprep.subr.bf16.mxu0 0
        %4896 = vmatpush1.bf16.msra.mxu0 0
        %4897 = vmatprep.subr.bf16.mxu0 0
        %4898 = vmatpush1.bf16.msra.mxu0 0
        %4899 = vmatprep.subr.bf16.mxu0 0
        %4900 = vmatpush1.bf16.msra.mxu0 0
        %4901 = vmatprep.subr.bf16.mxu0 0
        %4902 = vmatpush1.bf16.msra.mxu0 0
        %4903 = vmatprep.mubr.bf16.mxu0 0
        %4904 = vmatmul.mubr.bf16.gmra.mrb[0].mxu0 %v4418
        %v4905 = vpop.f32.mrb[0].mxu0
        %v4906 = vadd.f32 %v1308, %v4905
        %v4907 = vpop.f32.mrb[0].mxu0
        %v4908 = vadd.f32 %v1312, %v4907
        %v4909 = vpop.f32.mrb[0].mxu0
        %v4910 = vpop.f32.mrb[0].mxu0
        %4911 = vdwg.mxu0
        %4912 = vmatprep.subr.bf16.mxu0 %v3418
        %4913 = vmatpush1.bf16.msra.mxu0 %v3417
        %4914 = vmatprep.subr.bf16.mxu0 %v3546
        %4915 = vmatpush1.bf16.msra.mxu0 %v3545
        %4916 = vmatprep.subr.bf16.mxu0 %v3674
        %4917 = vmatpush1.bf16.msra.mxu0 %v3673
        %4918 = vmatprep.subr.bf16.mxu0 %v3802
        %4919 = vmatpush1.bf16.msra.mxu0 %v3801
        %4920 = vmatprep.subr.bf16.mxu0 0
        %4921 = vmatpush1.bf16.msra.mxu0 0
        %4922 = vmatprep.subr.bf16.mxu0 0
        %4923 = vmatpush1.bf16.msra.mxu0 0
        %4924 = vmatprep.subr.bf16.mxu0 0
        %4925 = vmatpush1.bf16.msra.mxu0 0
        %4926 = vmatprep.subr.bf16.mxu0 0
        %4927 = vmatpush1.bf16.msra.mxu0 0
        %4928 = vmatprep.subr.bf16.mxu0 0
        %4929 = vmatpush1.bf16.msra.mxu0 0
        %4930 = vmatprep.subr.bf16.mxu0 0
        %4931 = vmatpush1.bf16.msra.mxu0 0
        %4932 = vmatprep.subr.bf16.mxu0 0
        %4933 = vmatpush1.bf16.msra.mxu0 0
        %4934 = vmatprep.subr.bf16.mxu0 0
        %4935 = vmatpush1.bf16.msra.mxu0 0
        %4936 = vmatprep.subr.bf16.mxu0 0
        %4937 = vmatpush1.bf16.msra.mxu0 0
        %4938 = vmatprep.subr.bf16.mxu0 0
        %4939 = vmatpush1.bf16.msra.mxu0 0
        %4940 = vmatprep.subr.bf16.mxu0 0
        %4941 = vmatpush1.bf16.msra.mxu0 0
        %4942 = vmatprep.subr.bf16.mxu0 0
        %4943 = vmatpush1.bf16.msra.mxu0 0
        %4944 = vmatprep.mubr.bf16.mxu0 0
        %4945 = vmatmul.mubr.bf16.gmra.mrb[0].mxu0 %v4418
        %v4946 = vpop.f32.mrb[0].mxu0
        %v4947 = vadd.f32 %v1316, %v4946
        %v4948 = vpop.f32.mrb[0].mxu0
        %v4949 = vadd.f32 %v1320, %v4948
        %v4950 = vpop.f32.mrb[0].mxu0
        %v4951 = vpop.f32.mrb[0].mxu0
        %4952 = vdwg.mxu0
        %4953 = vmatprep.subr.bf16.mxu0 %v3420
        %4954 = vmatpush1.bf16.msra.mxu0 %v3419
        %4955 = vmatprep.subr.bf16.mxu0 %v3548
        %4956 = vmatpush1.bf16.msra.mxu0 %v3547
        %4957 = vmatprep.subr.bf16.mxu0 %v3676
        %4958 = vmatpush1.bf16.msra.mxu0 %v3675
        %4959 = vmatprep.subr.bf16.mxu0 %v3804
        %4960 = vmatpush1.bf16.msra.mxu0 %v3803
        %4961 = vmatprep.subr.bf16.mxu0 0
        %4962 = vmatpush1.bf16.msra.mxu0 0
        %4963 = vmatprep.subr.bf16.mxu0 0
        %4964 = vmatpush1.bf16.msra.mxu0 0
        %4965 = vmatprep.subr.bf16.mxu0 0
        %4966 = vmatpush1.bf16.msra.mxu0 0
        %4967 = vmatprep.subr.bf16.mxu0 0
        %4968 = vmatpush1.bf16.msra.mxu0 0
        %4969 = vmatprep.subr.bf16.mxu0 0
        %4970 = vmatpush1.bf16.msra.mxu0 0
        %4971 = vmatprep.subr.bf16.mxu0 0
        %4972 = vmatpush1.bf16.msra.mxu0 0
        %4973 = vmatprep.subr.bf16.mxu0 0
        %4974 = vmatpush1.bf16.msra.mxu0 0
        %4975 = vmatprep.subr.bf16.mxu0 0
        %4976 = vmatpush1.bf16.msra.mxu0 0
        %4977 = vmatprep.subr.bf16.mxu0 0
        %4978 = vmatpush1.bf16.msra.mxu0 0
        %4979 = vmatprep.subr.bf16.mxu0 0
        %4980 = vmatpush1.bf16.msra.mxu0 0
        %4981 = vmatprep.subr.bf16.mxu0 0
        %4982 = vmatpush1.bf16.msra.mxu0 0
        %4983 = vmatprep.subr.bf16.mxu0 0
        %4984 = vmatpush1.bf16.msra.mxu0 0
        %4985 = vmatprep.mubr.bf16.mxu0 0
        %4986 = vmatmul.mubr.bf16.gmra.mrb[0].mxu0 %v4418
        %v4987 = vpop.f32.mrb[0].mxu0
        %v4988 = vadd.f32 %v1324, %v4987
        %v4989 = vpop.f32.mrb[0].mxu0
        %v4990 = vadd.f32 %v1328, %v4989
        %v4991 = vpop.f32.mrb[0].mxu0
        %v4992 = vpop.f32.mrb[0].mxu0
        %4993 = vdwg.mxu0
        %4994 = vmatprep.subr.bf16.mxu0 %v3422
        %4995 = vmatpush1.bf16.msra.mxu0 %v3421
        %4996 = vmatprep.subr.bf16.mxu0 %v3550
        %4997 = vmatpush1.bf16.msra.mxu0 %v3549
        %4998 = vmatprep.subr.bf16.mxu0 %v3678
        %4999 = vmatpush1.bf16.msra.mxu0 %v3677
        %5000 = vmatprep.subr.bf16.mxu0 %v3806
        %5001 = vmatpush1.bf16.msra.mxu0 %v3805
        %5002 = vmatprep.subr.bf16.mxu0 0
        %5003 = vmatpush1.bf16.msra.mxu0 0
        %5004 = vmatprep.subr.bf16.mxu0 0
        %5005 = vmatpush1.bf16.msra.mxu0 0
        %5006 = vmatprep.subr.bf16.mxu0 0
        %5007 = vmatpush1.bf16.msra.mxu0 0
        %5008 = vmatprep.subr.bf16.mxu0 0
        %5009 = vmatpush1.bf16.msra.mxu0 0
        %5010 = vmatprep.subr.bf16.mxu0 0
        %5011 = vmatpush1.bf16.msra.mxu0 0
        %5012 = vmatprep.subr.bf16.mxu0 0
        %5013 = vmatpush1.bf16.msra.mxu0 0
        %5014 = vmatprep.subr.bf16.mxu0 0
        %5015 = vmatpush1.bf16.msra.mxu0 0
        %5016 = vmatprep.subr.bf16.mxu0 0
        %5017 = vmatpush1.bf16.msra.mxu0 0
        %5018 = vmatprep.subr.bf16.mxu0 0
        %5019 = vmatpush1.bf16.msra.mxu0 0
        %5020 = vmatprep.subr.bf16.mxu0 0
        %5021 = vmatpush1.bf16.msra.mxu0 0
        %5022 = vmatprep.subr.bf16.mxu0 0
        %5023 = vmatpush1.bf16.msra.mxu0 0
        %5024 = vmatprep.subr.bf16.mxu0 0
        %5025 = vmatpush1.bf16.msra.mxu0 0
        %5026 = vmatprep.mubr.bf16.mxu0 0
        %5027 = vmatmul.mubr.bf16.gmra.mrb[0].mxu0 %v4418
        %v5028 = vpop.f32.mrb[0].mxu0
        %v5029 = vadd.f32 %v1332, %v5028
        %v5030 = vpop.f32.mrb[0].mxu0
        %v5031 = vadd.f32 %v1336, %v5030
        %v5032 = vpop.f32.mrb[0].mxu0
        %v5033 = vpop.f32.mrb[0].mxu0
        %5034 = vdwg.mxu0
        %5035 = vmatprep.subr.bf16.mxu0 %v3424
        %5036 = vmatpush1.bf16.msra.mxu0 %v3423
        %5037 = vmatprep.subr.bf16.mxu0 %v3552
        %5038 = vmatpush1.bf16.msra.mxu0 %v3551
        %5039 = vmatprep.subr.bf16.mxu0 %v3680
        %5040 = vmatpush1.bf16.msra.mxu0 %v3679
        %5041 = vmatprep.subr.bf16.mxu0 %v3808
        %5042 = vmatpush1.bf16.msra.mxu0 %v3807
        %5043 = vmatprep.subr.bf16.mxu0 0
        %5044 = vmatpush1.bf16.msra.mxu0 0
        %5045 = vmatprep.subr.bf16.mxu0 0
        %5046 = vmatpush1.bf16.msra.mxu0 0
        %5047 = vmatprep.subr.bf16.mxu0 0
        %5048 = vmatpush1.bf16.msra.mxu0 0
        %5049 = vmatprep.subr.bf16.mxu0 0
        %5050 = vmatpush1.bf16.msra.mxu0 0
        %5051 = vmatprep.subr.bf16.mxu0 0
        %5052 = vmatpush1.bf16.msra.mxu0 0
        %5053 = vmatprep.subr.bf16.mxu0 0
        %5054 = vmatpush1.bf16.msra.mxu0 0
        %5055 = vmatprep.subr.bf16.mxu0 0
        %5056 = vmatpush1.bf16.msra.mxu0 0
        %5057 = vmatprep.subr.bf16.mxu0 0
        %5058 = vmatpush1.bf16.msra.mxu0 0
        %5059 = vmatprep.subr.bf16.mxu0 0
        %5060 = vmatpush1.bf16.msra.mxu0 0
        %5061 = vmatprep.subr.bf16.mxu0 0
        %5062 = vmatpush1.bf16.msra.mxu0 0
        %5063 = vmatprep.subr.bf16.mxu0 0
        %5064 = vmatpush1.bf16.msra.mxu0 0
        %5065 = vmatprep.subr.bf16.mxu0 0
        %5066 = vmatpush1.bf16.msra.mxu0 0
        %5067 = vmatprep.mubr.bf16.mxu0 0
        %5068 = vmatmul.mubr.bf16.gmra.mrb[0].mxu0 %v4418
        %v5069 = vpop.f32.mrb[0].mxu0
        %v5070 = vadd.f32 %v1340, %v5069
        %v5071 = vpop.f32.mrb[0].mxu0
        %v5072 = vadd.f32 %v1344, %v5071
        %v5073 = vpop.f32.mrb[0].mxu0
        %v5074 = vpop.f32.mrb[0].mxu0
        %5075 = vdwg.mxu0
        %5076 = vmatprep.subr.bf16.mxu0 %v3426
        %5077 = vmatpush1.bf16.msra.mxu0 %v3425
        %5078 = vmatprep.subr.bf16.mxu0 %v3554
        %5079 = vmatpush1.bf16.msra.mxu0 %v3553
        %5080 = vmatprep.subr.bf16.mxu0 %v3682
        %5081 = vmatpush1.bf16.msra.mxu0 %v3681
        %5082 = vmatprep.subr.bf16.mxu0 %v3810
        %5083 = vmatpush1.bf16.msra.mxu0 %v3809
        %5084 = vmatprep.subr.bf16.mxu0 0
        %5085 = vmatpush1.bf16.msra.mxu0 0
        %5086 = vmatprep.subr.bf16.mxu0 0
        %5087 = vmatpush1.bf16.msra.mxu0 0
        %5088 = vmatprep.subr.bf16.mxu0 0
        %5089 = vmatpush1.bf16.msra.mxu0 0
        %5090 = vmatprep.subr.bf16.mxu0 0
        %5091 = vmatpush1.bf16.msra.mxu0 0
        %5092 = vmatprep.subr.bf16.mxu0 0
        %5093 = vmatpush1.bf16.msra.mxu0 0
        %5094 = vmatprep.subr.bf16.mxu0 0
        %5095 = vmatpush1.bf16.msra.mxu0 0
        %5096 = vmatprep.subr.bf16.mxu0 0
        %5097 = vmatpush1.bf16.msra.mxu0 0
        %5098 = vmatprep.subr.bf16.mxu0 0
        %5099 = vmatpush1.bf16.msra.mxu0 0
        %5100 = vmatprep.subr.bf16.mxu0 0
        %5101 = vmatpush1.bf16.msra.mxu0 0
        %5102 = vmatprep.subr.bf16.mxu0 0
        %5103 = vmatpush1.bf16.msra.mxu0 0
        %5104 = vmatprep.subr.bf16.mxu0 0
        %5105 = vmatpush1.bf16.msra.mxu0 0
        %5106 = vmatprep.subr.bf16.mxu0 0
        %5107 = vmatpush1.bf16.msra.mxu0 0
        %5108 = vmatprep.mubr.bf16.mxu0 0
        %5109 = vmatmul.mubr.bf16.gmra.mrb[0].mxu0 %v4418
        %v5110 = vpop.f32.mrb[0].mxu0
        %v5111 = vadd.f32 %v1348, %v5110
        %v5112 = vpop.f32.mrb[0].mxu0
        %v5113 = vadd.f32 %v1352, %v5112
        %v5114 = vpop.f32.mrb[0].mxu0
        %v5115 = vpop.f32.mrb[0].mxu0
        %5116 = vdwg.mxu0
        %5117 = vmatprep.subr.bf16.mxu0 %v3428
        %5118 = vmatpush1.bf16.msra.mxu0 %v3427
        %5119 = vmatprep.subr.bf16.mxu0 %v3556
        %5120 = vmatpush1.bf16.msra.mxu0 %v3555
        %5121 = vmatprep.subr.bf16.mxu0 %v3684
        %5122 = vmatpush1.bf16.msra.mxu0 %v3683
        %5123 = vmatprep.subr.bf16.mxu0 %v3812
        %5124 = vmatpush1.bf16.msra.mxu0 %v3811
        %5125 = vmatprep.subr.bf16.mxu0 0
        %5126 = vmatpush1.bf16.msra.mxu0 0
        %5127 = vmatprep.subr.bf16.mxu0 0
        %5128 = vmatpush1.bf16.msra.mxu0 0
        %5129 = vmatprep.subr.bf16.mxu0 0
        %5130 = vmatpush1.bf16.msra.mxu0 0
        %5131 = vmatprep.subr.bf16.mxu0 0
        %5132 = vmatpush1.bf16.msra.mxu0 0
        %5133 = vmatprep.subr.bf16.mxu0 0
        %5134 = vmatpush1.bf16.msra.mxu0 0
        %5135 = vmatprep.subr.bf16.mxu0 0
        %5136 = vmatpush1.bf16.msra.mxu0 0
        %5137 = vmatprep.subr.bf16.mxu0 0
        %5138 = vmatpush1.bf16.msra.mxu0 0
        %5139 = vmatprep.subr.bf16.mxu0 0
        %5140 = vmatpush1.bf16.msra.mxu0 0
        %5141 = vmatprep.subr.bf16.mxu0 0
        %5142 = vmatpush1.bf16.msra.mxu0 0
        %5143 = vmatprep.subr.bf16.mxu0 0
        %5144 = vmatpush1.bf16.msra.mxu0 0
        %5145 = vmatprep.subr.bf16.mxu0 0
        %5146 = vmatpush1.bf16.msra.mxu0 0
        %5147 = vmatprep.subr.bf16.mxu0 0
        %5148 = vmatpush1.bf16.msra.mxu0 0
        %5149 = vmatprep.mubr.bf16.mxu0 0
        %5150 = vmatmul.mubr.bf16.gmra.mrb[0].mxu0 %v4418
        %v5151 = vpop.f32.mrb[0].mxu0
        %v5152 = vadd.f32 %v1356, %v5151
        %v5153 = vpop.f32.mrb[0].mxu0
        %v5154 = vadd.f32 %v1360, %v5153
        %v5155 = vpop.f32.mrb[0].mxu0
        %v5156 = vpop.f32.mrb[0].mxu0
        %5157 = vdwg.mxu0
        %5158 = vmatprep.subr.bf16.mxu0 %v3430
        %5159 = vmatpush1.bf16.msra.mxu0 %v3429
        %5160 = vmatprep.subr.bf16.mxu0 %v3558
        %5161 = vmatpush1.bf16.msra.mxu0 %v3557
        %5162 = vmatprep.subr.bf16.mxu0 %v3686
        %5163 = vmatpush1.bf16.msra.mxu0 %v3685
        %5164 = vmatprep.subr.bf16.mxu0 %v3814
        %5165 = vmatpush1.bf16.msra.mxu0 %v3813
        %5166 = vmatprep.subr.bf16.mxu0 0
        %5167 = vmatpush1.bf16.msra.mxu0 0
        %5168 = vmatprep.subr.bf16.mxu0 0
        %5169 = vmatpush1.bf16.msra.mxu0 0
        %5170 = vmatprep.subr.bf16.mxu0 0
        %5171 = vmatpush1.bf16.msra.mxu0 0
        %5172 = vmatprep.subr.bf16.mxu0 0
        %5173 = vmatpush1.bf16.msra.mxu0 0
        %5174 = vmatprep.subr.bf16.mxu0 0
        %5175 = vmatpush1.bf16.msra.mxu0 0
        %5176 = vmatprep.subr.bf16.mxu0 0
        %5177 = vmatpush1.bf16.msra.mxu0 0
        %5178 = vmatprep.subr.bf16.mxu0 0
        %5179 = vmatpush1.bf16.msra.mxu0 0
        %5180 = vmatprep.subr.bf16.mxu0 0
        %5181 = vmatpush1.bf16.msra.mxu0 0
        %5182 = vmatprep.subr.bf16.mxu0 0
        %5183 = vmatpush1.bf16.msra.mxu0 0
        %5184 = vmatprep.subr.bf16.mxu0 0
        %5185 = vmatpush1.bf16.msra.mxu0 0
        %5186 = vmatprep.subr.bf16.mxu0 0
        %5187 = vmatpush1.bf16.msra.mxu0 0
        %5188 = vmatprep.subr.bf16.mxu0 0
        %5189 = vmatpush1.bf16.msra.mxu0 0
        %5190 = vmatprep.mubr.bf16.mxu0 0
        %5191 = vmatmul.mubr.bf16.gmra.mrb[0].mxu0 %v4418
        %v5192 = vpop.f32.mrb[0].mxu0
        %v5193 = vadd.f32 %v1364, %v5192
        %v5194 = vpop.f32.mrb[0].mxu0
        %v5195 = vadd.f32 %v1368, %v5194
        %v5196 = vpop.f32.mrb[0].mxu0
        %v5197 = vpop.f32.mrb[0].mxu0
        %5198 = vdwg.mxu0
        %5199 = vmatprep.subr.bf16.mxu0 %v3432
        %5200 = vmatpush1.bf16.msra.mxu0 %v3431
        %5201 = vmatprep.subr.bf16.mxu0 %v3560
        %5202 = vmatpush1.bf16.msra.mxu0 %v3559
        %5203 = vmatprep.subr.bf16.mxu0 %v3688
        %5204 = vmatpush1.bf16.msra.mxu0 %v3687
        %5205 = vmatprep.subr.bf16.mxu0 %v3816
        %5206 = vmatpush1.bf16.msra.mxu0 %v3815
        %5207 = vmatprep.subr.bf16.mxu0 0
        %5208 = vmatpush1.bf16.msra.mxu0 0
        %5209 = vmatprep.subr.bf16.mxu0 0
        %5210 = vmatpush1.bf16.msra.mxu0 0
        %5211 = vmatprep.subr.bf16.mxu0 0
        %5212 = vmatpush1.bf16.msra.mxu0 0
        %5213 = vmatprep.subr.bf16.mxu0 0
        %5214 = vmatpush1.bf16.msra.mxu0 0
        %5215 = vmatprep.subr.bf16.mxu0 0
        %5216 = vmatpush1.bf16.msra.mxu0 0
        %5217 = vmatprep.subr.bf16.mxu0 0
        %5218 = vmatpush1.bf16.msra.mxu0 0
        %5219 = vmatprep.subr.bf16.mxu0 0
        %5220 = vmatpush1.bf16.msra.mxu0 0
        %5221 = vmatprep.subr.bf16.mxu0 0
        %5222 = vmatpush1.bf16.msra.mxu0 0
        %5223 = vmatprep.subr.bf16.mxu0 0
        %5224 = vmatpush1.bf16.msra.mxu0 0
        %5225 = vmatprep.subr.bf16.mxu0 0
        %5226 = vmatpush1.bf16.msra.mxu0 0
        %5227 = vmatprep.subr.bf16.mxu0 0
        %5228 = vmatpush1.bf16.msra.mxu0 0
        %5229 = vmatprep.subr.bf16.mxu0 0
        %5230 = vmatpush1.bf16.msra.mxu0 0
        %5231 = vmatprep.mubr.bf16.mxu0 0
        %5232 = vmatmul.mubr.bf16.gmra.mrb[0].mxu0 %v4418
        %v5233 = vpop.f32.mrb[0].mxu0
        %v5234 = vadd.f32 %v1372, %v5233
        %v5235 = vpop.f32.mrb[0].mxu0
        %v5236 = vadd.f32 %v1376, %v5235
        %v5237 = vpop.f32.mrb[0].mxu0
        %v5238 = vpop.f32.mrb[0].mxu0
        %5239 = vdwg.mxu0
        %5240 = vmatprep.subr.bf16.mxu0 %v3434
        %5241 = vmatpush1.bf16.msra.mxu0 %v3433
        %5242 = vmatprep.subr.bf16.mxu0 %v3562
        %5243 = vmatpush1.bf16.msra.mxu0 %v3561
        %5244 = vmatprep.subr.bf16.mxu0 %v3690
        %5245 = vmatpush1.bf16.msra.mxu0 %v3689
        %5246 = vmatprep.subr.bf16.mxu0 %v3818
        %5247 = vmatpush1.bf16.msra.mxu0 %v3817
        %5248 = vmatprep.subr.bf16.mxu0 0
        %5249 = vmatpush1.bf16.msra.mxu0 0
        %5250 = vmatprep.subr.bf16.mxu0 0
        %5251 = vmatpush1.bf16.msra.mxu0 0
        %5252 = vmatprep.subr.bf16.mxu0 0
        %5253 = vmatpush1.bf16.msra.mxu0 0
        %5254 = vmatprep.subr.bf16.mxu0 0
        %5255 = vmatpush1.bf16.msra.mxu0 0
        %5256 = vmatprep.subr.bf16.mxu0 0
        %5257 = vmatpush1.bf16.msra.mxu0 0
        %5258 = vmatprep.subr.bf16.mxu0 0
        %5259 = vmatpush1.bf16.msra.mxu0 0
        %5260 = vmatprep.subr.bf16.mxu0 0
        %5261 = vmatpush1.bf16.msra.mxu0 0
        %5262 = vmatprep.subr.bf16.mxu0 0
        %5263 = vmatpush1.bf16.msra.mxu0 0
        %5264 = vmatprep.subr.bf16.mxu0 0
        %5265 = vmatpush1.bf16.msra.mxu0 0
        %5266 = vmatprep.subr.bf16.mxu0 0
        %5267 = vmatpush1.bf16.msra.mxu0 0
        %5268 = vmatprep.subr.bf16.mxu0 0
        %5269 = vmatpush1.bf16.msra.mxu0 0
        %5270 = vmatprep.subr.bf16.mxu0 0
        %5271 = vmatpush1.bf16.msra.mxu0 0
        %5272 = vmatprep.mubr.bf16.mxu0 0
        %5273 = vmatmul.mubr.bf16.gmra.mrb[0].mxu0 %v4418
        %v5274 = vpop.f32.mrb[0].mxu0
        %v5275 = vadd.f32 %v1380, %v5274
        %v5276 = vpop.f32.mrb[0].mxu0
        %v5277 = vadd.f32 %v1384, %v5276
        %v5278 = vpop.f32.mrb[0].mxu0
        %v5279 = vpop.f32.mrb[0].mxu0
        %5280 = vdwg.mxu0
        %5281 = vmatprep.subr.bf16.mxu0 %v3436
        %5282 = vmatpush1.bf16.msra.mxu0 %v3435
        %5283 = vmatprep.subr.bf16.mxu0 %v3564
        %5284 = vmatpush1.bf16.msra.mxu0 %v3563
        %5285 = vmatprep.subr.bf16.mxu0 %v3692
        %5286 = vmatpush1.bf16.msra.mxu0 %v3691
        %5287 = vmatprep.subr.bf16.mxu0 %v3820
        %5288 = vmatpush1.bf16.msra.mxu0 %v3819
        %5289 = vmatprep.subr.bf16.mxu0 0
        %5290 = vmatpush1.bf16.msra.mxu0 0
        %5291 = vmatprep.subr.bf16.mxu0 0
        %5292 = vmatpush1.bf16.msra.mxu0 0
        %5293 = vmatprep.subr.bf16.mxu0 0
        %5294 = vmatpush1.bf16.msra.mxu0 0
        %5295 = vmatprep.subr.bf16.mxu0 0
        %5296 = vmatpush1.bf16.msra.mxu0 0
        %5297 = vmatprep.subr.bf16.mxu0 0
        %5298 = vmatpush1.bf16.msra.mxu0 0
        %5299 = vmatprep.subr.bf16.mxu0 0
        %5300 = vmatpush1.bf16.msra.mxu0 0
        %5301 = vmatprep.subr.bf16.mxu0 0
        %5302 = vmatpush1.bf16.msra.mxu0 0
        %5303 = vmatprep.subr.bf16.mxu0 0
        %5304 = vmatpush1.bf16.msra.mxu0 0
        %5305 = vmatprep.subr.bf16.mxu0 0
        %5306 = vmatpush1.bf16.msra.mxu0 0
        %5307 = vmatprep.subr.bf16.mxu0 0
        %5308 = vmatpush1.bf16.msra.mxu0 0
        %5309 = vmatprep.subr.bf16.mxu0 0
        %5310 = vmatpush1.bf16.msra.mxu0 0
        %5311 = vmatprep.subr.bf16.mxu0 0
        %5312 = vmatpush1.bf16.msra.mxu0 0
        %5313 = vmatprep.mubr.bf16.mxu0 0
        %5314 = vmatmul.mubr.bf16.gmra.mrb[0].mxu0 %v4418
        %v5315 = vpop.f32.mrb[0].mxu0
        %v5316 = vadd.f32 %v1388, %v5315
        %v5317 = vpop.f32.mrb[0].mxu0
        %v5318 = vadd.f32 %v1392, %v5317
        %v5319 = vpop.f32.mrb[0].mxu0
        %v5320 = vpop.f32.mrb[0].mxu0
        %5321 = vdwg.mxu0
        %5322 = vmatprep.subr.bf16.mxu0 %v3438
        %5323 = vmatpush1.bf16.msra.mxu0 %v3437
        %5324 = vmatprep.subr.bf16.mxu0 %v3566
        %5325 = vmatpush1.bf16.msra.mxu0 %v3565
        %5326 = vmatprep.subr.bf16.mxu0 %v3694
        %5327 = vmatpush1.bf16.msra.mxu0 %v3693
        %5328 = vmatprep.subr.bf16.mxu0 %v3822
        %5329 = vmatpush1.bf16.msra.mxu0 %v3821
        %5330 = vmatprep.subr.bf16.mxu0 0
        %5331 = vmatpush1.bf16.msra.mxu0 0
        %5332 = vmatprep.subr.bf16.mxu0 0
        %5333 = vmatpush1.bf16.msra.mxu0 0
        %5334 = vmatprep.subr.bf16.mxu0 0
        %5335 = vmatpush1.bf16.msra.mxu0 0
        %5336 = vmatprep.subr.bf16.mxu0 0
        %5337 = vmatpush1.bf16.msra.mxu0 0
        %5338 = vmatprep.subr.bf16.mxu0 0
        %5339 = vmatpush1.bf16.msra.mxu0 0
        %5340 = vmatprep.subr.bf16.mxu0 0
        %5341 = vmatpush1.bf16.msra.mxu0 0
        %5342 = vmatprep.subr.bf16.mxu0 0
        %5343 = vmatpush1.bf16.msra.mxu0 0
        %5344 = vmatprep.subr.bf16.mxu0 0
        %5345 = vmatpush1.bf16.msra.mxu0 0
        %5346 = vmatprep.subr.bf16.mxu0 0
        %5347 = vmatpush1.bf16.msra.mxu0 0
        %5348 = vmatprep.subr.bf16.mxu0 0
        %5349 = vmatpush1.bf16.msra.mxu0 0
        %5350 = vmatprep.subr.bf16.mxu0 0
        %5351 = vmatpush1.bf16.msra.mxu0 0
        %5352 = vmatprep.subr.bf16.mxu0 0
        %5353 = vmatpush1.bf16.msra.mxu0 0
        %5354 = vmatprep.mubr.bf16.mxu0 0
        %5355 = vmatmul.mubr.bf16.gmra.mrb[0].mxu0 %v4418
        %v5356 = vpop.f32.mrb[0].mxu0
        %v5357 = vadd.f32 %v1396, %v5356
        %v5358 = vpop.f32.mrb[0].mxu0
        %v5359 = vadd.f32 %v1400, %v5358
        %v5360 = vpop.f32.mrb[0].mxu0
        %v5361 = vpop.f32.mrb[0].mxu0
        %5362 = vdwg.mxu0
        %5363 = vmatprep.subr.bf16.mxu0 %v3440
        %5364 = vmatpush1.bf16.msra.mxu0 %v3439
        %5365 = vmatprep.subr.bf16.mxu0 %v3568
        %5366 = vmatpush1.bf16.msra.mxu0 %v3567
        %5367 = vmatprep.subr.bf16.mxu0 %v3696
        %5368 = vmatpush1.bf16.msra.mxu0 %v3695
        %5369 = vmatprep.subr.bf16.mxu0 %v3824
        %5370 = vmatpush1.bf16.msra.mxu0 %v3823
        %5371 = vmatprep.subr.bf16.mxu0 0
        %5372 = vmatpush1.bf16.msra.mxu0 0
        %5373 = vmatprep.subr.bf16.mxu0 0
        %5374 = vmatpush1.bf16.msra.mxu0 0
        %5375 = vmatprep.subr.bf16.mxu0 0
        %5376 = vmatpush1.bf16.msra.mxu0 0
        %5377 = vmatprep.subr.bf16.mxu0 0
        %5378 = vmatpush1.bf16.msra.mxu0 0
        %5379 = vmatprep.subr.bf16.mxu0 0
        %5380 = vmatpush1.bf16.msra.mxu0 0
        %5381 = vmatprep.subr.bf16.mxu0 0
        %5382 = vmatpush1.bf16.msra.mxu0 0
        %5383 = vmatprep.subr.bf16.mxu0 0
        %5384 = vmatpush1.bf16.msra.mxu0 0
        %5385 = vmatprep.subr.bf16.mxu0 0
        %5386 = vmatpush1.bf16.msra.mxu0 0
        %5387 = vmatprep.subr.bf16.mxu0 0
        %5388 = vmatpush1.bf16.msra.mxu0 0
        %5389 = vmatprep.subr.bf16.mxu0 0
        %5390 = vmatpush1.bf16.msra.mxu0 0
        %5391 = vmatprep.subr.bf16.mxu0 0
        %5392 = vmatpush1.bf16.msra.mxu0 0
        %5393 = vmatprep.subr.bf16.mxu0 0
        %5394 = vmatpush1.bf16.msra.mxu0 0
        %5395 = vmatprep.mubr.bf16.mxu0 0
        %5396 = vmatmul.mubr.bf16.gmra.mrb[0].mxu0 %v4418
        %v5397 = vpop.f32.mrb[0].mxu0
        %v5398 = vadd.f32 %v1404, %v5397
        %v5399 = vpop.f32.mrb[0].mxu0
        %v5400 = vadd.f32 %v1408, %v5399
        %v5401 = vpop.f32.mrb[0].mxu0
        %v5402 = vpop.f32.mrb[0].mxu0
        %5403 = vdwg.mxu0
        %5404 = vmatprep.subr.bf16.mxu0 %v3442
        %5405 = vmatpush1.bf16.msra.mxu0 %v3441
        %5406 = vmatprep.subr.bf16.mxu0 %v3570
        %5407 = vmatpush1.bf16.msra.mxu0 %v3569
        %5408 = vmatprep.subr.bf16.mxu0 %v3698
        %5409 = vmatpush1.bf16.msra.mxu0 %v3697
        %5410 = vmatprep.subr.bf16.mxu0 %v3826
        %5411 = vmatpush1.bf16.msra.mxu0 %v3825
        %5412 = vmatprep.subr.bf16.mxu0 0
        %5413 = vmatpush1.bf16.msra.mxu0 0
        %5414 = vmatprep.subr.bf16.mxu0 0
        %5415 = vmatpush1.bf16.msra.mxu0 0
        %5416 = vmatprep.subr.bf16.mxu0 0
        %5417 = vmatpush1.bf16.msra.mxu0 0
        %5418 = vmatprep.subr.bf16.mxu0 0
        %5419 = vmatpush1.bf16.msra.mxu0 0
        %5420 = vmatprep.subr.bf16.mxu0 0
        %5421 = vmatpush1.bf16.msra.mxu0 0
        %5422 = vmatprep.subr.bf16.mxu0 0
        %5423 = vmatpush1.bf16.msra.mxu0 0
        %5424 = vmatprep.subr.bf16.mxu0 0
        %5425 = vmatpush1.bf16.msra.mxu0 0
        %5426 = vmatprep.subr.bf16.mxu0 0
        %5427 = vmatpush1.bf16.msra.mxu0 0
        %5428 = vmatprep.subr.bf16.mxu0 0
        %5429 = vmatpush1.bf16.msra.mxu0 0
        %5430 = vmatprep.subr.bf16.mxu0 0
        %5431 = vmatpush1.bf16.msra.mxu0 0
        %5432 = vmatprep.subr.bf16.mxu0 0
        %5433 = vmatpush1.bf16.msra.mxu0 0
        %5434 = vmatprep.subr.bf16.mxu0 0
        %5435 = vmatpush1.bf16.msra.mxu0 0
        %5436 = vmatprep.mubr.bf16.mxu0 0
        %5437 = vmatmul.mubr.bf16.gmra.mrb[0].mxu0 %v4418
        %v5438 = vpop.f32.mrb[0].mxu0
        %v5439 = vadd.f32 %v1412, %v5438
        %v5440 = vpop.f32.mrb[0].mxu0
        %v5441 = vadd.f32 %v1416, %v5440
        %v5442 = vpop.f32.mrb[0].mxu0
        %v5443 = vpop.f32.mrb[0].mxu0
        %5444 = vdwg.mxu0
        %5445 = vmatprep.subr.bf16.mxu0 %v3444
        %5446 = vmatpush1.bf16.msra.mxu0 %v3443
        %5447 = vmatprep.subr.bf16.mxu0 %v3572
        %5448 = vmatpush1.bf16.msra.mxu0 %v3571
        %5449 = vmatprep.subr.bf16.mxu0 %v3700
        %5450 = vmatpush1.bf16.msra.mxu0 %v3699
        %5451 = vmatprep.subr.bf16.mxu0 %v3828
        %5452 = vmatpush1.bf16.msra.mxu0 %v3827
        %5453 = vmatprep.subr.bf16.mxu0 0
        %5454 = vmatpush1.bf16.msra.mxu0 0
        %5455 = vmatprep.subr.bf16.mxu0 0
        %5456 = vmatpush1.bf16.msra.mxu0 0
        %5457 = vmatprep.subr.bf16.mxu0 0
        %5458 = vmatpush1.bf16.msra.mxu0 0
        %5459 = vmatprep.subr.bf16.mxu0 0
        %5460 = vmatpush1.bf16.msra.mxu0 0
        %5461 = vmatprep.subr.bf16.mxu0 0
        %5462 = vmatpush1.bf16.msra.mxu0 0
        %5463 = vmatprep.subr.bf16.mxu0 0
        %5464 = vmatpush1.bf16.msra.mxu0 0
        %5465 = vmatprep.subr.bf16.mxu0 0
        %5466 = vmatpush1.bf16.msra.mxu0 0
        %5467 = vmatprep.subr.bf16.mxu0 0
        %5468 = vmatpush1.bf16.msra.mxu0 0
        %5469 = vmatprep.subr.bf16.mxu0 0
        %5470 = vmatpush1.bf16.msra.mxu0 0
        %5471 = vmatprep.subr.bf16.mxu0 0
        %5472 = vmatpush1.bf16.msra.mxu0 0
        %5473 = vmatprep.subr.bf16.mxu0 0
        %5474 = vmatpush1.bf16.msra.mxu0 0
        %5475 = vmatprep.subr.bf16.mxu0 0
        %5476 = vmatpush1.bf16.msra.mxu0 0
        %5477 = vmatprep.mubr.bf16.mxu0 0
        %5478 = vmatmul.mubr.bf16.gmra.mrb[0].mxu0 %v4418
        %v5479 = vpop.f32.mrb[0].mxu0
        %v5480 = vadd.f32 %v1420, %v5479
        %v5481 = vpop.f32.mrb[0].mxu0
        %v5482 = vadd.f32 %v1424, %v5481
        %v5483 = vpop.f32.mrb[0].mxu0
        %v5484 = vpop.f32.mrb[0].mxu0
        %5485 = vdwg.mxu0
        %5486 = vmatprep.subr.bf16.mxu0 %v3446
        %5487 = vmatpush1.bf16.msra.mxu0 %v3445
        %5488 = vmatprep.subr.bf16.mxu0 %v3574
        %5489 = vmatpush1.bf16.msra.mxu0 %v3573
        %5490 = vmatprep.subr.bf16.mxu0 %v3702
        %5491 = vmatpush1.bf16.msra.mxu0 %v3701
        %5492 = vmatprep.subr.bf16.mxu0 %v3830
        %5493 = vmatpush1.bf16.msra.mxu0 %v3829
        %5494 = vmatprep.subr.bf16.mxu0 0
        %5495 = vmatpush1.bf16.msra.mxu0 0
        %5496 = vmatprep.subr.bf16.mxu0 0
        %5497 = vmatpush1.bf16.msra.mxu0 0
        %5498 = vmatprep.subr.bf16.mxu0 0
        %5499 = vmatpush1.bf16.msra.mxu0 0
        %5500 = vmatprep.subr.bf16.mxu0 0
        %5501 = vmatpush1.bf16.msra.mxu0 0
        %5502 = vmatprep.subr.bf16.mxu0 0
        %5503 = vmatpush1.bf16.msra.mxu0 0
        %5504 = vmatprep.subr.bf16.mxu0 0
        %5505 = vmatpush1.bf16.msra.mxu0 0
        %5506 = vmatprep.subr.bf16.mxu0 0
        %5507 = vmatpush1.bf16.msra.mxu0 0
        %5508 = vmatprep.subr.bf16.mxu0 0
        %5509 = vmatpush1.bf16.msra.mxu0 0
        %5510 = vmatprep.subr.bf16.mxu0 0
        %5511 = vmatpush1.bf16.msra.mxu0 0
        %5512 = vmatprep.subr.bf16.mxu0 0
        %5513 = vmatpush1.bf16.msra.mxu0 0
        %5514 = vmatprep.subr.bf16.mxu0 0
        %5515 = vmatpush1.bf16.msra.mxu0 0
        %5516 = vmatprep.subr.bf16.mxu0 0
        %5517 = vmatpush1.bf16.msra.mxu0 0
        %5518 = vmatprep.mubr.bf16.mxu0 0
        %5519 = vmatmul.mubr.bf16.gmra.mrb[0].mxu0 %v4418
        %v5520 = vpop.f32.mrb[0].mxu0
        %v5521 = vadd.f32 %v1428, %v5520
        %v5522 = vpop.f32.mrb[0].mxu0
        %v5523 = vadd.f32 %v1432, %v5522
        %v5524 = vpop.f32.mrb[0].mxu0
        %v5525 = vpop.f32.mrb[0].mxu0
        %5526 = vdwg.mxu0
        %5527 = vmatprep.subr.bf16.mxu0 %v3448
        %5528 = vmatpush1.bf16.msra.mxu0 %v3447
        %5529 = vmatprep.subr.bf16.mxu0 %v3576
        %5530 = vmatpush1.bf16.msra.mxu0 %v3575
        %5531 = vmatprep.subr.bf16.mxu0 %v3704
        %5532 = vmatpush1.bf16.msra.mxu0 %v3703
        %5533 = vmatprep.subr.bf16.mxu0 %v3832
        %5534 = vmatpush1.bf16.msra.mxu0 %v3831
        %5535 = vmatprep.subr.bf16.mxu0 0
        %5536 = vmatpush1.bf16.msra.mxu0 0
        %5537 = vmatprep.subr.bf16.mxu0 0
        %5538 = vmatpush1.bf16.msra.mxu0 0
        %5539 = vmatprep.subr.bf16.mxu0 0
        %5540 = vmatpush1.bf16.msra.mxu0 0
        %5541 = vmatprep.subr.bf16.mxu0 0
        %5542 = vmatpush1.bf16.msra.mxu0 0
        %5543 = vmatprep.subr.bf16.mxu0 0
        %5544 = vmatpush1.bf16.msra.mxu0 0
        %5545 = vmatprep.subr.bf16.mxu0 0
        %5546 = vmatpush1.bf16.msra.mxu0 0
        %5547 = vmatprep.subr.bf16.mxu0 0
        %5548 = vmatpush1.bf16.msra.mxu0 0
        %5549 = vmatprep.subr.bf16.mxu0 0
        %5550 = vmatpush1.bf16.msra.mxu0 0
        %5551 = vmatprep.subr.bf16.mxu0 0
        %5552 = vmatpush1.bf16.msra.mxu0 0
        %5553 = vmatprep.subr.bf16.mxu0 0
        %5554 = vmatpush1.bf16.msra.mxu0 0
        %5555 = vmatprep.subr.bf16.mxu0 0
        %5556 = vmatpush1.bf16.msra.mxu0 0
        %5557 = vmatprep.subr.bf16.mxu0 0
        %5558 = vmatpush1.bf16.msra.mxu0 0
        %5559 = vmatprep.mubr.bf16.mxu0 0
        %5560 = vmatmul.mubr.bf16.gmra.mrb[0].mxu0 %v4418
        %v5561 = vpop.f32.mrb[0].mxu0
        %v5562 = vadd.f32 %v1436, %v5561
        %v5563 = vpop.f32.mrb[0].mxu0
        %v5564 = vadd.f32 %v1440, %v5563
        %v5565 = vpop.f32.mrb[0].mxu0
        %v5566 = vpop.f32.mrb[0].mxu0
        %5567 = vdwg.mxu0
        %5568 = vmatprep.subr.bf16.mxu0 %v3450
        %5569 = vmatpush1.bf16.msra.mxu0 %v3449
        %5570 = vmatprep.subr.bf16.mxu0 %v3578
        %5571 = vmatpush1.bf16.msra.mxu0 %v3577
        %5572 = vmatprep.subr.bf16.mxu0 %v3706
        %5573 = vmatpush1.bf16.msra.mxu0 %v3705
        %5574 = vmatprep.subr.bf16.mxu0 %v3834
        %5575 = vmatpush1.bf16.msra.mxu0 %v3833
        %5576 = vmatprep.subr.bf16.mxu0 0
        %5577 = vmatpush1.bf16.msra.mxu0 0
        %5578 = vmatprep.subr.bf16.mxu0 0
        %5579 = vmatpush1.bf16.msra.mxu0 0
        %5580 = vmatprep.subr.bf16.mxu0 0
        %5581 = vmatpush1.bf16.msra.mxu0 0
        %5582 = vmatprep.subr.bf16.mxu0 0
        %5583 = vmatpush1.bf16.msra.mxu0 0
        %5584 = vmatprep.subr.bf16.mxu0 0
        %5585 = vmatpush1.bf16.msra.mxu0 0
        %5586 = vmatprep.subr.bf16.mxu0 0
        %5587 = vmatpush1.bf16.msra.mxu0 0
        %5588 = vmatprep.subr.bf16.mxu0 0
        %5589 = vmatpush1.bf16.msra.mxu0 0
        %5590 = vmatprep.subr.bf16.mxu0 0
        %5591 = vmatpush1.bf16.msra.mxu0 0
        %5592 = vmatprep.subr.bf16.mxu0 0
        %5593 = vmatpush1.bf16.msra.mxu0 0
        %5594 = vmatprep.subr.bf16.mxu0 0
        %5595 = vmatpush1.bf16.msra.mxu0 0
        %5596 = vmatprep.subr.bf16.mxu0 0
        %5597 = vmatpush1.bf16.msra.mxu0 0
        %5598 = vmatprep.subr.bf16.mxu0 0
        %5599 = vmatpush1.bf16.msra.mxu0 0
        %5600 = vmatprep.mubr.bf16.mxu0 0
        %5601 = vmatmul.mubr.bf16.gmra.mrb[0].mxu0 %v4418
        %v5602 = vpop.f32.mrb[0].mxu0
        %v5603 = vadd.f32 %v1444, %v5602
        %v5604 = vpop.f32.mrb[0].mxu0
        %v5605 = vadd.f32 %v1448, %v5604
        %v5606 = vpop.f32.mrb[0].mxu0
        %v5607 = vpop.f32.mrb[0].mxu0
        %5608 = vdwg.mxu0
        %5609 = vmatprep.subr.bf16.mxu0 %v3452
        %5610 = vmatpush1.bf16.msra.mxu0 %v3451
        %5611 = vmatprep.subr.bf16.mxu0 %v3580
        %5612 = vmatpush1.bf16.msra.mxu0 %v3579
        %5613 = vmatprep.subr.bf16.mxu0 %v3708
        %5614 = vmatpush1.bf16.msra.mxu0 %v3707
        %5615 = vmatprep.subr.bf16.mxu0 %v3836
        %5616 = vmatpush1.bf16.msra.mxu0 %v3835
        %5617 = vmatprep.subr.bf16.mxu0 0
        %5618 = vmatpush1.bf16.msra.mxu0 0
        %5619 = vmatprep.subr.bf16.mxu0 0
        %5620 = vmatpush1.bf16.msra.mxu0 0
        %5621 = vmatprep.subr.bf16.mxu0 0
        %5622 = vmatpush1.bf16.msra.mxu0 0
        %5623 = vmatprep.subr.bf16.mxu0 0
        %5624 = vmatpush1.bf16.msra.mxu0 0
        %5625 = vmatprep.subr.bf16.mxu0 0
        %5626 = vmatpush1.bf16.msra.mxu0 0
        %5627 = vmatprep.subr.bf16.mxu0 0
        %5628 = vmatpush1.bf16.msra.mxu0 0
        %5629 = vmatprep.subr.bf16.mxu0 0
        %5630 = vmatpush1.bf16.msra.mxu0 0
        %5631 = vmatprep.subr.bf16.mxu0 0
        %5632 = vmatpush1.bf16.msra.mxu0 0
        %5633 = vmatprep.subr.bf16.mxu0 0
        %5634 = vmatpush1.bf16.msra.mxu0 0
        %5635 = vmatprep.subr.bf16.mxu0 0
        %5636 = vmatpush1.bf16.msra.mxu0 0
        %5637 = vmatprep.subr.bf16.mxu0 0
        %5638 = vmatpush1.bf16.msra.mxu0 0
        %5639 = vmatprep.subr.bf16.mxu0 0
        %5640 = vmatpush1.bf16.msra.mxu0 0
        %5641 = vmatprep.mubr.bf16.mxu0 0
        %5642 = vmatmul.mubr.bf16.gmra.mrb[0].mxu0 %v4418
        %v5643 = vpop.f32.mrb[0].mxu0
        %v5644 = vadd.f32 %v1452, %v5643
        %v5645 = vpop.f32.mrb[0].mxu0
        %v5646 = vadd.f32 %v1456, %v5645
        %v5647 = vpop.f32.mrb[0].mxu0
        %v5648 = vpop.f32.mrb[0].mxu0
        %5649 = vdwg.mxu0
        %5650 = vmatprep.subr.bf16.mxu0 %v3454
        %5651 = vmatpush1.bf16.msra.mxu0 %v3453
        %5652 = vmatprep.subr.bf16.mxu0 %v3582
        %5653 = vmatpush1.bf16.msra.mxu0 %v3581
        %5654 = vmatprep.subr.bf16.mxu0 %v3710
        %5655 = vmatpush1.bf16.msra.mxu0 %v3709
        %5656 = vmatprep.subr.bf16.mxu0 %v3838
        %5657 = vmatpush1.bf16.msra.mxu0 %v3837
        %5658 = vmatprep.subr.bf16.mxu0 0
        %5659 = vmatpush1.bf16.msra.mxu0 0
        %5660 = vmatprep.subr.bf16.mxu0 0
        %5661 = vmatpush1.bf16.msra.mxu0 0
        %5662 = vmatprep.subr.bf16.mxu0 0
        %5663 = vmatpush1.bf16.msra.mxu0 0
        %5664 = vmatprep.subr.bf16.mxu0 0
        %5665 = vmatpush1.bf16.msra.mxu0 0
        %5666 = vmatprep.subr.bf16.mxu0 0
        %5667 = vmatpush1.bf16.msra.mxu0 0
        %5668 = vmatprep.subr.bf16.mxu0 0
        %5669 = vmatpush1.bf16.msra.mxu0 0
        %5670 = vmatprep.subr.bf16.mxu0 0
        %5671 = vmatpush1.bf16.msra.mxu0 0
        %5672 = vmatprep.subr.bf16.mxu0 0
        %5673 = vmatpush1.bf16.msra.mxu0 0
        %5674 = vmatprep.subr.bf16.mxu0 0
        %5675 = vmatpush1.bf16.msra.mxu0 0
        %5676 = vmatprep.subr.bf16.mxu0 0
        %5677 = vmatpush1.bf16.msra.mxu0 0
        %5678 = vmatprep.subr.bf16.mxu0 0
        %5679 = vmatpush1.bf16.msra.mxu0 0
        %5680 = vmatprep.subr.bf16.mxu0 0
        %5681 = vmatpush1.bf16.msra.mxu0 0
        %5682 = vmatprep.mubr.bf16.mxu0 0
        %5683 = vmatmul.mubr.bf16.gmra.mrb[0].mxu0 %v4418
        %v5684 = vpop.f32.mrb[0].mxu0
        %v5685 = vadd.f32 %v1460, %v5684
        %v5686 = vpop.f32.mrb[0].mxu0
        %v5687 = vadd.f32 %v1464, %v5686
        %v5688 = vpop.f32.mrb[0].mxu0
        %v5689 = vpop.f32.mrb[0].mxu0
        %5690 = vdwg.mxu0
        %5691 = vmatprep.subr.bf16.mxu0 %v3456
        %5692 = vmatpush1.bf16.msra.mxu0 %v3455
        %5693 = vmatprep.subr.bf16.mxu0 %v3584
        %5694 = vmatpush1.bf16.msra.mxu0 %v3583
        %5695 = vmatprep.subr.bf16.mxu0 %v3712
        %5696 = vmatpush1.bf16.msra.mxu0 %v3711
        %5697 = vmatprep.subr.bf16.mxu0 %v3840
        %5698 = vmatpush1.bf16.msra.mxu0 %v3839
        %5699 = vmatprep.subr.bf16.mxu0 0
        %5700 = vmatpush1.bf16.msra.mxu0 0
        %5701 = vmatprep.subr.bf16.mxu0 0
        %5702 = vmatpush1.bf16.msra.mxu0 0
        %5703 = vmatprep.subr.bf16.mxu0 0
        %5704 = vmatpush1.bf16.msra.mxu0 0
        %5705 = vmatprep.subr.bf16.mxu0 0
        %5706 = vmatpush1.bf16.msra.mxu0 0
        %5707 = vmatprep.subr.bf16.mxu0 0
        %5708 = vmatpush1.bf16.msra.mxu0 0
        %5709 = vmatprep.subr.bf16.mxu0 0
        %5710 = vmatpush1.bf16.msra.mxu0 0
        %5711 = vmatprep.subr.bf16.mxu0 0
        %5712 = vmatpush1.bf16.msra.mxu0 0
        %5713 = vmatprep.subr.bf16.mxu0 0
        %5714 = vmatpush1.bf16.msra.mxu0 0
        %5715 = vmatprep.subr.bf16.mxu0 0
        %5716 = vmatpush1.bf16.msra.mxu0 0
        %5717 = vmatprep.subr.bf16.mxu0 0
        %5718 = vmatpush1.bf16.msra.mxu0 0
        %5719 = vmatprep.subr.bf16.mxu0 0
        %5720 = vmatpush1.bf16.msra.mxu0 0
        %5721 = vmatprep.subr.bf16.mxu0 0
        %5722 = vmatpush1.bf16.msra.mxu0 0
        %5723 = vmatprep.mubr.bf16.mxu0 0
        %5724 = vmatmul.mubr.bf16.gmra.mrb[0].mxu0 %v4418
        %v5725 = vpop.f32.mrb[0].mxu0
        %v5726 = vadd.f32 %v1468, %v5725
        %v5727 = vpop.f32.mrb[0].mxu0
        %v5728 = vadd.f32 %v1472, %v5727
        %v5729 = vpop.f32.mrb[0].mxu0
        %v5730 = vpop.f32.mrb[0].mxu0
        %5731 = vdwg.mxu0
        %5732 = vmatprep.subr.bf16.mxu0 %v3458
        %5733 = vmatpush1.bf16.msra.mxu0 %v3457
        %5734 = vmatprep.subr.bf16.mxu0 %v3586
        %5735 = vmatpush1.bf16.msra.mxu0 %v3585
        %5736 = vmatprep.subr.bf16.mxu0 %v3714
        %5737 = vmatpush1.bf16.msra.mxu0 %v3713
        %5738 = vmatprep.subr.bf16.mxu0 %v3842
        %5739 = vmatpush1.bf16.msra.mxu0 %v3841
        %5740 = vmatprep.subr.bf16.mxu0 0
        %5741 = vmatpush1.bf16.msra.mxu0 0
        %5742 = vmatprep.subr.bf16.mxu0 0
        %5743 = vmatpush1.bf16.msra.mxu0 0
        %5744 = vmatprep.subr.bf16.mxu0 0
        %5745 = vmatpush1.bf16.msra.mxu0 0
        %5746 = vmatprep.subr.bf16.mxu0 0
        %5747 = vmatpush1.bf16.msra.mxu0 0
        %5748 = vmatprep.subr.bf16.mxu0 0
        %5749 = vmatpush1.bf16.msra.mxu0 0
        %5750 = vmatprep.subr.bf16.mxu0 0
        %5751 = vmatpush1.bf16.msra.mxu0 0
        %5752 = vmatprep.subr.bf16.mxu0 0
        %5753 = vmatpush1.bf16.msra.mxu0 0
        %5754 = vmatprep.subr.bf16.mxu0 0
        %5755 = vmatpush1.bf16.msra.mxu0 0
        %5756 = vmatprep.subr.bf16.mxu0 0
        %5757 = vmatpush1.bf16.msra.mxu0 0
        %5758 = vmatprep.subr.bf16.mxu0 0
        %5759 = vmatpush1.bf16.msra.mxu0 0
        %5760 = vmatprep.subr.bf16.mxu0 0
        %5761 = vmatpush1.bf16.msra.mxu0 0
        %5762 = vmatprep.subr.bf16.mxu0 0
        %5763 = vmatpush1.bf16.msra.mxu0 0
        %5764 = vmatprep.mubr.bf16.mxu0 0
        %5765 = vmatmul.mubr.bf16.gmra.mrb[0].mxu0 %v4418
        %v5766 = vpop.f32.mrb[0].mxu0
        %v5767 = vadd.f32 %v1476, %v5766
        %v5768 = vpop.f32.mrb[0].mxu0
        %v5769 = vadd.f32 %v1480, %v5768
        %v5770 = vpop.f32.mrb[0].mxu0
        %v5771 = vpop.f32.mrb[0].mxu0
        %5772 = vdwg.mxu0
        %5773 = vmatprep.subr.bf16.mxu0 %v3460
        %5774 = vmatpush1.bf16.msra.mxu0 %v3459
        %5775 = vmatprep.subr.bf16.mxu0 %v3588
        %5776 = vmatpush1.bf16.msra.mxu0 %v3587
        %5777 = vmatprep.subr.bf16.mxu0 %v3716
        %5778 = vmatpush1.bf16.msra.mxu0 %v3715
        %5779 = vmatprep.subr.bf16.mxu0 %v3844
        %5780 = vmatpush1.bf16.msra.mxu0 %v3843
        %5781 = vmatprep.subr.bf16.mxu0 0
        %5782 = vmatpush1.bf16.msra.mxu0 0
        %5783 = vmatprep.subr.bf16.mxu0 0
        %5784 = vmatpush1.bf16.msra.mxu0 0
        %5785 = vmatprep.subr.bf16.mxu0 0
        %5786 = vmatpush1.bf16.msra.mxu0 0
        %5787 = vmatprep.subr.bf16.mxu0 0
        %5788 = vmatpush1.bf16.msra.mxu0 0
        %5789 = vmatprep.subr.bf16.mxu0 0
        %5790 = vmatpush1.bf16.msra.mxu0 0
        %5791 = vmatprep.subr.bf16.mxu0 0
        %5792 = vmatpush1.bf16.msra.mxu0 0
        %5793 = vmatprep.subr.bf16.mxu0 0
        %5794 = vmatpush1.bf16.msra.mxu0 0
        %5795 = vmatprep.subr.bf16.mxu0 0
        %5796 = vmatpush1.bf16.msra.mxu0 0
        %5797 = vmatprep.subr.bf16.mxu0 0
        %5798 = vmatpush1.bf16.msra.mxu0 0
        %5799 = vmatprep.subr.bf16.mxu0 0
        %5800 = vmatpush1.bf16.msra.mxu0 0
        %5801 = vmatprep.subr.bf16.mxu0 0
        %5802 = vmatpush1.bf16.msra.mxu0 0
        %5803 = vmatprep.subr.bf16.mxu0 0
        %5804 = vmatpush1.bf16.msra.mxu0 0
        %5805 = vmatprep.mubr.bf16.mxu0 0
        %5806 = vmatmul.mubr.bf16.gmra.mrb[0].mxu0 %v4418
        %v5807 = vpop.f32.mrb[0].mxu0
        %v5808 = vadd.f32 %v1484, %v5807
        %v5809 = vpop.f32.mrb[0].mxu0
        %v5810 = vadd.f32 %v1488, %v5809
        %v5811 = vpop.f32.mrb[0].mxu0
        %v5812 = vpop.f32.mrb[0].mxu0
        %5813 = vdwg.mxu0
        %5814 = vmatprep.subr.bf16.mxu0 %v3462
        %5815 = vmatpush1.bf16.msra.mxu0 %v3461
        %5816 = vmatprep.subr.bf16.mxu0 %v3590
        %5817 = vmatpush1.bf16.msra.mxu0 %v3589
        %5818 = vmatprep.subr.bf16.mxu0 %v3718
        %5819 = vmatpush1.bf16.msra.mxu0 %v3717
        %5820 = vmatprep.subr.bf16.mxu0 %v3846
        %5821 = vmatpush1.bf16.msra.mxu0 %v3845
        %5822 = vmatprep.subr.bf16.mxu0 0
        %5823 = vmatpush1.bf16.msra.mxu0 0
        %5824 = vmatprep.subr.bf16.mxu0 0
        %5825 = vmatpush1.bf16.msra.mxu0 0
        %5826 = vmatprep.subr.bf16.mxu0 0
        %5827 = vmatpush1.bf16.msra.mxu0 0
        %5828 = vmatprep.subr.bf16.mxu0 0
        %5829 = vmatpush1.bf16.msra.mxu0 0
        %5830 = vmatprep.subr.bf16.mxu0 0
        %5831 = vmatpush1.bf16.msra.mxu0 0
        %5832 = vmatprep.subr.bf16.mxu0 0
        %5833 = vmatpush1.bf16.msra.mxu0 0
        %5834 = vmatprep.subr.bf16.mxu0 0
        %5835 = vmatpush1.bf16.msra.mxu0 0
        %5836 = vmatprep.subr.bf16.mxu0 0
        %5837 = vmatpush1.bf16.msra.mxu0 0
        %5838 = vmatprep.subr.bf16.mxu0 0
        %5839 = vmatpush1.bf16.msra.mxu0 0
        %5840 = vmatprep.subr.bf16.mxu0 0
        %5841 = vmatpush1.bf16.msra.mxu0 0
        %5842 = vmatprep.subr.bf16.mxu0 0
        %5843 = vmatpush1.bf16.msra.mxu0 0
        %5844 = vmatprep.subr.bf16.mxu0 0
        %5845 = vmatpush1.bf16.msra.mxu0 0
        %5846 = vmatprep.mubr.bf16.mxu0 0
        %5847 = vmatmul.mubr.bf16.gmra.mrb[0].mxu0 %v4418
        %v5848 = vpop.f32.mrb[0].mxu0
        %v5849 = vadd.f32 %v1492, %v5848
        %v5850 = vpop.f32.mrb[0].mxu0
        %v5851 = vadd.f32 %v1496, %v5850
        %v5852 = vpop.f32.mrb[0].mxu0
        %v5853 = vpop.f32.mrb[0].mxu0
        %5854 = vdwg.mxu0
        %5855 = vmatprep.subr.bf16.mxu0 %v3464
        %5856 = vmatpush1.bf16.msra.mxu0 %v3463
        %5857 = vmatprep.subr.bf16.mxu0 %v3592
        %5858 = vmatpush1.bf16.msra.mxu0 %v3591
        %5859 = vmatprep.subr.bf16.mxu0 %v3720
        %5860 = vmatpush1.bf16.msra.mxu0 %v3719
        %5861 = vmatprep.subr.bf16.mxu0 %v3848
        %5862 = vmatpush1.bf16.msra.mxu0 %v3847
        %5863 = vmatprep.subr.bf16.mxu0 0
        %5864 = vmatpush1.bf16.msra.mxu0 0
        %5865 = vmatprep.subr.bf16.mxu0 0
        %5866 = vmatpush1.bf16.msra.mxu0 0
        %5867 = vmatprep.subr.bf16.mxu0 0
        %5868 = vmatpush1.bf16.msra.mxu0 0
        %5869 = vmatprep.subr.bf16.mxu0 0
        %5870 = vmatpush1.bf16.msra.mxu0 0
        %5871 = vmatprep.subr.bf16.mxu0 0
        %5872 = vmatpush1.bf16.msra.mxu0 0
        %5873 = vmatprep.subr.bf16.mxu0 0
        %5874 = vmatpush1.bf16.msra.mxu0 0
        %5875 = vmatprep.subr.bf16.mxu0 0
        %5876 = vmatpush1.bf16.msra.mxu0 0
        %5877 = vmatprep.subr.bf16.mxu0 0
        %5878 = vmatpush1.bf16.msra.mxu0 0
        %5879 = vmatprep.subr.bf16.mxu0 0
        %5880 = vmatpush1.bf16.msra.mxu0 0
        %5881 = vmatprep.subr.bf16.mxu0 0
        %5882 = vmatpush1.bf16.msra.mxu0 0
        %5883 = vmatprep.subr.bf16.mxu0 0
        %5884 = vmatpush1.bf16.msra.mxu0 0
        %5885 = vmatprep.subr.bf16.mxu0 0
        %5886 = vmatpush1.bf16.msra.mxu0 0
        %5887 = vmatprep.mubr.bf16.mxu0 0
        %5888 = vmatmul.mubr.bf16.gmra.mrb[0].mxu0 %v4418
        %v5889 = vpop.f32.mrb[0].mxu0
        %v5890 = vadd.f32 %v1500, %v5889
        %v5891 = vpop.f32.mrb[0].mxu0
        %v5892 = vadd.f32 %v1504, %v5891
        %v5893 = vpop.f32.mrb[0].mxu0
        %v5894 = vpop.f32.mrb[0].mxu0
        %5895 = vdwg.mxu0
        %5896 = vmatprep.subr.bf16.mxu0 %v3466
        %5897 = vmatpush1.bf16.msra.mxu0 %v3465
        %5898 = vmatprep.subr.bf16.mxu0 %v3594
        %5899 = vmatpush1.bf16.msra.mxu0 %v3593
        %5900 = vmatprep.subr.bf16.mxu0 %v3722
        %5901 = vmatpush1.bf16.msra.mxu0 %v3721
        %5902 = vmatprep.subr.bf16.mxu0 %v3850
        %5903 = vmatpush1.bf16.msra.mxu0 %v3849
        %5904 = vmatprep.subr.bf16.mxu0 0
        %5905 = vmatpush1.bf16.msra.mxu0 0
        %5906 = vmatprep.subr.bf16.mxu0 0
        %5907 = vmatpush1.bf16.msra.mxu0 0
        %5908 = vmatprep.subr.bf16.mxu0 0
        %5909 = vmatpush1.bf16.msra.mxu0 0
        %5910 = vmatprep.subr.bf16.mxu0 0
        %5911 = vmatpush1.bf16.msra.mxu0 0
        %5912 = vmatprep.subr.bf16.mxu0 0
        %5913 = vmatpush1.bf16.msra.mxu0 0
        %5914 = vmatprep.subr.bf16.mxu0 0
        %5915 = vmatpush1.bf16.msra.mxu0 0
        %5916 = vmatprep.subr.bf16.mxu0 0
        %5917 = vmatpush1.bf16.msra.mxu0 0
        %5918 = vmatprep.subr.bf16.mxu0 0
        %5919 = vmatpush1.bf16.msra.mxu0 0
        %5920 = vmatprep.subr.bf16.mxu0 0
        %5921 = vmatpush1.bf16.msra.mxu0 0
        %5922 = vmatprep.subr.bf16.mxu0 0
        %5923 = vmatpush1.bf16.msra.mxu0 0
        %5924 = vmatprep.subr.bf16.mxu0 0
        %5925 = vmatpush1.bf16.msra.mxu0 0
        %5926 = vmatprep.subr.bf16.mxu0 0
        %5927 = vmatpush1.bf16.msra.mxu0 0
        %5928 = vmatprep.mubr.bf16.mxu0 0
        %5929 = vmatmul.mubr.bf16.gmra.mrb[0].mxu0 %v4418
        %v5930 = vpop.f32.mrb[0].mxu0
        %v5931 = vadd.f32 %v1508, %v5930
        %v5932 = vpop.f32.mrb[0].mxu0
        %v5933 = vadd.f32 %v1512, %v5932
        %v5934 = vpop.f32.mrb[0].mxu0
        %v5935 = vpop.f32.mrb[0].mxu0
        %5936 = vdwg.mxu0
        %5937 = vmatprep.subr.bf16.mxu0 %v3468
        %5938 = vmatpush1.bf16.msra.mxu0 %v3467
        %5939 = vmatprep.subr.bf16.mxu0 %v3596
        %5940 = vmatpush1.bf16.msra.mxu0 %v3595
        %5941 = vmatprep.subr.bf16.mxu0 %v3724
        %5942 = vmatpush1.bf16.msra.mxu0 %v3723
        %5943 = vmatprep.subr.bf16.mxu0 %v3852
        %5944 = vmatpush1.bf16.msra.mxu0 %v3851
        %5945 = vmatprep.subr.bf16.mxu0 0
        %5946 = vmatpush1.bf16.msra.mxu0 0
        %5947 = vmatprep.subr.bf16.mxu0 0
        %5948 = vmatpush1.bf16.msra.mxu0 0
        %5949 = vmatprep.subr.bf16.mxu0 0
        %5950 = vmatpush1.bf16.msra.mxu0 0
        %5951 = vmatprep.subr.bf16.mxu0 0
        %5952 = vmatpush1.bf16.msra.mxu0 0
        %5953 = vmatprep.subr.bf16.mxu0 0
        %5954 = vmatpush1.bf16.msra.mxu0 0
        %5955 = vmatprep.subr.bf16.mxu0 0
        %5956 = vmatpush1.bf16.msra.mxu0 0
        %5957 = vmatprep.subr.bf16.mxu0 0
        %5958 = vmatpush1.bf16.msra.mxu0 0
        %5959 = vmatprep.subr.bf16.mxu0 0
        %5960 = vmatpush1.bf16.msra.mxu0 0
        %5961 = vmatprep.subr.bf16.mxu0 0
        %5962 = vmatpush1.bf16.msra.mxu0 0
        %5963 = vmatprep.subr.bf16.mxu0 0
        %5964 = vmatpush1.bf16.msra.mxu0 0
        %5965 = vmatprep.subr.bf16.mxu0 0
        %5966 = vmatpush1.bf16.msra.mxu0 0
        %5967 = vmatprep.subr.bf16.mxu0 0
        %5968 = vmatpush1.bf16.msra.mxu0 0
        %5969 = vmatprep.mubr.bf16.mxu0 0
        %5970 = vmatmul.mubr.bf16.gmra.mrb[0].mxu0 %v4418
        %v5971 = vpop.f32.mrb[0].mxu0
        %v5972 = vadd.f32 %v1516, %v5971
        %v5973 = vpop.f32.mrb[0].mxu0
        %v5974 = vadd.f32 %v1520, %v5973
        %v5975 = vpop.f32.mrb[0].mxu0
        %v5976 = vpop.f32.mrb[0].mxu0
        %5977 = vdwg.mxu0
        %5978 = vmatprep.subr.bf16.mxu0 %v3470
        %5979 = vmatpush1.bf16.msra.mxu0 %v3469
        %5980 = vmatprep.subr.bf16.mxu0 %v3598
        %5981 = vmatpush1.bf16.msra.mxu0 %v3597
        %5982 = vmatprep.subr.bf16.mxu0 %v3726
        %5983 = vmatpush1.bf16.msra.mxu0 %v3725
        %5984 = vmatprep.subr.bf16.mxu0 %v3854
        %5985 = vmatpush1.bf16.msra.mxu0 %v3853
        %5986 = vmatprep.subr.bf16.mxu0 0
        %5987 = vmatpush1.bf16.msra.mxu0 0
        %5988 = vmatprep.subr.bf16.mxu0 0
        %5989 = vmatpush1.bf16.msra.mxu0 0
        %5990 = vmatprep.subr.bf16.mxu0 0
        %5991 = vmatpush1.bf16.msra.mxu0 0
        %5992 = vmatprep.subr.bf16.mxu0 0
        %5993 = vmatpush1.bf16.msra.mxu0 0
        %5994 = vmatprep.subr.bf16.mxu0 0
        %5995 = vmatpush1.bf16.msra.mxu0 0
        %5996 = vmatprep.subr.bf16.mxu0 0
        %5997 = vmatpush1.bf16.msra.mxu0 0
        %5998 = vmatprep.subr.bf16.mxu0 0
        %5999 = vmatpush1.bf16.msra.mxu0 0
        %6000 = vmatprep.subr.bf16.mxu0 0
        %6001 = vmatpush1.bf16.msra.mxu0 0
        %6002 = vmatprep.subr.bf16.mxu0 0
        %6003 = vmatpush1.bf16.msra.mxu0 0
        %6004 = vmatprep.subr.bf16.mxu0 0
        %6005 = vmatpush1.bf16.msra.mxu0 0
        %6006 = vmatprep.subr.bf16.mxu0 0
        %6007 = vmatpush1.bf16.msra.mxu0 0
        %6008 = vmatprep.subr.bf16.mxu0 0
        %6009 = vmatpush1.bf16.msra.mxu0 0
        %6010 = vmatprep.mubr.bf16.mxu0 0
        %6011 = vmatmul.mubr.bf16.gmra.mrb[0].mxu0 %v4418
        %v6012 = vpop.f32.mrb[0].mxu0
        %v6013 = vadd.f32 %v1524, %v6012
        %v6014 = vpop.f32.mrb[0].mxu0
        %v6015 = vadd.f32 %v1528, %v6014
        %v6016 = vpop.f32.mrb[0].mxu0
        %v6017 = vpop.f32.mrb[0].mxu0
        %6018 = vdwg.mxu0
        %6019 = vmatprep.subr.bf16.mxu0 %v3472
        %6020 = vmatpush1.bf16.msra.mxu0 %v3471
        %6021 = vmatprep.subr.bf16.mxu0 %v3600
        %6022 = vmatpush1.bf16.msra.mxu0 %v3599
        %6023 = vmatprep.subr.bf16.mxu0 %v3728
        %6024 = vmatpush1.bf16.msra.mxu0 %v3727
        %6025 = vmatprep.subr.bf16.mxu0 %v3856
        %6026 = vmatpush1.bf16.msra.mxu0 %v3855
        %6027 = vmatprep.subr.bf16.mxu0 0
        %6028 = vmatpush1.bf16.msra.mxu0 0
        %6029 = vmatprep.subr.bf16.mxu0 0
        %6030 = vmatpush1.bf16.msra.mxu0 0
        %6031 = vmatprep.subr.bf16.mxu0 0
        %6032 = vmatpush1.bf16.msra.mxu0 0
        %6033 = vmatprep.subr.bf16.mxu0 0
        %6034 = vmatpush1.bf16.msra.mxu0 0
        %6035 = vmatprep.subr.bf16.mxu0 0
        %6036 = vmatpush1.bf16.msra.mxu0 0
        %6037 = vmatprep.subr.bf16.mxu0 0
        %6038 = vmatpush1.bf16.msra.mxu0 0
        %6039 = vmatprep.subr.bf16.mxu0 0
        %6040 = vmatpush1.bf16.msra.mxu0 0
        %6041 = vmatprep.subr.bf16.mxu0 0
        %6042 = vmatpush1.bf16.msra.mxu0 0
        %6043 = vmatprep.subr.bf16.mxu0 0
        %6044 = vmatpush1.bf16.msra.mxu0 0
        %6045 = vmatprep.subr.bf16.mxu0 0
        %6046 = vmatpush1.bf16.msra.mxu0 0
        %6047 = vmatprep.subr.bf16.mxu0 0
        %6048 = vmatpush1.bf16.msra.mxu0 0
        %6049 = vmatprep.subr.bf16.mxu0 0
        %6050 = vmatpush1.bf16.msra.mxu0 0
        %6051 = vmatprep.mubr.bf16.mxu0 0
        %6052 = vmatmul.mubr.bf16.gmra.mrb[0].mxu0 %v4418
        %v6053 = vpop.f32.mrb[0].mxu0
        %v6054 = vadd.f32 %v1532, %v6053
        %v6055 = vpop.f32.mrb[0].mxu0
        %v6056 = vadd.f32 %v1536, %v6055
        %v6057 = vpop.f32.mrb[0].mxu0
        %v6058 = vpop.f32.mrb[0].mxu0
        %6059 = vdwg.mxu0
        %6060 = vmatprep.subr.bf16.mxu0 %v3474
        %6061 = vmatpush1.bf16.msra.mxu0 %v3473
        %6062 = vmatprep.subr.bf16.mxu0 %v3602
        %6063 = vmatpush1.bf16.msra.mxu0 %v3601
        %6064 = vmatprep.subr.bf16.mxu0 %v3730
        %6065 = vmatpush1.bf16.msra.mxu0 %v3729
        %6066 = vmatprep.subr.bf16.mxu0 %v3858
        %6067 = vmatpush1.bf16.msra.mxu0 %v3857
        %6068 = vmatprep.subr.bf16.mxu0 0
        %6069 = vmatpush1.bf16.msra.mxu0 0
        %6070 = vmatprep.subr.bf16.mxu0 0
        %6071 = vmatpush1.bf16.msra.mxu0 0
        %6072 = vmatprep.subr.bf16.mxu0 0
        %6073 = vmatpush1.bf16.msra.mxu0 0
        %6074 = vmatprep.subr.bf16.mxu0 0
        %6075 = vmatpush1.bf16.msra.mxu0 0
        %6076 = vmatprep.subr.bf16.mxu0 0
        %6077 = vmatpush1.bf16.msra.mxu0 0
        %6078 = vmatprep.subr.bf16.mxu0 0
        %6079 = vmatpush1.bf16.msra.mxu0 0
        %6080 = vmatprep.subr.bf16.mxu0 0
        %6081 = vmatpush1.bf16.msra.mxu0 0
        %6082 = vmatprep.subr.bf16.mxu0 0
        %6083 = vmatpush1.bf16.msra.mxu0 0
        %6084 = vmatprep.subr.bf16.mxu0 0
        %6085 = vmatpush1.bf16.msra.mxu0 0
        %6086 = vmatprep.subr.bf16.mxu0 0
        %6087 = vmatpush1.bf16.msra.mxu0 0
        %6088 = vmatprep.subr.bf16.mxu0 0
        %6089 = vmatpush1.bf16.msra.mxu0 0
        %6090 = vmatprep.subr.bf16.mxu0 0
        %6091 = vmatpush1.bf16.msra.mxu0 0
        %6092 = vmatprep.mubr.bf16.mxu0 0
        %6093 = vmatmul.mubr.bf16.gmra.mrb[0].mxu0 %v4418
        %v6094 = vpop.f32.mrb[0].mxu0
        %v6095 = vadd.f32 %v1540, %v6094
        %v6096 = vpop.f32.mrb[0].mxu0
        %v6097 = vadd.f32 %v1544, %v6096
        %v6098 = vpop.f32.mrb[0].mxu0
        %v6099 = vpop.f32.mrb[0].mxu0
        %6100 = vdwg.mxu0
        %6101 = vmatprep.subr.bf16.mxu0 %v3476
        %6102 = vmatpush1.bf16.msra.mxu0 %v3475
        %6103 = vmatprep.subr.bf16.mxu0 %v3604
        %6104 = vmatpush1.bf16.msra.mxu0 %v3603
        %6105 = vmatprep.subr.bf16.mxu0 %v3732
        %6106 = vmatpush1.bf16.msra.mxu0 %v3731
        %6107 = vmatprep.subr.bf16.mxu0 %v3860
        %6108 = vmatpush1.bf16.msra.mxu0 %v3859
        %6109 = vmatprep.subr.bf16.mxu0 0
        %6110 = vmatpush1.bf16.msra.mxu0 0
        %6111 = vmatprep.subr.bf16.mxu0 0
        %6112 = vmatpush1.bf16.msra.mxu0 0
        %6113 = vmatprep.subr.bf16.mxu0 0
        %6114 = vmatpush1.bf16.msra.mxu0 0
        %6115 = vmatprep.subr.bf16.mxu0 0
        %6116 = vmatpush1.bf16.msra.mxu0 0
        %6117 = vmatprep.subr.bf16.mxu0 0
        %6118 = vmatpush1.bf16.msra.mxu0 0
        %6119 = vmatprep.subr.bf16.mxu0 0
        %6120 = vmatpush1.bf16.msra.mxu0 0
        %6121 = vmatprep.subr.bf16.mxu0 0
        %6122 = vmatpush1.bf16.msra.mxu0 0
        %6123 = vmatprep.subr.bf16.mxu0 0
        %6124 = vmatpush1.bf16.msra.mxu0 0
        %6125 = vmatprep.subr.bf16.mxu0 0
        %6126 = vmatpush1.bf16.msra.mxu0 0
        %6127 = vmatprep.subr.bf16.mxu0 0
        %6128 = vmatpush1.bf16.msra.mxu0 0
        %6129 = vmatprep.subr.bf16.mxu0 0
        %6130 = vmatpush1.bf16.msra.mxu0 0
        %6131 = vmatprep.subr.bf16.mxu0 0
        %6132 = vmatpush1.bf16.msra.mxu0 0
        %6133 = vmatprep.mubr.bf16.mxu0 0
        %6134 = vmatmul.mubr.bf16.gmra.mrb[0].mxu0 %v4418
        %v6135 = vpop.f32.mrb[0].mxu0
        %v6136 = vadd.f32 %v1548, %v6135
        %v6137 = vpop.f32.mrb[0].mxu0
        %v6138 = vadd.f32 %v1552, %v6137
        %v6139 = vpop.f32.mrb[0].mxu0
        %v6140 = vpop.f32.mrb[0].mxu0
        %6141 = vdwg.mxu0
        %6142 = vmatprep.subr.bf16.mxu0 %v3478
        %6143 = vmatpush1.bf16.msra.mxu0 %v3477
        %6144 = vmatprep.subr.bf16.mxu0 %v3606
        %6145 = vmatpush1.bf16.msra.mxu0 %v3605
        %6146 = vmatprep.subr.bf16.mxu0 %v3734
        %6147 = vmatpush1.bf16.msra.mxu0 %v3733
        %6148 = vmatprep.subr.bf16.mxu0 %v3862
        %6149 = vmatpush1.bf16.msra.mxu0 %v3861
        %6150 = vmatprep.subr.bf16.mxu0 0
        %6151 = vmatpush1.bf16.msra.mxu0 0
        %6152 = vmatprep.subr.bf16.mxu0 0
        %6153 = vmatpush1.bf16.msra.mxu0 0
        %6154 = vmatprep.subr.bf16.mxu0 0
        %6155 = vmatpush1.bf16.msra.mxu0 0
        %6156 = vmatprep.subr.bf16.mxu0 0
        %6157 = vmatpush1.bf16.msra.mxu0 0
        %6158 = vmatprep.subr.bf16.mxu0 0
        %6159 = vmatpush1.bf16.msra.mxu0 0
        %6160 = vmatprep.subr.bf16.mxu0 0
        %6161 = vmatpush1.bf16.msra.mxu0 0
        %6162 = vmatprep.subr.bf16.mxu0 0
        %6163 = vmatpush1.bf16.msra.mxu0 0
        %6164 = vmatprep.subr.bf16.mxu0 0
        %6165 = vmatpush1.bf16.msra.mxu0 0
        %6166 = vmatprep.subr.bf16.mxu0 0
        %6167 = vmatpush1.bf16.msra.mxu0 0
        %6168 = vmatprep.subr.bf16.mxu0 0
        %6169 = vmatpush1.bf16.msra.mxu0 0
        %6170 = vmatprep.subr.bf16.mxu0 0
        %6171 = vmatpush1.bf16.msra.mxu0 0
        %6172 = vmatprep.subr.bf16.mxu0 0
        %6173 = vmatpush1.bf16.msra.mxu0 0
        %6174 = vmatprep.mubr.bf16.mxu0 0
        %6175 = vmatmul.mubr.bf16.gmra.mrb[0].mxu0 %v4418
        %v6176 = vpop.f32.mrb[0].mxu0
        %v6177 = vadd.f32 %v1556, %v6176
        %v6178 = vpop.f32.mrb[0].mxu0
        %v6179 = vadd.f32 %v1560, %v6178
        %v6180 = vpop.f32.mrb[0].mxu0
        %v6181 = vpop.f32.mrb[0].mxu0
        %6182 = vdwg.mxu0
        %6183 = vmatprep.subr.bf16.mxu0 %v3480
        %6184 = vmatpush1.bf16.msra.mxu0 %v3479
        %6185 = vmatprep.subr.bf16.mxu0 %v3608
        %6186 = vmatpush1.bf16.msra.mxu0 %v3607
        %6187 = vmatprep.subr.bf16.mxu0 %v3736
        %6188 = vmatpush1.bf16.msra.mxu0 %v3735
        %6189 = vmatprep.subr.bf16.mxu0 %v3864
        %6190 = vmatpush1.bf16.msra.mxu0 %v3863
        %6191 = vmatprep.subr.bf16.mxu0 0
        %6192 = vmatpush1.bf16.msra.mxu0 0
        %6193 = vmatprep.subr.bf16.mxu0 0
        %6194 = vmatpush1.bf16.msra.mxu0 0
        %6195 = vmatprep.subr.bf16.mxu0 0
        %6196 = vmatpush1.bf16.msra.mxu0 0
        %6197 = vmatprep.subr.bf16.mxu0 0
        %6198 = vmatpush1.bf16.msra.mxu0 0
        %6199 = vmatprep.subr.bf16.mxu0 0
        %6200 = vmatpush1.bf16.msra.mxu0 0
        %6201 = vmatprep.subr.bf16.mxu0 0
        %6202 = vmatpush1.bf16.msra.mxu0 0
        %6203 = vmatprep.subr.bf16.mxu0 0
        %6204 = vmatpush1.bf16.msra.mxu0 0
        %6205 = vmatprep.subr.bf16.mxu0 0
        %6206 = vmatpush1.bf16.msra.mxu0 0
        %6207 = vmatprep.subr.bf16.mxu0 0
        %6208 = vmatpush1.bf16.msra.mxu0 0
        %6209 = vmatprep.subr.bf16.mxu0 0
        %6210 = vmatpush1.bf16.msra.mxu0 0
        %6211 = vmatprep.subr.bf16.mxu0 0
        %6212 = vmatpush1.bf16.msra.mxu0 0
        %6213 = vmatprep.subr.bf16.mxu0 0
        %6214 = vmatpush1.bf16.msra.mxu0 0
        %6215 = vmatprep.mubr.bf16.mxu0 0
        %6216 = vmatmul.mubr.bf16.gmra.mrb[0].mxu0 %v4418
        %v6217 = vpop.f32.mrb[0].mxu0
        %v6218 = vadd.f32 %v1564, %v6217
        %v6219 = vpop.f32.mrb[0].mxu0
        %v6220 = vadd.f32 %v1568, %v6219
        %v6221 = vpop.f32.mrb[0].mxu0
        %v6222 = vpop.f32.mrb[0].mxu0
        %6223 = vdwg.mxu0
        %6224 = vmatprep.subr.bf16.mxu0 %v3482
        %6225 = vmatpush1.bf16.msra.mxu0 %v3481
        %6226 = vmatprep.subr.bf16.mxu0 %v3610
        %6227 = vmatpush1.bf16.msra.mxu0 %v3609
        %6228 = vmatprep.subr.bf16.mxu0 %v3738
        %6229 = vmatpush1.bf16.msra.mxu0 %v3737
        %6230 = vmatprep.subr.bf16.mxu0 %v3866
        %6231 = vmatpush1.bf16.msra.mxu0 %v3865
        %6232 = vmatprep.subr.bf16.mxu0 0
        %6233 = vmatpush1.bf16.msra.mxu0 0
        %6234 = vmatprep.subr.bf16.mxu0 0
        %6235 = vmatpush1.bf16.msra.mxu0 0
        %6236 = vmatprep.subr.bf16.mxu0 0
        %6237 = vmatpush1.bf16.msra.mxu0 0
        %6238 = vmatprep.subr.bf16.mxu0 0
        %6239 = vmatpush1.bf16.msra.mxu0 0
        %6240 = vmatprep.subr.bf16.mxu0 0
        %6241 = vmatpush1.bf16.msra.mxu0 0
        %6242 = vmatprep.subr.bf16.mxu0 0
        %6243 = vmatpush1.bf16.msra.mxu0 0
        %6244 = vmatprep.subr.bf16.mxu0 0
        %6245 = vmatpush1.bf16.msra.mxu0 0
        %6246 = vmatprep.subr.bf16.mxu0 0
        %6247 = vmatpush1.bf16.msra.mxu0 0
        %6248 = vmatprep.subr.bf16.mxu0 0
        %6249 = vmatpush1.bf16.msra.mxu0 0
        %6250 = vmatprep.subr.bf16.mxu0 0
        %6251 = vmatpush1.bf16.msra.mxu0 0
        %6252 = vmatprep.subr.bf16.mxu0 0
        %6253 = vmatpush1.bf16.msra.mxu0 0
        %6254 = vmatprep.subr.bf16.mxu0 0
        %6255 = vmatpush1.bf16.msra.mxu0 0
        %6256 = vmatprep.mubr.bf16.mxu0 0
        %6257 = vmatmul.mubr.bf16.gmra.mrb[0].mxu0 %v4418
        %v6258 = vpop.f32.mrb[0].mxu0
        %v6259 = vadd.f32 %v1572, %v6258
        %v6260 = vpop.f32.mrb[0].mxu0
        %v6261 = vadd.f32 %v1576, %v6260
        %v6262 = vpop.f32.mrb[0].mxu0
        %v6263 = vpop.f32.mrb[0].mxu0
        %6264 = vdwg.mxu0
        %6265 = vmatprep.subr.bf16.mxu0 %v3484
        %6266 = vmatpush1.bf16.msra.mxu0 %v3483
        %6267 = vmatprep.subr.bf16.mxu0 %v3612
        %6268 = vmatpush1.bf16.msra.mxu0 %v3611
        %6269 = vmatprep.subr.bf16.mxu0 %v3740
        %6270 = vmatpush1.bf16.msra.mxu0 %v3739
        %6271 = vmatprep.subr.bf16.mxu0 %v3868
        %6272 = vmatpush1.bf16.msra.mxu0 %v3867
        %6273 = vmatprep.subr.bf16.mxu0 0
        %6274 = vmatpush1.bf16.msra.mxu0 0
        %6275 = vmatprep.subr.bf16.mxu0 0
        %6276 = vmatpush1.bf16.msra.mxu0 0
        %6277 = vmatprep.subr.bf16.mxu0 0
        %6278 = vmatpush1.bf16.msra.mxu0 0
        %6279 = vmatprep.subr.bf16.mxu0 0
        %6280 = vmatpush1.bf16.msra.mxu0 0
        %6281 = vmatprep.subr.bf16.mxu0 0
        %6282 = vmatpush1.bf16.msra.mxu0 0
        %6283 = vmatprep.subr.bf16.mxu0 0
        %6284 = vmatpush1.bf16.msra.mxu0 0
        %6285 = vmatprep.subr.bf16.mxu0 0
        %6286 = vmatpush1.bf16.msra.mxu0 0
        %6287 = vmatprep.subr.bf16.mxu0 0
        %6288 = vmatpush1.bf16.msra.mxu0 0
        %6289 = vmatprep.subr.bf16.mxu0 0
        %6290 = vmatpush1.bf16.msra.mxu0 0
        %6291 = vmatprep.subr.bf16.mxu0 0
        %6292 = vmatpush1.bf16.msra.mxu0 0
        %6293 = vmatprep.subr.bf16.mxu0 0
        %6294 = vmatpush1.bf16.msra.mxu0 0
        %6295 = vmatprep.subr.bf16.mxu0 0
        %6296 = vmatpush1.bf16.msra.mxu0 0
        %6297 = vmatprep.mubr.bf16.mxu0 0
        %6298 = vmatmul.mubr.bf16.gmra.mrb[0].mxu0 %v4418
        %v6299 = vpop.f32.mrb[0].mxu0
        %v6300 = vadd.f32 %v1580, %v6299
        %v6301 = vpop.f32.mrb[0].mxu0
        %v6302 = vadd.f32 %v1584, %v6301
        %v6303 = vpop.f32.mrb[0].mxu0
        %v6304 = vpop.f32.mrb[0].mxu0
        %6305 = vdwg.mxu0
        %6306 = vmatprep.subr.bf16.mxu0 %v3486
        %6307 = vmatpush1.bf16.msra.mxu0 %v3485
        %6308 = vmatprep.subr.bf16.mxu0 %v3614
        %6309 = vmatpush1.bf16.msra.mxu0 %v3613
        %6310 = vmatprep.subr.bf16.mxu0 %v3742
        %6311 = vmatpush1.bf16.msra.mxu0 %v3741
        %6312 = vmatprep.subr.bf16.mxu0 %v3870
        %6313 = vmatpush1.bf16.msra.mxu0 %v3869
        %6314 = vmatprep.subr.bf16.mxu0 0
        %6315 = vmatpush1.bf16.msra.mxu0 0
        %6316 = vmatprep.subr.bf16.mxu0 0
        %6317 = vmatpush1.bf16.msra.mxu0 0
        %6318 = vmatprep.subr.bf16.mxu0 0
        %6319 = vmatpush1.bf16.msra.mxu0 0
        %6320 = vmatprep.subr.bf16.mxu0 0
        %6321 = vmatpush1.bf16.msra.mxu0 0
        %6322 = vmatprep.subr.bf16.mxu0 0
        %6323 = vmatpush1.bf16.msra.mxu0 0
        %6324 = vmatprep.subr.bf16.mxu0 0
        %6325 = vmatpush1.bf16.msra.mxu0 0
        %6326 = vmatprep.subr.bf16.mxu0 0
        %6327 = vmatpush1.bf16.msra.mxu0 0
        %6328 = vmatprep.subr.bf16.mxu0 0
        %6329 = vmatpush1.bf16.msra.mxu0 0
        %6330 = vmatprep.subr.bf16.mxu0 0
        %6331 = vmatpush1.bf16.msra.mxu0 0
        %6332 = vmatprep.subr.bf16.mxu0 0
        %6333 = vmatpush1.bf16.msra.mxu0 0
        %6334 = vmatprep.subr.bf16.mxu0 0
        %6335 = vmatpush1.bf16.msra.mxu0 0
        %6336 = vmatprep.subr.bf16.mxu0 0
        %6337 = vmatpush1.bf16.msra.mxu0 0
        %6338 = vmatprep.mubr.bf16.mxu0 0
        %6339 = vmatmul.mubr.bf16.gmra.mrb[0].mxu0 %v4418
        %v6340 = vpop.f32.mrb[0].mxu0
        %v6341 = vadd.f32 %v1588, %v6340
        %v6342 = vpop.f32.mrb[0].mxu0
        %v6343 = vadd.f32 %v1592, %v6342
        %v6344 = vpop.f32.mrb[0].mxu0
        %v6345 = vpop.f32.mrb[0].mxu0
        %6346 = vdwg.mxu0
        %6347 = vmatprep.subr.bf16.mxu0 %v3488
        %6348 = vmatpush1.bf16.msra.mxu0 %v3487
        %6349 = vmatprep.subr.bf16.mxu0 %v3616
        %6350 = vmatpush1.bf16.msra.mxu0 %v3615
        %6351 = vmatprep.subr.bf16.mxu0 %v3744
        %6352 = vmatpush1.bf16.msra.mxu0 %v3743
        %6353 = vmatprep.subr.bf16.mxu0 %v3872
        %6354 = vmatpush1.bf16.msra.mxu0 %v3871
        %6355 = vmatprep.subr.bf16.mxu0 0
        %6356 = vmatpush1.bf16.msra.mxu0 0
        %6357 = vmatprep.subr.bf16.mxu0 0
        %6358 = vmatpush1.bf16.msra.mxu0 0
        %6359 = vmatprep.subr.bf16.mxu0 0
        %6360 = vmatpush1.bf16.msra.mxu0 0
        %6361 = vmatprep.subr.bf16.mxu0 0
        %6362 = vmatpush1.bf16.msra.mxu0 0
        %6363 = vmatprep.subr.bf16.mxu0 0
        %6364 = vmatpush1.bf16.msra.mxu0 0
        %6365 = vmatprep.subr.bf16.mxu0 0
        %6366 = vmatpush1.bf16.msra.mxu0 0
        %6367 = vmatprep.subr.bf16.mxu0 0
        %6368 = vmatpush1.bf16.msra.mxu0 0
        %6369 = vmatprep.subr.bf16.mxu0 0
        %6370 = vmatpush1.bf16.msra.mxu0 0
        %6371 = vmatprep.subr.bf16.mxu0 0
        %6372 = vmatpush1.bf16.msra.mxu0 0
        %6373 = vmatprep.subr.bf16.mxu0 0
        %6374 = vmatpush1.bf16.msra.mxu0 0
        %6375 = vmatprep.subr.bf16.mxu0 0
        %6376 = vmatpush1.bf16.msra.mxu0 0
        %6377 = vmatprep.subr.bf16.mxu0 0
        %6378 = vmatpush1.bf16.msra.mxu0 0
        %6379 = vmatprep.mubr.bf16.mxu0 0
        %6380 = vmatmul.mubr.bf16.gmra.mrb[0].mxu0 %v4418
        %v6381 = vpop.f32.mrb[0].mxu0
        %v6382 = vadd.f32 %v1596, %v6381
        %v6383 = vpop.f32.mrb[0].mxu0
        %v6384 = vadd.f32 %v1600, %v6383
        %v6385 = vpop.f32.mrb[0].mxu0
        %v6386 = vpop.f32.mrb[0].mxu0
        %6387 = vdwg.mxu0
        %6388 = vmatprep.subr.bf16.mxu0 %v3490
        %6389 = vmatpush1.bf16.msra.mxu0 %v3489
        %6390 = vmatprep.subr.bf16.mxu0 %v3618
        %6391 = vmatpush1.bf16.msra.mxu0 %v3617
        %6392 = vmatprep.subr.bf16.mxu0 %v3746
        %6393 = vmatpush1.bf16.msra.mxu0 %v3745
        %6394 = vmatprep.subr.bf16.mxu0 %v3874
        %6395 = vmatpush1.bf16.msra.mxu0 %v3873
        %6396 = vmatprep.subr.bf16.mxu0 0
        %6397 = vmatpush1.bf16.msra.mxu0 0
        %6398 = vmatprep.subr.bf16.mxu0 0
        %6399 = vmatpush1.bf16.msra.mxu0 0
        %6400 = vmatprep.subr.bf16.mxu0 0
        %6401 = vmatpush1.bf16.msra.mxu0 0
        %6402 = vmatprep.subr.bf16.mxu0 0
        %6403 = vmatpush1.bf16.msra.mxu0 0
        %6404 = vmatprep.subr.bf16.mxu0 0
        %6405 = vmatpush1.bf16.msra.mxu0 0
        %6406 = vmatprep.subr.bf16.mxu0 0
        %6407 = vmatpush1.bf16.msra.mxu0 0
        %6408 = vmatprep.subr.bf16.mxu0 0
        %6409 = vmatpush1.bf16.msra.mxu0 0
        %6410 = vmatprep.subr.bf16.mxu0 0
        %6411 = vmatpush1.bf16.msra.mxu0 0
        %6412 = vmatprep.subr.bf16.mxu0 0
        %6413 = vmatpush1.bf16.msra.mxu0 0
        %6414 = vmatprep.subr.bf16.mxu0 0
        %6415 = vmatpush1.bf16.msra.mxu0 0
        %6416 = vmatprep.subr.bf16.mxu0 0
        %6417 = vmatpush1.bf16.msra.mxu0 0
        %6418 = vmatprep.subr.bf16.mxu0 0
        %6419 = vmatpush1.bf16.msra.mxu0 0
        %6420 = vmatprep.mubr.bf16.mxu0 0
        %6421 = vmatmul.mubr.bf16.gmra.mrb[0].mxu0 %v4418
        %v6422 = vpop.f32.mrb[0].mxu0
        %v6423 = vadd.f32 %v1604, %v6422
        %v6424 = vpop.f32.mrb[0].mxu0
        %v6425 = vadd.f32 %v1608, %v6424
        %v6426 = vpop.f32.mrb[0].mxu0
        %v6427 = vpop.f32.mrb[0].mxu0
        %6428 = vdwg.mxu0
        %6429 = vmatprep.subr.bf16.mxu0 %v3492
        %6430 = vmatpush1.bf16.msra.mxu0 %v3491
        %6431 = vmatprep.subr.bf16.mxu0 %v3620
        %6432 = vmatpush1.bf16.msra.mxu0 %v3619
        %6433 = vmatprep.subr.bf16.mxu0 %v3748
        %6434 = vmatpush1.bf16.msra.mxu0 %v3747
        %6435 = vmatprep.subr.bf16.mxu0 %v3876
        %6436 = vmatpush1.bf16.msra.mxu0 %v3875
        %6437 = vmatprep.subr.bf16.mxu0 0
        %6438 = vmatpush1.bf16.msra.mxu0 0
        %6439 = vmatprep.subr.bf16.mxu0 0
        %6440 = vmatpush1.bf16.msra.mxu0 0
        %6441 = vmatprep.subr.bf16.mxu0 0
        %6442 = vmatpush1.bf16.msra.mxu0 0
        %6443 = vmatprep.subr.bf16.mxu0 0
        %6444 = vmatpush1.bf16.msra.mxu0 0
        %6445 = vmatprep.subr.bf16.mxu0 0
        %6446 = vmatpush1.bf16.msra.mxu0 0
        %6447 = vmatprep.subr.bf16.mxu0 0
        %6448 = vmatpush1.bf16.msra.mxu0 0
        %6449 = vmatprep.subr.bf16.mxu0 0
        %6450 = vmatpush1.bf16.msra.mxu0 0
        %6451 = vmatprep.subr.bf16.mxu0 0
        %6452 = vmatpush1.bf16.msra.mxu0 0
        %6453 = vmatprep.subr.bf16.mxu0 0
        %6454 = vmatpush1.bf16.msra.mxu0 0
        %6455 = vmatprep.subr.bf16.mxu0 0
        %6456 = vmatpush1.bf16.msra.mxu0 0
        %6457 = vmatprep.subr.bf16.mxu0 0
        %6458 = vmatpush1.bf16.msra.mxu0 0
        %6459 = vmatprep.subr.bf16.mxu0 0
        %6460 = vmatpush1.bf16.msra.mxu0 0
        %6461 = vmatprep.mubr.bf16.mxu0 0
        %6462 = vmatmul.mubr.bf16.gmra.mrb[0].mxu0 %v4418
        %v6463 = vpop.f32.mrb[0].mxu0
        %v6464 = vadd.f32 %v1612, %v6463
        %v6465 = vpop.f32.mrb[0].mxu0
        %v6466 = vadd.f32 %v1616, %v6465
        %v6467 = vpop.f32.mrb[0].mxu0
        %v6468 = vpop.f32.mrb[0].mxu0
        %6469 = vdwg.mxu0
        %6470 = vmatprep.subr.bf16.mxu0 %v3494
        %6471 = vmatpush1.bf16.msra.mxu0 %v3493
        %6472 = vmatprep.subr.bf16.mxu0 %v3622
        %6473 = vmatpush1.bf16.msra.mxu0 %v3621
        %6474 = vmatprep.subr.bf16.mxu0 %v3750
        %6475 = vmatpush1.bf16.msra.mxu0 %v3749
        %6476 = vmatprep.subr.bf16.mxu0 %v3878
        %6477 = vmatpush1.bf16.msra.mxu0 %v3877
        %6478 = vmatprep.subr.bf16.mxu0 0
        %6479 = vmatpush1.bf16.msra.mxu0 0
        %6480 = vmatprep.subr.bf16.mxu0 0
        %6481 = vmatpush1.bf16.msra.mxu0 0
        %6482 = vmatprep.subr.bf16.mxu0 0
        %6483 = vmatpush1.bf16.msra.mxu0 0
        %6484 = vmatprep.subr.bf16.mxu0 0
        %6485 = vmatpush1.bf16.msra.mxu0 0
        %6486 = vmatprep.subr.bf16.mxu0 0
        %6487 = vmatpush1.bf16.msra.mxu0 0
        %6488 = vmatprep.subr.bf16.mxu0 0
        %6489 = vmatpush1.bf16.msra.mxu0 0
        %6490 = vmatprep.subr.bf16.mxu0 0
        %6491 = vmatpush1.bf16.msra.mxu0 0
        %6492 = vmatprep.subr.bf16.mxu0 0
        %6493 = vmatpush1.bf16.msra.mxu0 0
        %6494 = vmatprep.subr.bf16.mxu0 0
        %6495 = vmatpush1.bf16.msra.mxu0 0
        %6496 = vmatprep.subr.bf16.mxu0 0
        %6497 = vmatpush1.bf16.msra.mxu0 0
        %6498 = vmatprep.subr.bf16.mxu0 0
        %6499 = vmatpush1.bf16.msra.mxu0 0
        %6500 = vmatprep.subr.bf16.mxu0 0
        %6501 = vmatpush1.bf16.msra.mxu0 0
        %6502 = vmatprep.mubr.bf16.mxu0 0
        %6503 = vmatmul.mubr.bf16.gmra.mrb[0].mxu0 %v4418
        %v6504 = vpop.f32.mrb[0].mxu0
        %v6505 = vadd.f32 %v1620, %v6504
        %v6506 = vpop.f32.mrb[0].mxu0
        %v6507 = vadd.f32 %v1624, %v6506
        %v6508 = vpop.f32.mrb[0].mxu0
        %v6509 = vpop.f32.mrb[0].mxu0
        %6510 = vdwg.mxu0
        %6511 = vmatprep.subr.bf16.mxu0 %v3496
        %6512 = vmatpush1.bf16.msra.mxu0 %v3495
        %6513 = vmatprep.subr.bf16.mxu0 %v3624
        %6514 = vmatpush1.bf16.msra.mxu0 %v3623
        %6515 = vmatprep.subr.bf16.mxu0 %v3752
        %6516 = vmatpush1.bf16.msra.mxu0 %v3751
        %6517 = vmatprep.subr.bf16.mxu0 %v3880
        %6518 = vmatpush1.bf16.msra.mxu0 %v3879
        %6519 = vmatprep.subr.bf16.mxu0 0
        %6520 = vmatpush1.bf16.msra.mxu0 0
        %6521 = vmatprep.subr.bf16.mxu0 0
        %6522 = vmatpush1.bf16.msra.mxu0 0
        %6523 = vmatprep.subr.bf16.mxu0 0
        %6524 = vmatpush1.bf16.msra.mxu0 0
        %6525 = vmatprep.subr.bf16.mxu0 0
        %6526 = vmatpush1.bf16.msra.mxu0 0
        %6527 = vmatprep.subr.bf16.mxu0 0
        %6528 = vmatpush1.bf16.msra.mxu0 0
        %6529 = vmatprep.subr.bf16.mxu0 0
        %6530 = vmatpush1.bf16.msra.mxu0 0
        %6531 = vmatprep.subr.bf16.mxu0 0
        %6532 = vmatpush1.bf16.msra.mxu0 0
        %6533 = vmatprep.subr.bf16.mxu0 0
        %6534 = vmatpush1.bf16.msra.mxu0 0
        %6535 = vmatprep.subr.bf16.mxu0 0
        %6536 = vmatpush1.bf16.msra.mxu0 0
        %6537 = vmatprep.subr.bf16.mxu0 0
        %6538 = vmatpush1.bf16.msra.mxu0 0
        %6539 = vmatprep.subr.bf16.mxu0 0
        %6540 = vmatpush1.bf16.msra.mxu0 0
        %6541 = vmatprep.subr.bf16.mxu0 0
        %6542 = vmatpush1.bf16.msra.mxu0 0
        %6543 = vmatprep.mubr.bf16.mxu0 0
        %6544 = vmatmul.mubr.bf16.gmra.mrb[0].mxu0 %v4418
        %v6545 = vpop.f32.mrb[0].mxu0
        %v6546 = vadd.f32 %v1628, %v6545
        %v6547 = vpop.f32.mrb[0].mxu0
        %v6548 = vadd.f32 %v1632, %v6547
        %v6549 = vpop.f32.mrb[0].mxu0
        %v6550 = vpop.f32.mrb[0].mxu0
        %6551 = vdwg.mxu0
        %6552 = vmatprep.subr.bf16.mxu0 %v3498
        %6553 = vmatpush1.bf16.msra.mxu0 %v3497
        %6554 = vmatprep.subr.bf16.mxu0 %v3626
        %6555 = vmatpush1.bf16.msra.mxu0 %v3625
        %6556 = vmatprep.subr.bf16.mxu0 %v3754
        %6557 = vmatpush1.bf16.msra.mxu0 %v3753
        %6558 = vmatprep.subr.bf16.mxu0 %v3882
        %6559 = vmatpush1.bf16.msra.mxu0 %v3881
        %6560 = vmatprep.subr.bf16.mxu0 0
        %6561 = vmatpush1.bf16.msra.mxu0 0
        %6562 = vmatprep.subr.bf16.mxu0 0
        %6563 = vmatpush1.bf16.msra.mxu0 0
        %6564 = vmatprep.subr.bf16.mxu0 0
        %6565 = vmatpush1.bf16.msra.mxu0 0
        %6566 = vmatprep.subr.bf16.mxu0 0
        %6567 = vmatpush1.bf16.msra.mxu0 0
        %6568 = vmatprep.subr.bf16.mxu0 0
        %6569 = vmatpush1.bf16.msra.mxu0 0
        %6570 = vmatprep.subr.bf16.mxu0 0
        %6571 = vmatpush1.bf16.msra.mxu0 0
        %6572 = vmatprep.subr.bf16.mxu0 0
        %6573 = vmatpush1.bf16.msra.mxu0 0
        %6574 = vmatprep.subr.bf16.mxu0 0
        %6575 = vmatpush1.bf16.msra.mxu0 0
        %6576 = vmatprep.subr.bf16.mxu0 0
        %6577 = vmatpush1.bf16.msra.mxu0 0
        %6578 = vmatprep.subr.bf16.mxu0 0
        %6579 = vmatpush1.bf16.msra.mxu0 0
        %6580 = vmatprep.subr.bf16.mxu0 0
        %6581 = vmatpush1.bf16.msra.mxu0 0
        %6582 = vmatprep.subr.bf16.mxu0 0
        %6583 = vmatpush1.bf16.msra.mxu0 0
        %6584 = vmatprep.mubr.bf16.mxu0 0
        %6585 = vmatmul.mubr.bf16.gmra.mrb[0].mxu0 %v4418
        %v6586 = vpop.f32.mrb[0].mxu0
        %v6587 = vadd.f32 %v1636, %v6586
        %v6588 = vpop.f32.mrb[0].mxu0
        %v6589 = vadd.f32 %v1640, %v6588
        %v6590 = vpop.f32.mrb[0].mxu0
        %v6591 = vpop.f32.mrb[0].mxu0
        %6592 = vdwg.mxu0
        %6593 = vmatprep.subr.bf16.mxu0 %v3500
        %6594 = vmatpush1.bf16.msra.mxu0 %v3499
        %6595 = vmatprep.subr.bf16.mxu0 %v3628
        %6596 = vmatpush1.bf16.msra.mxu0 %v3627
        %6597 = vmatprep.subr.bf16.mxu0 %v3756
        %6598 = vmatpush1.bf16.msra.mxu0 %v3755
        %6599 = vmatprep.subr.bf16.mxu0 %v3884
        %6600 = vmatpush1.bf16.msra.mxu0 %v3883
        %6601 = vmatprep.subr.bf16.mxu0 0
        %6602 = vmatpush1.bf16.msra.mxu0 0
        %6603 = vmatprep.subr.bf16.mxu0 0
        %6604 = vmatpush1.bf16.msra.mxu0 0
        %6605 = vmatprep.subr.bf16.mxu0 0
        %6606 = vmatpush1.bf16.msra.mxu0 0
        %6607 = vmatprep.subr.bf16.mxu0 0
        %6608 = vmatpush1.bf16.msra.mxu0 0
        %6609 = vmatprep.subr.bf16.mxu0 0
        %6610 = vmatpush1.bf16.msra.mxu0 0
        %6611 = vmatprep.subr.bf16.mxu0 0
        %6612 = vmatpush1.bf16.msra.mxu0 0
        %6613 = vmatprep.subr.bf16.mxu0 0
        %6614 = vmatpush1.bf16.msra.mxu0 0
        %6615 = vmatprep.subr.bf16.mxu0 0
        %6616 = vmatpush1.bf16.msra.mxu0 0
        %6617 = vmatprep.subr.bf16.mxu0 0
        %6618 = vmatpush1.bf16.msra.mxu0 0
        %6619 = vmatprep.subr.bf16.mxu0 0
        %6620 = vmatpush1.bf16.msra.mxu0 0
        %6621 = vmatprep.subr.bf16.mxu0 0
        %6622 = vmatpush1.bf16.msra.mxu0 0
        %6623 = vmatprep.subr.bf16.mxu0 0
        %6624 = vmatpush1.bf16.msra.mxu0 0
        %6625 = vmatprep.mubr.bf16.mxu0 0
        %6626 = vmatmul.mubr.bf16.gmra.mrb[0].mxu0 %v4418
        %v6627 = vpop.f32.mrb[0].mxu0
        %v6628 = vadd.f32 %v1644, %v6627
        %v6629 = vpop.f32.mrb[0].mxu0
        %v6630 = vadd.f32 %v1648, %v6629
        %v6631 = vpop.f32.mrb[0].mxu0
        %v6632 = vpop.f32.mrb[0].mxu0
        %6633 = vdwg.mxu0
        %6634 = vmatprep.subr.bf16.mxu0 %v3502
        %6635 = vmatpush1.bf16.msra.mxu0 %v3501
        %6636 = vmatprep.subr.bf16.mxu0 %v3630
        %6637 = vmatpush1.bf16.msra.mxu0 %v3629
        %6638 = vmatprep.subr.bf16.mxu0 %v3758
        %6639 = vmatpush1.bf16.msra.mxu0 %v3757
        %6640 = vmatprep.subr.bf16.mxu0 %v3886
        %6641 = vmatpush1.bf16.msra.mxu0 %v3885
        %6642 = vmatprep.subr.bf16.mxu0 0
        %6643 = vmatpush1.bf16.msra.mxu0 0
        %6644 = vmatprep.subr.bf16.mxu0 0
        %6645 = vmatpush1.bf16.msra.mxu0 0
        %6646 = vmatprep.subr.bf16.mxu0 0
        %6647 = vmatpush1.bf16.msra.mxu0 0
        %6648 = vmatprep.subr.bf16.mxu0 0
        %6649 = vmatpush1.bf16.msra.mxu0 0
        %6650 = vmatprep.subr.bf16.mxu0 0
        %6651 = vmatpush1.bf16.msra.mxu0 0
        %6652 = vmatprep.subr.bf16.mxu0 0
        %6653 = vmatpush1.bf16.msra.mxu0 0
        %6654 = vmatprep.subr.bf16.mxu0 0
        %6655 = vmatpush1.bf16.msra.mxu0 0
        %6656 = vmatprep.subr.bf16.mxu0 0
        %6657 = vmatpush1.bf16.msra.mxu0 0
        %6658 = vmatprep.subr.bf16.mxu0 0
        %6659 = vmatpush1.bf16.msra.mxu0 0
        %6660 = vmatprep.subr.bf16.mxu0 0
        %6661 = vmatpush1.bf16.msra.mxu0 0
        %6662 = vmatprep.subr.bf16.mxu0 0
        %6663 = vmatpush1.bf16.msra.mxu0 0
        %6664 = vmatprep.subr.bf16.mxu0 0
        %6665 = vmatpush1.bf16.msra.mxu0 0
        %6666 = vmatprep.mubr.bf16.mxu0 0
        %6667 = vmatmul.mubr.bf16.gmra.mrb[0].mxu0 %v4418
        %v6668 = vpop.f32.mrb[0].mxu0
        %v6669 = vadd.f32 %v1652, %v6668
        %v6670 = vpop.f32.mrb[0].mxu0
        %v6671 = vadd.f32 %v1656, %v6670
        %v6672 = vpop.f32.mrb[0].mxu0
        %v6673 = vpop.f32.mrb[0].mxu0
        %6674 = vdwg.mxu0
        %6675 = vmatprep.subr.bf16.mxu0 %v3504
        %6676 = vmatpush1.bf16.msra.mxu0 %v3503
        %6677 = vmatprep.subr.bf16.mxu0 %v3632
        %6678 = vmatpush1.bf16.msra.mxu0 %v3631
        %6679 = vmatprep.subr.bf16.mxu0 %v3760
        %6680 = vmatpush1.bf16.msra.mxu0 %v3759
        %6681 = vmatprep.subr.bf16.mxu0 %v3888
        %6682 = vmatpush1.bf16.msra.mxu0 %v3887
        %6683 = vmatprep.subr.bf16.mxu0 0
        %6684 = vmatpush1.bf16.msra.mxu0 0
        %6685 = vmatprep.subr.bf16.mxu0 0
        %6686 = vmatpush1.bf16.msra.mxu0 0
        %6687 = vmatprep.subr.bf16.mxu0 0
        %6688 = vmatpush1.bf16.msra.mxu0 0
        %6689 = vmatprep.subr.bf16.mxu0 0
        %6690 = vmatpush1.bf16.msra.mxu0 0
        %6691 = vmatprep.subr.bf16.mxu0 0
        %6692 = vmatpush1.bf16.msra.mxu0 0
        %6693 = vmatprep.subr.bf16.mxu0 0
        %6694 = vmatpush1.bf16.msra.mxu0 0
        %6695 = vmatprep.subr.bf16.mxu0 0
        %6696 = vmatpush1.bf16.msra.mxu0 0
        %6697 = vmatprep.subr.bf16.mxu0 0
        %6698 = vmatpush1.bf16.msra.mxu0 0
        %6699 = vmatprep.subr.bf16.mxu0 0
        %6700 = vmatpush1.bf16.msra.mxu0 0
        %6701 = vmatprep.subr.bf16.mxu0 0
        %6702 = vmatpush1.bf16.msra.mxu0 0
        %6703 = vmatprep.subr.bf16.mxu0 0
        %6704 = vmatpush1.bf16.msra.mxu0 0
        %6705 = vmatprep.subr.bf16.mxu0 0
        %6706 = vmatpush1.bf16.msra.mxu0 0
        %6707 = vmatprep.mubr.bf16.mxu0 0
        %6708 = vmatmul.mubr.bf16.gmra.mrb[0].mxu0 %v4418
        %v6709 = vpop.f32.mrb[0].mxu0
        %v6710 = vadd.f32 %v1660, %v6709
        %v6711 = vpop.f32.mrb[0].mxu0
        %v6712 = vadd.f32 %v1664, %v6711
        %v6713 = vpop.f32.mrb[0].mxu0
        %v6714 = vpop.f32.mrb[0].mxu0
        %6715 = vdwg.mxu0
        %6716 = vmatprep.subr.bf16.mxu0 %v3506
        %6717 = vmatpush1.bf16.msra.mxu0 %v3505
        %6718 = vmatprep.subr.bf16.mxu0 %v3634
        %6719 = vmatpush1.bf16.msra.mxu0 %v3633
        %6720 = vmatprep.subr.bf16.mxu0 %v3762
        %6721 = vmatpush1.bf16.msra.mxu0 %v3761
        %6722 = vmatprep.subr.bf16.mxu0 %v3890
        %6723 = vmatpush1.bf16.msra.mxu0 %v3889
        %6724 = vmatprep.subr.bf16.mxu0 0
        %6725 = vmatpush1.bf16.msra.mxu0 0
        %6726 = vmatprep.subr.bf16.mxu0 0
        %6727 = vmatpush1.bf16.msra.mxu0 0
        %6728 = vmatprep.subr.bf16.mxu0 0
        %6729 = vmatpush1.bf16.msra.mxu0 0
        %6730 = vmatprep.subr.bf16.mxu0 0
        %6731 = vmatpush1.bf16.msra.mxu0 0
        %6732 = vmatprep.subr.bf16.mxu0 0
        %6733 = vmatpush1.bf16.msra.mxu0 0
        %6734 = vmatprep.subr.bf16.mxu0 0
        %6735 = vmatpush1.bf16.msra.mxu0 0
        %6736 = vmatprep.subr.bf16.mxu0 0
        %6737 = vmatpush1.bf16.msra.mxu0 0
        %6738 = vmatprep.subr.bf16.mxu0 0
        %6739 = vmatpush1.bf16.msra.mxu0 0
        %6740 = vmatprep.subr.bf16.mxu0 0
        %6741 = vmatpush1.bf16.msra.mxu0 0
        %6742 = vmatprep.subr.bf16.mxu0 0
        %6743 = vmatpush1.bf16.msra.mxu0 0
        %6744 = vmatprep.subr.bf16.mxu0 0
        %6745 = vmatpush1.bf16.msra.mxu0 0
        %6746 = vmatprep.subr.bf16.mxu0 0
        %6747 = vmatpush1.bf16.msra.mxu0 0
        %6748 = vmatprep.mubr.bf16.mxu0 0
        %6749 = vmatmul.mubr.bf16.gmra.mrb[0].mxu0 %v4418
        %v6750 = vpop.f32.mrb[0].mxu0
        %v6751 = vadd.f32 %v1668, %v6750
        %v6752 = vpop.f32.mrb[0].mxu0
        %v6753 = vadd.f32 %v1672, %v6752
        %v6754 = vpop.f32.mrb[0].mxu0
        %v6755 = vpop.f32.mrb[0].mxu0
        %6756 = vdwg.mxu0
        %6757 = vmatprep.subr.bf16.mxu0 %v3508
        %6758 = vmatpush1.bf16.msra.mxu0 %v3507
        %6759 = vmatprep.subr.bf16.mxu0 %v3636
        %6760 = vmatpush1.bf16.msra.mxu0 %v3635
        %6761 = vmatprep.subr.bf16.mxu0 %v3764
        %6762 = vmatpush1.bf16.msra.mxu0 %v3763
        %6763 = vmatprep.subr.bf16.mxu0 %v3892
        %6764 = vmatpush1.bf16.msra.mxu0 %v3891
        %6765 = vmatprep.subr.bf16.mxu0 0
        %6766 = vmatpush1.bf16.msra.mxu0 0
        %6767 = vmatprep.subr.bf16.mxu0 0
        %6768 = vmatpush1.bf16.msra.mxu0 0
        %6769 = vmatprep.subr.bf16.mxu0 0
        %6770 = vmatpush1.bf16.msra.mxu0 0
        %6771 = vmatprep.subr.bf16.mxu0 0
        %6772 = vmatpush1.bf16.msra.mxu0 0
        %6773 = vmatprep.subr.bf16.mxu0 0
        %6774 = vmatpush1.bf16.msra.mxu0 0
        %6775 = vmatprep.subr.bf16.mxu0 0
        %6776 = vmatpush1.bf16.msra.mxu0 0
        %6777 = vmatprep.subr.bf16.mxu0 0
        %6778 = vmatpush1.bf16.msra.mxu0 0
        %6779 = vmatprep.subr.bf16.mxu0 0
        %6780 = vmatpush1.bf16.msra.mxu0 0
        %6781 = vmatprep.subr.bf16.mxu0 0
        %6782 = vmatpush1.bf16.msra.mxu0 0
        %6783 = vmatprep.subr.bf16.mxu0 0
        %6784 = vmatpush1.bf16.msra.mxu0 0
        %6785 = vmatprep.subr.bf16.mxu0 0
        %6786 = vmatpush1.bf16.msra.mxu0 0
        %6787 = vmatprep.subr.bf16.mxu0 0
        %6788 = vmatpush1.bf16.msra.mxu0 0
        %6789 = vmatprep.mubr.bf16.mxu0 0
        %6790 = vmatmul.mubr.bf16.gmra.mrb[0].mxu0 %v4418
        %v6791 = vpop.f32.mrb[0].mxu0
        %v6792 = vadd.f32 %v1676, %v6791
        %v6793 = vpop.f32.mrb[0].mxu0
        %v6794 = vadd.f32 %v1680, %v6793
        %v6795 = vpop.f32.mrb[0].mxu0
        %v6796 = vpop.f32.mrb[0].mxu0
        %6797 = vdwg.mxu0
        %6798 = vmatprep.subr.bf16.mxu0 %v3510
        %6799 = vmatpush1.bf16.msra.mxu0 %v3509
        %6800 = vmatprep.subr.bf16.mxu0 %v3638
        %6801 = vmatpush1.bf16.msra.mxu0 %v3637
        %6802 = vmatprep.subr.bf16.mxu0 %v3766
        %6803 = vmatpush1.bf16.msra.mxu0 %v3765
        %6804 = vmatprep.subr.bf16.mxu0 %v3894
        %6805 = vmatpush1.bf16.msra.mxu0 %v3893
        %6806 = vmatprep.subr.bf16.mxu0 0
        %6807 = vmatpush1.bf16.msra.mxu0 0
        %6808 = vmatprep.subr.bf16.mxu0 0
        %6809 = vmatpush1.bf16.msra.mxu0 0
        %6810 = vmatprep.subr.bf16.mxu0 0
        %6811 = vmatpush1.bf16.msra.mxu0 0
        %6812 = vmatprep.subr.bf16.mxu0 0
        %6813 = vmatpush1.bf16.msra.mxu0 0
        %6814 = vmatprep.subr.bf16.mxu0 0
        %6815 = vmatpush1.bf16.msra.mxu0 0
        %6816 = vmatprep.subr.bf16.mxu0 0
        %6817 = vmatpush1.bf16.msra.mxu0 0
        %6818 = vmatprep.subr.bf16.mxu0 0
        %6819 = vmatpush1.bf16.msra.mxu0 0
        %6820 = vmatprep.subr.bf16.mxu0 0
        %6821 = vmatpush1.bf16.msra.mxu0 0
        %6822 = vmatprep.subr.bf16.mxu0 0
        %6823 = vmatpush1.bf16.msra.mxu0 0
        %6824 = vmatprep.subr.bf16.mxu0 0
        %6825 = vmatpush1.bf16.msra.mxu0 0
        %6826 = vmatprep.subr.bf16.mxu0 0
        %6827 = vmatpush1.bf16.msra.mxu0 0
        %6828 = vmatprep.subr.bf16.mxu0 0
        %6829 = vmatpush1.bf16.msra.mxu0 0
        %6830 = vmatprep.mubr.bf16.mxu0 0
        %6831 = vmatmul.mubr.bf16.gmra.mrb[0].mxu0 %v4418
        %v6832 = vpop.f32.mrb[0].mxu0
        %v6833 = vadd.f32 %v1684, %v6832
        %v6834 = vpop.f32.mrb[0].mxu0
        %v6835 = vadd.f32 %v1688, %v6834
        %v6836 = vpop.f32.mrb[0].mxu0
        %v6837 = vpop.f32.mrb[0].mxu0
        %6838 = vdwg.mxu0
        %6839 = vmatprep.subr.bf16.mxu0 %v3512
        %6840 = vmatpush1.bf16.msra.mxu0 %v3511
        %6841 = vmatprep.subr.bf16.mxu0 %v3640
        %6842 = vmatpush1.bf16.msra.mxu0 %v3639
        %6843 = vmatprep.subr.bf16.mxu0 %v3768
        %6844 = vmatpush1.bf16.msra.mxu0 %v3767
        %6845 = vmatprep.subr.bf16.mxu0 %v3896
        %6846 = vmatpush1.bf16.msra.mxu0 %v3895
        %6847 = vmatprep.subr.bf16.mxu0 0
        %6848 = vmatpush1.bf16.msra.mxu0 0
        %6849 = vmatprep.subr.bf16.mxu0 0
        %6850 = vmatpush1.bf16.msra.mxu0 0
        %6851 = vmatprep.subr.bf16.mxu0 0
        %6852 = vmatpush1.bf16.msra.mxu0 0
        %6853 = vmatprep.subr.bf16.mxu0 0
        %6854 = vmatpush1.bf16.msra.mxu0 0
        %6855 = vmatprep.subr.bf16.mxu0 0
        %6856 = vmatpush1.bf16.msra.mxu0 0
        %6857 = vmatprep.subr.bf16.mxu0 0
        %6858 = vmatpush1.bf16.msra.mxu0 0
        %6859 = vmatprep.subr.bf16.mxu0 0
        %6860 = vmatpush1.bf16.msra.mxu0 0
        %6861 = vmatprep.subr.bf16.mxu0 0
        %6862 = vmatpush1.bf16.msra.mxu0 0
        %6863 = vmatprep.subr.bf16.mxu0 0
        %6864 = vmatpush1.bf16.msra.mxu0 0
        %6865 = vmatprep.subr.bf16.mxu0 0
        %6866 = vmatpush1.bf16.msra.mxu0 0
        %6867 = vmatprep.subr.bf16.mxu0 0
        %6868 = vmatpush1.bf16.msra.mxu0 0
        %6869 = vmatprep.subr.bf16.mxu0 0
        %6870 = vmatpush1.bf16.msra.mxu0 0
        %6871 = vmatprep.mubr.bf16.mxu0 0
        %6872 = vmatmul.mubr.bf16.gmra.mrb[0].mxu0 %v4418
        %v6873 = vpop.f32.mrb[0].mxu0
        %v6874 = vadd.f32 %v1692, %v6873
        %v6875 = vpop.f32.mrb[0].mxu0
        %v6876 = vadd.f32 %v1696, %v6875
        %v6877 = vpop.f32.mrb[0].mxu0
        %v6878 = vpop.f32.mrb[0].mxu0
        %6879 = vdwg.mxu0
        %6880 = vmatprep.subr.bf16.mxu0 %v3514
        %6881 = vmatpush1.bf16.msra.mxu0 %v3513
        %6882 = vmatprep.subr.bf16.mxu0 %v3642
        %6883 = vmatpush1.bf16.msra.mxu0 %v3641
        %6884 = vmatprep.subr.bf16.mxu0 %v3770
        %6885 = vmatpush1.bf16.msra.mxu0 %v3769
        %6886 = vmatprep.subr.bf16.mxu0 %v3898
        %6887 = vmatpush1.bf16.msra.mxu0 %v3897
        %6888 = vmatprep.subr.bf16.mxu0 0
        %6889 = vmatpush1.bf16.msra.mxu0 0
        %6890 = vmatprep.subr.bf16.mxu0 0
        %6891 = vmatpush1.bf16.msra.mxu0 0
        %6892 = vmatprep.subr.bf16.mxu0 0
        %6893 = vmatpush1.bf16.msra.mxu0 0
        %6894 = vmatprep.subr.bf16.mxu0 0
        %6895 = vmatpush1.bf16.msra.mxu0 0
        %6896 = vmatprep.subr.bf16.mxu0 0
        %6897 = vmatpush1.bf16.msra.mxu0 0
        %6898 = vmatprep.subr.bf16.mxu0 0
        %6899 = vmatpush1.bf16.msra.mxu0 0
        %6900 = vmatprep.subr.bf16.mxu0 0
        %6901 = vmatpush1.bf16.msra.mxu0 0
        %6902 = vmatprep.subr.bf16.mxu0 0
        %6903 = vmatpush1.bf16.msra.mxu0 0
        %6904 = vmatprep.subr.bf16.mxu0 0
        %6905 = vmatpush1.bf16.msra.mxu0 0
        %6906 = vmatprep.subr.bf16.mxu0 0
        %6907 = vmatpush1.bf16.msra.mxu0 0
        %6908 = vmatprep.subr.bf16.mxu0 0
        %6909 = vmatpush1.bf16.msra.mxu0 0
        %6910 = vmatprep.subr.bf16.mxu0 0
        %6911 = vmatpush1.bf16.msra.mxu0 0
        %6912 = vmatprep.mubr.bf16.mxu0 0
        %6913 = vmatmul.mubr.bf16.gmra.mrb[0].mxu0 %v4418
        %v6914 = vpop.f32.mrb[0].mxu0
        %v6915 = vadd.f32 %v1700, %v6914
        %v6916 = vpop.f32.mrb[0].mxu0
        %v6917 = vadd.f32 %v1704, %v6916
        %v6918 = vpop.f32.mrb[0].mxu0
        %v6919 = vpop.f32.mrb[0].mxu0
        %6920 = vdwg.mxu0
        %6921 = vmatprep.subr.bf16.mxu0 %v3516
        %6922 = vmatpush1.bf16.msra.mxu0 %v3515
        %6923 = vmatprep.subr.bf16.mxu0 %v3644
        %6924 = vmatpush1.bf16.msra.mxu0 %v3643
        %6925 = vmatprep.subr.bf16.mxu0 %v3772
        %6926 = vmatpush1.bf16.msra.mxu0 %v3771
        %6927 = vmatprep.subr.bf16.mxu0 %v3900
        %6928 = vmatpush1.bf16.msra.mxu0 %v3899
        %6929 = vmatprep.subr.bf16.mxu0 0
        %6930 = vmatpush1.bf16.msra.mxu0 0
        %6931 = vmatprep.subr.bf16.mxu0 0
        %6932 = vmatpush1.bf16.msra.mxu0 0
        %6933 = vmatprep.subr.bf16.mxu0 0
        %6934 = vmatpush1.bf16.msra.mxu0 0
        %6935 = vmatprep.subr.bf16.mxu0 0
        %6936 = vmatpush1.bf16.msra.mxu0 0
        %6937 = vmatprep.subr.bf16.mxu0 0
        %6938 = vmatpush1.bf16.msra.mxu0 0
        %6939 = vmatprep.subr.bf16.mxu0 0
        %6940 = vmatpush1.bf16.msra.mxu0 0
        %6941 = vmatprep.subr.bf16.mxu0 0
        %6942 = vmatpush1.bf16.msra.mxu0 0
        %6943 = vmatprep.subr.bf16.mxu0 0
        %6944 = vmatpush1.bf16.msra.mxu0 0
        %6945 = vmatprep.subr.bf16.mxu0 0
        %6946 = vmatpush1.bf16.msra.mxu0 0
        %6947 = vmatprep.subr.bf16.mxu0 0
        %6948 = vmatpush1.bf16.msra.mxu0 0
        %6949 = vmatprep.subr.bf16.mxu0 0
        %6950 = vmatpush1.bf16.msra.mxu0 0
        %6951 = vmatprep.subr.bf16.mxu0 0
        %6952 = vmatpush1.bf16.msra.mxu0 0
        %6953 = vmatprep.mubr.bf16.mxu0 0
        %6954 = vmatmul.mubr.bf16.gmra.mrb[0].mxu0 %v4418
        %v6955 = vpop.f32.mrb[0].mxu0
        %v6956 = vadd.f32 %v1708, %v6955
        %v6957 = vpop.f32.mrb[0].mxu0
        %v6958 = vadd.f32 %v1712, %v6957
        %v6959 = vpop.f32.mrb[0].mxu0
        %v6960 = vpop.f32.mrb[0].mxu0
        %6961 = vdwg.mxu0
        %6962 = vmatprep.subr.bf16.mxu0 %v3518
        %6963 = vmatpush1.bf16.msra.mxu0 %v3517
        %6964 = vmatprep.subr.bf16.mxu0 %v3646
        %6965 = vmatpush1.bf16.msra.mxu0 %v3645
        %6966 = vmatprep.subr.bf16.mxu0 %v3774
        %6967 = vmatpush1.bf16.msra.mxu0 %v3773
        %6968 = vmatprep.subr.bf16.mxu0 %v3902
        %6969 = vmatpush1.bf16.msra.mxu0 %v3901
        %6970 = vmatprep.subr.bf16.mxu0 0
        %6971 = vmatpush1.bf16.msra.mxu0 0
        %6972 = vmatprep.subr.bf16.mxu0 0
        %6973 = vmatpush1.bf16.msra.mxu0 0
        %6974 = vmatprep.subr.bf16.mxu0 0
        %6975 = vmatpush1.bf16.msra.mxu0 0
        %6976 = vmatprep.subr.bf16.mxu0 0
        %6977 = vmatpush1.bf16.msra.mxu0 0
        %6978 = vmatprep.subr.bf16.mxu0 0
        %6979 = vmatpush1.bf16.msra.mxu0 0
        %6980 = vmatprep.subr.bf16.mxu0 0
        %6981 = vmatpush1.bf16.msra.mxu0 0
        %6982 = vmatprep.subr.bf16.mxu0 0
        %6983 = vmatpush1.bf16.msra.mxu0 0
        %6984 = vmatprep.subr.bf16.mxu0 0
        %6985 = vmatpush1.bf16.msra.mxu0 0
        %6986 = vmatprep.subr.bf16.mxu0 0
        %6987 = vmatpush1.bf16.msra.mxu0 0
        %6988 = vmatprep.subr.bf16.mxu0 0
        %6989 = vmatpush1.bf16.msra.mxu0 0
        %6990 = vmatprep.subr.bf16.mxu0 0
        %6991 = vmatpush1.bf16.msra.mxu0 0
        %6992 = vmatprep.subr.bf16.mxu0 0
        %6993 = vmatpush1.bf16.msra.mxu0 0
        %6994 = vmatprep.mubr.bf16.mxu0 0
        %6995 = vmatmul.mubr.bf16.gmra.mrb[0].mxu0 %v4418
        %v6996 = vpop.f32.mrb[0].mxu0
        %v6997 = vadd.f32 %v1716, %v6996
        %v6998 = vpop.f32.mrb[0].mxu0
        %v6999 = vadd.f32 %v1720, %v6998
        %v7000 = vpop.f32.mrb[0].mxu0
        %v7001 = vpop.f32.mrb[0].mxu0
        %7002 = vdwg.mxu0
        %7003 = vmatprep.subr.bf16.mxu0 %v3520
        %7004 = vmatpush1.bf16.msra.mxu0 %v3519
        %7005 = vmatprep.subr.bf16.mxu0 %v3648
        %7006 = vmatpush1.bf16.msra.mxu0 %v3647
        %7007 = vmatprep.subr.bf16.mxu0 %v3776
        %7008 = vmatpush1.bf16.msra.mxu0 %v3775
        %7009 = vmatprep.subr.bf16.mxu0 %v3904
        %7010 = vmatpush1.bf16.msra.mxu0 %v3903
        %7011 = vmatprep.subr.bf16.mxu0 0
        %7012 = vmatpush1.bf16.msra.mxu0 0
        %7013 = vmatprep.subr.bf16.mxu0 0
        %7014 = vmatpush1.bf16.msra.mxu0 0
        %7015 = vmatprep.subr.bf16.mxu0 0
        %7016 = vmatpush1.bf16.msra.mxu0 0
        %7017 = vmatprep.subr.bf16.mxu0 0
        %7018 = vmatpush1.bf16.msra.mxu0 0
        %7019 = vmatprep.subr.bf16.mxu0 0
        %7020 = vmatpush1.bf16.msra.mxu0 0
        %7021 = vmatprep.subr.bf16.mxu0 0
        %7022 = vmatpush1.bf16.msra.mxu0 0
        %7023 = vmatprep.subr.bf16.mxu0 0
        %7024 = vmatpush1.bf16.msra.mxu0 0
        %7025 = vmatprep.subr.bf16.mxu0 0
        %7026 = vmatpush1.bf16.msra.mxu0 0
        %7027 = vmatprep.subr.bf16.mxu0 0
        %7028 = vmatpush1.bf16.msra.mxu0 0
        %7029 = vmatprep.subr.bf16.mxu0 0
        %7030 = vmatpush1.bf16.msra.mxu0 0
        %7031 = vmatprep.subr.bf16.mxu0 0
        %7032 = vmatpush1.bf16.msra.mxu0 0
        %7033 = vmatprep.subr.bf16.mxu0 0
        %7034 = vmatpush1.bf16.msra.mxu0 0
        %7035 = vmatprep.mubr.bf16.mxu0 0
        %7036 = vmatmul.mubr.bf16.gmra.mrb[0].mxu0 %v4418
        %v7037 = vpop.f32.mrb[0].mxu0
        %v7038 = vadd.f32 %v1724, %v7037
        %v7039 = vpop.f32.mrb[0].mxu0
        %v7040 = vadd.f32 %v1728, %v7039
        %v7041 = vpop.f32.mrb[0].mxu0
        %v7042 = vpop.f32.mrb[0].mxu0
        %7043 = vdwg.mxu0
        %v7172 = vcombine.low %v4455, %v4457
        %v7173 = vcombine.low %v4496, %v4498
        %v7175 = vunpack.c.l.s4 1983009808
        %v7176 = vunpack.c.0.s8 %v7175
        %v7177 = vlaneseq
        %v7178 = vshrl.u32 %v7177, 7
        %v7179 = vsub.s32 %v7176, %v7178
        %v7180 = vrot.slane %v7172, %v7179
        %v7182 = vunpack.c.l.s4 1983009808
        %v7183 = vunpack.c.0.s8 %v7182
        %v7184 = vlaneseq
        %v7185 = vshrl.u32 %v7184, 7
        %v7186 = vsub.s32 %v7183, %v7185
        %v7187 = vrot.slane %v7173, %v7186
        %v7188 = vcombine.low %v7180, %v7187
        %v7189 = vcombine.low %v4537, %v4539
        %v7190 = vcombine.low %v4578, %v4580
        %v7192 = vunpack.c.l.s4 1983009808
        %v7193 = vunpack.c.0.s8 %v7192
        %v7194 = vlaneseq
        %v7195 = vshrl.u32 %v7194, 7
        %v7196 = vsub.s32 %v7193, %v7195
        %v7197 = vrot.slane %v7189, %v7196
        %v7199 = vunpack.c.l.s4 1983009808
        %v7200 = vunpack.c.0.s8 %v7199
        %v7201 = vlaneseq
        %v7202 = vshrl.u32 %v7201, 7
        %v7203 = vsub.s32 %v7200, %v7202
        %v7204 = vrot.slane %v7190, %v7203
        %v7205 = vcombine.low %v7197, %v7204
        %v7206 = vcombine.low %v4619, %v4621
        %v7207 = vcombine.low %v4660, %v4662
        %v7209 = vunpack.c.l.s4 1983009808
        %v7210 = vunpack.c.0.s8 %v7209
        %v7211 = vlaneseq
        %v7212 = vshrl.u32 %v7211, 7
        %v7213 = vsub.s32 %v7210, %v7212
        %v7214 = vrot.slane %v7206, %v7213
        %v7216 = vunpack.c.l.s4 1983009808
        %v7217 = vunpack.c.0.s8 %v7216
        %v7218 = vlaneseq
        %v7219 = vshrl.u32 %v7218, 7
        %v7220 = vsub.s32 %v7217, %v7219
        %v7221 = vrot.slane %v7207, %v7220
        %v7222 = vcombine.low %v7214, %v7221
        %v7223 = vcombine.low %v4701, %v4703
        %v7224 = vcombine.low %v4742, %v4744
        %v7226 = vunpack.c.l.s4 1983009808
        %v7227 = vunpack.c.0.s8 %v7226
        %v7228 = vlaneseq
        %v7229 = vshrl.u32 %v7228, 7
        %v7230 = vsub.s32 %v7227, %v7229
        %v7231 = vrot.slane %v7223, %v7230
        %v7233 = vunpack.c.l.s4 1983009808
        %v7234 = vunpack.c.0.s8 %v7233
        %v7235 = vlaneseq
        %v7236 = vshrl.u32 %v7235, 7
        %v7237 = vsub.s32 %v7234, %v7236
        %v7238 = vrot.slane %v7224, %v7237
        %v7239 = vcombine.low %v7231, %v7238
        %v7240 = vcombine.low %v4783, %v4785
        %v7241 = vcombine.low %v4824, %v4826
        %v7243 = vunpack.c.l.s4 1983009808
        %v7244 = vunpack.c.0.s8 %v7243
        %v7245 = vlaneseq
        %v7246 = vshrl.u32 %v7245, 7
        %v7247 = vsub.s32 %v7244, %v7246
        %v7248 = vrot.slane %v7240, %v7247
        %v7250 = vunpack.c.l.s4 1983009808
        %v7251 = vunpack.c.0.s8 %v7250
        %v7252 = vlaneseq
        %v7253 = vshrl.u32 %v7252, 7
        %v7254 = vsub.s32 %v7251, %v7253
        %v7255 = vrot.slane %v7241, %v7254
        %v7256 = vcombine.low %v7248, %v7255
        %v7257 = vcombine.low %v4865, %v4867
        %v7258 = vcombine.low %v4906, %v4908
        %v7260 = vunpack.c.l.s4 1983009808
        %v7261 = vunpack.c.0.s8 %v7260
        %v7262 = vlaneseq
        %v7263 = vshrl.u32 %v7262, 7
        %v7264 = vsub.s32 %v7261, %v7263
        %v7265 = vrot.slane %v7257, %v7264
        %v7267 = vunpack.c.l.s4 1983009808
        %v7268 = vunpack.c.0.s8 %v7267
        %v7269 = vlaneseq
        %v7270 = vshrl.u32 %v7269, 7
        %v7271 = vsub.s32 %v7268, %v7270
        %v7272 = vrot.slane %v7258, %v7271
        %v7273 = vcombine.low %v7265, %v7272
        %v7274 = vcombine.low %v4947, %v4949
        %v7275 = vcombine.low %v4988, %v4990
        %v7277 = vunpack.c.l.s4 1983009808
        %v7278 = vunpack.c.0.s8 %v7277
        %v7279 = vlaneseq
        %v7280 = vshrl.u32 %v7279, 7
        %v7281 = vsub.s32 %v7278, %v7280
        %v7282 = vrot.slane %v7274, %v7281
        %v7284 = vunpack.c.l.s4 1983009808
        %v7285 = vunpack.c.0.s8 %v7284
        %v7286 = vlaneseq
        %v7287 = vshrl.u32 %v7286, 7
        %v7288 = vsub.s32 %v7285, %v7287
        %v7289 = vrot.slane %v7275, %v7288
        %v7290 = vcombine.low %v7282, %v7289
        %v7291 = vcombine.low %v5029, %v5031
        %v7292 = vcombine.low %v5070, %v5072
        %v7294 = vunpack.c.l.s4 1983009808
        %v7295 = vunpack.c.0.s8 %v7294
        %v7296 = vlaneseq
        %v7297 = vshrl.u32 %v7296, 7
        %v7298 = vsub.s32 %v7295, %v7297
        %v7299 = vrot.slane %v7291, %v7298
        %v7301 = vunpack.c.l.s4 1983009808
        %v7302 = vunpack.c.0.s8 %v7301
        %v7303 = vlaneseq
        %v7304 = vshrl.u32 %v7303, 7
        %v7305 = vsub.s32 %v7302, %v7304
        %v7306 = vrot.slane %v7292, %v7305
        %v7307 = vcombine.low %v7299, %v7306
        %v7308 = vcombine.low %v5111, %v5113
        %v7309 = vcombine.low %v5152, %v5154
        %v7311 = vunpack.c.l.s4 1983009808
        %v7312 = vunpack.c.0.s8 %v7311
        %v7313 = vlaneseq
        %v7314 = vshrl.u32 %v7313, 7
        %v7315 = vsub.s32 %v7312, %v7314
        %v7316 = vrot.slane %v7308, %v7315
        %v7318 = vunpack.c.l.s4 1983009808
        %v7319 = vunpack.c.0.s8 %v7318
        %v7320 = vlaneseq
        %v7321 = vshrl.u32 %v7320, 7
        %v7322 = vsub.s32 %v7319, %v7321
        %v7323 = vrot.slane %v7309, %v7322
        %v7324 = vcombine.low %v7316, %v7323
        %v7325 = vcombine.low %v5193, %v5195
        %v7326 = vcombine.low %v5234, %v5236
        %v7328 = vunpack.c.l.s4 1983009808
        %v7329 = vunpack.c.0.s8 %v7328
        %v7330 = vlaneseq
        %v7331 = vshrl.u32 %v7330, 7
        %v7332 = vsub.s32 %v7329, %v7331
        %v7333 = vrot.slane %v7325, %v7332
        %v7335 = vunpack.c.l.s4 1983009808
        %v7336 = vunpack.c.0.s8 %v7335
        %v7337 = vlaneseq
        %v7338 = vshrl.u32 %v7337, 7
        %v7339 = vsub.s32 %v7336, %v7338
        %v7340 = vrot.slane %v7326, %v7339
        %v7341 = vcombine.low %v7333, %v7340
        %v7342 = vcombine.low %v5275, %v5277
        %v7343 = vcombine.low %v5316, %v5318
        %v7345 = vunpack.c.l.s4 1983009808
        %v7346 = vunpack.c.0.s8 %v7345
        %v7347 = vlaneseq
        %v7348 = vshrl.u32 %v7347, 7
        %v7349 = vsub.s32 %v7346, %v7348
        %v7350 = vrot.slane %v7342, %v7349
        %v7352 = vunpack.c.l.s4 1983009808
        %v7353 = vunpack.c.0.s8 %v7352
        %v7354 = vlaneseq
        %v7355 = vshrl.u32 %v7354, 7
        %v7356 = vsub.s32 %v7353, %v7355
        %v7357 = vrot.slane %v7343, %v7356
        %v7358 = vcombine.low %v7350, %v7357
        %v7359 = vcombine.low %v5357, %v5359
        %v7360 = vcombine.low %v5398, %v5400
        %v7362 = vunpack.c.l.s4 1983009808
        %v7363 = vunpack.c.0.s8 %v7362
        %v7364 = vlaneseq
        %v7365 = vshrl.u32 %v7364, 7
        %v7366 = vsub.s32 %v7363, %v7365
        %v7367 = vrot.slane %v7359, %v7366
        %v7369 = vunpack.c.l.s4 1983009808
        %v7370 = vunpack.c.0.s8 %v7369
        %v7371 = vlaneseq
        %v7372 = vshrl.u32 %v7371, 7
        %v7373 = vsub.s32 %v7370, %v7372
        %v7374 = vrot.slane %v7360, %v7373
        %v7375 = vcombine.low %v7367, %v7374
        %v7376 = vcombine.low %v5439, %v5441
        %v7377 = vcombine.low %v5480, %v5482
        %v7379 = vunpack.c.l.s4 1983009808
        %v7380 = vunpack.c.0.s8 %v7379
        %v7381 = vlaneseq
        %v7382 = vshrl.u32 %v7381, 7
        %v7383 = vsub.s32 %v7380, %v7382
        %v7384 = vrot.slane %v7376, %v7383
        %v7386 = vunpack.c.l.s4 1983009808
        %v7387 = vunpack.c.0.s8 %v7386
        %v7388 = vlaneseq
        %v7389 = vshrl.u32 %v7388, 7
        %v7390 = vsub.s32 %v7387, %v7389
        %v7391 = vrot.slane %v7377, %v7390
        %v7392 = vcombine.low %v7384, %v7391
        %v7393 = vcombine.low %v5521, %v5523
        %v7394 = vcombine.low %v5562, %v5564
        %v7396 = vunpack.c.l.s4 1983009808
        %v7397 = vunpack.c.0.s8 %v7396
        %v7398 = vlaneseq
        %v7399 = vshrl.u32 %v7398, 7
        %v7400 = vsub.s32 %v7397, %v7399
        %v7401 = vrot.slane %v7393, %v7400
        %v7403 = vunpack.c.l.s4 1983009808
        %v7404 = vunpack.c.0.s8 %v7403
        %v7405 = vlaneseq
        %v7406 = vshrl.u32 %v7405, 7
        %v7407 = vsub.s32 %v7404, %v7406
        %v7408 = vrot.slane %v7394, %v7407
        %v7409 = vcombine.low %v7401, %v7408
        %v7410 = vcombine.low %v5603, %v5605
        %v7411 = vcombine.low %v5644, %v5646
        %v7413 = vunpack.c.l.s4 1983009808
        %v7414 = vunpack.c.0.s8 %v7413
        %v7415 = vlaneseq
        %v7416 = vshrl.u32 %v7415, 7
        %v7417 = vsub.s32 %v7414, %v7416
        %v7418 = vrot.slane %v7410, %v7417
        %v7420 = vunpack.c.l.s4 1983009808
        %v7421 = vunpack.c.0.s8 %v7420
        %v7422 = vlaneseq
        %v7423 = vshrl.u32 %v7422, 7
        %v7424 = vsub.s32 %v7421, %v7423
        %v7425 = vrot.slane %v7411, %v7424
        %v7426 = vcombine.low %v7418, %v7425
        %v7427 = vcombine.low %v5685, %v5687
        %v7428 = vcombine.low %v5726, %v5728
        %v7430 = vunpack.c.l.s4 1983009808
        %v7431 = vunpack.c.0.s8 %v7430
        %v7432 = vlaneseq
        %v7433 = vshrl.u32 %v7432, 7
        %v7434 = vsub.s32 %v7431, %v7433
        %v7435 = vrot.slane %v7427, %v7434
        %v7437 = vunpack.c.l.s4 1983009808
        %v7438 = vunpack.c.0.s8 %v7437
        %v7439 = vlaneseq
        %v7440 = vshrl.u32 %v7439, 7
        %v7441 = vsub.s32 %v7438, %v7440
        %v7442 = vrot.slane %v7428, %v7441
        %v7443 = vcombine.low %v7435, %v7442
        %v7444 = vcombine.low %v5767, %v5769
        %v7445 = vcombine.low %v5808, %v5810
        %v7447 = vunpack.c.l.s4 1983009808
        %v7448 = vunpack.c.0.s8 %v7447
        %v7449 = vlaneseq
        %v7450 = vshrl.u32 %v7449, 7
        %v7451 = vsub.s32 %v7448, %v7450
        %v7452 = vrot.slane %v7444, %v7451
        %v7454 = vunpack.c.l.s4 1983009808
        %v7455 = vunpack.c.0.s8 %v7454
        %v7456 = vlaneseq
        %v7457 = vshrl.u32 %v7456, 7
        %v7458 = vsub.s32 %v7455, %v7457
        %v7459 = vrot.slane %v7445, %v7458
        %v7460 = vcombine.low %v7452, %v7459
        %v7461 = vcombine.low %v5849, %v5851
        %v7462 = vcombine.low %v5890, %v5892
        %v7464 = vunpack.c.l.s4 1983009808
        %v7465 = vunpack.c.0.s8 %v7464
        %v7466 = vlaneseq
        %v7467 = vshrl.u32 %v7466, 7
        %v7468 = vsub.s32 %v7465, %v7467
        %v7469 = vrot.slane %v7461, %v7468
        %v7471 = vunpack.c.l.s4 1983009808
        %v7472 = vunpack.c.0.s8 %v7471
        %v7473 = vlaneseq
        %v7474 = vshrl.u32 %v7473, 7
        %v7475 = vsub.s32 %v7472, %v7474
        %v7476 = vrot.slane %v7462, %v7475
        %v7477 = vcombine.low %v7469, %v7476
        %v7478 = vcombine.low %v5931, %v5933
        %v7479 = vcombine.low %v5972, %v5974
        %v7481 = vunpack.c.l.s4 1983009808
        %v7482 = vunpack.c.0.s8 %v7481
        %v7483 = vlaneseq
        %v7484 = vshrl.u32 %v7483, 7
        %v7485 = vsub.s32 %v7482, %v7484
        %v7486 = vrot.slane %v7478, %v7485
        %v7488 = vunpack.c.l.s4 1983009808
        %v7489 = vunpack.c.0.s8 %v7488
        %v7490 = vlaneseq
        %v7491 = vshrl.u32 %v7490, 7
        %v7492 = vsub.s32 %v7489, %v7491
        %v7493 = vrot.slane %v7479, %v7492
        %v7494 = vcombine.low %v7486, %v7493
        %v7495 = vcombine.low %v6013, %v6015
        %v7496 = vcombine.low %v6054, %v6056
        %v7498 = vunpack.c.l.s4 1983009808
        %v7499 = vunpack.c.0.s8 %v7498
        %v7500 = vlaneseq
        %v7501 = vshrl.u32 %v7500, 7
        %v7502 = vsub.s32 %v7499, %v7501
        %v7503 = vrot.slane %v7495, %v7502
        %v7505 = vunpack.c.l.s4 1983009808
        %v7506 = vunpack.c.0.s8 %v7505
        %v7507 = vlaneseq
        %v7508 = vshrl.u32 %v7507, 7
        %v7509 = vsub.s32 %v7506, %v7508
        %v7510 = vrot.slane %v7496, %v7509
        %v7511 = vcombine.low %v7503, %v7510
        %v7512 = vcombine.low %v6095, %v6097
        %v7513 = vcombine.low %v6136, %v6138
        %v7515 = vunpack.c.l.s4 1983009808
        %v7516 = vunpack.c.0.s8 %v7515
        %v7517 = vlaneseq
        %v7518 = vshrl.u32 %v7517, 7
        %v7519 = vsub.s32 %v7516, %v7518
        %v7520 = vrot.slane %v7512, %v7519
        %v7522 = vunpack.c.l.s4 1983009808
        %v7523 = vunpack.c.0.s8 %v7522
        %v7524 = vlaneseq
        %v7525 = vshrl.u32 %v7524, 7
        %v7526 = vsub.s32 %v7523, %v7525
        %v7527 = vrot.slane %v7513, %v7526
        %v7528 = vcombine.low %v7520, %v7527
        %v7529 = vcombine.low %v6177, %v6179
        %v7530 = vcombine.low %v6218, %v6220
        %v7532 = vunpack.c.l.s4 1983009808
        %v7533 = vunpack.c.0.s8 %v7532
        %v7534 = vlaneseq
        %v7535 = vshrl.u32 %v7534, 7
        %v7536 = vsub.s32 %v7533, %v7535
        %v7537 = vrot.slane %v7529, %v7536
        %v7539 = vunpack.c.l.s4 1983009808
        %v7540 = vunpack.c.0.s8 %v7539
        %v7541 = vlaneseq
        %v7542 = vshrl.u32 %v7541, 7
        %v7543 = vsub.s32 %v7540, %v7542
        %v7544 = vrot.slane %v7530, %v7543
        %v7545 = vcombine.low %v7537, %v7544
        %v7546 = vcombine.low %v6259, %v6261
        %v7547 = vcombine.low %v6300, %v6302
        %v7549 = vunpack.c.l.s4 1983009808
        %v7550 = vunpack.c.0.s8 %v7549
        %v7551 = vlaneseq
        %v7552 = vshrl.u32 %v7551, 7
        %v7553 = vsub.s32 %v7550, %v7552
        %v7554 = vrot.slane %v7546, %v7553
        %v7556 = vunpack.c.l.s4 1983009808
        %v7557 = vunpack.c.0.s8 %v7556
        %v7558 = vlaneseq
        %v7559 = vshrl.u32 %v7558, 7
        %v7560 = vsub.s32 %v7557, %v7559
        %v7561 = vrot.slane %v7547, %v7560
        %v7562 = vcombine.low %v7554, %v7561
        %v7563 = vcombine.low %v6341, %v6343
        %v7564 = vcombine.low %v6382, %v6384
        %v7566 = vunpack.c.l.s4 1983009808
        %v7567 = vunpack.c.0.s8 %v7566
        %v7568 = vlaneseq
        %v7569 = vshrl.u32 %v7568, 7
        %v7570 = vsub.s32 %v7567, %v7569
        %v7571 = vrot.slane %v7563, %v7570
        %v7573 = vunpack.c.l.s4 1983009808
        %v7574 = vunpack.c.0.s8 %v7573
        %v7575 = vlaneseq
        %v7576 = vshrl.u32 %v7575, 7
        %v7577 = vsub.s32 %v7574, %v7576
        %v7578 = vrot.slane %v7564, %v7577
        %v7579 = vcombine.low %v7571, %v7578
        %v7580 = vcombine.low %v6423, %v6425
        %v7581 = vcombine.low %v6464, %v6466
        %v7583 = vunpack.c.l.s4 1983009808
        %v7584 = vunpack.c.0.s8 %v7583
        %v7585 = vlaneseq
        %v7586 = vshrl.u32 %v7585, 7
        %v7587 = vsub.s32 %v7584, %v7586
        %v7588 = vrot.slane %v7580, %v7587
        %v7590 = vunpack.c.l.s4 1983009808
        %v7591 = vunpack.c.0.s8 %v7590
        %v7592 = vlaneseq
        %v7593 = vshrl.u32 %v7592, 7
        %v7594 = vsub.s32 %v7591, %v7593
        %v7595 = vrot.slane %v7581, %v7594
        %v7596 = vcombine.low %v7588, %v7595
        %v7597 = vcombine.low %v6505, %v6507
        %v7598 = vcombine.low %v6546, %v6548
        %v7600 = vunpack.c.l.s4 1983009808
        %v7601 = vunpack.c.0.s8 %v7600
        %v7602 = vlaneseq
        %v7603 = vshrl.u32 %v7602, 7
        %v7604 = vsub.s32 %v7601, %v7603
        %v7605 = vrot.slane %v7597, %v7604
        %v7607 = vunpack.c.l.s4 1983009808
        %v7608 = vunpack.c.0.s8 %v7607
        %v7609 = vlaneseq
        %v7610 = vshrl.u32 %v7609, 7
        %v7611 = vsub.s32 %v7608, %v7610
        %v7612 = vrot.slane %v7598, %v7611
        %v7613 = vcombine.low %v7605, %v7612
        %v7614 = vcombine.low %v6587, %v6589
        %v7615 = vcombine.low %v6628, %v6630
        %v7617 = vunpack.c.l.s4 1983009808
        %v7618 = vunpack.c.0.s8 %v7617
        %v7619 = vlaneseq
        %v7620 = vshrl.u32 %v7619, 7
        %v7621 = vsub.s32 %v7618, %v7620
        %v7622 = vrot.slane %v7614, %v7621
        %v7624 = vunpack.c.l.s4 1983009808
        %v7625 = vunpack.c.0.s8 %v7624
        %v7626 = vlaneseq
        %v7627 = vshrl.u32 %v7626, 7
        %v7628 = vsub.s32 %v7625, %v7627
        %v7629 = vrot.slane %v7615, %v7628
        %v7630 = vcombine.low %v7622, %v7629
        %v7631 = vcombine.low %v6669, %v6671
        %v7632 = vcombine.low %v6710, %v6712
        %v7634 = vunpack.c.l.s4 1983009808
        %v7635 = vunpack.c.0.s8 %v7634
        %v7636 = vlaneseq
        %v7637 = vshrl.u32 %v7636, 7
        %v7638 = vsub.s32 %v7635, %v7637
        %v7639 = vrot.slane %v7631, %v7638
        %v7641 = vunpack.c.l.s4 1983009808
        %v7642 = vunpack.c.0.s8 %v7641
        %v7643 = vlaneseq
        %v7644 = vshrl.u32 %v7643, 7
        %v7645 = vsub.s32 %v7642, %v7644
        %v7646 = vrot.slane %v7632, %v7645
        %v7647 = vcombine.low %v7639, %v7646
        %v7648 = vcombine.low %v6751, %v6753
        %v7649 = vcombine.low %v6792, %v6794
        %v7651 = vunpack.c.l.s4 1983009808
        %v7652 = vunpack.c.0.s8 %v7651
        %v7653 = vlaneseq
        %v7654 = vshrl.u32 %v7653, 7
        %v7655 = vsub.s32 %v7652, %v7654
        %v7656 = vrot.slane %v7648, %v7655
        %v7658 = vunpack.c.l.s4 1983009808
        %v7659 = vunpack.c.0.s8 %v7658
        %v7660 = vlaneseq
        %v7661 = vshrl.u32 %v7660, 7
        %v7662 = vsub.s32 %v7659, %v7661
        %v7663 = vrot.slane %v7649, %v7662
        %v7664 = vcombine.low %v7656, %v7663
        %v7665 = vcombine.low %v6833, %v6835
        %v7666 = vcombine.low %v6874, %v6876
        %v7668 = vunpack.c.l.s4 1983009808
        %v7669 = vunpack.c.0.s8 %v7668
        %v7670 = vlaneseq
        %v7671 = vshrl.u32 %v7670, 7
        %v7672 = vsub.s32 %v7669, %v7671
        %v7673 = vrot.slane %v7665, %v7672
        %v7675 = vunpack.c.l.s4 1983009808
        %v7676 = vunpack.c.0.s8 %v7675
        %v7677 = vlaneseq
        %v7678 = vshrl.u32 %v7677, 7
        %v7679 = vsub.s32 %v7676, %v7678
        %v7680 = vrot.slane %v7666, %v7679
        %v7681 = vcombine.low %v7673, %v7680
        %v7682 = vcombine.low %v6915, %v6917
        %v7683 = vcombine.low %v6956, %v6958
        %v7685 = vunpack.c.l.s4 1983009808
        %v7686 = vunpack.c.0.s8 %v7685
        %v7687 = vlaneseq
        %v7688 = vshrl.u32 %v7687, 7
        %v7689 = vsub.s32 %v7686, %v7688
        %v7690 = vrot.slane %v7682, %v7689
        %v7692 = vunpack.c.l.s4 1983009808
        %v7693 = vunpack.c.0.s8 %v7692
        %v7694 = vlaneseq
        %v7695 = vshrl.u32 %v7694, 7
        %v7696 = vsub.s32 %v7693, %v7695
        %v7697 = vrot.slane %v7683, %v7696
        %v7698 = vcombine.low %v7690, %v7697
        %v7699 = vcombine.low %v6997, %v6999
        %v7700 = vcombine.low %v7038, %v7040
        %v7702 = vunpack.c.l.s4 1983009808
        %v7703 = vunpack.c.0.s8 %v7702
        %v7704 = vlaneseq
        %v7705 = vshrl.u32 %v7704, 7
        %v7706 = vsub.s32 %v7703, %v7705
        %v7707 = vrot.slane %v7699, %v7706
        %v7709 = vunpack.c.l.s4 1983009808
        %v7710 = vunpack.c.0.s8 %v7709
        %v7711 = vlaneseq
        %v7712 = vshrl.u32 %v7711, 7
        %v7713 = vsub.s32 %v7710, %v7712
        %v7714 = vrot.slane %v7700, %v7713
        %v7715 = vcombine.low %v7707, %v7714
        %7748 = vst [vmem:[%s400] sm:$0xff] %v7188
        %7749 = vst [vmem:[%s400 + $0x8] sm:$0xff] %v7205
        %7750 = vst [vmem:[%s400 + $0x10] sm:$0xff] %v7222
        %7751 = vst [vmem:[%s400 + $0x18] sm:$0xff] %v7239
        %7752 = vst [vmem:[%s400 + $0x20] sm:$0xff] %v7256
        %7753 = vst [vmem:[%s400 + $0x28] sm:$0xff] %v7273
        %7754 = vst [vmem:[%s400 + $0x30] sm:$0xff] %v7290
        %7755 = vst [vmem:[%s400 + $0x38] sm:$0xff] %v7307
        %7756 = vst [vmem:[%s400 + $0x40] sm:$0xff] %v7324
        %7757 = vst [vmem:[%s400 + $0x48] sm:$0xff] %v7341
        %7758 = vst [vmem:[%s400 + $0x50] sm:$0xff] %v7358
        %7759 = vst [vmem:[%s400 + $0x58] sm:$0xff] %v7375
        %7760 = vst [vmem:[%s400 + $0x60] sm:$0xff] %v7392
        %7761 = vst [vmem:[%s400 + $0x68] sm:$0xff] %v7409
        %7762 = vst [vmem:[%s400 + $0x70] sm:$0xff] %v7426
        %7763 = vst [vmem:[%s400 + $0x78] sm:$0xff] %v7443
        %7764 = vst [vmem:[%s400 + $0x80] sm:$0xff] %v7460
        %7765 = vst [vmem:[%s400 + $0x88] sm:$0xff] %v7477
        %7766 = vst [vmem:[%s400 + $0x90] sm:$0xff] %v7494
        %7767 = vst [vmem:[%s400 + $0x98] sm:$0xff] %v7511
        %7768 = vst [vmem:[%s400 + $0xa0] sm:$0xff] %v7528
        %7769 = vst [vmem:[%s400 + $0xa8] sm:$0xff] %v7545
        %7770 = vst [vmem:[%s400 + $0xb0] sm:$0xff] %v7562
        %7771 = vst [vmem:[%s400 + $0xb8] sm:$0xff] %v7579
        %7772 = vst [vmem:[%s400 + $0xc0] sm:$0xff] %v7596
        %7773 = vst [vmem:[%s400 + $0xc8] sm:$0xff] %v7613
        %7774 = vst [vmem:[%s400 + $0xd0] sm:$0xff] %v7630
        %7775 = vst [vmem:[%s400 + $0xd8] sm:$0xff] %v7647
        %7776 = vst [vmem:[%s400 + $0xe0] sm:$0xff] %v7664
        %7777 = vst [vmem:[%s400 + $0xe8] sm:$0xff] %v7681
        %7778 = vst [vmem:[%s400 + $0xf0] sm:$0xff] %v7698
        %7779 = vst [vmem:[%s400 + $0xf8] sm:$0xff] %v7715
        %s7780 = sand.u32 %s192, 1
        %s7781 = scalar_lea.sflag [#allocation4], %s7780
        %s7782 = sand.u32 %s192, 1
        %s7783 = smul.addr %s7782, 256
        %s7784 = scalar_lea.vmem [#allocation14], %s7783
        // Predicated region
        $region77: #{tpu_custom_call.1} parent=47 // pred_check
          %p7785 = pneg %p202
        $region78: #{tpu_custom_call.1} parent=47 // pred_check_branch
          %7787 = sbr.rel (%p7785) target = $region80
        $region79: #{tpu_custom_call.1} parent=47 // pred_region
          %s7788 = smul.u32 128, %s27
          %s7790 = ssub.s32 4096, 4096
          %7791 = vsyncadd %s7781, %s7790
          %s7792 = smul.addr %s7788, 32
          %s7793 = scalar_lea.hbm %s7, %s7792
          %s7795 = sshll.u32 %s7784, 4
          %s7796 = int_to_ptr.vmem [resolvable:$true] %s7795
          %7798 = dma.vmem_to_hbm [thread:$0]  %s7796, 4096, %s7793, %s7781
        $region80: #{tpu_custom_call.1} parent=47 // pred_fallthru
          _
      $region48: #{tpu_custom_call.1} parent=5 // pred_fallthru
        _
      %p7799 = scmp.le.s32.totalorder 2, %s22
      // Predicated region
      $region81: #{tpu_custom_call.1} parent=5 // pred_check
        %p7800 = pneg %p7799
      $region82: #{tpu_custom_call.1} parent=5 // pred_check_branch
        %7802 = sbr.rel (%p7800) target = $region84
      $region83: #{tpu_custom_call.1} parent=5 // pred_region
        %s7803 = ssub.s32 %s22, 2
        // Predicated region
        $region85: #{tpu_custom_call.1} parent=83 // pred_check
          %p7804 = pneg %p208
        $region86: #{tpu_custom_call.1} parent=83 // pred_check_branch
          %7806 = sbr.rel (%p7804) target = $region88
        $region87: #{tpu_custom_call.1} parent=83 // pred_region
          %s7807 = sand.u32 %s193, 1
          %s7808 = scalar_lea.sflag [#allocation4], %s7807
          %s7809 = sand.u32 %s193, 1
          %s7810 = smul.addr %s7809, 256
          %s7811 = scalar_lea.vmem [#allocation14], %s7810
          %7812 = dma.done %s7808, 4096
        $region88: #{tpu_custom_call.1} parent=83 // pred_fallthru
          _
      $region84: #{tpu_custom_call.1} parent=5 // pred_fallthru
        _
    $region6: #{tpu_custom_call.1} parent=1 // loop_footer
      %s26 = sadd.s32 1, %s22
    $region7: #{tpu_custom_call.1} parent=1 // loop_footer_branch
      %21 = sbr.rel target = $region3
    $region8: #{tpu_custom_call.1} parent=1 // loop_exit
      _
    %7813 = vsyncpa [#allocation3], 1
    %s7814 = scalar_lea.sflag [#allocation3], 1
    %7815 = vsyncpa %s7814, 1
    %7816 = vsyncpa [#allocation6], 1
    %7817 = vsyncpa [#allocation9], 1
    %7818 = vsyncpa [#allocation12], 1
    %s7819 = scalar_lea.sflag [#allocation12], 1
    %7820 = vsyncpa %s7819, 1
    %7821 = vsyncpa [#allocation4], 1
    %s7822 = scalar_lea.sflag [#allocation4], 1
    %7823 = vsyncpa %s7822, 1

</llo_original>
